<compile_context>
chip_gen: v6e
topology: v6e:2x2x1
jax: 0.10.0
libtpu: 0.0.40
codegen_flags: <defaults>
</compile_context>

<pallas_src>
import jax
import jax.numpy as jnp
import numpy as np
from jax.experimental import pallas as pl
from jax.experimental.pallas import tpu as pltpu

# Small, module-consistent sizes.
HIDDEN = 32          # hidden_size
VOCAB = 48           # output_size
MAX_LEN = 10         # max_length (MAX_LENGTH analogue, shrunk)
PACK = 128           # lane-dense packed-output width (>= VOCAB+HIDDEN+MAX_LEN)
assert VOCAB + HIDDEN + MAX_LEN <= PACK

F32 = jnp.float32


def _dot(a, b):
    return jnp.dot(a, b, preferred_element_type=jnp.float32)


def attn_decoder_kernel(
    # scalar prefetch (SMEM): token ids, read per step inside the kernel
    tok_ref,                                   # (T,) int32
    # tensors (VMEM blocks, all resident for the whole call)
    emb_ref,                                   # (V, H) embedding table
    h0_ref,                                    # (1, H) initial hidden
    enc_ref,                                   # (L, H) encoder outputs
    attn_we_ref, attn_wh_ref, attn_b_ref,      # (H,L) (H,L) (1,L)
    comb_we_ref, comb_wa_ref, comb_b_ref,      # (H,H) (H,H) (1,H)
    w_gi_ref, w_gh_ref,                        # (H,3H) input/hidden GRU weights
    b_gi_ref, b_gh_ref,                        # (1,3H) GRU biases
    out_w_ref, out_b_ref,                      # (H,V) (1,V)
    # output: packed [log_probs | h_new | attn_w | 0-pad] per step
    out_ref,                                   # (T, PACK)
):
    H = HIDDEN
    T = out_ref.shape[0]                       # static at trace time
    pad = jnp.zeros((1, PACK - (VOCAB + HIDDEN + MAX_LEN)), F32)

    h = h0_ref[...]                            # (1, H) recurrent state (value carry)

    for t in range(T):                         # static unroll: no per-step grid /
        tok = tok_ref[t]                       # write-back overhead
        embedded = emb_ref[pl.ds(tok, 1), :]   # (1, H) dynamic row gather
        # TODO(synk): dropout_p=0.1 is a no-op in eval mode; training-mode
        # dropout would use pltpu.prng_seed / pltpu.stateful_bernoulli here.

        # attention scores: Linear(cat(embedded, hidden)) with split weights.
        scores = (_dot(embedded, attn_we_ref[...]) +
                  _dot(h, attn_wh_ref[...]) + attn_b_ref[...])        # (1, L)
        s_max = jnp.max(scores, axis=-1, keepdims=True)
        s_exp = jnp.exp(scores - s_max)
        denom = jnp.sum(s_exp, axis=-1, keepdims=True)
        attn_w = s_exp * pl.reciprocal(denom, approx=True)            # softmax

        # attn_applied = bmm(attn_w, encoder_outputs)   (batch of 1)
        attn_applied = _dot(attn_w, enc_ref[...])                     # (1, H)

        # attn_combine(cat(embedded, attn_applied)) then ReLU
        comb = (_dot(embedded, comb_we_ref[...]) +
                _dot(attn_applied, comb_wa_ref[...]) + comb_b_ref[...])
        x = jnp.maximum(comb, 0.0)                                    # (1, H)

        # single-step GRU: two fused (1,H)@(H,3H) dots, PyTorch gate order r,z,n
        gi = _dot(x, w_gi_ref[...]) + b_gi_ref[...]                   # (1, 3H)
        gh = _dot(h, w_gh_ref[...]) + b_gh_ref[...]                   # (1, 3H)
        r = jax.nn.sigmoid(gi[:, 0:H] + gh[:, 0:H])
        z = jax.nn.sigmoid(gi[:, H:2 * H] + gh[:, H:2 * H])
        n = jnp.tanh(gi[:, 2 * H:3 * H] + r * gh[:, 2 * H:3 * H])
        h = (1.0 - z) * n + z * h                                     # new hidden

        # out Linear + log_softmax
        logits = _dot(h, out_w_ref[...]) + out_b_ref[...]             # (1, V)
        l_max = jnp.max(logits, axis=-1, keepdims=True)
        lse = jnp.log(jnp.sum(jnp.exp(logits - l_max), axis=-1,
                              keepdims=True)) + l_max
        logp = logits - lse

        # assemble the lane-dense packed row in registers; one store per step,
        # single write-back DMA for the whole kernel (output block is resident).
        row = jnp.concatenate([logp, h, attn_w, pad], axis=-1)        # (1, PACK)
        out_ref[pl.ds(t, 1), :] = row


def make_params(key, hidden=HIDDEN, vocab=VOCAB, max_len=MAX_LEN):
    ks = jax.random.split(key, 13)
    u = lambda k, shape, s=0.1: jax.random.uniform(k, shape, F32, -s, s)
    return {
        "emb":     u(ks[0], (vocab, hidden), 1.0),
        # attn: Linear(2H -> L), weight split into embedded-half / hidden-half
        "attn_we": u(ks[1], (hidden, max_len)),
        "attn_wh": u(ks[2], (hidden, max_len)),
        "attn_b":  u(ks[3], (1, max_len)),
        # attn_combine: Linear(2H -> H), split the same way
        "comb_we": u(ks[4], (hidden, hidden)),
        "comb_wa": u(ks[5], (hidden, hidden)),
        "comb_b":  u(ks[6], (1, hidden)),
        # GRU weight_ih / weight_hh packed as [r | z | n] along the output dim
        "w_gi":    u(ks[7], (hidden, 3 * hidden)),
        "w_gh":    u(ks[8], (hidden, 3 * hidden)),
        "b_gi":    u(ks[9], (1, 3 * hidden)),
        "b_gh":    u(ks[10], (1, 3 * hidden)),
        # out: Linear(H -> V)
        "out_w":   u(ks[11], (hidden, vocab)),
        "out_b":   u(ks[12], (1, vocab)),
    }


@jax.jit
def attn_decoder_decode(tokens, hidden, encoder_outputs, params):
    """Run T fused decoder steps (teacher-forced token sequence).

    tokens: (T,) int32; hidden: (1,1,H); encoder_outputs: (L,H).
    Returns (log_probs (T,V), final hidden (1,1,H), attn_weights (T,L)).
    """
    T = tokens.shape[0]
    # Guard the dynamic embedding index (VMEM OOB is silent or fatal).
    tokens = jnp.clip(tokens.astype(jnp.int32), 0, VOCAB - 1)
    h0 = hidden.reshape(1, HIDDEN)

    tensor_inputs = [
        params["emb"], h0, encoder_outputs,
        params["attn_we"], params["attn_wh"], params["attn_b"],
        params["comb_we"], params["comb_wa"], params["comb_b"],
        params["w_gi"], params["w_gh"], params["b_gi"], params["b_gh"],
        params["out_w"], params["out_b"],
    ]

    c2 = lambda i, tok: (0, 0)    # everything resident (single grid step)
    in_specs = [
        # TODO(synk): at production vocab sizes the full table should not sit
        # in VMEM; switch back to a per-step row DMA (scalar-prefetch-driven
        # index_map or manual make_async_copy) for large vocabularies.
        pl.BlockSpec((VOCAB, HIDDEN), c2),                      # embedding table
        pl.BlockSpec((1, HIDDEN), c2),                          # h0
        pl.BlockSpec((MAX_LEN, HIDDEN), c2),                    # encoder outputs
        pl.BlockSpec((HIDDEN, MAX_LEN), c2),                    # attn_we
        pl.BlockSpec((HIDDEN, MAX_LEN), c2),                    # attn_wh
        pl.BlockSpec((1, MAX_LEN), c2),                         # attn_b
        pl.BlockSpec((HIDDEN, HIDDEN), c2),                     # comb_we
        pl.BlockSpec((HIDDEN, HIDDEN), c2),                     # comb_wa
        pl.BlockSpec((1, HIDDEN), c2),                          # comb_b
        pl.BlockSpec((HIDDEN, 3 * HIDDEN), c2),                 # w_gi
        pl.BlockSpec((HIDDEN, 3 * HIDDEN), c2),                 # w_gh
        pl.BlockSpec((1, 3 * HIDDEN), c2),                      # b_gi
        pl.BlockSpec((1, 3 * HIDDEN), c2),                      # b_gh
        pl.BlockSpec((HIDDEN, VOCAB), c2),                      # out_w
        pl.BlockSpec((1, VOCAB), c2),                           # out_b
    ]
    out_spec = pl.BlockSpec((T, PACK), c2)

    packed = pl.pallas_call(
        attn_decoder_kernel,
        out_shape=jax.ShapeDtypeStruct((T, PACK), F32),
        grid_spec=pltpu.PrefetchScalarGridSpec(
            num_scalar_prefetch=1,
            grid=(1,),
            in_specs=in_specs,
            out_specs=out_spec,
        ),
        compiler_params=pltpu.CompilerParams(
            dimension_semantics=("arbitrary",),
            vmem_limit_bytes=32 * 1024 * 1024,
        ),
    )(tokens, *tensor_inputs)

    log_probs = packed[:, 0:VOCAB]                                  # (T, V)
    hiddens = packed[:, VOCAB:VOCAB + HIDDEN]                       # (T, H)
    attn_ws = packed[:, VOCAB + HIDDEN:VOCAB + HIDDEN + MAX_LEN]    # (T, L)
    h_final = hiddens[-1].reshape(1, 1, HIDDEN)
    return log_probs, h_final, attn_ws
    # TODO(synk): for multi-sequence serving, add a batch dim (M=B activations)
    # and a "parallel" grid axis so v7x's second TensorCore is engaged.


def attn_decoder_forward(token, hidden, encoder_outputs, params):
    """Single decoder step; mirrors AttnDecoderRNN.forward (eval mode)."""
    log_probs, h_new, attn_w = attn_decoder_decode(
        token.reshape(1).astype(jnp.int32), hidden, encoder_outputs, params)
    return log_probs, h_new, attn_w


def reference_decode(tokens, hidden, encoder_outputs, params):
    """Pure-JAX reference mirroring the PyTorch forward, looped over steps."""
    p = params
    H = HIDDEN
    h = hidden.reshape(1, H)
    logps, attws = [], []
    for t in range(int(tokens.shape[0])):
        embedded = p["emb"][tokens[t]][None, :]
        scores = embedded @ p["attn_we"] + h @ p["attn_wh"] + p["attn_b"]
        attn_w = jax.nn.softmax(scores, axis=1)
        attn_applied = attn_w @ encoder_outputs
        x = jax.nn.relu(embedded @ p["comb_we"] + attn_applied @ p["comb_wa"]
                        + p["comb_b"])
        gi = x @ p["w_gi"] + p["b_gi"]
        gh = h @ p["w_gh"] + p["b_gh"]
        r = jax.nn.sigmoid(gi[:, 0:H] + gh[:, 0:H])
        z = jax.nn.sigmoid(gi[:, H:2 * H] + gh[:, H:2 * H])
        n = jnp.tanh(gi[:, 2 * H:3 * H] + r * gh[:, 2 * H:3 * H])
        h = (1.0 - z) * n + z * h
        logps.append(jax.nn.log_softmax(h @ p["out_w"] + p["out_b"], axis=1))
        attws.append(attn_w)
    return (jnp.concatenate(logps, axis=0), h.reshape(1, 1, H),
            jnp.concatenate(attws, axis=0))


if __name__ == "__main__":
    key = jax.random.PRNGKey(0)
    k_par, k_hid, k_enc, k_tok = jax.random.split(key, 4)

    params = make_params(k_par)
    T = 8
    tokens = jax.random.randint(k_tok, (T,), 0, VOCAB, dtype=jnp.int32)
    hidden = jax.random.normal(k_hid, (1, 1, HIDDEN), F32)
    encoder_outputs = jax.random.normal(k_enc, (MAX_LEN, HIDDEN), F32)

    # Fused multi-step decode.
    log_probs, h_final, attn_ws = attn_decoder_decode(
        tokens, hidden, encoder_outputs, params)
    jax.block_until_ready((log_probs, h_final, attn_ws))

    ref_lp, ref_h, ref_aw = reference_decode(tokens, hidden, encoder_outputs,
                                             params)
    # Tolerance accounts for pl.reciprocal(approx=True) in the in-kernel softmax
    # and MXU-vs-XLA f32 matmul pass differences compounding through the
    # recurrence; structural bugs would show up as O(0.1-1) errors.
    tol = dict(rtol=5e-3, atol=5e-3)
    np.testing.assert_allclose(np.asarray(log_probs), np.asarray(ref_lp), **tol)
    np.testing.assert_allclose(np.asarray(h_final), np.asarray(ref_h), **tol)
    np.testing.assert_allclose(np.asarray(attn_ws), np.asarray(ref_aw), **tol)

    # Single-step path (matches the PyTorch module's forward signature).
    lp1, h1, aw1 = attn_decoder_forward(tokens[:1], hidden, encoder_outputs,
                                        params)
    jax.block_until_ready((lp1, h1, aw1))
    ref_lp1, ref_h1, ref_aw1 = reference_decode(tokens[:1], hidden,
                                                encoder_outputs, params)
    np.testing.assert_allclose(np.asarray(lp1), np.asarray(ref_lp1), **tol)
    np.testing.assert_allclose(np.asarray(h1), np.asarray(ref_h1), **tol)
    np.testing.assert_allclose(np.asarray(aw1), np.asarray(ref_aw1), **tol)

    print("KERNEL_OK")
</pallas_src>

<mosaic_0001>
module attributes {stable_mosaic.version = 11 : i64} {
  func.func @attn_decoder_kernel(%arg0: i32, %arg1: memref<8xi32, #tpu.memory_space<smem>>, %arg2: memref<48x32xf32, #tpu.memory_space<vmem>>, %arg3: memref<1x32xf32, #tpu.memory_space<vmem>>, %arg4: memref<10x32xf32, #tpu.memory_space<vmem>>, %arg5: memref<32x10xf32, #tpu.memory_space<vmem>>, %arg6: memref<32x10xf32, #tpu.memory_space<vmem>>, %arg7: memref<1x10xf32, #tpu.memory_space<vmem>>, %arg8: memref<32x32xf32, #tpu.memory_space<vmem>>, %arg9: memref<32x32xf32, #tpu.memory_space<vmem>>, %arg10: memref<1x32xf32, #tpu.memory_space<vmem>>, %arg11: memref<32x96xf32, #tpu.memory_space<vmem>>, %arg12: memref<32x96xf32, #tpu.memory_space<vmem>>, %arg13: memref<1x96xf32, #tpu.memory_space<vmem>>, %arg14: memref<1x96xf32, #tpu.memory_space<vmem>>, %arg15: memref<32x48xf32, #tpu.memory_space<vmem>>, %arg16: memref<1x48xf32, #tpu.memory_space<vmem>>, %arg17: memref<8x128xf32, #tpu.memory_space<vmem>>) attributes {dimension_semantics = [#tpu.dimension_semantics<arbitrary>], iteration_bounds = array<i64: 1>, scalar_prefetch = 1 : i64, scratch_operands = 0 : i64, tpu.core_type = #tpu.core_type<tc>, window_params = [{pipeline_mode = #tpu.pipeline_mode<synchronous>, transform_indices = @transform_0, window_bounds = array<i64: 48, 32>}, {pipeline_mode = #tpu.pipeline_mode<synchronous>, transform_indices = @transform_1, window_bounds = array<i64: 1, 32>}, {pipeline_mode = #tpu.pipeline_mode<synchronous>, transform_indices = @transform_2, window_bounds = array<i64: 10, 32>}, {pipeline_mode = #tpu.pipeline_mode<synchronous>, transform_indices = @transform_3, window_bounds = array<i64: 32, 10>}, {pipeline_mode = #tpu.pipeline_mode<synchronous>, transform_indices = @transform_4, window_bounds = array<i64: 32, 10>}, {pipeline_mode = #tpu.pipeline_mode<synchronous>, transform_indices = @transform_5, window_bounds = array<i64: 1, 10>}, {pipeline_mode = #tpu.pipeline_mode<synchronous>, transform_indices = @transform_6, window_bounds = array<i64: 32, 32>}, {pipeline_mode = #tpu.pipeline_mode<synchronous>, transform_indices = @transform_7, window_bounds = array<i64: 32, 32>}, {pipeline_mode = #tpu.pipeline_mode<synchronous>, transform_indices = @transform_8, window_bounds = array<i64: 1, 32>}, {pipeline_mode = #tpu.pipeline_mode<synchronous>, transform_indices = @transform_9, window_bounds = array<i64: 32, 96>}, {pipeline_mode = #tpu.pipeline_mode<synchronous>, transform_indices = @transform_10, window_bounds = array<i64: 32, 96>}, {pipeline_mode = #tpu.pipeline_mode<synchronous>, transform_indices = @transform_11, window_bounds = array<i64: 1, 96>}, {pipeline_mode = #tpu.pipeline_mode<synchronous>, transform_indices = @transform_12, window_bounds = array<i64: 1, 96>}, {pipeline_mode = #tpu.pipeline_mode<synchronous>, transform_indices = @transform_13, window_bounds = array<i64: 32, 48>}, {pipeline_mode = #tpu.pipeline_mode<synchronous>, transform_indices = @transform_14, window_bounds = array<i64: 1, 48>}, {pipeline_mode = #tpu.pipeline_mode<synchronous>, transform_indices = @transform_15, window_bounds = array<i64: 8, 128>}]} {
    %cst = arith.constant 0.000000e+00 : f32
    %0 = vector.broadcast %cst : f32 to vector<1x38xf32>
    %c0 = arith.constant 0 : index
    %c0_0 = arith.constant 0 : index
    %1 = vector.load %arg3[%c0, %c0_0] : memref<1x32xf32, #tpu.memory_space<vmem>>, vector<1x32xf32>
    %c0_1 = arith.constant 0 : index
    %2 = memref.load %arg1[%c0_1] : memref<8xi32, #tpu.memory_space<smem>>
    %3 = arith.index_cast %2 : i32 to index
    %c0_2 = arith.constant 0 : index
    %4 = vector.load %arg2[%3, %c0_2] : memref<48x32xf32, #tpu.memory_space<vmem>>, vector<1x32xf32>
    %c0_3 = arith.constant 0 : index
    %c0_4 = arith.constant 0 : index
    %5 = vector.load %arg5[%c0_3, %c0_4] : memref<32x10xf32, #tpu.memory_space<vmem>>, vector<32x10xf32>
    %cst_5 = arith.constant dense<0.000000e+00> : vector<1x10xf32>
    %6 = tpu.matmul %4, %5, %cst_5 {dimension_numbers = #tpu.dot_dimension_numbers<[1], [0], [0], [1], [0, 0, 1, 1], [], []>} : vector<1x32xf32>, vector<32x10xf32>, vector<1x10xf32> -> vector<1x10xf32>
    %c0_6 = arith.constant 0 : index
    %c0_7 = arith.constant 0 : index
    %7 = vector.load %arg6[%c0_6, %c0_7] : memref<32x10xf32, #tpu.memory_space<vmem>>, vector<32x10xf32>
    %cst_8 = arith.constant dense<0.000000e+00> : vector<1x10xf32>
    %8 = tpu.matmul %1, %7, %cst_8 {dimension_numbers = #tpu.dot_dimension_numbers<[1], [0], [0], [1], [0, 0, 1, 1], [], []>} : vector<1x32xf32>, vector<32x10xf32>, vector<1x10xf32> -> vector<1x10xf32>
    %9 = arith.addf %6, %8 : vector<1x10xf32>
    %c0_9 = arith.constant 0 : index
    %c0_10 = arith.constant 0 : index
    %10 = vector.load %arg7[%c0_9, %c0_10] : memref<1x10xf32, #tpu.memory_space<vmem>>, vector<1x10xf32>
    %11 = arith.addf %9, %10 : vector<1x10xf32>
    %cst_11 = arith.constant dense<0xFF800000> : vector<1xf32>
    %12 = vector.multi_reduction <maximumf>, %11, %cst_11 [1] : vector<1x10xf32> to vector<1xf32>
    %13 = vector.shape_cast %12 : vector<1xf32> to vector<1x1xf32>
    %14 = vector.broadcast %13 : vector<1x1xf32> to vector<1x10xf32>
    %15 = arith.subf %11, %14 : vector<1x10xf32>
    %16 = math.exp %15 : vector<1x10xf32>
    %cst_12 = arith.constant dense<0.000000e+00> : vector<1xf32>
    %17 = vector.multi_reduction <add>, %16, %cst_12 [1] : vector<1x10xf32> to vector<1xf32>
    %18 = vector.shape_cast %17 : vector<1xf32> to vector<1x1xf32>
    %19 = tpu.reciprocal %18 {approx = true} : vector<1x1xf32> -> vector<1x1xf32>
    %20 = vector.broadcast %19 : vector<1x1xf32> to vector<1x10xf32>
    %21 = arith.mulf %16, %20 : vector<1x10xf32>
    %c0_13 = arith.constant 0 : index
    %c0_14 = arith.constant 0 : index
    %22 = vector.load %arg4[%c0_13, %c0_14] : memref<10x32xf32, #tpu.memory_space<vmem>>, vector<10x32xf32>
    %cst_15 = arith.constant dense<0.000000e+00> : vector<1x32xf32>
    %23 = tpu.matmul %21, %22, %cst_15 {dimension_numbers = #tpu.dot_dimension_numbers<[1], [0], [0], [1], [0, 0, 1, 1], [], []>} : vector<1x10xf32>, vector<10x32xf32>, vector<1x32xf32> -> vector<1x32xf32>
    %c0_16 = arith.constant 0 : index
    %c0_17 = arith.constant 0 : index
    %24 = vector.load %arg8[%c0_16, %c0_17] : memref<32x32xf32, #tpu.memory_space<vmem>>, vector<32x32xf32>
    %cst_18 = arith.constant dense<0.000000e+00> : vector<1x32xf32>
    %25 = tpu.matmul %4, %24, %cst_18 {dimension_numbers = #tpu.dot_dimension_numbers<[1], [0], [0], [1], [0, 0, 1, 1], [], []>} : vector<1x32xf32>, vector<32x32xf32>, vector<1x32xf32> -> vector<1x32xf32>
    %c0_19 = arith.constant 0 : index
    %c0_20 = arith.constant 0 : index
    %26 = vector.load %arg9[%c0_19, %c0_20] : memref<32x32xf32, #tpu.memory_space<vmem>>, vector<32x32xf32>
    %cst_21 = arith.constant dense<0.000000e+00> : vector<1x32xf32>
    %27 = tpu.matmul %23, %26, %cst_21 {dimension_numbers = #tpu.dot_dimension_numbers<[1], [0], [0], [1], [0, 0, 1, 1], [], []>} : vector<1x32xf32>, vector<32x32xf32>, vector<1x32xf32> -> vector<1x32xf32>
    %28 = arith.addf %25, %27 : vector<1x32xf32>
    %c0_22 = arith.constant 0 : index
    %c0_23 = arith.constant 0 : index
    %29 = vector.load %arg10[%c0_22, %c0_23] : memref<1x32xf32, #tpu.memory_space<vmem>>, vector<1x32xf32>
    %30 = arith.addf %28, %29 : vector<1x32xf32>
    %cst_24 = arith.constant 0.000000e+00 : f32
    %31 = vector.broadcast %cst_24 : f32 to vector<1x32xf32>
    %32 = arith.maximumf %30, %31 : vector<1x32xf32>
    %c0_25 = arith.constant 0 : index
    %c0_26 = arith.constant 0 : index
    %33 = vector.load %arg11[%c0_25, %c0_26] : memref<32x96xf32, #tpu.memory_space<vmem>>, vector<32x96xf32>
    %cst_27 = arith.constant dense<0.000000e+00> : vector<1x96xf32>
    %34 = tpu.matmul %32, %33, %cst_27 {dimension_numbers = #tpu.dot_dimension_numbers<[1], [0], [0], [1], [0, 0, 1, 1], [], []>} : vector<1x32xf32>, vector<32x96xf32>, vector<1x96xf32> -> vector<1x96xf32>
    %c0_28 = arith.constant 0 : index
    %c0_29 = arith.constant 0 : index
    %35 = vector.load %arg13[%c0_28, %c0_29] : memref<1x96xf32, #tpu.memory_space<vmem>>, vector<1x96xf32>
    %36 = arith.addf %34, %35 : vector<1x96xf32>
    %c0_30 = arith.constant 0 : index
    %c0_31 = arith.constant 0 : index
    %37 = vector.load %arg12[%c0_30, %c0_31] : memref<32x96xf32, #tpu.memory_space<vmem>>, vector<32x96xf32>
    %cst_32 = arith.constant dense<0.000000e+00> : vector<1x96xf32>
    %38 = tpu.matmul %1, %37, %cst_32 {dimension_numbers = #tpu.dot_dimension_numbers<[1], [0], [0], [1], [0, 0, 1, 1], [], []>} : vector<1x32xf32>, vector<32x96xf32>, vector<1x96xf32> -> vector<1x96xf32>
    %c0_33 = arith.constant 0 : index
    %c0_34 = arith.constant 0 : index
    %39 = vector.load %arg14[%c0_33, %c0_34] : memref<1x96xf32, #tpu.memory_space<vmem>>, vector<1x96xf32>
    %40 = arith.addf %38, %39 : vector<1x96xf32>
    %41 = vector.extract_strided_slice %36 {offsets = [0, 0], sizes = [1, 32], strides = [1, 1]} : vector<1x96xf32> to vector<1x32xf32>
    %42 = vector.extract_strided_slice %40 {offsets = [0, 0], sizes = [1, 32], strides = [1, 1]} : vector<1x96xf32> to vector<1x32xf32>
    %43 = arith.addf %41, %42 : vector<1x32xf32>
    %44 = arith.negf %43 : vector<1x32xf32>
    %45 = math.exp %44 : vector<1x32xf32>
    %cst_35 = arith.constant 1.000000e+00 : f32
    %46 = vector.broadcast %cst_35 : f32 to vector<1x32xf32>
    %47 = arith.addf %46, %45 : vector<1x32xf32>
    %48 = arith.divf %46, %47 : vector<1x32xf32>
    %49 = vector.extract_strided_slice %36 {offsets = [0, 32], sizes = [1, 32], strides = [1, 1]} : vector<1x96xf32> to vector<1x32xf32>
    %50 = vector.extract_strided_slice %40 {offsets = [0, 32], sizes = [1, 32], strides = [1, 1]} : vector<1x96xf32> to vector<1x32xf32>
    %51 = arith.addf %49, %50 : vector<1x32xf32>
    %52 = arith.negf %51 : vector<1x32xf32>
    %53 = math.exp %52 : vector<1x32xf32>
    %cst_36 = arith.constant 1.000000e+00 : f32
    %54 = vector.broadcast %cst_36 : f32 to vector<1x32xf32>
    %55 = arith.addf %54, %53 : vector<1x32xf32>
    %56 = arith.divf %54, %55 : vector<1x32xf32>
    %57 = vector.extract_strided_slice %36 {offsets = [0, 64], sizes = [1, 32], strides = [1, 1]} : vector<1x96xf32> to vector<1x32xf32>
    %58 = vector.extract_strided_slice %40 {offsets = [0, 64], sizes = [1, 32], strides = [1, 1]} : vector<1x96xf32> to vector<1x32xf32>
    %59 = arith.mulf %48, %58 : vector<1x32xf32>
    %60 = arith.addf %57, %59 : vector<1x32xf32>
    %61 = math.tanh %60 : vector<1x32xf32>
    %cst_37 = arith.constant 1.000000e+00 : f32
    %62 = vector.broadcast %cst_37 : f32 to vector<1x32xf32>
    %63 = arith.subf %62, %56 : vector<1x32xf32>
    %64 = arith.mulf %63, %61 : vector<1x32xf32>
    %65 = arith.mulf %56, %1 : vector<1x32xf32>
    %66 = arith.addf %64, %65 : vector<1x32xf32>
    %c0_38 = arith.constant 0 : index
    %c0_39 = arith.constant 0 : index
    %67 = vector.load %arg15[%c0_38, %c0_39] : memref<32x48xf32, #tpu.memory_space<vmem>>, vector<32x48xf32>
    %cst_40 = arith.constant dense<0.000000e+00> : vector<1x48xf32>
    %68 = tpu.matmul %66, %67, %cst_40 {dimension_numbers = #tpu.dot_dimension_numbers<[1], [0], [0], [1], [0, 0, 1, 1], [], []>} : vector<1x32xf32>, vector<32x48xf32>, vector<1x48xf32> -> vector<1x48xf32>
    %c0_41 = arith.constant 0 : index
    %c0_42 = arith.constant 0 : index
    %69 = vector.load %arg16[%c0_41, %c0_42] : memref<1x48xf32, #tpu.memory_space<vmem>>, vector<1x48xf32>
    %70 = arith.addf %68, %69 : vector<1x48xf32>
    %cst_43 = arith.constant dense<0xFF800000> : vector<1xf32>
    %71 = vector.multi_reduction <maximumf>, %70, %cst_43 [1] : vector<1x48xf32> to vector<1xf32>
    %72 = vector.shape_cast %71 : vector<1xf32> to vector<1x1xf32>
    %73 = vector.broadcast %72 : vector<1x1xf32> to vector<1x48xf32>
    %74 = arith.subf %70, %73 : vector<1x48xf32>
    %75 = math.exp %74 : vector<1x48xf32>
    %cst_44 = arith.constant dense<0.000000e+00> : vector<1xf32>
    %76 = vector.multi_reduction <add>, %75, %cst_44 [1] : vector<1x48xf32> to vector<1xf32>
    %77 = vector.shape_cast %76 : vector<1xf32> to vector<1x1xf32>
    %78 = math.log %77 : vector<1x1xf32>
    %79 = arith.addf %78, %72 : vector<1x1xf32>
    %80 = vector.broadcast %79 : vector<1x1xf32> to vector<1x48xf32>
    %81 = arith.subf %70, %80 : vector<1x48xf32>
    %82 = tpu.concatenate %81, %66, %21, %0 in 1 : vector<1x48xf32>, vector<1x32xf32>, vector<1x10xf32>, vector<1x38xf32> -> vector<1x128xf32>
    %c0_45 = arith.constant 0 : index
    %c0_46 = arith.constant 0 : index
    %83 = vector.load %arg17[%c0_45, %c0_46] : memref<8x128xf32, #tpu.memory_space<vmem>>, vector<1x128xf32>
    tpu.vector_store %arg17[%c0_45, %c0_46], %82 {strides = array<i32>} : memref<8x128xf32, #tpu.memory_space<vmem>>, vector<1x128xf32>,
    %c1 = arith.constant 1 : index
    %84 = memref.load %arg1[%c1] : memref<8xi32, #tpu.memory_space<smem>>
    %85 = arith.index_cast %84 : i32 to index
    %c0_47 = arith.constant 0 : index
    %86 = vector.load %arg2[%85, %c0_47] : memref<48x32xf32, #tpu.memory_space<vmem>>, vector<1x32xf32>
    %c0_48 = arith.constant 0 : index
    %c0_49 = arith.constant 0 : index
    %87 = vector.load %arg5[%c0_48, %c0_49] : memref<32x10xf32, #tpu.memory_space<vmem>>, vector<32x10xf32>
    %cst_50 = arith.constant dense<0.000000e+00> : vector<1x10xf32>
    %88 = tpu.matmul %86, %87, %cst_50 {dimension_numbers = #tpu.dot_dimension_numbers<[1], [0], [0], [1], [0, 0, 1, 1], [], []>} : vector<1x32xf32>, vector<32x10xf32>, vector<1x10xf32> -> vector<1x10xf32>
    %c0_51 = arith.constant 0 : index
    %c0_52 = arith.constant 0 : index
    %89 = vector.load %arg6[%c0_51, %c0_52] : memref<32x10xf32, #tpu.memory_space<vmem>>, vector<32x10xf32>
    %cst_53 = arith.constant dense<0.000000e+00> : vector<1x10xf32>
    %90 = tpu.matmul %66, %89, %cst_53 {dimension_numbers = #tpu.dot_dimension_numbers<[1], [0], [0], [1], [0, 0, 1, 1], [], []>} : vector<1x32xf32>, vector<32x10xf32>, vector<1x10xf32> -> vector<1x10xf32>
    %91 = arith.addf %88, %90 : vector<1x10xf32>
    %c0_54 = arith.constant 0 : index
    %c0_55 = arith.constant 0 : index
    %92 = vector.load %arg7[%c0_54, %c0_55] : memref<1x10xf32, #tpu.memory_space<vmem>>, vector<1x10xf32>
    %93 = arith.addf %91, %92 : vector<1x10xf32>
    %cst_56 = arith.constant dense<0xFF800000> : vector<1xf32>
    %94 = vector.multi_reduction <maximumf>, %93, %cst_56 [1] : vector<1x10xf32> to vector<1xf32>
    %95 = vector.shape_cast %94 : vector<1xf32> to vector<1x1xf32>
    %96 = vector.broadcast %95 : vector<1x1xf32> to vector<1x10xf32>
    %97 = arith.subf %93, %96 : vector<1x10xf32>
    %98 = math.exp %97 : vector<1x10xf32>
    %cst_57 = arith.constant dense<0.000000e+00> : vector<1xf32>
    %99 = vector.multi_reduction <add>, %98, %cst_57 [1] : vector<1x10xf32> to vector<1xf32>
    %100 = vector.shape_cast %99 : vector<1xf32> to vector<1x1xf32>
    %101 = tpu.reciprocal %100 {approx = true} : vector<1x1xf32> -> vector<1x1xf32>
    %102 = vector.broadcast %101 : vector<1x1xf32> to vector<1x10xf32>
    %103 = arith.mulf %98, %102 : vector<1x10xf32>
    %c0_58 = arith.constant 0 : index
    %c0_59 = arith.constant 0 : index
    %104 = vector.load %arg4[%c0_58, %c0_59] : memref<10x32xf32, #tpu.memory_space<vmem>>, vector<10x32xf32>
    %cst_60 = arith.constant dense<0.000000e+00> : vector<1x32xf32>
    %105 = tpu.matmul %103, %104, %cst_60 {dimension_numbers = #tpu.dot_dimension_numbers<[1], [0], [0], [1], [0, 0, 1, 1], [], []>} : vector<1x10xf32>, vector<10x32xf32>, vector<1x32xf32> -> vector<1x32xf32>
    %c0_61 = arith.constant 0 : index
    %c0_62 = arith.constant 0 : index
    %106 = vector.load %arg8[%c0_61, %c0_62] : memref<32x32xf32, #tpu.memory_space<vmem>>, vector<32x32xf32>
    %cst_63 = arith.constant dense<0.000000e+00> : vector<1x32xf32>
    %107 = tpu.matmul %86, %106, %cst_63 {dimension_numbers = #tpu.dot_dimension_numbers<[1], [0], [0], [1], [0, 0, 1, 1], [], []>} : vector<1x32xf32>, vector<32x32xf32>, vector<1x32xf32> -> vector<1x32xf32>
    %c0_64 = arith.constant 0 : index
    %c0_65 = arith.constant 0 : index
    %108 = vector.load %arg9[%c0_64, %c0_65] : memref<32x32xf32, #tpu.memory_space<vmem>>, vector<32x32xf32>
    %cst_66 = arith.constant dense<0.000000e+00> : vector<1x32xf32>
    %109 = tpu.matmul %105, %108, %cst_66 {dimension_numbers = #tpu.dot_dimension_numbers<[1], [0], [0], [1], [0, 0, 1, 1], [], []>} : vector<1x32xf32>, vector<32x32xf32>, vector<1x32xf32> -> vector<1x32xf32>
    %110 = arith.addf %107, %109 : vector<1x32xf32>
    %c0_67 = arith.constant 0 : index
    %c0_68 = arith.constant 0 : index
    %111 = vector.load %arg10[%c0_67, %c0_68] : memref<1x32xf32, #tpu.memory_space<vmem>>, vector<1x32xf32>
    %112 = arith.addf %110, %111 : vector<1x32xf32>
    %cst_69 = arith.constant 0.000000e+00 : f32
    %113 = vector.broadcast %cst_69 : f32 to vector<1x32xf32>
    %114 = arith.maximumf %112, %113 : vector<1x32xf32>
    %c0_70 = arith.constant 0 : index
    %c0_71 = arith.constant 0 : index
    %115 = vector.load %arg11[%c0_70, %c0_71] : memref<32x96xf32, #tpu.memory_space<vmem>>, vector<32x96xf32>
    %cst_72 = arith.constant dense<0.000000e+00> : vector<1x96xf32>
    %116 = tpu.matmul %114, %115, %cst_72 {dimension_numbers = #tpu.dot_dimension_numbers<[1], [0], [0], [1], [0, 0, 1, 1], [], []>} : vector<1x32xf32>, vector<32x96xf32>, vector<1x96xf32> -> vector<1x96xf32>
    %c0_73 = arith.constant 0 : index
    %c0_74 = arith.constant 0 : index
    %117 = vector.load %arg13[%c0_73, %c0_74] : memref<1x96xf32, #tpu.memory_space<vmem>>, vector<1x96xf32>
    %118 = arith.addf %116, %117 : vector<1x96xf32>
    %c0_75 = arith.constant 0 : index
    %c0_76 = arith.constant 0 : index
    %119 = vector.load %arg12[%c0_75, %c0_76] : memref<32x96xf32, #tpu.memory_space<vmem>>, vector<32x96xf32>
    %cst_77 = arith.constant dense<0.000000e+00> : vector<1x96xf32>
    %120 = tpu.matmul %66, %119, %cst_77 {dimension_numbers = #tpu.dot_dimension_numbers<[1], [0], [0], [1], [0, 0, 1, 1], [], []>} : vector<1x32xf32>, vector<32x96xf32>, vector<1x96xf32> -> vector<1x96xf32>
    %c0_78 = arith.constant 0 : index
    %c0_79 = arith.constant 0 : index
    %121 = vector.load %arg14[%c0_78, %c0_79] : memref<1x96xf32, #tpu.memory_space<vmem>>, vector<1x96xf32>
    %122 = arith.addf %120, %121 : vector<1x96xf32>
    %123 = vector.extract_strided_slice %118 {offsets = [0, 0], sizes = [1, 32], strides = [1, 1]} : vector<1x96xf32> to vector<1x32xf32>
    %124 = vector.extract_strided_slice %122 {offsets = [0, 0], sizes = [1, 32], strides = [1, 1]} : vector<1x96xf32> to vector<1x32xf32>
    %125 = arith.addf %123, %124 : vector<1x32xf32>
    %126 = arith.negf %125 : vector<1x32xf32>
    %127 = math.exp %126 : vector<1x32xf32>
    %cst_80 = arith.constant 1.000000e+00 : f32
    %128 = vector.broadcast %cst_80 : f32 to vector<1x32xf32>
    %129 = arith.addf %128, %127 : vector<1x32xf32>
    %130 = arith.divf %128, %129 : vector<1x32xf32>
    %131 = vector.extract_strided_slice %118 {offsets = [0, 32], sizes = [1, 32], strides = [1, 1]} : vector<1x96xf32> to vector<1x32xf32>
    %132 = vector.extract_strided_slice %122 {offsets = [0, 32], sizes = [1, 32], strides = [1, 1]} : vector<1x96xf32> to vector<1x32xf32>
    %133 = arith.addf %131, %132 : vector<1x32xf32>
    %134 = arith.negf %133 : vector<1x32xf32>
    %135 = math.exp %134 : vector<1x32xf32>
    %cst_81 = arith.constant 1.000000e+00 : f32
    %136 = vector.broadcast %cst_81 : f32 to vector<1x32xf32>
    %137 = arith.addf %136, %135 : vector<1x32xf32>
    %138 = arith.divf %136, %137 : vector<1x32xf32>
    %139 = vector.extract_strided_slice %118 {offsets = [0, 64], sizes = [1, 32], strides = [1, 1]} : vector<1x96xf32> to vector<1x32xf32>
    %140 = vector.extract_strided_slice %122 {offsets = [0, 64], sizes = [1, 32], strides = [1, 1]} : vector<1x96xf32> to vector<1x32xf32>
    %141 = arith.mulf %130, %140 : vector<1x32xf32>
    %142 = arith.addf %139, %141 : vector<1x32xf32>
    %143 = math.tanh %142 : vector<1x32xf32>
    %cst_82 = arith.constant 1.000000e+00 : f32
    %144 = vector.broadcast %cst_82 : f32 to vector<1x32xf32>
    %145 = arith.subf %144, %138 : vector<1x32xf32>
    %146 = arith.mulf %145, %143 : vector<1x32xf32>
    %147 = arith.mulf %138, %66 : vector<1x32xf32>
    %148 = arith.addf %146, %147 : vector<1x32xf32>
    %c0_83 = arith.constant 0 : index
    %c0_84 = arith.constant 0 : index
    %149 = vector.load %arg15[%c0_83, %c0_84] : memref<32x48xf32, #tpu.memory_space<vmem>>, vector<32x48xf32>
    %cst_85 = arith.constant dense<0.000000e+00> : vector<1x48xf32>
    %150 = tpu.matmul %148, %149, %cst_85 {dimension_numbers = #tpu.dot_dimension_numbers<[1], [0], [0], [1], [0, 0, 1, 1], [], []>} : vector<1x32xf32>, vector<32x48xf32>, vector<1x48xf32> -> vector<1x48xf32>
    %c0_86 = arith.constant 0 : index
    %c0_87 = arith.constant 0 : index
    %151 = vector.load %arg16[%c0_86, %c0_87] : memref<1x48xf32, #tpu.memory_space<vmem>>, vector<1x48xf32>
    %152 = arith.addf %150, %151 : vector<1x48xf32>
    %cst_88 = arith.constant dense<0xFF800000> : vector<1xf32>
    %153 = vector.multi_reduction <maximumf>, %152, %cst_88 [1] : vector<1x48xf32> to vector<1xf32>
    %154 = vector.shape_cast %153 : vector<1xf32> to vector<1x1xf32>
    %155 = vector.broadcast %154 : vector<1x1xf32> to vector<1x48xf32>
    %156 = arith.subf %152, %155 : vector<1x48xf32>
    %157 = math.exp %156 : vector<1x48xf32>
    %cst_89 = arith.constant dense<0.000000e+00> : vector<1xf32>
    %158 = vector.multi_reduction <add>, %157, %cst_89 [1] : vector<1x48xf32> to vector<1xf32>
    %159 = vector.shape_cast %158 : vector<1xf32> to vector<1x1xf32>
    %160 = math.log %159 : vector<1x1xf32>
    %161 = arith.addf %160, %154 : vector<1x1xf32>
    %162 = vector.broadcast %161 : vector<1x1xf32> to vector<1x48xf32>
    %163 = arith.subf %152, %162 : vector<1x48xf32>
    %164 = tpu.concatenate %163, %148, %103, %0 in 1 : vector<1x48xf32>, vector<1x32xf32>, vector<1x10xf32>, vector<1x38xf32> -> vector<1x128xf32>
    %c1_90 = arith.constant 1 : index
    %c0_91 = arith.constant 0 : index
    %165 = vector.load %arg17[%c1_90, %c0_91] : memref<8x128xf32, #tpu.memory_space<vmem>>, vector<1x128xf32>
    tpu.vector_store %arg17[%c1_90, %c0_91], %164 {strides = array<i32>} : memref<8x128xf32, #tpu.memory_space<vmem>>, vector<1x128xf32>,
    %c2 = arith.constant 2 : index
    %166 = memref.load %arg1[%c2] : memref<8xi32, #tpu.memory_space<smem>>
    %167 = arith.index_cast %166 : i32 to index
    %c0_92 = arith.constant 0 : index
    %168 = vector.load %arg2[%167, %c0_92] : memref<48x32xf32, #tpu.memory_space<vmem>>, vector<1x32xf32>
    %c0_93 = arith.constant 0 : index
    %c0_94 = arith.constant 0 : index
    %169 = vector.load %arg5[%c0_93, %c0_94] : memref<32x10xf32, #tpu.memory_space<vmem>>, vector<32x10xf32>
    %cst_95 = arith.constant dense<0.000000e+00> : vector<1x10xf32>
    %170 = tpu.matmul %168, %169, %cst_95 {dimension_numbers = #tpu.dot_dimension_numbers<[1], [0], [0], [1], [0, 0, 1, 1], [], []>} : vector<1x32xf32>, vector<32x10xf32>, vector<1x10xf32> -> vector<1x10xf32>
    %c0_96 = arith.constant 0 : index
    %c0_97 = arith.constant 0 : index
    %171 = vector.load %arg6[%c0_96, %c0_97] : memref<32x10xf32, #tpu.memory_space<vmem>>, vector<32x10xf32>
    %cst_98 = arith.constant dense<0.000000e+00> : vector<1x10xf32>
    %172 = tpu.matmul %148, %171, %cst_98 {dimension_numbers = #tpu.dot_dimension_numbers<[1], [0], [0], [1], [0, 0, 1, 1], [], []>} : vector<1x32xf32>, vector<32x10xf32>, vector<1x10xf32> -> vector<1x10xf32>
    %173 = arith.addf %170, %172 : vector<1x10xf32>
    %c0_99 = arith.constant 0 : index
    %c0_100 = arith.constant 0 : index
    %174 = vector.load %arg7[%c0_99, %c0_100] : memref<1x10xf32, #tpu.memory_space<vmem>>, vector<1x10xf32>
    %175 = arith.addf %173, %174 : vector<1x10xf32>
    %cst_101 = arith.constant dense<0xFF800000> : vector<1xf32>
    %176 = vector.multi_reduction <maximumf>, %175, %cst_101 [1] : vector<1x10xf32> to vector<1xf32>
    %177 = vector.shape_cast %176 : vector<1xf32> to vector<1x1xf32>
    %178 = vector.broadcast %177 : vector<1x1xf32> to vector<1x10xf32>
    %179 = arith.subf %175, %178 : vector<1x10xf32>
    %180 = math.exp %179 : vector<1x10xf32>
    %cst_102 = arith.constant dense<0.000000e+00> : vector<1xf32>
    %181 = vector.multi_reduction <add>, %180, %cst_102 [1] : vector<1x10xf32> to vector<1xf32>
    %182 = vector.shape_cast %181 : vector<1xf32> to vector<1x1xf32>
    %183 = tpu.reciprocal %182 {approx = true} : vector<1x1xf32> -> vector<1x1xf32>
    %184 = vector.broadcast %183 : vector<1x1xf32> to vector<1x10xf32>
    %185 = arith.mulf %180, %184 : vector<1x10xf32>
    %c0_103 = arith.constant 0 : index
    %c0_104 = arith.constant 0 : index
    %186 = vector.load %arg4[%c0_103, %c0_104] : memref<10x32xf32, #tpu.memory_space<vmem>>, vector<10x32xf32>
    %cst_105 = arith.constant dense<0.000000e+00> : vector<1x32xf32>
    %187 = tpu.matmul %185, %186, %cst_105 {dimension_numbers = #tpu.dot_dimension_numbers<[1], [0], [0], [1], [0, 0, 1, 1], [], []>} : vector<1x10xf32>, vector<10x32xf32>, vector<1x32xf32> -> vector<1x32xf32>
    %c0_106 = arith.constant 0 : index
    %c0_107 = arith.constant 0 : index
    %188 = vector.load %arg8[%c0_106, %c0_107] : memref<32x32xf32, #tpu.memory_space<vmem>>, vector<32x32xf32>
    %cst_108 = arith.constant dense<0.000000e+00> : vector<1x32xf32>
    %189 = tpu.matmul %168, %188, %cst_108 {dimension_numbers = #tpu.dot_dimension_numbers<[1], [0], [0], [1], [0, 0, 1, 1], [], []>} : vector<1x32xf32>, vector<32x32xf32>, vector<1x32xf32> -> vector<1x32xf32>
    %c0_109 = arith.constant 0 : index
    %c0_110 = arith.constant 0 : index
    %190 = vector.load %arg9[%c0_109, %c0_110] : memref<32x32xf32, #tpu.memory_space<vmem>>, vector<32x32xf32>
    %cst_111 = arith.constant dense<0.000000e+00> : vector<1x32xf32>
    %191 = tpu.matmul %187, %190, %cst_111 {dimension_numbers = #tpu.dot_dimension_numbers<[1], [0], [0], [1], [0, 0, 1, 1], [], []>} : vector<1x32xf32>, vector<32x32xf32>, vector<1x32xf32> -> vector<1x32xf32>
    %192 = arith.addf %189, %191 : vector<1x32xf32>
    %c0_112 = arith.constant 0 : index
    %c0_113 = arith.constant 0 : index
    %193 = vector.load %arg10[%c0_112, %c0_113] : memref<1x32xf32, #tpu.memory_space<vmem>>, vector<1x32xf32>
    %194 = arith.addf %192, %193 : vector<1x32xf32>
    %cst_114 = arith.constant 0.000000e+00 : f32
    %195 = vector.broadcast %cst_114 : f32 to vector<1x32xf32>
    %196 = arith.maximumf %194, %195 : vector<1x32xf32>
    %c0_115 = arith.constant 0 : index
    %c0_116 = arith.constant 0 : index
    %197 = vector.load %arg11[%c0_115, %c0_116] : memref<32x96xf32, #tpu.memory_space<vmem>>, vector<32x96xf32>
    %cst_117 = arith.constant dense<0.000000e+00> : vector<1x96xf32>
    %198 = tpu.matmul %196, %197, %cst_117 {dimension_numbers = #tpu.dot_dimension_numbers<[1], [0], [0], [1], [0, 0, 1, 1], [], []>} : vector<1x32xf32>, vector<32x96xf32>, vector<1x96xf32> -> vector<1x96xf32>
    %c0_118 = arith.constant 0 : index
    %c0_119 = arith.constant 0 : index
    %199 = vector.load %arg13[%c0_118, %c0_119] : memref<1x96xf32, #tpu.memory_space<vmem>>, vector<1x96xf32>
    %200 = arith.addf %198, %199 : vector<1x96xf32>
    %c0_120 = arith.constant 0 : index
    %c0_121 = arith.constant 0 : index
    %201 = vector.load %arg12[%c0_120, %c0_121] : memref<32x96xf32, #tpu.memory_space<vmem>>, vector<32x96xf32>
    %cst_122 = arith.constant dense<0.000000e+00> : vector<1x96xf32>
    %202 = tpu.matmul %148, %201, %cst_122 {dimension_numbers = #tpu.dot_dimension_numbers<[1], [0], [0], [1], [0, 0, 1, 1], [], []>} : vector<1x32xf32>, vector<32x96xf32>, vector<1x96xf32> -> vector<1x96xf32>
    %c0_123 = arith.constant 0 : index
    %c0_124 = arith.constant 0 : index
    %203 = vector.load %arg14[%c0_123, %c0_124] : memref<1x96xf32, #tpu.memory_space<vmem>>, vector<1x96xf32>
    %204 = arith.addf %202, %203 : vector<1x96xf32>
    %205 = vector.extract_strided_slice %200 {offsets = [0, 0], sizes = [1, 32], strides = [1, 1]} : vector<1x96xf32> to vector<1x32xf32>
    %206 = vector.extract_strided_slice %204 {offsets = [0, 0], sizes = [1, 32], strides = [1, 1]} : vector<1x96xf32> to vector<1x32xf32>
    %207 = arith.addf %205, %206 : vector<1x32xf32>
    %208 = arith.negf %207 : vector<1x32xf32>
    %209 = math.exp %208 : vector<1x32xf32>
    %cst_125 = arith.constant 1.000000e+00 : f32
    %210 = vector.broadcast %cst_125 : f32 to vector<1x32xf32>
    %211 = arith.addf %210, %209 : vector<1x32xf32>
    %212 = arith.divf %210, %211 : vector<1x32xf32>
    %213 = vector.extract_strided_slice %200 {offsets = [0, 32], sizes = [1, 32], strides = [1, 1]} : vector<1x96xf32> to vector<1x32xf32>
    %214 = vector.extract_strided_slice %204 {offsets = [0, 32], sizes = [1, 32], strides = [1, 1]} : vector<1x96xf32> to vector<1x32xf32>
    %215 = arith.addf %213, %214 : vector<1x32xf32>
    %216 = arith.negf %215 : vector<1x32xf32>
    %217 = math.exp %216 : vector<1x32xf32>
    %cst_126 = arith.constant 1.000000e+00 : f32
    %218 = vector.broadcast %cst_126 : f32 to vector<1x32xf32>
    %219 = arith.addf %218, %217 : vector<1x32xf32>
    %220 = arith.divf %218, %219 : vector<1x32xf32>
    %221 = vector.extract_strided_slice %200 {offsets = [0, 64], sizes = [1, 32], strides = [1, 1]} : vector<1x96xf32> to vector<1x32xf32>
    %222 = vector.extract_strided_slice %204 {offsets = [0, 64], sizes = [1, 32], strides = [1, 1]} : vector<1x96xf32> to vector<1x32xf32>
    %223 = arith.mulf %212, %222 : vector<1x32xf32>
    %224 = arith.addf %221, %223 : vector<1x32xf32>
    %225 = math.tanh %224 : vector<1x32xf32>
    %cst_127 = arith.constant 1.000000e+00 : f32
    %226 = vector.broadcast %cst_127 : f32 to vector<1x32xf32>
    %227 = arith.subf %226, %220 : vector<1x32xf32>
    %228 = arith.mulf %227, %225 : vector<1x32xf32>
    %229 = arith.mulf %220, %148 : vector<1x32xf32>
    %230 = arith.addf %228, %229 : vector<1x32xf32>
    %c0_128 = arith.constant 0 : index
    %c0_129 = arith.constant 0 : index
    %231 = vector.load %arg15[%c0_128, %c0_129] : memref<32x48xf32, #tpu.memory_space<vmem>>, vector<32x48xf32>
    %cst_130 = arith.constant dense<0.000000e+00> : vector<1x48xf32>
    %232 = tpu.matmul %230, %231, %cst_130 {dimension_numbers = #tpu.dot_dimension_numbers<[1], [0], [0], [1], [0, 0, 1, 1], [], []>} : vector<1x32xf32>, vector<32x48xf32>, vector<1x48xf32> -> vector<1x48xf32>
    %c0_131 = arith.constant 0 : index
    %c0_132 = arith.constant 0 : index
    %233 = vector.load %arg16[%c0_131, %c0_132] : memref<1x48xf32, #tpu.memory_space<vmem>>, vector<1x48xf32>
    %234 = arith.addf %232, %233 : vector<1x48xf32>
    %cst_133 = arith.constant dense<0xFF800000> : vector<1xf32>
    %235 = vector.multi_reduction <maximumf>, %234, %cst_133 [1] : vector<1x48xf32> to vector<1xf32>
    %236 = vector.shape_cast %235 : vector<1xf32> to vector<1x1xf32>
    %237 = vector.broadcast %236 : vector<1x1xf32> to vector<1x48xf32>
    %238 = arith.subf %234, %237 : vector<1x48xf32>
    %239 = math.exp %238 : vector<1x48xf32>
    %cst_134 = arith.constant dense<0.000000e+00> : vector<1xf32>
    %240 = vector.multi_reduction <add>, %239, %cst_134 [1] : vector<1x48xf32> to vector<1xf32>
    %241 = vector.shape_cast %240 : vector<1xf32> to vector<1x1xf32>
    %242 = math.log %241 : vector<1x1xf32>
    %243 = arith.addf %242, %236 : vector<1x1xf32>
    %244 = vector.broadcast %243 : vector<1x1xf32> to vector<1x48xf32>
    %245 = arith.subf %234, %244 : vector<1x48xf32>
    %246 = tpu.concatenate %245, %230, %185, %0 in 1 : vector<1x48xf32>, vector<1x32xf32>, vector<1x10xf32>, vector<1x38xf32> -> vector<1x128xf32>
    %c2_135 = arith.constant 2 : index
    %c0_136 = arith.constant 0 : index
    %247 = vector.load %arg17[%c2_135, %c0_136] : memref<8x128xf32, #tpu.memory_space<vmem>>, vector<1x128xf32>
    tpu.vector_store %arg17[%c2_135, %c0_136], %246 {strides = array<i32>} : memref<8x128xf32, #tpu.memory_space<vmem>>, vector<1x128xf32>,
    %c3 = arith.constant 3 : index
    %248 = memref.load %arg1[%c3] : memref<8xi32, #tpu.memory_space<smem>>
    %249 = arith.index_cast %248 : i32 to index
    %c0_137 = arith.constant 0 : index
    %250 = vector.load %arg2[%249, %c0_137] : memref<48x32xf32, #tpu.memory_space<vmem>>, vector<1x32xf32>
    %c0_138 = arith.constant 0 : index
    %c0_139 = arith.constant 0 : index
    %251 = vector.load %arg5[%c0_138, %c0_139] : memref<32x10xf32, #tpu.memory_space<vmem>>, vector<32x10xf32>
    %cst_140 = arith.constant dense<0.000000e+00> : vector<1x10xf32>
    %252 = tpu.matmul %250, %251, %cst_140 {dimension_numbers = #tpu.dot_dimension_numbers<[1], [0], [0], [1], [0, 0, 1, 1], [], []>} : vector<1x32xf32>, vector<32x10xf32>, vector<1x10xf32> -> vector<1x10xf32>
    %c0_141 = arith.constant 0 : index
    %c0_142 = arith.constant 0 : index
    %253 = vector.load %arg6[%c0_141, %c0_142] : memref<32x10xf32, #tpu.memory_space<vmem>>, vector<32x10xf32>
    %cst_143 = arith.constant dense<0.000000e+00> : vector<1x10xf32>
    %254 = tpu.matmul %230, %253, %cst_143 {dimension_numbers = #tpu.dot_dimension_numbers<[1], [0], [0], [1], [0, 0, 1, 1], [], []>} : vector<1x32xf32>, vector<32x10xf32>, vector<1x10xf32> -> vector<1x10xf32>
    %255 = arith.addf %252, %254 : vector<1x10xf32>
    %c0_144 = arith.constant 0 : index
    %c0_145 = arith.constant 0 : index
    %256 = vector.load %arg7[%c0_144, %c0_145] : memref<1x10xf32, #tpu.memory_space<vmem>>, vector<1x10xf32>
    %257 = arith.addf %255, %256 : vector<1x10xf32>
    %cst_146 = arith.constant dense<0xFF800000> : vector<1xf32>
    %258 = vector.multi_reduction <maximumf>, %257, %cst_146 [1] : vector<1x10xf32> to vector<1xf32>
    %259 = vector.shape_cast %258 : vector<1xf32> to vector<1x1xf32>
    %260 = vector.broadcast %259 : vector<1x1xf32> to vector<1x10xf32>
    %261 = arith.subf %257, %260 : vector<1x10xf32>
    %262 = math.exp %261 : vector<1x10xf32>
    %cst_147 = arith.constant dense<0.000000e+00> : vector<1xf32>
    %263 = vector.multi_reduction <add>, %262, %cst_147 [1] : vector<1x10xf32> to vector<1xf32>
    %264 = vector.shape_cast %263 : vector<1xf32> to vector<1x1xf32>
    %265 = tpu.reciprocal %264 {approx = true} : vector<1x1xf32> -> vector<1x1xf32>
    %266 = vector.broadcast %265 : vector<1x1xf32> to vector<1x10xf32>
    %267 = arith.mulf %262, %266 : vector<1x10xf32>
    %c0_148 = arith.constant 0 : index
    %c0_149 = arith.constant 0 : index
    %268 = vector.load %arg4[%c0_148, %c0_149] : memref<10x32xf32, #tpu.memory_space<vmem>>, vector<10x32xf32>
    %cst_150 = arith.constant dense<0.000000e+00> : vector<1x32xf32>
    %269 = tpu.matmul %267, %268, %cst_150 {dimension_numbers = #tpu.dot_dimension_numbers<[1], [0], [0], [1], [0, 0, 1, 1], [], []>} : vector<1x10xf32>, vector<10x32xf32>, vector<1x32xf32> -> vector<1x32xf32>
    %c0_151 = arith.constant 0 : index
    %c0_152 = arith.constant 0 : index
    %270 = vector.load %arg8[%c0_151, %c0_152] : memref<32x32xf32, #tpu.memory_space<vmem>>, vector<32x32xf32>
    %cst_153 = arith.constant dense<0.000000e+00> : vector<1x32xf32>
    %271 = tpu.matmul %250, %270, %cst_153 {dimension_numbers = #tpu.dot_dimension_numbers<[1], [0], [0], [1], [0, 0, 1, 1], [], []>} : vector<1x32xf32>, vector<32x32xf32>, vector<1x32xf32> -> vector<1x32xf32>
    %c0_154 = arith.constant 0 : index
    %c0_155 = arith.constant 0 : index
    %272 = vector.load %arg9[%c0_154, %c0_155] : memref<32x32xf32, #tpu.memory_space<vmem>>, vector<32x32xf32>
    %cst_156 = arith.constant dense<0.000000e+00> : vector<1x32xf32>
    %273 = tpu.matmul %269, %272, %cst_156 {dimension_numbers = #tpu.dot_dimension_numbers<[1], [0], [0], [1], [0, 0, 1, 1], [], []>} : vector<1x32xf32>, vector<32x32xf32>, vector<1x32xf32> -> vector<1x32xf32>
    %274 = arith.addf %271, %273 : vector<1x32xf32>
    %c0_157 = arith.constant 0 : index
    %c0_158 = arith.constant 0 : index
    %275 = vector.load %arg10[%c0_157, %c0_158] : memref<1x32xf32, #tpu.memory_space<vmem>>, vector<1x32xf32>
    %276 = arith.addf %274, %275 : vector<1x32xf32>
    %cst_159 = arith.constant 0.000000e+00 : f32
    %277 = vector.broadcast %cst_159 : f32 to vector<1x32xf32>
    %278 = arith.maximumf %276, %277 : vector<1x32xf32>
    %c0_160 = arith.constant 0 : index
    %c0_161 = arith.constant 0 : index
    %279 = vector.load %arg11[%c0_160, %c0_161] : memref<32x96xf32, #tpu.memory_space<vmem>>, vector<32x96xf32>
    %cst_162 = arith.constant dense<0.000000e+00> : vector<1x96xf32>
    %280 = tpu.matmul %278, %279, %cst_162 {dimension_numbers = #tpu.dot_dimension_numbers<[1], [0], [0], [1], [0, 0, 1, 1], [], []>} : vector<1x32xf32>, vector<32x96xf32>, vector<1x96xf32> -> vector<1x96xf32>
    %c0_163 = arith.constant 0 : index
    %c0_164 = arith.constant 0 : index
    %281 = vector.load %arg13[%c0_163, %c0_164] : memref<1x96xf32, #tpu.memory_space<vmem>>, vector<1x96xf32>
    %282 = arith.addf %280, %281 : vector<1x96xf32>
    %c0_165 = arith.constant 0 : index
    %c0_166 = arith.constant 0 : index
    %283 = vector.load %arg12[%c0_165, %c0_166] : memref<32x96xf32, #tpu.memory_space<vmem>>, vector<32x96xf32>
    %cst_167 = arith.constant dense<0.000000e+00> : vector<1x96xf32>
    %284 = tpu.matmul %230, %283, %cst_167 {dimension_numbers = #tpu.dot_dimension_numbers<[1], [0], [0], [1], [0, 0, 1, 1], [], []>} : vector<1x32xf32>, vector<32x96xf32>, vector<1x96xf32> -> vector<1x96xf32>
    %c0_168 = arith.constant 0 : index
    %c0_169 = arith.constant 0 : index
    %285 = vector.load %arg14[%c0_168, %c0_169] : memref<1x96xf32, #tpu.memory_space<vmem>>, vector<1x96xf32>
    %286 = arith.addf %284, %285 : vector<1x96xf32>
    %287 = vector.extract_strided_slice %282 {offsets = [0, 0], sizes = [1, 32], strides = [1, 1]} : vector<1x96xf32> to vector<1x32xf32>
    %288 = vector.extract_strided_slice %286 {offsets = [0, 0], sizes = [1, 32], strides = [1, 1]} : vector<1x96xf32> to vector<1x32xf32>
    %289 = arith.addf %287, %288 : vector<1x32xf32>
    %290 = arith.negf %289 : vector<1x32xf32>
    %291 = math.exp %290 : vector<1x32xf32>
    %cst_170 = arith.constant 1.000000e+00 : f32
    %292 = vector.broadcast %cst_170 : f32 to vector<1x32xf32>
    %293 = arith.addf %292, %291 : vector<1x32xf32>
    %294 = arith.divf %292, %293 : vector<1x32xf32>
    %295 = vector.extract_strided_slice %282 {offsets = [0, 32], sizes = [1, 32], strides = [1, 1]} : vector<1x96xf32> to vector<1x32xf32>
    %296 = vector.extract_strided_slice %286 {offsets = [0, 32], sizes = [1, 32], strides = [1, 1]} : vector<1x96xf32> to vector<1x32xf32>
    %297 = arith.addf %295, %296 : vector<1x32xf32>
    %298 = arith.negf %297 : vector<1x32xf32>
    %299 = math.exp %298 : vector<1x32xf32>
    %cst_171 = arith.constant 1.000000e+00 : f32
    %300 = vector.broadcast %cst_171 : f32 to vector<1x32xf32>
    %301 = arith.addf %300, %299 : vector<1x32xf32>
    %302 = arith.divf %300, %301 : vector<1x32xf32>
    %303 = vector.extract_strided_slice %282 {offsets = [0, 64], sizes = [1, 32], strides = [1, 1]} : vector<1x96xf32> to vector<1x32xf32>
    %304 = vector.extract_strided_slice %286 {offsets = [0, 64], sizes = [1, 32], strides = [1, 1]} : vector<1x96xf32> to vector<1x32xf32>
    %305 = arith.mulf %294, %304 : vector<1x32xf32>
    %306 = arith.addf %303, %305 : vector<1x32xf32>
    %307 = math.tanh %306 : vector<1x32xf32>
    %cst_172 = arith.constant 1.000000e+00 : f32
    %308 = vector.broadcast %cst_172 : f32 to vector<1x32xf32>
    %309 = arith.subf %308, %302 : vector<1x32xf32>
    %310 = arith.mulf %309, %307 : vector<1x32xf32>
    %311 = arith.mulf %302, %230 : vector<1x32xf32>
    %312 = arith.addf %310, %311 : vector<1x32xf32>
    %c0_173 = arith.constant 0 : index
    %c0_174 = arith.constant 0 : index
    %313 = vector.load %arg15[%c0_173, %c0_174] : memref<32x48xf32, #tpu.memory_space<vmem>>, vector<32x48xf32>
    %cst_175 = arith.constant dense<0.000000e+00> : vector<1x48xf32>
    %314 = tpu.matmul %312, %313, %cst_175 {dimension_numbers = #tpu.dot_dimension_numbers<[1], [0], [0], [1], [0, 0, 1, 1], [], []>} : vector<1x32xf32>, vector<32x48xf32>, vector<1x48xf32> -> vector<1x48xf32>
    %c0_176 = arith.constant 0 : index
    %c0_177 = arith.constant 0 : index
    %315 = vector.load %arg16[%c0_176, %c0_177] : memref<1x48xf32, #tpu.memory_space<vmem>>, vector<1x48xf32>
    %316 = arith.addf %314, %315 : vector<1x48xf32>
    %cst_178 = arith.constant dense<0xFF800000> : vector<1xf32>
    %317 = vector.multi_reduction <maximumf>, %316, %cst_178 [1] : vector<1x48xf32> to vector<1xf32>
    %318 = vector.shape_cast %317 : vector<1xf32> to vector<1x1xf32>
    %319 = vector.broadcast %318 : vector<1x1xf32> to vector<1x48xf32>
    %320 = arith.subf %316, %319 : vector<1x48xf32>
    %321 = math.exp %320 : vector<1x48xf32>
    %cst_179 = arith.constant dense<0.000000e+00> : vector<1xf32>
    %322 = vector.multi_reduction <add>, %321, %cst_179 [1] : vector<1x48xf32> to vector<1xf32>
    %323 = vector.shape_cast %322 : vector<1xf32> to vector<1x1xf32>
    %324 = math.log %323 : vector<1x1xf32>
    %325 = arith.addf %324, %318 : vector<1x1xf32>
    %326 = vector.broadcast %325 : vector<1x1xf32> to vector<1x48xf32>
    %327 = arith.subf %316, %326 : vector<1x48xf32>
    %328 = tpu.concatenate %327, %312, %267, %0 in 1 : vector<1x48xf32>, vector<1x32xf32>, vector<1x10xf32>, vector<1x38xf32> -> vector<1x128xf32>
    %c3_180 = arith.constant 3 : index
    %c0_181 = arith.constant 0 : index
    %329 = vector.load %arg17[%c3_180, %c0_181] : memref<8x128xf32, #tpu.memory_space<vmem>>, vector<1x128xf32>
    tpu.vector_store %arg17[%c3_180, %c0_181], %328 {strides = array<i32>} : memref<8x128xf32, #tpu.memory_space<vmem>>, vector<1x128xf32>,
    %c4 = arith.constant 4 : index
    %330 = memref.load %arg1[%c4] : memref<8xi32, #tpu.memory_space<smem>>
    %331 = arith.index_cast %330 : i32 to index
    %c0_182 = arith.constant 0 : index
    %332 = vector.load %arg2[%331, %c0_182] : memref<48x32xf32, #tpu.memory_space<vmem>>, vector<1x32xf32>
    %c0_183 = arith.constant 0 : index
    %c0_184 = arith.constant 0 : index
    %333 = vector.load %arg5[%c0_183, %c0_184] : memref<32x10xf32, #tpu.memory_space<vmem>>, vector<32x10xf32>
    %cst_185 = arith.constant dense<0.000000e+00> : vector<1x10xf32>
    %334 = tpu.matmul %332, %333, %cst_185 {dimension_numbers = #tpu.dot_dimension_numbers<[1], [0], [0], [1], [0, 0, 1, 1], [], []>} : vector<1x32xf32>, vector<32x10xf32>, vector<1x10xf32> -> vector<1x10xf32>
    %c0_186 = arith.constant 0 : index
    %c0_187 = arith.constant 0 : index
    %335 = vector.load %arg6[%c0_186, %c0_187] : memref<32x10xf32, #tpu.memory_space<vmem>>, vector<32x10xf32>
    %cst_188 = arith.constant dense<0.000000e+00> : vector<1x10xf32>
    %336 = tpu.matmul %312, %335, %cst_188 {dimension_numbers = #tpu.dot_dimension_numbers<[1], [0], [0], [1], [0, 0, 1, 1], [], []>} : vector<1x32xf32>, vector<32x10xf32>, vector<1x10xf32> -> vector<1x10xf32>
    %337 = arith.addf %334, %336 : vector<1x10xf32>
    %c0_189 = arith.constant 0 : index
    %c0_190 = arith.constant 0 : index
    %338 = vector.load %arg7[%c0_189, %c0_190] : memref<1x10xf32, #tpu.memory_space<vmem>>, vector<1x10xf32>
    %339 = arith.addf %337, %338 : vector<1x10xf32>
    %cst_191 = arith.constant dense<0xFF800000> : vector<1xf32>
    %340 = vector.multi_reduction <maximumf>, %339, %cst_191 [1] : vector<1x10xf32> to vector<1xf32>
    %341 = vector.shape_cast %340 : vector<1xf32> to vector<1x1xf32>
    %342 = vector.broadcast %341 : vector<1x1xf32> to vector<1x10xf32>
    %343 = arith.subf %339, %342 : vector<1x10xf32>
    %344 = math.exp %343 : vector<1x10xf32>
    %cst_192 = arith.constant dense<0.000000e+00> : vector<1xf32>
    %345 = vector.multi_reduction <add>, %344, %cst_192 [1] : vector<1x10xf32> to vector<1xf32>
    %346 = vector.shape_cast %345 : vector<1xf32> to vector<1x1xf32>
    %347 = tpu.reciprocal %346 {approx = true} : vector<1x1xf32> -> vector<1x1xf32>
    %348 = vector.broadcast %347 : vector<1x1xf32> to vector<1x10xf32>
    %349 = arith.mulf %344, %348 : vector<1x10xf32>
    %c0_193 = arith.constant 0 : index
    %c0_194 = arith.constant 0 : index
    %350 = vector.load %arg4[%c0_193, %c0_194] : memref<10x32xf32, #tpu.memory_space<vmem>>, vector<10x32xf32>
    %cst_195 = arith.constant dense<0.000000e+00> : vector<1x32xf32>
    %351 = tpu.matmul %349, %350, %cst_195 {dimension_numbers = #tpu.dot_dimension_numbers<[1], [0], [0], [1], [0, 0, 1, 1], [], []>} : vector<1x10xf32>, vector<10x32xf32>, vector<1x32xf32> -> vector<1x32xf32>
    %c0_196 = arith.constant 0 : index
    %c0_197 = arith.constant 0 : index
    %352 = vector.load %arg8[%c0_196, %c0_197] : memref<32x32xf32, #tpu.memory_space<vmem>>, vector<32x32xf32>
    %cst_198 = arith.constant dense<0.000000e+00> : vector<1x32xf32>
    %353 = tpu.matmul %332, %352, %cst_198 {dimension_numbers = #tpu.dot_dimension_numbers<[1], [0], [0], [1], [0, 0, 1, 1], [], []>} : vector<1x32xf32>, vector<32x32xf32>, vector<1x32xf32> -> vector<1x32xf32>
    %c0_199 = arith.constant 0 : index
    %c0_200 = arith.constant 0 : index
    %354 = vector.load %arg9[%c0_199, %c0_200] : memref<32x32xf32, #tpu.memory_space<vmem>>, vector<32x32xf32>
    %cst_201 = arith.constant dense<0.000000e+00> : vector<1x32xf32>
    %355 = tpu.matmul %351, %354, %cst_201 {dimension_numbers = #tpu.dot_dimension_numbers<[1], [0], [0], [1], [0, 0, 1, 1], [], []>} : vector<1x32xf32>, vector<32x32xf32>, vector<1x32xf32> -> vector<1x32xf32>
    %356 = arith.addf %353, %355 : vector<1x32xf32>
    %c0_202 = arith.constant 0 : index
    %c0_203 = arith.constant 0 : index
    %357 = vector.load %arg10[%c0_202, %c0_203] : memref<1x32xf32, #tpu.memory_space<vmem>>, vector<1x32xf32>
    %358 = arith.addf %356, %357 : vector<1x32xf32>
    %cst_204 = arith.constant 0.000000e+00 : f32
    %359 = vector.broadcast %cst_204 : f32 to vector<1x32xf32>
    %360 = arith.maximumf %358, %359 : vector<1x32xf32>
    %c0_205 = arith.constant 0 : index
    %c0_206 = arith.constant 0 : index
    %361 = vector.load %arg11[%c0_205, %c0_206] : memref<32x96xf32, #tpu.memory_space<vmem>>, vector<32x96xf32>
    %cst_207 = arith.constant dense<0.000000e+00> : vector<1x96xf32>
    %362 = tpu.matmul %360, %361, %cst_207 {dimension_numbers = #tpu.dot_dimension_numbers<[1], [0], [0], [1], [0, 0, 1, 1], [], []>} : vector<1x32xf32>, vector<32x96xf32>, vector<1x96xf32> -> vector<1x96xf32>
    %c0_208 = arith.constant 0 : index
    %c0_209 = arith.constant 0 : index
    %363 = vector.load %arg13[%c0_208, %c0_209] : memref<1x96xf32, #tpu.memory_space<vmem>>, vector<1x96xf32>
    %364 = arith.addf %362, %363 : vector<1x96xf32>
    %c0_210 = arith.constant 0 : index
    %c0_211 = arith.constant 0 : index
    %365 = vector.load %arg12[%c0_210, %c0_211] : memref<32x96xf32, #tpu.memory_space<vmem>>, vector<32x96xf32>
    %cst_212 = arith.constant dense<0.000000e+00> : vector<1x96xf32>
    %366 = tpu.matmul %312, %365, %cst_212 {dimension_numbers = #tpu.dot_dimension_numbers<[1], [0], [0], [1], [0, 0, 1, 1], [], []>} : vector<1x32xf32>, vector<32x96xf32>, vector<1x96xf32> -> vector<1x96xf32>
    %c0_213 = arith.constant 0 : index
    %c0_214 = arith.constant 0 : index
    %367 = vector.load %arg14[%c0_213, %c0_214] : memref<1x96xf32, #tpu.memory_space<vmem>>, vector<1x96xf32>
    %368 = arith.addf %366, %367 : vector<1x96xf32>
    %369 = vector.extract_strided_slice %364 {offsets = [0, 0], sizes = [1, 32], strides = [1, 1]} : vector<1x96xf32> to vector<1x32xf32>
    %370 = vector.extract_strided_slice %368 {offsets = [0, 0], sizes = [1, 32], strides = [1, 1]} : vector<1x96xf32> to vector<1x32xf32>
    %371 = arith.addf %369, %370 : vector<1x32xf32>
    %372 = arith.negf %371 : vector<1x32xf32>
    %373 = math.exp %372 : vector<1x32xf32>
    %cst_215 = arith.constant 1.000000e+00 : f32
    %374 = vector.broadcast %cst_215 : f32 to vector<1x32xf32>
    %375 = arith.addf %374, %373 : vector<1x32xf32>
    %376 = arith.divf %374, %375 : vector<1x32xf32>
    %377 = vector.extract_strided_slice %364 {offsets = [0, 32], sizes = [1, 32], strides = [1, 1]} : vector<1x96xf32> to vector<1x32xf32>
    %378 = vector.extract_strided_slice %368 {offsets = [0, 32], sizes = [1, 32], strides = [1, 1]} : vector<1x96xf32> to vector<1x32xf32>
    %379 = arith.addf %377, %378 : vector<1x32xf32>
    %380 = arith.negf %379 : vector<1x32xf32>
    %381 = math.exp %380 : vector<1x32xf32>
    %cst_216 = arith.constant 1.000000e+00 : f32
    %382 = vector.broadcast %cst_216 : f32 to vector<1x32xf32>
    %383 = arith.addf %382, %381 : vector<1x32xf32>
    %384 = arith.divf %382, %383 : vector<1x32xf32>
    %385 = vector.extract_strided_slice %364 {offsets = [0, 64], sizes = [1, 32], strides = [1, 1]} : vector<1x96xf32> to vector<1x32xf32>
    %386 = vector.extract_strided_slice %368 {offsets = [0, 64], sizes = [1, 32], strides = [1, 1]} : vector<1x96xf32> to vector<1x32xf32>
    %387 = arith.mulf %376, %386 : vector<1x32xf32>
    %388 = arith.addf %385, %387 : vector<1x32xf32>
    %389 = math.tanh %388 : vector<1x32xf32>
    %cst_217 = arith.constant 1.000000e+00 : f32
    %390 = vector.broadcast %cst_217 : f32 to vector<1x32xf32>
    %391 = arith.subf %390, %384 : vector<1x32xf32>
    %392 = arith.mulf %391, %389 : vector<1x32xf32>
    %393 = arith.mulf %384, %312 : vector<1x32xf32>
    %394 = arith.addf %392, %393 : vector<1x32xf32>
    %c0_218 = arith.constant 0 : index
    %c0_219 = arith.constant 0 : index
    %395 = vector.load %arg15[%c0_218, %c0_219] : memref<32x48xf32, #tpu.memory_space<vmem>>, vector<32x48xf32>
    %cst_220 = arith.constant dense<0.000000e+00> : vector<1x48xf32>
    %396 = tpu.matmul %394, %395, %cst_220 {dimension_numbers = #tpu.dot_dimension_numbers<[1], [0], [0], [1], [0, 0, 1, 1], [], []>} : vector<1x32xf32>, vector<32x48xf32>, vector<1x48xf32> -> vector<1x48xf32>
    %c0_221 = arith.constant 0 : index
    %c0_222 = arith.constant 0 : index
    %397 = vector.load %arg16[%c0_221, %c0_222] : memref<1x48xf32, #tpu.memory_space<vmem>>, vector<1x48xf32>
    %398 = arith.addf %396, %397 : vector<1x48xf32>
    %cst_223 = arith.constant dense<0xFF800000> : vector<1xf32>
    %399 = vector.multi_reduction <maximumf>, %398, %cst_223 [1] : vector<1x48xf32> to vector<1xf32>
    %400 = vector.shape_cast %399 : vector<1xf32> to vector<1x1xf32>
    %401 = vector.broadcast %400 : vector<1x1xf32> to vector<1x48xf32>
    %402 = arith.subf %398, %401 : vector<1x48xf32>
    %403 = math.exp %402 : vector<1x48xf32>
    %cst_224 = arith.constant dense<0.000000e+00> : vector<1xf32>
    %404 = vector.multi_reduction <add>, %403, %cst_224 [1] : vector<1x48xf32> to vector<1xf32>
    %405 = vector.shape_cast %404 : vector<1xf32> to vector<1x1xf32>
    %406 = math.log %405 : vector<1x1xf32>
    %407 = arith.addf %406, %400 : vector<1x1xf32>
    %408 = vector.broadcast %407 : vector<1x1xf32> to vector<1x48xf32>
    %409 = arith.subf %398, %408 : vector<1x48xf32>
    %410 = tpu.concatenate %409, %394, %349, %0 in 1 : vector<1x48xf32>, vector<1x32xf32>, vector<1x10xf32>, vector<1x38xf32> -> vector<1x128xf32>
    %c4_225 = arith.constant 4 : index
    %c0_226 = arith.constant 0 : index
    %411 = vector.load %arg17[%c4_225, %c0_226] : memref<8x128xf32, #tpu.memory_space<vmem>>, vector<1x128xf32>
    tpu.vector_store %arg17[%c4_225, %c0_226], %410 {strides = array<i32>} : memref<8x128xf32, #tpu.memory_space<vmem>>, vector<1x128xf32>,
    %c5 = arith.constant 5 : index
    %412 = memref.load %arg1[%c5] : memref<8xi32, #tpu.memory_space<smem>>
    %413 = arith.index_cast %412 : i32 to index
    %c0_227 = arith.constant 0 : index
    %414 = vector.load %arg2[%413, %c0_227] : memref<48x32xf32, #tpu.memory_space<vmem>>, vector<1x32xf32>
    %c0_228 = arith.constant 0 : index
    %c0_229 = arith.constant 0 : index
    %415 = vector.load %arg5[%c0_228, %c0_229] : memref<32x10xf32, #tpu.memory_space<vmem>>, vector<32x10xf32>
    %cst_230 = arith.constant dense<0.000000e+00> : vector<1x10xf32>
    %416 = tpu.matmul %414, %415, %cst_230 {dimension_numbers = #tpu.dot_dimension_numbers<[1], [0], [0], [1], [0, 0, 1, 1], [], []>} : vector<1x32xf32>, vector<32x10xf32>, vector<1x10xf32> -> vector<1x10xf32>
    %c0_231 = arith.constant 0 : index
    %c0_232 = arith.constant 0 : index
    %417 = vector.load %arg6[%c0_231, %c0_232] : memref<32x10xf32, #tpu.memory_space<vmem>>, vector<32x10xf32>
    %cst_233 = arith.constant dense<0.000000e+00> : vector<1x10xf32>
    %418 = tpu.matmul %394, %417, %cst_233 {dimension_numbers = #tpu.dot_dimension_numbers<[1], [0], [0], [1], [0, 0, 1, 1], [], []>} : vector<1x32xf32>, vector<32x10xf32>, vector<1x10xf32> -> vector<1x10xf32>
    %419 = arith.addf %416, %418 : vector<1x10xf32>
    %c0_234 = arith.constant 0 : index
    %c0_235 = arith.constant 0 : index
    %420 = vector.load %arg7[%c0_234, %c0_235] : memref<1x10xf32, #tpu.memory_space<vmem>>, vector<1x10xf32>
    %421 = arith.addf %419, %420 : vector<1x10xf32>
    %cst_236 = arith.constant dense<0xFF800000> : vector<1xf32>
    %422 = vector.multi_reduction <maximumf>, %421, %cst_236 [1] : vector<1x10xf32> to vector<1xf32>
    %423 = vector.shape_cast %422 : vector<1xf32> to vector<1x1xf32>
    %424 = vector.broadcast %423 : vector<1x1xf32> to vector<1x10xf32>
    %425 = arith.subf %421, %424 : vector<1x10xf32>
    %426 = math.exp %425 : vector<1x10xf32>
    %cst_237 = arith.constant dense<0.000000e+00> : vector<1xf32>
    %427 = vector.multi_reduction <add>, %426, %cst_237 [1] : vector<1x10xf32> to vector<1xf32>
    %428 = vector.shape_cast %427 : vector<1xf32> to vector<1x1xf32>
    %429 = tpu.reciprocal %428 {approx = true} : vector<1x1xf32> -> vector<1x1xf32>
    %430 = vector.broadcast %429 : vector<1x1xf32> to vector<1x10xf32>
    %431 = arith.mulf %426, %430 : vector<1x10xf32>
    %c0_238 = arith.constant 0 : index
    %c0_239 = arith.constant 0 : index
    %432 = vector.load %arg4[%c0_238, %c0_239] : memref<10x32xf32, #tpu.memory_space<vmem>>, vector<10x32xf32>
    %cst_240 = arith.constant dense<0.000000e+00> : vector<1x32xf32>
    %433 = tpu.matmul %431, %432, %cst_240 {dimension_numbers = #tpu.dot_dimension_numbers<[1], [0], [0], [1], [0, 0, 1, 1], [], []>} : vector<1x10xf32>, vector<10x32xf32>, vector<1x32xf32> -> vector<1x32xf32>
    %c0_241 = arith.constant 0 : index
    %c0_242 = arith.constant 0 : index
    %434 = vector.load %arg8[%c0_241, %c0_242] : memref<32x32xf32, #tpu.memory_space<vmem>>, vector<32x32xf32>
    %cst_243 = arith.constant dense<0.000000e+00> : vector<1x32xf32>
    %435 = tpu.matmul %414, %434, %cst_243 {dimension_numbers = #tpu.dot_dimension_numbers<[1], [0], [0], [1], [0, 0, 1, 1], [], []>} : vector<1x32xf32>, vector<32x32xf32>, vector<1x32xf32> -> vector<1x32xf32>
    %c0_244 = arith.constant 0 : index
    %c0_245 = arith.constant 0 : index
    %436 = vector.load %arg9[%c0_244, %c0_245] : memref<32x32xf32, #tpu.memory_space<vmem>>, vector<32x32xf32>
    %cst_246 = arith.constant dense<0.000000e+00> : vector<1x32xf32>
    %437 = tpu.matmul %433, %436, %cst_246 {dimension_numbers = #tpu.dot_dimension_numbers<[1], [0], [0], [1], [0, 0, 1, 1], [], []>} : vector<1x32xf32>, vector<32x32xf32>, vector<1x32xf32> -> vector<1x32xf32>
    %438 = arith.addf %435, %437 : vector<1x32xf32>
    %c0_247 = arith.constant 0 : index
    %c0_248 = arith.constant 0 : index
    %439 = vector.load %arg10[%c0_247, %c0_248] : memref<1x32xf32, #tpu.memory_space<vmem>>, vector<1x32xf32>
    %440 = arith.addf %438, %439 : vector<1x32xf32>
    %cst_249 = arith.constant 0.000000e+00 : f32
    %441 = vector.broadcast %cst_249 : f32 to vector<1x32xf32>
    %442 = arith.maximumf %440, %441 : vector<1x32xf32>
    %c0_250 = arith.constant 0 : index
    %c0_251 = arith.constant 0 : index
    %443 = vector.load %arg11[%c0_250, %c0_251] : memref<32x96xf32, #tpu.memory_space<vmem>>, vector<32x96xf32>
    %cst_252 = arith.constant dense<0.000000e+00> : vector<1x96xf32>
    %444 = tpu.matmul %442, %443, %cst_252 {dimension_numbers = #tpu.dot_dimension_numbers<[1], [0], [0], [1], [0, 0, 1, 1], [], []>} : vector<1x32xf32>, vector<32x96xf32>, vector<1x96xf32> -> vector<1x96xf32>
    %c0_253 = arith.constant 0 : index
    %c0_254 = arith.constant 0 : index
    %445 = vector.load %arg13[%c0_253, %c0_254] : memref<1x96xf32, #tpu.memory_space<vmem>>, vector<1x96xf32>
    %446 = arith.addf %444, %445 : vector<1x96xf32>
    %c0_255 = arith.constant 0 : index
    %c0_256 = arith.constant 0 : index
    %447 = vector.load %arg12[%c0_255, %c0_256] : memref<32x96xf32, #tpu.memory_space<vmem>>, vector<32x96xf32>
    %cst_257 = arith.constant dense<0.000000e+00> : vector<1x96xf32>
    %448 = tpu.matmul %394, %447, %cst_257 {dimension_numbers = #tpu.dot_dimension_numbers<[1], [0], [0], [1], [0, 0, 1, 1], [], []>} : vector<1x32xf32>, vector<32x96xf32>, vector<1x96xf32> -> vector<1x96xf32>
    %c0_258 = arith.constant 0 : index
    %c0_259 = arith.constant 0 : index
    %449 = vector.load %arg14[%c0_258, %c0_259] : memref<1x96xf32, #tpu.memory_space<vmem>>, vector<1x96xf32>
    %450 = arith.addf %448, %449 : vector<1x96xf32>
    %451 = vector.extract_strided_slice %446 {offsets = [0, 0], sizes = [1, 32], strides = [1, 1]} : vector<1x96xf32> to vector<1x32xf32>
    %452 = vector.extract_strided_slice %450 {offsets = [0, 0], sizes = [1, 32], strides = [1, 1]} : vector<1x96xf32> to vector<1x32xf32>
    %453 = arith.addf %451, %452 : vector<1x32xf32>
    %454 = arith.negf %453 : vector<1x32xf32>
    %455 = math.exp %454 : vector<1x32xf32>
    %cst_260 = arith.constant 1.000000e+00 : f32
    %456 = vector.broadcast %cst_260 : f32 to vector<1x32xf32>
    %457 = arith.addf %456, %455 : vector<1x32xf32>
    %458 = arith.divf %456, %457 : vector<1x32xf32>
    %459 = vector.extract_strided_slice %446 {offsets = [0, 32], sizes = [1, 32], strides = [1, 1]} : vector<1x96xf32> to vector<1x32xf32>
    %460 = vector.extract_strided_slice %450 {offsets = [0, 32], sizes = [1, 32], strides = [1, 1]} : vector<1x96xf32> to vector<1x32xf32>
    %461 = arith.addf %459, %460 : vector<1x32xf32>
    %462 = arith.negf %461 : vector<1x32xf32>
    %463 = math.exp %462 : vector<1x32xf32>
    %cst_261 = arith.constant 1.000000e+00 : f32
    %464 = vector.broadcast %cst_261 : f32 to vector<1x32xf32>
    %465 = arith.addf %464, %463 : vector<1x32xf32>
    %466 = arith.divf %464, %465 : vector<1x32xf32>
    %467 = vector.extract_strided_slice %446 {offsets = [0, 64], sizes = [1, 32], strides = [1, 1]} : vector<1x96xf32> to vector<1x32xf32>
    %468 = vector.extract_strided_slice %450 {offsets = [0, 64], sizes = [1, 32], strides = [1, 1]} : vector<1x96xf32> to vector<1x32xf32>
    %469 = arith.mulf %458, %468 : vector<1x32xf32>
    %470 = arith.addf %467, %469 : vector<1x32xf32>
    %471 = math.tanh %470 : vector<1x32xf32>
    %cst_262 = arith.constant 1.000000e+00 : f32
    %472 = vector.broadcast %cst_262 : f32 to vector<1x32xf32>
    %473 = arith.subf %472, %466 : vector<1x32xf32>
    %474 = arith.mulf %473, %471 : vector<1x32xf32>
    %475 = arith.mulf %466, %394 : vector<1x32xf32>
    %476 = arith.addf %474, %475 : vector<1x32xf32>
    %c0_263 = arith.constant 0 : index
    %c0_264 = arith.constant 0 : index
    %477 = vector.load %arg15[%c0_263, %c0_264] : memref<32x48xf32, #tpu.memory_space<vmem>>, vector<32x48xf32>
    %cst_265 = arith.constant dense<0.000000e+00> : vector<1x48xf32>
    %478 = tpu.matmul %476, %477, %cst_265 {dimension_numbers = #tpu.dot_dimension_numbers<[1], [0], [0], [1], [0, 0, 1, 1], [], []>} : vector<1x32xf32>, vector<32x48xf32>, vector<1x48xf32> -> vector<1x48xf32>
    %c0_266 = arith.constant 0 : index
    %c0_267 = arith.constant 0 : index
    %479 = vector.load %arg16[%c0_266, %c0_267] : memref<1x48xf32, #tpu.memory_space<vmem>>, vector<1x48xf32>
    %480 = arith.addf %478, %479 : vector<1x48xf32>
    %cst_268 = arith.constant dense<0xFF800000> : vector<1xf32>
    %481 = vector.multi_reduction <maximumf>, %480, %cst_268 [1] : vector<1x48xf32> to vector<1xf32>
    %482 = vector.shape_cast %481 : vector<1xf32> to vector<1x1xf32>
    %483 = vector.broadcast %482 : vector<1x1xf32> to vector<1x48xf32>
    %484 = arith.subf %480, %483 : vector<1x48xf32>
    %485 = math.exp %484 : vector<1x48xf32>
    %cst_269 = arith.constant dense<0.000000e+00> : vector<1xf32>
    %486 = vector.multi_reduction <add>, %485, %cst_269 [1] : vector<1x48xf32> to vector<1xf32>
    %487 = vector.shape_cast %486 : vector<1xf32> to vector<1x1xf32>
    %488 = math.log %487 : vector<1x1xf32>
    %489 = arith.addf %488, %482 : vector<1x1xf32>
    %490 = vector.broadcast %489 : vector<1x1xf32> to vector<1x48xf32>
    %491 = arith.subf %480, %490 : vector<1x48xf32>
    %492 = tpu.concatenate %491, %476, %431, %0 in 1 : vector<1x48xf32>, vector<1x32xf32>, vector<1x10xf32>, vector<1x38xf32> -> vector<1x128xf32>
    %c5_270 = arith.constant 5 : index
    %c0_271 = arith.constant 0 : index
    %493 = vector.load %arg17[%c5_270, %c0_271] : memref<8x128xf32, #tpu.memory_space<vmem>>, vector<1x128xf32>
    tpu.vector_store %arg17[%c5_270, %c0_271], %492 {strides = array<i32>} : memref<8x128xf32, #tpu.memory_space<vmem>>, vector<1x128xf32>,
    %c6 = arith.constant 6 : index
    %494 = memref.load %arg1[%c6] : memref<8xi32, #tpu.memory_space<smem>>
    %495 = arith.index_cast %494 : i32 to index
    %c0_272 = arith.constant 0 : index
    %496 = vector.load %arg2[%495, %c0_272] : memref<48x32xf32, #tpu.memory_space<vmem>>, vector<1x32xf32>
    %c0_273 = arith.constant 0 : index
    %c0_274 = arith.constant 0 : index
    %497 = vector.load %arg5[%c0_273, %c0_274] : memref<32x10xf32, #tpu.memory_space<vmem>>, vector<32x10xf32>
    %cst_275 = arith.constant dense<0.000000e+00> : vector<1x10xf32>
    %498 = tpu.matmul %496, %497, %cst_275 {dimension_numbers = #tpu.dot_dimension_numbers<[1], [0], [0], [1], [0, 0, 1, 1], [], []>} : vector<1x32xf32>, vector<32x10xf32>, vector<1x10xf32> -> vector<1x10xf32>
    %c0_276 = arith.constant 0 : index
    %c0_277 = arith.constant 0 : index
    %499 = vector.load %arg6[%c0_276, %c0_277] : memref<32x10xf32, #tpu.memory_space<vmem>>, vector<32x10xf32>
    %cst_278 = arith.constant dense<0.000000e+00> : vector<1x10xf32>
    %500 = tpu.matmul %476, %499, %cst_278 {dimension_numbers = #tpu.dot_dimension_numbers<[1], [0], [0], [1], [0, 0, 1, 1], [], []>} : vector<1x32xf32>, vector<32x10xf32>, vector<1x10xf32> -> vector<1x10xf32>
    %501 = arith.addf %498, %500 : vector<1x10xf32>
    %c0_279 = arith.constant 0 : index
    %c0_280 = arith.constant 0 : index
    %502 = vector.load %arg7[%c0_279, %c0_280] : memref<1x10xf32, #tpu.memory_space<vmem>>, vector<1x10xf32>
    %503 = arith.addf %501, %502 : vector<1x10xf32>
    %cst_281 = arith.constant dense<0xFF800000> : vector<1xf32>
    %504 = vector.multi_reduction <maximumf>, %503, %cst_281 [1] : vector<1x10xf32> to vector<1xf32>
    %505 = vector.shape_cast %504 : vector<1xf32> to vector<1x1xf32>
    %506 = vector.broadcast %505 : vector<1x1xf32> to vector<1x10xf32>
    %507 = arith.subf %503, %506 : vector<1x10xf32>
    %508 = math.exp %507 : vector<1x10xf32>
    %cst_282 = arith.constant dense<0.000000e+00> : vector<1xf32>
    %509 = vector.multi_reduction <add>, %508, %cst_282 [1] : vector<1x10xf32> to vector<1xf32>
    %510 = vector.shape_cast %509 : vector<1xf32> to vector<1x1xf32>
    %511 = tpu.reciprocal %510 {approx = true} : vector<1x1xf32> -> vector<1x1xf32>
    %512 = vector.broadcast %511 : vector<1x1xf32> to vector<1x10xf32>
    %513 = arith.mulf %508, %512 : vector<1x10xf32>
    %c0_283 = arith.constant 0 : index
    %c0_284 = arith.constant 0 : index
    %514 = vector.load %arg4[%c0_283, %c0_284] : memref<10x32xf32, #tpu.memory_space<vmem>>, vector<10x32xf32>
    %cst_285 = arith.constant dense<0.000000e+00> : vector<1x32xf32>
    %515 = tpu.matmul %513, %514, %cst_285 {dimension_numbers = #tpu.dot_dimension_numbers<[1], [0], [0], [1], [0, 0, 1, 1], [], []>} : vector<1x10xf32>, vector<10x32xf32>, vector<1x32xf32> -> vector<1x32xf32>
    %c0_286 = arith.constant 0 : index
    %c0_287 = arith.constant 0 : index
    %516 = vector.load %arg8[%c0_286, %c0_287] : memref<32x32xf32, #tpu.memory_space<vmem>>, vector<32x32xf32>
    %cst_288 = arith.constant dense<0.000000e+00> : vector<1x32xf32>
    %517 = tpu.matmul %496, %516, %cst_288 {dimension_numbers = #tpu.dot_dimension_numbers<[1], [0], [0], [1], [0, 0, 1, 1], [], []>} : vector<1x32xf32>, vector<32x32xf32>, vector<1x32xf32> -> vector<1x32xf32>
    %c0_289 = arith.constant 0 : index
    %c0_290 = arith.constant 0 : index
    %518 = vector.load %arg9[%c0_289, %c0_290] : memref<32x32xf32, #tpu.memory_space<vmem>>, vector<32x32xf32>
    %cst_291 = arith.constant dense<0.000000e+00> : vector<1x32xf32>
    %519 = tpu.matmul %515, %518, %cst_291 {dimension_numbers = #tpu.dot_dimension_numbers<[1], [0], [0], [1], [0, 0, 1, 1], [], []>} : vector<1x32xf32>, vector<32x32xf32>, vector<1x32xf32> -> vector<1x32xf32>
    %520 = arith.addf %517, %519 : vector<1x32xf32>
    %c0_292 = arith.constant 0 : index
    %c0_293 = arith.constant 0 : index
    %521 = vector.load %arg10[%c0_292, %c0_293] : memref<1x32xf32, #tpu.memory_space<vmem>>, vector<1x32xf32>
    %522 = arith.addf %520, %521 : vector<1x32xf32>
    %cst_294 = arith.constant 0.000000e+00 : f32
    %523 = vector.broadcast %cst_294 : f32 to vector<1x32xf32>
    %524 = arith.maximumf %522, %523 : vector<1x32xf32>
    %c0_295 = arith.constant 0 : index
    %c0_296 = arith.constant 0 : index
    %525 = vector.load %arg11[%c0_295, %c0_296] : memref<32x96xf32, #tpu.memory_space<vmem>>, vector<32x96xf32>
    %cst_297 = arith.constant dense<0.000000e+00> : vector<1x96xf32>
    %526 = tpu.matmul %524, %525, %cst_297 {dimension_numbers = #tpu.dot_dimension_numbers<[1], [0], [0], [1], [0, 0, 1, 1], [], []>} : vector<1x32xf32>, vector<32x96xf32>, vector<1x96xf32> -> vector<1x96xf32>
    %c0_298 = arith.constant 0 : index
    %c0_299 = arith.constant 0 : index
    %527 = vector.load %arg13[%c0_298, %c0_299] : memref<1x96xf32, #tpu.memory_space<vmem>>, vector<1x96xf32>
    %528 = arith.addf %526, %527 : vector<1x96xf32>
    %c0_300 = arith.constant 0 : index
    %c0_301 = arith.constant 0 : index
    %529 = vector.load %arg12[%c0_300, %c0_301] : memref<32x96xf32, #tpu.memory_space<vmem>>, vector<32x96xf32>
    %cst_302 = arith.constant dense<0.000000e+00> : vector<1x96xf32>
    %530 = tpu.matmul %476, %529, %cst_302 {dimension_numbers = #tpu.dot_dimension_numbers<[1], [0], [0], [1], [0, 0, 1, 1], [], []>} : vector<1x32xf32>, vector<32x96xf32>, vector<1x96xf32> -> vector<1x96xf32>
    %c0_303 = arith.constant 0 : index
    %c0_304 = arith.constant 0 : index
    %531 = vector.load %arg14[%c0_303, %c0_304] : memref<1x96xf32, #tpu.memory_space<vmem>>, vector<1x96xf32>
    %532 = arith.addf %530, %531 : vector<1x96xf32>
    %533 = vector.extract_strided_slice %528 {offsets = [0, 0], sizes = [1, 32], strides = [1, 1]} : vector<1x96xf32> to vector<1x32xf32>
    %534 = vector.extract_strided_slice %532 {offsets = [0, 0], sizes = [1, 32], strides = [1, 1]} : vector<1x96xf32> to vector<1x32xf32>
    %535 = arith.addf %533, %534 : vector<1x32xf32>
    %536 = arith.negf %535 : vector<1x32xf32>
    %537 = math.exp %536 : vector<1x32xf32>
    %cst_305 = arith.constant 1.000000e+00 : f32
    %538 = vector.broadcast %cst_305 : f32 to vector<1x32xf32>
    %539 = arith.addf %538, %537 : vector<1x32xf32>
    %540 = arith.divf %538, %539 : vector<1x32xf32>
    %541 = vector.extract_strided_slice %528 {offsets = [0, 32], sizes = [1, 32], strides = [1, 1]} : vector<1x96xf32> to vector<1x32xf32>
    %542 = vector.extract_strided_slice %532 {offsets = [0, 32], sizes = [1, 32], strides = [1, 1]} : vector<1x96xf32> to vector<1x32xf32>
    %543 = arith.addf %541, %542 : vector<1x32xf32>
    %544 = arith.negf %543 : vector<1x32xf32>
    %545 = math.exp %544 : vector<1x32xf32>
    %cst_306 = arith.constant 1.000000e+00 : f32
    %546 = vector.broadcast %cst_306 : f32 to vector<1x32xf32>
    %547 = arith.addf %546, %545 : vector<1x32xf32>
    %548 = arith.divf %546, %547 : vector<1x32xf32>
    %549 = vector.extract_strided_slice %528 {offsets = [0, 64], sizes = [1, 32], strides = [1, 1]} : vector<1x96xf32> to vector<1x32xf32>
    %550 = vector.extract_strided_slice %532 {offsets = [0, 64], sizes = [1, 32], strides = [1, 1]} : vector<1x96xf32> to vector<1x32xf32>
    %551 = arith.mulf %540, %550 : vector<1x32xf32>
    %552 = arith.addf %549, %551 : vector<1x32xf32>
    %553 = math.tanh %552 : vector<1x32xf32>
    %cst_307 = arith.constant 1.000000e+00 : f32
    %554 = vector.broadcast %cst_307 : f32 to vector<1x32xf32>
    %555 = arith.subf %554, %548 : vector<1x32xf32>
    %556 = arith.mulf %555, %553 : vector<1x32xf32>
    %557 = arith.mulf %548, %476 : vector<1x32xf32>
    %558 = arith.addf %556, %557 : vector<1x32xf32>
    %c0_308 = arith.constant 0 : index
    %c0_309 = arith.constant 0 : index
    %559 = vector.load %arg15[%c0_308, %c0_309] : memref<32x48xf32, #tpu.memory_space<vmem>>, vector<32x48xf32>
    %cst_310 = arith.constant dense<0.000000e+00> : vector<1x48xf32>
    %560 = tpu.matmul %558, %559, %cst_310 {dimension_numbers = #tpu.dot_dimension_numbers<[1], [0], [0], [1], [0, 0, 1, 1], [], []>} : vector<1x32xf32>, vector<32x48xf32>, vector<1x48xf32> -> vector<1x48xf32>
    %c0_311 = arith.constant 0 : index
    %c0_312 = arith.constant 0 : index
    %561 = vector.load %arg16[%c0_311, %c0_312] : memref<1x48xf32, #tpu.memory_space<vmem>>, vector<1x48xf32>
    %562 = arith.addf %560, %561 : vector<1x48xf32>
    %cst_313 = arith.constant dense<0xFF800000> : vector<1xf32>
    %563 = vector.multi_reduction <maximumf>, %562, %cst_313 [1] : vector<1x48xf32> to vector<1xf32>
    %564 = vector.shape_cast %563 : vector<1xf32> to vector<1x1xf32>
    %565 = vector.broadcast %564 : vector<1x1xf32> to vector<1x48xf32>
    %566 = arith.subf %562, %565 : vector<1x48xf32>
    %567 = math.exp %566 : vector<1x48xf32>
    %cst_314 = arith.constant dense<0.000000e+00> : vector<1xf32>
    %568 = vector.multi_reduction <add>, %567, %cst_314 [1] : vector<1x48xf32> to vector<1xf32>
    %569 = vector.shape_cast %568 : vector<1xf32> to vector<1x1xf32>
    %570 = math.log %569 : vector<1x1xf32>
    %571 = arith.addf %570, %564 : vector<1x1xf32>
    %572 = vector.broadcast %571 : vector<1x1xf32> to vector<1x48xf32>
    %573 = arith.subf %562, %572 : vector<1x48xf32>
    %574 = tpu.concatenate %573, %558, %513, %0 in 1 : vector<1x48xf32>, vector<1x32xf32>, vector<1x10xf32>, vector<1x38xf32> -> vector<1x128xf32>
    %c6_315 = arith.constant 6 : index
    %c0_316 = arith.constant 0 : index
    %575 = vector.load %arg17[%c6_315, %c0_316] : memref<8x128xf32, #tpu.memory_space<vmem>>, vector<1x128xf32>
    tpu.vector_store %arg17[%c6_315, %c0_316], %574 {strides = array<i32>} : memref<8x128xf32, #tpu.memory_space<vmem>>, vector<1x128xf32>,
    %c7 = arith.constant 7 : index
    %576 = memref.load %arg1[%c7] : memref<8xi32, #tpu.memory_space<smem>>
    %577 = arith.index_cast %576 : i32 to index
    %c0_317 = arith.constant 0 : index
    %578 = vector.load %arg2[%577, %c0_317] : memref<48x32xf32, #tpu.memory_space<vmem>>, vector<1x32xf32>
    %c0_318 = arith.constant 0 : index
    %c0_319 = arith.constant 0 : index
    %579 = vector.load %arg5[%c0_318, %c0_319] : memref<32x10xf32, #tpu.memory_space<vmem>>, vector<32x10xf32>
    %cst_320 = arith.constant dense<0.000000e+00> : vector<1x10xf32>
    %580 = tpu.matmul %578, %579, %cst_320 {dimension_numbers = #tpu.dot_dimension_numbers<[1], [0], [0], [1], [0, 0, 1, 1], [], []>} : vector<1x32xf32>, vector<32x10xf32>, vector<1x10xf32> -> vector<1x10xf32>
    %c0_321 = arith.constant 0 : index
    %c0_322 = arith.constant 0 : index
    %581 = vector.load %arg6[%c0_321, %c0_322] : memref<32x10xf32, #tpu.memory_space<vmem>>, vector<32x10xf32>
    %cst_323 = arith.constant dense<0.000000e+00> : vector<1x10xf32>
    %582 = tpu.matmul %558, %581, %cst_323 {dimension_numbers = #tpu.dot_dimension_numbers<[1], [0], [0], [1], [0, 0, 1, 1], [], []>} : vector<1x32xf32>, vector<32x10xf32>, vector<1x10xf32> -> vector<1x10xf32>
    %583 = arith.addf %580, %582 : vector<1x10xf32>
    %c0_324 = arith.constant 0 : index
    %c0_325 = arith.constant 0 : index
    %584 = vector.load %arg7[%c0_324, %c0_325] : memref<1x10xf32, #tpu.memory_space<vmem>>, vector<1x10xf32>
    %585 = arith.addf %583, %584 : vector<1x10xf32>
    %cst_326 = arith.constant dense<0xFF800000> : vector<1xf32>
    %586 = vector.multi_reduction <maximumf>, %585, %cst_326 [1] : vector<1x10xf32> to vector<1xf32>
    %587 = vector.shape_cast %586 : vector<1xf32> to vector<1x1xf32>
    %588 = vector.broadcast %587 : vector<1x1xf32> to vector<1x10xf32>
    %589 = arith.subf %585, %588 : vector<1x10xf32>
    %590 = math.exp %589 : vector<1x10xf32>
    %cst_327 = arith.constant dense<0.000000e+00> : vector<1xf32>
    %591 = vector.multi_reduction <add>, %590, %cst_327 [1] : vector<1x10xf32> to vector<1xf32>
    %592 = vector.shape_cast %591 : vector<1xf32> to vector<1x1xf32>
    %593 = tpu.reciprocal %592 {approx = true} : vector<1x1xf32> -> vector<1x1xf32>
    %594 = vector.broadcast %593 : vector<1x1xf32> to vector<1x10xf32>
    %595 = arith.mulf %590, %594 : vector<1x10xf32>
    %c0_328 = arith.constant 0 : index
    %c0_329 = arith.constant 0 : index
    %596 = vector.load %arg4[%c0_328, %c0_329] : memref<10x32xf32, #tpu.memory_space<vmem>>, vector<10x32xf32>
    %cst_330 = arith.constant dense<0.000000e+00> : vector<1x32xf32>
    %597 = tpu.matmul %595, %596, %cst_330 {dimension_numbers = #tpu.dot_dimension_numbers<[1], [0], [0], [1], [0, 0, 1, 1], [], []>} : vector<1x10xf32>, vector<10x32xf32>, vector<1x32xf32> -> vector<1x32xf32>
    %c0_331 = arith.constant 0 : index
    %c0_332 = arith.constant 0 : index
    %598 = vector.load %arg8[%c0_331, %c0_332] : memref<32x32xf32, #tpu.memory_space<vmem>>, vector<32x32xf32>
    %cst_333 = arith.constant dense<0.000000e+00> : vector<1x32xf32>
    %599 = tpu.matmul %578, %598, %cst_333 {dimension_numbers = #tpu.dot_dimension_numbers<[1], [0], [0], [1], [0, 0, 1, 1], [], []>} : vector<1x32xf32>, vector<32x32xf32>, vector<1x32xf32> -> vector<1x32xf32>
    %c0_334 = arith.constant 0 : index
    %c0_335 = arith.constant 0 : index
    %600 = vector.load %arg9[%c0_334, %c0_335] : memref<32x32xf32, #tpu.memory_space<vmem>>, vector<32x32xf32>
    %cst_336 = arith.constant dense<0.000000e+00> : vector<1x32xf32>
    %601 = tpu.matmul %597, %600, %cst_336 {dimension_numbers = #tpu.dot_dimension_numbers<[1], [0], [0], [1], [0, 0, 1, 1], [], []>} : vector<1x32xf32>, vector<32x32xf32>, vector<1x32xf32> -> vector<1x32xf32>
    %602 = arith.addf %599, %601 : vector<1x32xf32>
    %c0_337 = arith.constant 0 : index
    %c0_338 = arith.constant 0 : index
    %603 = vector.load %arg10[%c0_337, %c0_338] : memref<1x32xf32, #tpu.memory_space<vmem>>, vector<1x32xf32>
    %604 = arith.addf %602, %603 : vector<1x32xf32>
    %cst_339 = arith.constant 0.000000e+00 : f32
    %605 = vector.broadcast %cst_339 : f32 to vector<1x32xf32>
    %606 = arith.maximumf %604, %605 : vector<1x32xf32>
    %c0_340 = arith.constant 0 : index
    %c0_341 = arith.constant 0 : index
    %607 = vector.load %arg11[%c0_340, %c0_341] : memref<32x96xf32, #tpu.memory_space<vmem>>, vector<32x96xf32>
    %cst_342 = arith.constant dense<0.000000e+00> : vector<1x96xf32>
    %608 = tpu.matmul %606, %607, %cst_342 {dimension_numbers = #tpu.dot_dimension_numbers<[1], [0], [0], [1], [0, 0, 1, 1], [], []>} : vector<1x32xf32>, vector<32x96xf32>, vector<1x96xf32> -> vector<1x96xf32>
    %c0_343 = arith.constant 0 : index
    %c0_344 = arith.constant 0 : index
    %609 = vector.load %arg13[%c0_343, %c0_344] : memref<1x96xf32, #tpu.memory_space<vmem>>, vector<1x96xf32>
    %610 = arith.addf %608, %609 : vector<1x96xf32>
    %c0_345 = arith.constant 0 : index
    %c0_346 = arith.constant 0 : index
    %611 = vector.load %arg12[%c0_345, %c0_346] : memref<32x96xf32, #tpu.memory_space<vmem>>, vector<32x96xf32>
    %cst_347 = arith.constant dense<0.000000e+00> : vector<1x96xf32>
    %612 = tpu.matmul %558, %611, %cst_347 {dimension_numbers = #tpu.dot_dimension_numbers<[1], [0], [0], [1], [0, 0, 1, 1], [], []>} : vector<1x32xf32>, vector<32x96xf32>, vector<1x96xf32> -> vector<1x96xf32>
    %c0_348 = arith.constant 0 : index
    %c0_349 = arith.constant 0 : index
    %613 = vector.load %arg14[%c0_348, %c0_349] : memref<1x96xf32, #tpu.memory_space<vmem>>, vector<1x96xf32>
    %614 = arith.addf %612, %613 : vector<1x96xf32>
    %615 = vector.extract_strided_slice %610 {offsets = [0, 0], sizes = [1, 32], strides = [1, 1]} : vector<1x96xf32> to vector<1x32xf32>
    %616 = vector.extract_strided_slice %614 {offsets = [0, 0], sizes = [1, 32], strides = [1, 1]} : vector<1x96xf32> to vector<1x32xf32>
    %617 = arith.addf %615, %616 : vector<1x32xf32>
    %618 = arith.negf %617 : vector<1x32xf32>
    %619 = math.exp %618 : vector<1x32xf32>
    %cst_350 = arith.constant 1.000000e+00 : f32
    %620 = vector.broadcast %cst_350 : f32 to vector<1x32xf32>
    %621 = arith.addf %620, %619 : vector<1x32xf32>
    %622 = arith.divf %620, %621 : vector<1x32xf32>
    %623 = vector.extract_strided_slice %610 {offsets = [0, 32], sizes = [1, 32], strides = [1, 1]} : vector<1x96xf32> to vector<1x32xf32>
    %624 = vector.extract_strided_slice %614 {offsets = [0, 32], sizes = [1, 32], strides = [1, 1]} : vector<1x96xf32> to vector<1x32xf32>
    %625 = arith.addf %623, %624 : vector<1x32xf32>
    %626 = arith.negf %625 : vector<1x32xf32>
    %627 = math.exp %626 : vector<1x32xf32>
    %cst_351 = arith.constant 1.000000e+00 : f32
    %628 = vector.broadcast %cst_351 : f32 to vector<1x32xf32>
    %629 = arith.addf %628, %627 : vector<1x32xf32>
    %630 = arith.divf %628, %629 : vector<1x32xf32>
    %631 = vector.extract_strided_slice %610 {offsets = [0, 64], sizes = [1, 32], strides = [1, 1]} : vector<1x96xf32> to vector<1x32xf32>
    %632 = vector.extract_strided_slice %614 {offsets = [0, 64], sizes = [1, 32], strides = [1, 1]} : vector<1x96xf32> to vector<1x32xf32>
    %633 = arith.mulf %622, %632 : vector<1x32xf32>
    %634 = arith.addf %631, %633 : vector<1x32xf32>
    %635 = math.tanh %634 : vector<1x32xf32>
    %cst_352 = arith.constant 1.000000e+00 : f32
    %636 = vector.broadcast %cst_352 : f32 to vector<1x32xf32>
    %637 = arith.subf %636, %630 : vector<1x32xf32>
    %638 = arith.mulf %637, %635 : vector<1x32xf32>
    %639 = arith.mulf %630, %558 : vector<1x32xf32>
    %640 = arith.addf %638, %639 : vector<1x32xf32>
    %c0_353 = arith.constant 0 : index
    %c0_354 = arith.constant 0 : index
    %641 = vector.load %arg15[%c0_353, %c0_354] : memref<32x48xf32, #tpu.memory_space<vmem>>, vector<32x48xf32>
    %cst_355 = arith.constant dense<0.000000e+00> : vector<1x48xf32>
    %642 = tpu.matmul %640, %641, %cst_355 {dimension_numbers = #tpu.dot_dimension_numbers<[1], [0], [0], [1], [0, 0, 1, 1], [], []>} : vector<1x32xf32>, vector<32x48xf32>, vector<1x48xf32> -> vector<1x48xf32>
    %c0_356 = arith.constant 0 : index
    %c0_357 = arith.constant 0 : index
    %643 = vector.load %arg16[%c0_356, %c0_357] : memref<1x48xf32, #tpu.memory_space<vmem>>, vector<1x48xf32>
    %644 = arith.addf %642, %643 : vector<1x48xf32>
    %cst_358 = arith.constant dense<0xFF800000> : vector<1xf32>
    %645 = vector.multi_reduction <maximumf>, %644, %cst_358 [1] : vector<1x48xf32> to vector<1xf32>
    %646 = vector.shape_cast %645 : vector<1xf32> to vector<1x1xf32>
    %647 = vector.broadcast %646 : vector<1x1xf32> to vector<1x48xf32>
    %648 = arith.subf %644, %647 : vector<1x48xf32>
    %649 = math.exp %648 : vector<1x48xf32>
    %cst_359 = arith.constant dense<0.000000e+00> : vector<1xf32>
    %650 = vector.multi_reduction <add>, %649, %cst_359 [1] : vector<1x48xf32> to vector<1xf32>
    %651 = vector.shape_cast %650 : vector<1xf32> to vector<1x1xf32>
    %652 = math.log %651 : vector<1x1xf32>
    %653 = arith.addf %652, %646 : vector<1x1xf32>
    %654 = vector.broadcast %653 : vector<1x1xf32> to vector<1x48xf32>
    %655 = arith.subf %644, %654 : vector<1x48xf32>
    %656 = tpu.concatenate %655, %640, %595, %0 in 1 : vector<1x48xf32>, vector<1x32xf32>, vector<1x10xf32>, vector<1x38xf32> -> vector<1x128xf32>
    %c7_360 = arith.constant 7 : index
    %c0_361 = arith.constant 0 : index
    %657 = vector.load %arg17[%c7_360, %c0_361] : memref<8x128xf32, #tpu.memory_space<vmem>>, vector<1x128xf32>
    tpu.vector_store %arg17[%c7_360, %c0_361], %656 {strides = array<i32>} : memref<8x128xf32, #tpu.memory_space<vmem>>, vector<1x128xf32>,
    return
  }
  func.func @transform_0(%arg0: i32, %arg1: memref<8xi32, #tpu.memory_space<smem>>) -> (i32, i32) {
    %c0_i32 = arith.constant 0 : i32
    %c0_i32_0 = arith.constant 0 : i32
    %c0_i32_1 = arith.constant 0 : i32
    return %c0_i32, %c0_i32_0 : i32, i32
  }
  func.func @transform_1(%arg0: i32, %arg1: memref<8xi32, #tpu.memory_space<smem>>) -> (i32, i32) {
    %c0_i32 = arith.constant 0 : i32
    %c0_i32_0 = arith.constant 0 : i32
    %c0_i32_1 = arith.constant 0 : i32
    return %c0_i32, %c0_i32_0 : i32, i32
  }
  func.func @transform_2(%arg0: i32, %arg1: memref<8xi32, #tpu.memory_space<smem>>) -> (i32, i32) {
    %c0_i32 = arith.constant 0 : i32
    %c0_i32_0 = arith.constant 0 : i32
    %c0_i32_1 = arith.constant 0 : i32
    return %c0_i32, %c0_i32_0 : i32, i32
  }
  func.func @transform_3(%arg0: i32, %arg1: memref<8xi32, #tpu.memory_space<smem>>) -> (i32, i32) {
    %c0_i32 = arith.constant 0 : i32
    %c0_i32_0 = arith.constant 0 : i32
    %c0_i32_1 = arith.constant 0 : i32
    return %c0_i32, %c0_i32_0 : i32, i32
  }
  func.func @transform_4(%arg0: i32, %arg1: memref<8xi32, #tpu.memory_space<smem>>) -> (i32, i32) {
    %c0_i32 = arith.constant 0 : i32
    %c0_i32_0 = arith.constant 0 : i32
    %c0_i32_1 = arith.constant 0 : i32
    return %c0_i32, %c0_i32_0 : i32, i32
  }
  func.func @transform_5(%arg0: i32, %arg1: memref<8xi32, #tpu.memory_space<smem>>) -> (i32, i32) {
    %c0_i32 = arith.constant 0 : i32
    %c0_i32_0 = arith.constant 0 : i32
    %c0_i32_1 = arith.constant 0 : i32
    return %c0_i32, %c0_i32_0 : i32, i32
  }
  func.func @transform_6(%arg0: i32, %arg1: memref<8xi32, #tpu.memory_space<smem>>) -> (i32, i32) {
    %c0_i32 = arith.constant 0 : i32
    %c0_i32_0 = arith.constant 0 : i32
    %c0_i32_1 = arith.constant 0 : i32
    return %c0_i32, %c0_i32_0 : i32, i32
  }
  func.func @transform_7(%arg0: i32, %arg1: memref<8xi32, #tpu.memory_space<smem>>) -> (i32, i32) {
    %c0_i32 = arith.constant 0 : i32
    %c0_i32_0 = arith.constant 0 : i32
    %c0_i32_1 = arith.constant 0 : i32
    return %c0_i32, %c0_i32_0 : i32, i32
  }
  func.func @transform_8(%arg0: i32, %arg1: memref<8xi32, #tpu.memory_space<smem>>) -> (i32, i32) {
    %c0_i32 = arith.constant 0 : i32
    %c0_i32_0 = arith.constant 0 : i32
    %c0_i32_1 = arith.constant 0 : i32
    return %c0_i32, %c0_i32_0 : i32, i32
  }
  func.func @transform_9(%arg0: i32, %arg1: memref<8xi32, #tpu.memory_space<smem>>) -> (i32, i32) {
    %c0_i32 = arith.constant 0 : i32
    %c0_i32_0 = arith.constant 0 : i32
    %c0_i32_1 = arith.constant 0 : i32
    return %c0_i32, %c0_i32_0 : i32, i32
  }
  func.func @transform_10(%arg0: i32, %arg1: memref<8xi32, #tpu.memory_space<smem>>) -> (i32, i32) {
    %c0_i32 = arith.constant 0 : i32
    %c0_i32_0 = arith.constant 0 : i32
    %c0_i32_1 = arith.constant 0 : i32
    return %c0_i32, %c0_i32_0 : i32, i32
  }
  func.func @transform_11(%arg0: i32, %arg1: memref<8xi32, #tpu.memory_space<smem>>) -> (i32, i32) {
    %c0_i32 = arith.constant 0 : i32
    %c0_i32_0 = arith.constant 0 : i32
    %c0_i32_1 = arith.constant 0 : i32
    return %c0_i32, %c0_i32_0 : i32, i32
  }
  func.func @transform_12(%arg0: i32, %arg1: memref<8xi32, #tpu.memory_space<smem>>) -> (i32, i32) {
    %c0_i32 = arith.constant 0 : i32
    %c0_i32_0 = arith.constant 0 : i32
    %c0_i32_1 = arith.constant 0 : i32
    return %c0_i32, %c0_i32_0 : i32, i32
  }
  func.func @transform_13(%arg0: i32, %arg1: memref<8xi32, #tpu.memory_space<smem>>) -> (i32, i32) {
    %c0_i32 = arith.constant 0 : i32
    %c0_i32_0 = arith.constant 0 : i32
    %c0_i32_1 = arith.constant 0 : i32
    return %c0_i32, %c0_i32_0 : i32, i32
  }
  func.func @transform_14(%arg0: i32, %arg1: memref<8xi32, #tpu.memory_space<smem>>) -> (i32, i32) {
    %c0_i32 = arith.constant 0 : i32
    %c0_i32_0 = arith.constant 0 : i32
    %c0_i32_1 = arith.constant 0 : i32
    return %c0_i32, %c0_i32_0 : i32, i32
  }
  func.func @transform_15(%arg0: i32, %arg1: memref<8xi32, #tpu.memory_space<smem>>) -> (i32, i32) {
    %c0_i32 = arith.constant 0 : i32
    %c0_i32_0 = arith.constant 0 : i32
    %c0_i32_1 = arith.constant 0 : i32
    return %c0_i32, %c0_i32_0 : i32, i32
  }
}

</mosaic_0001>

<llo_original>
// kernel: attn_decoder_decode.1
$region0: #{attn_decoder_decode.1}
  #allocation0 [shape = 'u32[]', space=smem, size = 0x4, offset = 0x4, fixed_abs, tag = 'smem constant byte address 0x4 - core index']
  #allocation1 [shape = 'u32[144,128]{1,0:T(1,128)}', space=vmem, size = 0x12000, scoped, tag = 'internal scratch']
  #allocation2 [shape = 's32[1]{0}', space=sflag, size = 0x4, scoped, tag = 'scoped memory for attn_decoder_decode.1']
  #allocation3 [shape = 'u8[512]{0}', space=smem, size = 0x200, scoped, tag = 'prefetched SMEM operand 0']
  %s0 = inlined_call_operand.vmem [shape: s32[8], index: 0, kind: input, shape index: {}]
  %s1 = inlined_call_operand.vmem [shape: f32[48,32], index: 1, kind: input, shape index: {}]
  %s2 = inlined_call_operand.vmem [shape: f32[1,32], index: 2, kind: input, shape index: {}]
  %s3 = inlined_call_operand.hbm [shape: f32[10,32], index: 3, kind: input, shape index: {}]
  %s4 = inlined_call_operand.vmem [shape: f32[32,10], index: 4, kind: input, shape index: {}]
  %s5 = inlined_call_operand.vmem [shape: f32[32,10], index: 5, kind: input, shape index: {}]
  %s6 = inlined_call_operand.vmem [shape: f32[1,10], index: 6, kind: input, shape index: {}]
  %s7 = inlined_call_operand.vmem [shape: f32[32,32], index: 7, kind: input, shape index: {}]
  %s8 = inlined_call_operand.vmem [shape: f32[32,32], index: 8, kind: input, shape index: {}]
  %s9 = inlined_call_operand.hbm [shape: f32[1,32], index: 9, kind: input, shape index: {}]
  %s10 = inlined_call_operand.vmem [shape: f32[32,96], index: 10, kind: input, shape index: {}]
  %s11 = inlined_call_operand.vmem [shape: f32[32,96], index: 11, kind: input, shape index: {}]
  %s12 = inlined_call_operand.hbm [shape: f32[1,96], index: 12, kind: input, shape index: {}]
  %s13 = inlined_call_operand.hbm [shape: f32[1,96], index: 13, kind: input, shape index: {}]
  %s14 = inlined_call_operand.vmem [shape: f32[32,48], index: 14, kind: input, shape index: {}]
  %s15 = inlined_call_operand.vmem [shape: f32[1,48], index: 15, kind: input, shape index: {}]
  %s16 = inlined_call_operand.vmem [shape: f32[8,128], index: 16, kind: output, shape index: {}]
  %s17 = sld [smem:[#allocation0]]
  $region86: #{attn_decoder_decode.1} parent=0
    _
  %s19 = ssub.s32 1, %s17
  %s20 = scalar_select 0, %s19, %s17
  %s21 = sshll.u32 %s0, 4
  %s22 = int_to_ptr.vmem [resolvable:$true] %s21
  %24 = dma.vmem_to_smem %s22, 16, [#allocation3], [#allocation2]
  %25 = dma.done [#allocation2], 16
  %26 = sfence
  $region1: #{attn_decoder_decode.1} parent=0
    #allocation4 [shape = 'u8[8192]{0}', space=vmem, size = 0x2000, scoped, tag = 'input window, operand 3, single buffered']
    #allocation5 [shape = 's32[1]{0}', space=sflag, size = 0x4, scoped, tag = 'scoped memory for attn_decoder_decode.1']
    #allocation6 [shape = 'u8[512]{0}', space=vmem, size = 0x400, scoped, tag = 'input window, operand 9, single buffered']
    #allocation7 [shape = 's32[1]{0}', space=sflag, size = 0x4, scoped, tag = 'scoped memory for attn_decoder_decode.1']
    #allocation8 [shape = 'u8[512]{0}', space=vmem, size = 0x400, scoped, tag = 'input window, operand 12, single buffered']
    #allocation9 [shape = 'u8[512]{0}', space=vmem, size = 0x400, scoped, tag = 'input window, operand 13, single buffered']
    #allocation10 [shape = 's32[1]{0}', space=sflag, size = 0x4, scoped, tag = 'scoped memory for attn_decoder_decode.1']
    %27 = vsyncpa [#allocation5], 0
    %28 = vsyncpa [#allocation7], 0
    %29 = vsyncpa [#allocation10], 0
    // Predicated region
    $region2: #{attn_decoder_decode.1} parent=1 // pred_check
      _
    $region3: #{attn_decoder_decode.1} parent=1 // pred_check_branch
      %31 = sbr.rel (0) target = $region5
    $region4: #{attn_decoder_decode.1} parent=1 // pred_region
      _
    $region5: #{attn_decoder_decode.1} parent=1 // pred_fallthru
      _
    // Predicated region
    $region6: #{attn_decoder_decode.1} parent=1 // pred_check
      _
    $region7: #{attn_decoder_decode.1} parent=1 // pred_check_branch
      %33 = sbr.rel (0) target = $region9
    $region8: #{attn_decoder_decode.1} parent=1 // pred_region
      _
    $region9: #{attn_decoder_decode.1} parent=1 // pred_fallthru
      _
    // Predicated region
    $region10: #{attn_decoder_decode.1} parent=1 // pred_check
      _
    $region11: #{attn_decoder_decode.1} parent=1 // pred_check_branch
      %35 = sbr.rel (0) target = $region13
    $region12: #{attn_decoder_decode.1} parent=1 // pred_region
      %s37 = ssub.s32 256, 256
      %38 = vsyncadd [#allocation5], %s37
      %s39 = sshll.u32 [#allocation4], 4
      %s40 = int_to_ptr.vmem [resolvable:$true] %s39
      %45 = dma.hbm_to_vmem [thread:$0]  %s3, 256, %s40, [#allocation5], 128, 128, 8
    $region13: #{attn_decoder_decode.1} parent=1 // pred_fallthru
      _
    // Predicated region
    $region14: #{attn_decoder_decode.1} parent=1 // pred_check
      _
    $region15: #{attn_decoder_decode.1} parent=1 // pred_check_branch
      %47 = sbr.rel (0) target = $region17
    $region16: #{attn_decoder_decode.1} parent=1 // pred_region
      _
    $region17: #{attn_decoder_decode.1} parent=1 // pred_fallthru
      _
    // Predicated region
    $region18: #{attn_decoder_decode.1} parent=1 // pred_check
      _
    $region19: #{attn_decoder_decode.1} parent=1 // pred_check_branch
      %49 = sbr.rel (0) target = $region21
    $region20: #{attn_decoder_decode.1} parent=1 // pred_region
      _
    $region21: #{attn_decoder_decode.1} parent=1 // pred_fallthru
      _
    // Predicated region
    $region22: #{attn_decoder_decode.1} parent=1 // pred_check
      _
    $region23: #{attn_decoder_decode.1} parent=1 // pred_check_branch
      %51 = sbr.rel (0) target = $region25
    $region24: #{attn_decoder_decode.1} parent=1 // pred_region
      _
    $region25: #{attn_decoder_decode.1} parent=1 // pred_fallthru
      _
    // Predicated region
    $region26: #{attn_decoder_decode.1} parent=1 // pred_check
      _
    $region27: #{attn_decoder_decode.1} parent=1 // pred_check_branch
      %53 = sbr.rel (0) target = $region29
    $region28: #{attn_decoder_decode.1} parent=1 // pred_region
      _
    $region29: #{attn_decoder_decode.1} parent=1 // pred_fallthru
      _
    // Predicated region
    $region30: #{attn_decoder_decode.1} parent=1 // pred_check
      _
    $region31: #{attn_decoder_decode.1} parent=1 // pred_check_branch
      %55 = sbr.rel (0) target = $region33
    $region32: #{attn_decoder_decode.1} parent=1 // pred_region
      _
    $region33: #{attn_decoder_decode.1} parent=1 // pred_fallthru
      _
    // Predicated region
    $region34: #{attn_decoder_decode.1} parent=1 // pred_check
      _
    $region35: #{attn_decoder_decode.1} parent=1 // pred_check_branch
      %57 = sbr.rel (0) target = $region37
    $region36: #{attn_decoder_decode.1} parent=1 // pred_region
      %s59 = ssub.s32 16, 16
      %60 = vsyncadd [#allocation7], %s59
      %s62 = sshll.u32 [#allocation6], 4
      %s63 = int_to_ptr.vmem [resolvable:$true] %s62
      %65 = dma.hbm_to_vmem [thread:$0]  %s9, 16, %s63, [#allocation7]
    $region37: #{attn_decoder_decode.1} parent=1 // pred_fallthru
      _
    // Predicated region
    $region38: #{attn_decoder_decode.1} parent=1 // pred_check
      _
    $region39: #{attn_decoder_decode.1} parent=1 // pred_check_branch
      %67 = sbr.rel (0) target = $region41
    $region40: #{attn_decoder_decode.1} parent=1 // pred_region
      _
    $region41: #{attn_decoder_decode.1} parent=1 // pred_fallthru
      _
    // Predicated region
    $region42: #{attn_decoder_decode.1} parent=1 // pred_check
      _
    $region43: #{attn_decoder_decode.1} parent=1 // pred_check_branch
      %69 = sbr.rel (0) target = $region45
    $region44: #{attn_decoder_decode.1} parent=1 // pred_region
      _
    $region45: #{attn_decoder_decode.1} parent=1 // pred_fallthru
      _
    // Predicated region
    $region46: #{attn_decoder_decode.1} parent=1 // pred_check
      _
    $region47: #{attn_decoder_decode.1} parent=1 // pred_check_branch
      %71 = sbr.rel (0) target = $region49
    $region48: #{attn_decoder_decode.1} parent=1 // pred_region
      %s73 = ssub.s32 16, 16
      %74 = vsyncadd [#allocation7], %s73
      %s76 = sshll.u32 [#allocation8], 4
      %s77 = int_to_ptr.vmem [resolvable:$true] %s76
      %79 = dma.hbm_to_vmem [thread:$0]  %s12, 16, %s77, [#allocation7]
    $region49: #{attn_decoder_decode.1} parent=1 // pred_fallthru
      _
    // Predicated region
    $region50: #{attn_decoder_decode.1} parent=1 // pred_check
      _
    $region51: #{attn_decoder_decode.1} parent=1 // pred_check_branch
      %81 = sbr.rel (0) target = $region53
    $region52: #{attn_decoder_decode.1} parent=1 // pred_region
      %s83 = ssub.s32 16, 16
      %84 = vsyncadd [#allocation10], %s83
      %s86 = sshll.u32 [#allocation9], 4
      %s87 = int_to_ptr.vmem [resolvable:$true] %s86
      %89 = dma.hbm_to_vmem [thread:$0]  %s13, 16, %s87, [#allocation10]
    $region53: #{attn_decoder_decode.1} parent=1 // pred_fallthru
      _
    // Predicated region
    $region54: #{attn_decoder_decode.1} parent=1 // pred_check
      _
    $region55: #{attn_decoder_decode.1} parent=1 // pred_check_branch
      %91 = sbr.rel (0) target = $region57
    $region56: #{attn_decoder_decode.1} parent=1 // pred_region
      _
    $region57: #{attn_decoder_decode.1} parent=1 // pred_fallthru
      _
    // Predicated region
    $region58: #{attn_decoder_decode.1} parent=1 // pred_check
      _
    $region59: #{attn_decoder_decode.1} parent=1 // pred_check_branch
      %93 = sbr.rel (0) target = $region61
    $region60: #{attn_decoder_decode.1} parent=1 // pred_region
      _
    $region61: #{attn_decoder_decode.1} parent=1 // pred_fallthru
      _
    // Predicated region
    $region62: #{attn_decoder_decode.1} parent=1 // pred_check
      _
    $region63: #{attn_decoder_decode.1} parent=1 // pred_check_branch
      %95 = sbr.rel (0) target = $region65
    $region64: #{attn_decoder_decode.1} parent=1 // pred_region
      %96 = dma.done [#allocation5], 256
    $region65: #{attn_decoder_decode.1} parent=1 // pred_fallthru
      _
    // Predicated region
    $region66: #{attn_decoder_decode.1} parent=1 // pred_check
      _
    $region67: #{attn_decoder_decode.1} parent=1 // pred_check_branch
      %98 = sbr.rel (0) target = $region69
    $region68: #{attn_decoder_decode.1} parent=1 // pred_region
      %99 = dma.done [#allocation7], 16
    $region69: #{attn_decoder_decode.1} parent=1 // pred_fallthru
      _
    // Predicated region
    $region70: #{attn_decoder_decode.1} parent=1 // pred_check
      _
    $region71: #{attn_decoder_decode.1} parent=1 // pred_check_branch
      %101 = sbr.rel (0) target = $region73
    $region72: #{attn_decoder_decode.1} parent=1 // pred_region
      %102 = dma.done [#allocation7], 16
    $region73: #{attn_decoder_decode.1} parent=1 // pred_fallthru
      _
    // Predicated region
    $region74: #{attn_decoder_decode.1} parent=1 // pred_check
      _
    $region75: #{attn_decoder_decode.1} parent=1 // pred_check_branch
      %104 = sbr.rel (0) target = $region77
    $region76: #{attn_decoder_decode.1} parent=1 // pred_region
      %105 = dma.done [#allocation10], 16
    $region77: #{attn_decoder_decode.1} parent=1 // pred_fallthru
      _
    %v106 = vld [vmem:[%s2] sm:$0x1]
    %s107 = sld [smem:[#allocation3]]
    %s108 = scalar_lea.vmem %s1, %s107
    %v109 = vld [vmem:[%s108] sm:$0x1]
    %v110 = vld [vmem:[%s4] sm:$0xff]
    %v111 = vld [vmem:[%s4 + $0x8] sm:$0xff]
    %v112 = vld [vmem:[%s4 + $0x10] sm:$0xff]
    %v113 = vld [vmem:[%s4 + $0x18] sm:$0xff]
    %v114 = vld [vmem:[%s5] sm:$0xff]
    %v115 = vld [vmem:[%s5 + $0x8] sm:$0xff]
    %v116 = vld [vmem:[%s5 + $0x10] sm:$0xff]
    %v117 = vld [vmem:[%s5 + $0x18] sm:$0xff]
    %vm118 = vcmask 261120
    %v120 = vsel %vm118, %v106, 0
    %122 = vmatprep.subr.mxu0 0.0
    %123 = vmatpush1.msra.mxu0 0.0
    %124 = vmatprep.subr.mxu0 0.0
    %125 = vmatpush1.msra.mxu0 0.0
    %126 = vmatprep.subr.mxu0 0.0
    %127 = vmatpush1.msra.mxu0 0.0
    %128 = vmatprep.subr.mxu0 0.0
    %129 = vmatpush1.msra.mxu0 0.0
    %130 = vmatprep.subr.mxu0 0.0
    %131 = vmatpush1.msra.mxu0 0.0
    %132 = vmatprep.subr.mxu0 0.0
    %133 = vmatpush1.msra.mxu0 0.0
    %134 = vmatprep.subr.mxu0 0.0
    %135 = vmatpush1.msra.mxu0 0.0
    %136 = vmatprep.subr.mxu0 0.0
    %137 = vmatpush1.msra.mxu0 0.0
    %138 = vmatprep.subr.mxu0 0.0
    %139 = vmatpush1.msra.mxu0 0.0
    %140 = vmatprep.subr.mxu0 0.0
    %141 = vmatpush1.msra.mxu0 0.0
    %142 = vmatprep.subr.mxu0 0.0
    %143 = vmatpush1.msra.mxu0 0.0
    %144 = vmatprep.subr.mxu0 0.0
    %145 = vmatpush1.msra.mxu0 0.0
    %146 = vmatprep.subr.mxu0 0.0
    %147 = vmatpush1.msra.mxu0 %v117
    %148 = vmatprep.subr.mxu0 0.0
    %149 = vmatpush1.msra.mxu0 %v116
    %150 = vmatprep.subr.mxu0 0.0
    %151 = vmatpush1.msra.mxu0 %v115
    %152 = vmatprep.subr.mxu0 0.0
    %153 = vmatpush1.msra.mxu0 %v114
    %154 = vmatprep.subr.mxu0 0.0
    %155 = vmatpush2.msra.mxu0 0.0
    %156 = vmatprep.subr.mxu0 0.0
    %157 = vmatpush2.msra.mxu0 0.0
    %158 = vmatprep.subr.mxu0 0.0
    %159 = vmatpush2.msra.mxu0 0.0
    %160 = vmatprep.subr.mxu0 0.0
    %161 = vmatpush2.msra.mxu0 0.0
    %162 = vmatprep.subr.mxu0 0.0
    %163 = vmatpush2.msra.mxu0 0.0
    %164 = vmatprep.subr.mxu0 0.0
    %165 = vmatpush2.msra.mxu0 0.0
    %166 = vmatprep.subr.mxu0 0.0
    %167 = vmatpush2.msra.mxu0 0.0
    %168 = vmatprep.subr.mxu0 0.0
    %169 = vmatpush2.msra.mxu0 0.0
    %170 = vmatprep.subr.mxu0 0.0
    %171 = vmatpush2.msra.mxu0 0.0
    %172 = vmatprep.subr.mxu0 0.0
    %173 = vmatpush2.msra.mxu0 0.0
    %174 = vmatprep.subr.mxu0 0.0
    %175 = vmatpush2.msra.mxu0 0.0
    %176 = vmatprep.subr.mxu0 0.0
    %177 = vmatpush2.msra.mxu0 0.0
    %178 = vmatprep.subr.mxu0 0.0
    %179 = vmatpush2.msra.mxu0 0.0
    %180 = vmatprep.subr.mxu0 0.0
    %181 = vmatpush2.msra.mxu0 0.0
    %182 = vmatprep.subr.mxu0 0.0
    %183 = vmatpush2.msra.mxu0 0.0
    %184 = vmatprep.subr.mxu0 0.0
    %185 = vmatpush2.msra.mxu0 0.0
    %186 = vmatprep.mubr.f32.mxu0 0.0
    %187 = vmatmul.mubr.f32.gmra.mxu0 %v120
    %v188 = vpop.f32.mrf.mxu0
    %v189 = vadd.f32 0.0, %v188
    %v190 = vpop.f32.mrf.mxu0
    %191 = vdwg.mxu0
    %v193 = vsel %vm118, %v109, 0
    %195 = vmatprep.subr.mxu0 0.0
    %196 = vmatpush1.msra.mxu0 0.0
    %197 = vmatprep.subr.mxu0 0.0
    %198 = vmatpush1.msra.mxu0 0.0
    %199 = vmatprep.subr.mxu0 0.0
    %200 = vmatpush1.msra.mxu0 0.0
    %201 = vmatprep.subr.mxu0 0.0
    %202 = vmatpush1.msra.mxu0 0.0
    %203 = vmatprep.subr.mxu0 0.0
    %204 = vmatpush1.msra.mxu0 0.0
    %205 = vmatprep.subr.mxu0 0.0
    %206 = vmatpush1.msra.mxu0 0.0
    %207 = vmatprep.subr.mxu0 0.0
    %208 = vmatpush1.msra.mxu0 0.0
    %209 = vmatprep.subr.mxu0 0.0
    %210 = vmatpush1.msra.mxu0 0.0
    %211 = vmatprep.subr.mxu0 0.0
    %212 = vmatpush1.msra.mxu0 0.0
    %213 = vmatprep.subr.mxu0 0.0
    %214 = vmatpush1.msra.mxu0 0.0
    %215 = vmatprep.subr.mxu0 0.0
    %216 = vmatpush1.msra.mxu0 0.0
    %217 = vmatprep.subr.mxu0 0.0
    %218 = vmatpush1.msra.mxu0 0.0
    %219 = vmatprep.subr.mxu0 0.0
    %220 = vmatpush1.msra.mxu0 %v113
    %221 = vmatprep.subr.mxu0 0.0
    %222 = vmatpush1.msra.mxu0 %v112
    %223 = vmatprep.subr.mxu0 0.0
    %224 = vmatpush1.msra.mxu0 %v111
    %225 = vmatprep.subr.mxu0 0.0
    %226 = vmatpush1.msra.mxu0 %v110
    %227 = vmatprep.subr.mxu0 0.0
    %228 = vmatpush2.msra.mxu0 0.0
    %229 = vmatprep.subr.mxu0 0.0
    %230 = vmatpush2.msra.mxu0 0.0
    %231 = vmatprep.subr.mxu0 0.0
    %232 = vmatpush2.msra.mxu0 0.0
    %233 = vmatprep.subr.mxu0 0.0
    %234 = vmatpush2.msra.mxu0 0.0
    %235 = vmatprep.subr.mxu0 0.0
    %236 = vmatpush2.msra.mxu0 0.0
    %237 = vmatprep.subr.mxu0 0.0
    %238 = vmatpush2.msra.mxu0 0.0
    %239 = vmatprep.subr.mxu0 0.0
    %240 = vmatpush2.msra.mxu0 0.0
    %241 = vmatprep.subr.mxu0 0.0
    %242 = vmatpush2.msra.mxu0 0.0
    %243 = vmatprep.subr.mxu0 0.0
    %244 = vmatpush2.msra.mxu0 0.0
    %245 = vmatprep.subr.mxu0 0.0
    %246 = vmatpush2.msra.mxu0 0.0
    %247 = vmatprep.subr.mxu0 0.0
    %248 = vmatpush2.msra.mxu0 0.0
    %249 = vmatprep.subr.mxu0 0.0
    %250 = vmatpush2.msra.mxu0 0.0
    %251 = vmatprep.subr.mxu0 0.0
    %252 = vmatpush2.msra.mxu0 0.0
    %253 = vmatprep.subr.mxu0 0.0
    %254 = vmatpush2.msra.mxu0 0.0
    %255 = vmatprep.subr.mxu0 0.0
    %256 = vmatpush2.msra.mxu0 0.0
    %257 = vmatprep.subr.mxu0 0.0
    %258 = vmatpush2.msra.mxu0 0.0
    %259 = vmatprep.mubr.f32.mxu0 0.0
    %260 = vmatmul.mubr.f32.gmra.mxu0 %v193
    %v261 = vpop.f32.mrf.mxu0
    %v262 = vadd.f32 %v189, %v261
    %v263 = vpop.f32.mrf.mxu0
    %264 = vdwg.mxu0
    %v265 = vld [vmem:[%s6] sm:$0x1]
    %v266 = vadd.f32 %v262, %v265
    %vm267 = vcmask 73728
    %v268 = vsel %vm267, %v266, -inf
    %269 = vmax.xlane.f32.xlu0 %v268
    %v270 = vpop.xlane.xlu0 %269
    %v271 = vsub.f32 %v266, %v270
    %v272 = vmul.f32 %v271, 1.442695
    %v273 = vpow.pop %v272
    %v274 = vsel %vm267, %v273, 0.0
    %275 = vadd.xlane.f32.xlu0 %v274
    %v276 = vpop.xlane.xlu0 %275
    %v277 = vrcp.pop %v276
    %v278 = vmul.f32 %v273, %v277
    %v279 = vld [vmem:[#allocation4] sm:$0xff]
    %v280 = vld [vmem:[#allocation4 + $0x8] sm:$0x3]
    %vm281 = vcmask 80896
    %v283 = vsel %vm281, %v278, 0
    %vm285 = vcmask 1041408
    %v287 = vsel %vm285, %v280, 0
    %289 = vmatprep.subr.mxu0 0.0
    %290 = vmatpush1.msra.mxu0 0.0
    %291 = vmatprep.subr.mxu0 0.0
    %292 = vmatpush1.msra.mxu0 0.0
    %293 = vmatprep.subr.mxu0 0.0
    %294 = vmatpush1.msra.mxu0 0.0
    %295 = vmatprep.subr.mxu0 0.0
    %296 = vmatpush1.msra.mxu0 0.0
    %297 = vmatprep.subr.mxu0 0.0
    %298 = vmatpush1.msra.mxu0 0.0
    %299 = vmatprep.subr.mxu0 0.0
    %300 = vmatpush1.msra.mxu0 0.0
    %301 = vmatprep.subr.mxu0 0.0
    %302 = vmatpush1.msra.mxu0 0.0
    %303 = vmatprep.subr.mxu0 0.0
    %304 = vmatpush1.msra.mxu0 0.0
    %305 = vmatprep.subr.mxu0 0.0
    %306 = vmatpush1.msra.mxu0 0.0
    %307 = vmatprep.subr.mxu0 0.0
    %308 = vmatpush1.msra.mxu0 0.0
    %309 = vmatprep.subr.mxu0 0.0
    %310 = vmatpush1.msra.mxu0 0.0
    %311 = vmatprep.subr.mxu0 0.0
    %312 = vmatpush1.msra.mxu0 0.0
    %313 = vmatprep.subr.mxu0 0.0
    %314 = vmatpush1.msra.mxu0 0.0
    %315 = vmatprep.subr.mxu0 0.0
    %316 = vmatpush1.msra.mxu0 0.0
    %317 = vmatprep.subr.mxu0 0.0
    %318 = vmatpush1.msra.mxu0 %v287
    %319 = vmatprep.subr.mxu0 0.0
    %320 = vmatpush1.msra.mxu0 %v279
    %321 = vmatprep.subr.mxu0 0.0
    %322 = vmatpush2.msra.mxu0 0.0
    %323 = vmatprep.subr.mxu0 0.0
    %324 = vmatpush2.msra.mxu0 0.0
    %325 = vmatprep.subr.mxu0 0.0
    %326 = vmatpush2.msra.mxu0 0.0
    %327 = vmatprep.subr.mxu0 0.0
    %328 = vmatpush2.msra.mxu0 0.0
    %329 = vmatprep.subr.mxu0 0.0
    %330 = vmatpush2.msra.mxu0 0.0
    %331 = vmatprep.subr.mxu0 0.0
    %332 = vmatpush2.msra.mxu0 0.0
    %333 = vmatprep.subr.mxu0 0.0
    %334 = vmatpush2.msra.mxu0 0.0
    %335 = vmatprep.subr.mxu0 0.0
    %336 = vmatpush2.msra.mxu0 0.0
    %337 = vmatprep.subr.mxu0 0.0
    %338 = vmatpush2.msra.mxu0 0.0
    %339 = vmatprep.subr.mxu0 0.0
    %340 = vmatpush2.msra.mxu0 0.0
    %341 = vmatprep.subr.mxu0 0.0
    %342 = vmatpush2.msra.mxu0 0.0
    %343 = vmatprep.subr.mxu0 0.0
    %344 = vmatpush2.msra.mxu0 0.0
    %345 = vmatprep.subr.mxu0 0.0
    %346 = vmatpush2.msra.mxu0 0.0
    %347 = vmatprep.subr.mxu0 0.0
    %348 = vmatpush2.msra.mxu0 0.0
    %349 = vmatprep.subr.mxu0 0.0
    %350 = vmatpush2.msra.mxu0 0.0
    %351 = vmatprep.subr.mxu0 0.0
    %352 = vmatpush2.msra.mxu0 0.0
    %353 = vmatprep.mubr.f32.mxu0 0.0
    %354 = vmatmul.mubr.f32.gmra.mxu0 %v283
    %v355 = vpop.f32.mrf.mxu0
    %v356 = vadd.f32 0.0, %v355
    %v357 = vpop.f32.mrf.mxu0
    %358 = vdwg.mxu0
    %v359 = vld [vmem:[%s7] sm:$0xff]
    %v360 = vld [vmem:[%s7 + $0x8] sm:$0xff]
    %v361 = vld [vmem:[%s7 + $0x10] sm:$0xff]
    %v362 = vld [vmem:[%s7 + $0x18] sm:$0xff]
    %v363 = vld [vmem:[%s8] sm:$0xff]
    %v364 = vld [vmem:[%s8 + $0x8] sm:$0xff]
    %v365 = vld [vmem:[%s8 + $0x10] sm:$0xff]
    %v366 = vld [vmem:[%s8 + $0x18] sm:$0xff]
    %v368 = vsel %vm118, %v356, 0
    %370 = vmatprep.subr.mxu0 0.0
    %371 = vmatpush1.msra.mxu0 0.0
    %372 = vmatprep.subr.mxu0 0.0
    %373 = vmatpush1.msra.mxu0 0.0
    %374 = vmatprep.subr.mxu0 0.0
    %375 = vmatpush1.msra.mxu0 0.0
    %376 = vmatprep.subr.mxu0 0.0
    %377 = vmatpush1.msra.mxu0 0.0
    %378 = vmatprep.subr.mxu0 0.0
    %379 = vmatpush1.msra.mxu0 0.0
    %380 = vmatprep.subr.mxu0 0.0
    %381 = vmatpush1.msra.mxu0 0.0
    %382 = vmatprep.subr.mxu0 0.0
    %383 = vmatpush1.msra.mxu0 0.0
    %384 = vmatprep.subr.mxu0 0.0
    %385 = vmatpush1.msra.mxu0 0.0
    %386 = vmatprep.subr.mxu0 0.0
    %387 = vmatpush1.msra.mxu0 0.0
    %388 = vmatprep.subr.mxu0 0.0
    %389 = vmatpush1.msra.mxu0 0.0
    %390 = vmatprep.subr.mxu0 0.0
    %391 = vmatpush1.msra.mxu0 0.0
    %392 = vmatprep.subr.mxu0 0.0
    %393 = vmatpush1.msra.mxu0 0.0
    %394 = vmatprep.subr.mxu0 0.0
    %395 = vmatpush1.msra.mxu0 %v366
    %396 = vmatprep.subr.mxu0 0.0
    %397 = vmatpush1.msra.mxu0 %v365
    %398 = vmatprep.subr.mxu0 0.0
    %399 = vmatpush1.msra.mxu0 %v364
    %400 = vmatprep.subr.mxu0 0.0
    %401 = vmatpush1.msra.mxu0 %v363
    %402 = vmatprep.subr.mxu0 0.0
    %403 = vmatpush2.msra.mxu0 0.0
    %404 = vmatprep.subr.mxu0 0.0
    %405 = vmatpush2.msra.mxu0 0.0
    %406 = vmatprep.subr.mxu0 0.0
    %407 = vmatpush2.msra.mxu0 0.0
    %408 = vmatprep.subr.mxu0 0.0
    %409 = vmatpush2.msra.mxu0 0.0
    %410 = vmatprep.subr.mxu0 0.0
    %411 = vmatpush2.msra.mxu0 0.0
    %412 = vmatprep.subr.mxu0 0.0
    %413 = vmatpush2.msra.mxu0 0.0
    %414 = vmatprep.subr.mxu0 0.0
    %415 = vmatpush2.msra.mxu0 0.0
    %416 = vmatprep.subr.mxu0 0.0
    %417 = vmatpush2.msra.mxu0 0.0
    %418 = vmatprep.subr.mxu0 0.0
    %419 = vmatpush2.msra.mxu0 0.0
    %420 = vmatprep.subr.mxu0 0.0
    %421 = vmatpush2.msra.mxu0 0.0
    %422 = vmatprep.subr.mxu0 0.0
    %423 = vmatpush2.msra.mxu0 0.0
    %424 = vmatprep.subr.mxu0 0.0
    %425 = vmatpush2.msra.mxu0 0.0
    %426 = vmatprep.subr.mxu0 0.0
    %427 = vmatpush2.msra.mxu0 0.0
    %428 = vmatprep.subr.mxu0 0.0
    %429 = vmatpush2.msra.mxu0 0.0
    %430 = vmatprep.subr.mxu0 0.0
    %431 = vmatpush2.msra.mxu0 0.0
    %432 = vmatprep.subr.mxu0 0.0
    %433 = vmatpush2.msra.mxu0 0.0
    %434 = vmatprep.mubr.f32.mxu0 0.0
    %435 = vmatmul.mubr.f32.gmra.mxu0 %v368
    %v436 = vpop.f32.mrf.mxu0
    %v437 = vadd.f32 0.0, %v436
    %v438 = vpop.f32.mrf.mxu0
    %439 = vdwg.mxu0
    %440 = vmatprep.subr.mxu0 0.0
    %441 = vmatpush1.msra.mxu0 0.0
    %442 = vmatprep.subr.mxu0 0.0
    %443 = vmatpush1.msra.mxu0 0.0
    %444 = vmatprep.subr.mxu0 0.0
    %445 = vmatpush1.msra.mxu0 0.0
    %446 = vmatprep.subr.mxu0 0.0
    %447 = vmatpush1.msra.mxu0 0.0
    %448 = vmatprep.subr.mxu0 0.0
    %449 = vmatpush1.msra.mxu0 0.0
    %450 = vmatprep.subr.mxu0 0.0
    %451 = vmatpush1.msra.mxu0 0.0
    %452 = vmatprep.subr.mxu0 0.0
    %453 = vmatpush1.msra.mxu0 0.0
    %454 = vmatprep.subr.mxu0 0.0
    %455 = vmatpush1.msra.mxu0 0.0
    %456 = vmatprep.subr.mxu0 0.0
    %457 = vmatpush1.msra.mxu0 0.0
    %458 = vmatprep.subr.mxu0 0.0
    %459 = vmatpush1.msra.mxu0 0.0
    %460 = vmatprep.subr.mxu0 0.0
    %461 = vmatpush1.msra.mxu0 0.0
    %462 = vmatprep.subr.mxu0 0.0
    %463 = vmatpush1.msra.mxu0 0.0
    %464 = vmatprep.subr.mxu0 0.0
    %465 = vmatpush1.msra.mxu0 %v362
    %466 = vmatprep.subr.mxu0 0.0
    %467 = vmatpush1.msra.mxu0 %v361
    %468 = vmatprep.subr.mxu0 0.0
    %469 = vmatpush1.msra.mxu0 %v360
    %470 = vmatprep.subr.mxu0 0.0
    %471 = vmatpush1.msra.mxu0 %v359
    %472 = vmatprep.subr.mxu0 0.0
    %473 = vmatpush2.msra.mxu0 0.0
    %474 = vmatprep.subr.mxu0 0.0
    %475 = vmatpush2.msra.mxu0 0.0
    %476 = vmatprep.subr.mxu0 0.0
    %477 = vmatpush2.msra.mxu0 0.0
    %478 = vmatprep.subr.mxu0 0.0
    %479 = vmatpush2.msra.mxu0 0.0
    %480 = vmatprep.subr.mxu0 0.0
    %481 = vmatpush2.msra.mxu0 0.0
    %482 = vmatprep.subr.mxu0 0.0
    %483 = vmatpush2.msra.mxu0 0.0
    %484 = vmatprep.subr.mxu0 0.0
    %485 = vmatpush2.msra.mxu0 0.0
    %486 = vmatprep.subr.mxu0 0.0
    %487 = vmatpush2.msra.mxu0 0.0
    %488 = vmatprep.subr.mxu0 0.0
    %489 = vmatpush2.msra.mxu0 0.0
    %490 = vmatprep.subr.mxu0 0.0
    %491 = vmatpush2.msra.mxu0 0.0
    %492 = vmatprep.subr.mxu0 0.0
    %493 = vmatpush2.msra.mxu0 0.0
    %494 = vmatprep.subr.mxu0 0.0
    %495 = vmatpush2.msra.mxu0 0.0
    %496 = vmatprep.subr.mxu0 0.0
    %497 = vmatpush2.msra.mxu0 0.0
    %498 = vmatprep.subr.mxu0 0.0
    %499 = vmatpush2.msra.mxu0 0.0
    %500 = vmatprep.subr.mxu0 0.0
    %501 = vmatpush2.msra.mxu0 0.0
    %502 = vmatprep.subr.mxu0 0.0
    %503 = vmatpush2.msra.mxu0 0.0
    %504 = vmatprep.mubr.f32.mxu0 0.0
    %505 = vmatmul.mubr.f32.gmra.mxu0 %v193
    %v506 = vpop.f32.mrf.mxu0
    %v507 = vadd.f32 %v437, %v506
    %v508 = vpop.f32.mrf.mxu0
    %509 = vdwg.mxu0
    %v510 = vld [vmem:[#allocation6] sm:$0x1]
    %v511 = vadd.f32 %v507, %v510
    %v512 = vmax.f32 %v511, 0.0
    %v513 = vld [vmem:[%s10] sm:$0xff]
    %v514 = vld [vmem:[%s10 + $0x8] sm:$0xff]
    %v515 = vld [vmem:[%s10 + $0x10] sm:$0xff]
    %v516 = vld [vmem:[%s10 + $0x18] sm:$0xff]
    %v517 = vld [vmem:[#allocation8] sm:$0x1]
    %v519 = vsel %vm118, %v512, 0
    %521 = vmatprep.subr.mxu0 0.0
    %522 = vmatpush1.msra.mxu0 0.0
    %523 = vmatprep.subr.mxu0 0.0
    %524 = vmatpush1.msra.mxu0 0.0
    %525 = vmatprep.subr.mxu0 0.0
    %526 = vmatpush1.msra.mxu0 0.0
    %527 = vmatprep.subr.mxu0 0.0
    %528 = vmatpush1.msra.mxu0 0.0
    %529 = vmatprep.subr.mxu0 0.0
    %530 = vmatpush1.msra.mxu0 0.0
    %531 = vmatprep.subr.mxu0 0.0
    %532 = vmatpush1.msra.mxu0 0.0
    %533 = vmatprep.subr.mxu0 0.0
    %534 = vmatpush1.msra.mxu0 0.0
    %535 = vmatprep.subr.mxu0 0.0
    %536 = vmatpush1.msra.mxu0 0.0
    %537 = vmatprep.subr.mxu0 0.0
    %538 = vmatpush1.msra.mxu0 0.0
    %539 = vmatprep.subr.mxu0 0.0
    %540 = vmatpush1.msra.mxu0 0.0
    %541 = vmatprep.subr.mxu0 0.0
    %542 = vmatpush1.msra.mxu0 0.0
    %543 = vmatprep.subr.mxu0 0.0
    %544 = vmatpush1.msra.mxu0 0.0
    %545 = vmatprep.subr.mxu0 0.0
    %546 = vmatpush1.msra.mxu0 %v516
    %547 = vmatprep.subr.mxu0 0.0
    %548 = vmatpush1.msra.mxu0 %v515
    %549 = vmatprep.subr.mxu0 0.0
    %550 = vmatpush1.msra.mxu0 %v514
    %551 = vmatprep.subr.mxu0 0.0
    %552 = vmatpush1.msra.mxu0 %v513
    %553 = vmatprep.subr.mxu0 0.0
    %554 = vmatpush2.msra.mxu0 0.0
    %555 = vmatprep.subr.mxu0 0.0
    %556 = vmatpush2.msra.mxu0 0.0
    %557 = vmatprep.subr.mxu0 0.0
    %558 = vmatpush2.msra.mxu0 0.0
    %559 = vmatprep.subr.mxu0 0.0
    %560 = vmatpush2.msra.mxu0 0.0
    %561 = vmatprep.subr.mxu0 0.0
    %562 = vmatpush2.msra.mxu0 0.0
    %563 = vmatprep.subr.mxu0 0.0
    %564 = vmatpush2.msra.mxu0 0.0
    %565 = vmatprep.subr.mxu0 0.0
    %566 = vmatpush2.msra.mxu0 0.0
    %567 = vmatprep.subr.mxu0 0.0
    %568 = vmatpush2.msra.mxu0 0.0
    %569 = vmatprep.subr.mxu0 0.0
    %570 = vmatpush2.msra.mxu0 0.0
    %571 = vmatprep.subr.mxu0 0.0
    %572 = vmatpush2.msra.mxu0 0.0
    %573 = vmatprep.subr.mxu0 0.0
    %574 = vmatpush2.msra.mxu0 0.0
    %575 = vmatprep.subr.mxu0 0.0
    %576 = vmatpush2.msra.mxu0 0.0
    %577 = vmatprep.subr.mxu0 0.0
    %578 = vmatpush2.msra.mxu0 0.0
    %579 = vmatprep.subr.mxu0 0.0
    %580 = vmatpush2.msra.mxu0 0.0
    %581 = vmatprep.subr.mxu0 0.0
    %582 = vmatpush2.msra.mxu0 0.0
    %583 = vmatprep.subr.mxu0 0.0
    %584 = vmatpush2.msra.mxu0 0.0
    %585 = vmatprep.mubr.f32.mxu0 0.0
    %586 = vmatmul.mubr.f32.gmra.mxu0 %v519
    %v587 = vpop.f32.mrf.mxu0
    %v588 = vadd.f32 %v517, %v587
    %v589 = vpop.f32.mrf.mxu0
    %590 = vdwg.mxu0
    %v591 = vld [vmem:[%s11] sm:$0xff]
    %v592 = vld [vmem:[%s11 + $0x8] sm:$0xff]
    %v593 = vld [vmem:[%s11 + $0x10] sm:$0xff]
    %v594 = vld [vmem:[%s11 + $0x18] sm:$0xff]
    %v595 = vld [vmem:[#allocation9] sm:$0x1]
    %596 = vmatprep.subr.mxu0 0.0
    %597 = vmatpush1.msra.mxu0 0.0
    %598 = vmatprep.subr.mxu0 0.0
    %599 = vmatpush1.msra.mxu0 0.0
    %600 = vmatprep.subr.mxu0 0.0
    %601 = vmatpush1.msra.mxu0 0.0
    %602 = vmatprep.subr.mxu0 0.0
    %603 = vmatpush1.msra.mxu0 0.0
    %604 = vmatprep.subr.mxu0 0.0
    %605 = vmatpush1.msra.mxu0 0.0
    %606 = vmatprep.subr.mxu0 0.0
    %607 = vmatpush1.msra.mxu0 0.0
    %608 = vmatprep.subr.mxu0 0.0
    %609 = vmatpush1.msra.mxu0 0.0
    %610 = vmatprep.subr.mxu0 0.0
    %611 = vmatpush1.msra.mxu0 0.0
    %612 = vmatprep.subr.mxu0 0.0
    %613 = vmatpush1.msra.mxu0 0.0
    %614 = vmatprep.subr.mxu0 0.0
    %615 = vmatpush1.msra.mxu0 0.0
    %616 = vmatprep.subr.mxu0 0.0
    %617 = vmatpush1.msra.mxu0 0.0
    %618 = vmatprep.subr.mxu0 0.0
    %619 = vmatpush1.msra.mxu0 0.0
    %620 = vmatprep.subr.mxu0 0.0
    %621 = vmatpush1.msra.mxu0 %v594
    %622 = vmatprep.subr.mxu0 0.0
    %623 = vmatpush1.msra.mxu0 %v593
    %624 = vmatprep.subr.mxu0 0.0
    %625 = vmatpush1.msra.mxu0 %v592
    %626 = vmatprep.subr.mxu0 0.0
    %627 = vmatpush1.msra.mxu0 %v591
    %628 = vmatprep.subr.mxu0 0.0
    %629 = vmatpush2.msra.mxu0 0.0
    %630 = vmatprep.subr.mxu0 0.0
    %631 = vmatpush2.msra.mxu0 0.0
    %632 = vmatprep.subr.mxu0 0.0
    %633 = vmatpush2.msra.mxu0 0.0
    %634 = vmatprep.subr.mxu0 0.0
    %635 = vmatpush2.msra.mxu0 0.0
    %636 = vmatprep.subr.mxu0 0.0
    %637 = vmatpush2.msra.mxu0 0.0
    %638 = vmatprep.subr.mxu0 0.0
    %639 = vmatpush2.msra.mxu0 0.0
    %640 = vmatprep.subr.mxu0 0.0
    %641 = vmatpush2.msra.mxu0 0.0
    %642 = vmatprep.subr.mxu0 0.0
    %643 = vmatpush2.msra.mxu0 0.0
    %644 = vmatprep.subr.mxu0 0.0
    %645 = vmatpush2.msra.mxu0 0.0
    %646 = vmatprep.subr.mxu0 0.0
    %647 = vmatpush2.msra.mxu0 0.0
    %648 = vmatprep.subr.mxu0 0.0
    %649 = vmatpush2.msra.mxu0 0.0
    %650 = vmatprep.subr.mxu0 0.0
    %651 = vmatpush2.msra.mxu0 0.0
    %652 = vmatprep.subr.mxu0 0.0
    %653 = vmatpush2.msra.mxu0 0.0
    %654 = vmatprep.subr.mxu0 0.0
    %655 = vmatpush2.msra.mxu0 0.0
    %656 = vmatprep.subr.mxu0 0.0
    %657 = vmatpush2.msra.mxu0 0.0
    %658 = vmatprep.subr.mxu0 0.0
    %659 = vmatpush2.msra.mxu0 0.0
    %660 = vmatprep.mubr.f32.mxu0 0.0
    %661 = vmatmul.mubr.f32.gmra.mxu0 %v120
    %v662 = vpop.f32.mrf.mxu0
    %v663 = vadd.f32 %v595, %v662
    %v664 = vpop.f32.mrf.mxu0
    %665 = vdwg.mxu0
    %v666 = vadd.f32 %v588, %v663
    %v667 = vxor.u32 %v666, 2147483648
    %v668 = vmul.f32 %v667, 1.442695
    %v669 = vpow.pop %v668
    %v670 = vadd.f32 %v669, 1.0
    %v671 = vrcp.pop %v670
    %v672 = vmul.f32 1.0, %v671
    %674 = vrot.lane.b32.xlu0 %v663, 64
    %v675 = vpop.permute.xlu0 %674
    %v677 = vmul.f32 %v672, %v675
    %679 = vrot.lane.b32.xlu0 %v677, 64
    %v680 = vpop.permute.xlu0 %679
    %v682 = vadd.f32 %v588, %v680
    %v683 = vtanh.pop %v682
    %v684 = vsub.f32 1.0, %v672
    %686 = vrot.lane.b32.xlu0 %v683, 96
    %v687 = vpop.permute.xlu0 %686
    %v689 = vmul.f32 %v684, %v687
    %v690 = vlaneseq
    %v691 = vshrl.u32 %v690, 7
    %v692 = vsub.s32 0, %v691
    %v693 = vrot.slane %v106, %v692
    %694 = vrot.lane.b32.xlu0 %v693, 32
    %v695 = vpop.permute.xlu0 %694
    %v697 = vmul.f32 %v672, %v695
    %v698 = vadd.f32 %v689, %v697
    %v699 = vld [vmem:[%s14] sm:$0xff]
    %v700 = vld [vmem:[%s14 + $0x8] sm:$0xff]
    %v701 = vld [vmem:[%s14 + $0x10] sm:$0xff]
    %v702 = vld [vmem:[%s14 + $0x18] sm:$0xff]
    %v703 = vld [vmem:[%s15] sm:$0x1]
    %705 = vrot.lane.b32.xlu0 %v698, 96
    %v706 = vpop.permute.xlu0 %705
    %v707 = vsel %vm118, %v706, 0
    %709 = vmatprep.subr.mxu0 0.0
    %710 = vmatpush1.msra.mxu0 0.0
    %711 = vmatprep.subr.mxu0 0.0
    %712 = vmatpush1.msra.mxu0 0.0
    %713 = vmatprep.subr.mxu0 0.0
    %714 = vmatpush1.msra.mxu0 0.0
    %715 = vmatprep.subr.mxu0 0.0
    %716 = vmatpush1.msra.mxu0 0.0
    %717 = vmatprep.subr.mxu0 0.0
    %718 = vmatpush1.msra.mxu0 0.0
    %719 = vmatprep.subr.mxu0 0.0
    %720 = vmatpush1.msra.mxu0 0.0
    %721 = vmatprep.subr.mxu0 0.0
    %722 = vmatpush1.msra.mxu0 0.0
    %723 = vmatprep.subr.mxu0 0.0
    %724 = vmatpush1.msra.mxu0 0.0
    %725 = vmatprep.subr.mxu0 0.0
    %726 = vmatpush1.msra.mxu0 0.0
    %727 = vmatprep.subr.mxu0 0.0
    %728 = vmatpush1.msra.mxu0 0.0
    %729 = vmatprep.subr.mxu0 0.0
    %730 = vmatpush1.msra.mxu0 0.0
    %731 = vmatprep.subr.mxu0 0.0
    %732 = vmatpush1.msra.mxu0 0.0
    %733 = vmatprep.subr.mxu0 0.0
    %734 = vmatpush1.msra.mxu0 %v702
    %735 = vmatprep.subr.mxu0 0.0
    %736 = vmatpush1.msra.mxu0 %v701
    %737 = vmatprep.subr.mxu0 0.0
    %738 = vmatpush1.msra.mxu0 %v700
    %739 = vmatprep.subr.mxu0 0.0
    %740 = vmatpush1.msra.mxu0 %v699
    %741 = vmatprep.subr.mxu0 0.0
    %742 = vmatpush2.msra.mxu0 0.0
    %743 = vmatprep.subr.mxu0 0.0
    %744 = vmatpush2.msra.mxu0 0.0
    %745 = vmatprep.subr.mxu0 0.0
    %746 = vmatpush2.msra.mxu0 0.0
    %747 = vmatprep.subr.mxu0 0.0
    %748 = vmatpush2.msra.mxu0 0.0
    %749 = vmatprep.subr.mxu0 0.0
    %750 = vmatpush2.msra.mxu0 0.0
    %751 = vmatprep.subr.mxu0 0.0
    %752 = vmatpush2.msra.mxu0 0.0
    %753 = vmatprep.subr.mxu0 0.0
    %754 = vmatpush2.msra.mxu0 0.0
    %755 = vmatprep.subr.mxu0 0.0
    %756 = vmatpush2.msra.mxu0 0.0
    %757 = vmatprep.subr.mxu0 0.0
    %758 = vmatpush2.msra.mxu0 0.0
    %759 = vmatprep.subr.mxu0 0.0
    %760 = vmatpush2.msra.mxu0 0.0
    %761 = vmatprep.subr.mxu0 0.0
    %762 = vmatpush2.msra.mxu0 0.0
    %763 = vmatprep.subr.mxu0 0.0
    %764 = vmatpush2.msra.mxu0 0.0
    %765 = vmatprep.subr.mxu0 0.0
    %766 = vmatpush2.msra.mxu0 0.0
    %767 = vmatprep.subr.mxu0 0.0
    %768 = vmatpush2.msra.mxu0 0.0
    %769 = vmatprep.subr.mxu0 0.0
    %770 = vmatpush2.msra.mxu0 0.0
    %771 = vmatprep.subr.mxu0 0.0
    %772 = vmatpush2.msra.mxu0 0.0
    %773 = vmatprep.mubr.f32.mxu0 0.0
    %774 = vmatmul.mubr.f32.gmra.mxu0 %v707
    %v775 = vpop.f32.mrf.mxu0
    %v776 = vadd.f32 %v703, %v775
    %v777 = vpop.f32.mrf.mxu0
    %778 = vdwg.mxu0
    %vm779 = vcmask 385024
    %v780 = vsel %vm779, %v776, -inf
    %781 = vmax.xlane.f32.xlu0 %v780
    %v782 = vpop.xlane.xlu0 %781
    %v783 = vsub.f32 %v776, %v782
    %v784 = vmul.f32 %v783, 1.442695
    %v785 = vpow.pop %v784
    %v786 = vsel %vm779, %v785, 0.0
    %787 = vadd.xlane.f32.xlu0 %v786
    %v788 = vpop.xlane.xlu0 %787
    %v789 = vlog2.pop %v788
    %v790 = vmul.f32 %v789, 0.6931472
    %v791 = vadd.f32 %v790, %v782
    %v792 = vsub.f32 %v776, %v791
    %793 = vrot.lane.b32.xlu0 %v698, 16
    %v794 = vpop.permute.xlu0 %793
    %796 = vrot.lane.b32.xlu0 %v278, 80
    %v797 = vpop.permute.xlu0 %796
    %vm799 = vcmask 392192
    %v800 = vsel %vm799, %v792, %v794
    %vm801 = vcmask 654336
    %v802 = vsel %vm801, %v800, %v797
    %vm803 = vcmask 736256
    %v804 = vsel %vm803, %v802, 0.0
    %805 = vst [vmem:[%s16] sm:$0x1] %v804
    %s806 = sld [smem:[#allocation3 + $0x1]]
    %s807 = scalar_lea.vmem %s1, %s806
    %v808 = vld [vmem:[%s807] sm:$0x1]
    %v809 = vld [vmem:[%s4] sm:$0xff]
    %v810 = vld [vmem:[%s4 + $0x8] sm:$0xff]
    %v811 = vld [vmem:[%s4 + $0x10] sm:$0xff]
    %v812 = vld [vmem:[%s4 + $0x18] sm:$0xff]
    %v813 = vld [vmem:[%s5] sm:$0xff]
    %v814 = vld [vmem:[%s5 + $0x8] sm:$0xff]
    %v815 = vld [vmem:[%s5 + $0x10] sm:$0xff]
    %v816 = vld [vmem:[%s5 + $0x18] sm:$0xff]
    %817 = vmatprep.subr.mxu0 0.0
    %818 = vmatpush1.msra.mxu0 0.0
    %819 = vmatprep.subr.mxu0 0.0
    %820 = vmatpush1.msra.mxu0 0.0
    %821 = vmatprep.subr.mxu0 0.0
    %822 = vmatpush1.msra.mxu0 0.0
    %823 = vmatprep.subr.mxu0 0.0
    %824 = vmatpush1.msra.mxu0 0.0
    %825 = vmatprep.subr.mxu0 0.0
    %826 = vmatpush1.msra.mxu0 0.0
    %827 = vmatprep.subr.mxu0 0.0
    %828 = vmatpush1.msra.mxu0 0.0
    %829 = vmatprep.subr.mxu0 0.0
    %830 = vmatpush1.msra.mxu0 0.0
    %831 = vmatprep.subr.mxu0 0.0
    %832 = vmatpush1.msra.mxu0 0.0
    %833 = vmatprep.subr.mxu0 0.0
    %834 = vmatpush1.msra.mxu0 0.0
    %835 = vmatprep.subr.mxu0 0.0
    %836 = vmatpush1.msra.mxu0 0.0
    %837 = vmatprep.subr.mxu0 0.0
    %838 = vmatpush1.msra.mxu0 0.0
    %839 = vmatprep.subr.mxu0 0.0
    %840 = vmatpush1.msra.mxu0 0.0
    %841 = vmatprep.subr.mxu0 0.0
    %842 = vmatpush1.msra.mxu0 %v816
    %843 = vmatprep.subr.mxu0 0.0
    %844 = vmatpush1.msra.mxu0 %v815
    %845 = vmatprep.subr.mxu0 0.0
    %846 = vmatpush1.msra.mxu0 %v814
    %847 = vmatprep.subr.mxu0 0.0
    %848 = vmatpush1.msra.mxu0 %v813
    %849 = vmatprep.subr.mxu0 0.0
    %850 = vmatpush2.msra.mxu0 0.0
    %851 = vmatprep.subr.mxu0 0.0
    %852 = vmatpush2.msra.mxu0 0.0
    %853 = vmatprep.subr.mxu0 0.0
    %854 = vmatpush2.msra.mxu0 0.0
    %855 = vmatprep.subr.mxu0 0.0
    %856 = vmatpush2.msra.mxu0 0.0
    %857 = vmatprep.subr.mxu0 0.0
    %858 = vmatpush2.msra.mxu0 0.0
    %859 = vmatprep.subr.mxu0 0.0
    %860 = vmatpush2.msra.mxu0 0.0
    %861 = vmatprep.subr.mxu0 0.0
    %862 = vmatpush2.msra.mxu0 0.0
    %863 = vmatprep.subr.mxu0 0.0
    %864 = vmatpush2.msra.mxu0 0.0
    %865 = vmatprep.subr.mxu0 0.0
    %866 = vmatpush2.msra.mxu0 0.0
    %867 = vmatprep.subr.mxu0 0.0
    %868 = vmatpush2.msra.mxu0 0.0
    %869 = vmatprep.subr.mxu0 0.0
    %870 = vmatpush2.msra.mxu0 0.0
    %871 = vmatprep.subr.mxu0 0.0
    %872 = vmatpush2.msra.mxu0 0.0
    %873 = vmatprep.subr.mxu0 0.0
    %874 = vmatpush2.msra.mxu0 0.0
    %875 = vmatprep.subr.mxu0 0.0
    %876 = vmatpush2.msra.mxu0 0.0
    %877 = vmatprep.subr.mxu0 0.0
    %878 = vmatpush2.msra.mxu0 0.0
    %879 = vmatprep.subr.mxu0 0.0
    %880 = vmatpush2.msra.mxu0 0.0
    %881 = vmatprep.mubr.f32.mxu0 0.0
    %882 = vmatmul.mubr.f32.gmra.mxu0 %v707
    %v883 = vpop.f32.mrf.mxu0
    %v884 = vadd.f32 0.0, %v883
    %v885 = vpop.f32.mrf.mxu0
    %886 = vdwg.mxu0
    %v888 = vsel %vm118, %v808, 0
    %890 = vmatprep.subr.mxu0 0.0
    %891 = vmatpush1.msra.mxu0 0.0
    %892 = vmatprep.subr.mxu0 0.0
    %893 = vmatpush1.msra.mxu0 0.0
    %894 = vmatprep.subr.mxu0 0.0
    %895 = vmatpush1.msra.mxu0 0.0
    %896 = vmatprep.subr.mxu0 0.0
    %897 = vmatpush1.msra.mxu0 0.0
    %898 = vmatprep.subr.mxu0 0.0
    %899 = vmatpush1.msra.mxu0 0.0
    %900 = vmatprep.subr.mxu0 0.0
    %901 = vmatpush1.msra.mxu0 0.0
    %902 = vmatprep.subr.mxu0 0.0
    %903 = vmatpush1.msra.mxu0 0.0
    %904 = vmatprep.subr.mxu0 0.0
    %905 = vmatpush1.msra.mxu0 0.0
    %906 = vmatprep.subr.mxu0 0.0
    %907 = vmatpush1.msra.mxu0 0.0
    %908 = vmatprep.subr.mxu0 0.0
    %909 = vmatpush1.msra.mxu0 0.0
    %910 = vmatprep.subr.mxu0 0.0
    %911 = vmatpush1.msra.mxu0 0.0
    %912 = vmatprep.subr.mxu0 0.0
    %913 = vmatpush1.msra.mxu0 0.0
    %914 = vmatprep.subr.mxu0 0.0
    %915 = vmatpush1.msra.mxu0 %v812
    %916 = vmatprep.subr.mxu0 0.0
    %917 = vmatpush1.msra.mxu0 %v811
    %918 = vmatprep.subr.mxu0 0.0
    %919 = vmatpush1.msra.mxu0 %v810
    %920 = vmatprep.subr.mxu0 0.0
    %921 = vmatpush1.msra.mxu0 %v809
    %922 = vmatprep.subr.mxu0 0.0
    %923 = vmatpush2.msra.mxu0 0.0
    %924 = vmatprep.subr.mxu0 0.0
    %925 = vmatpush2.msra.mxu0 0.0
    %926 = vmatprep.subr.mxu0 0.0
    %927 = vmatpush2.msra.mxu0 0.0
    %928 = vmatprep.subr.mxu0 0.0
    %929 = vmatpush2.msra.mxu0 0.0
    %930 = vmatprep.subr.mxu0 0.0
    %931 = vmatpush2.msra.mxu0 0.0
    %932 = vmatprep.subr.mxu0 0.0
    %933 = vmatpush2.msra.mxu0 0.0
    %934 = vmatprep.subr.mxu0 0.0
    %935 = vmatpush2.msra.mxu0 0.0
    %936 = vmatprep.subr.mxu0 0.0
    %937 = vmatpush2.msra.mxu0 0.0
    %938 = vmatprep.subr.mxu0 0.0
    %939 = vmatpush2.msra.mxu0 0.0
    %940 = vmatprep.subr.mxu0 0.0
    %941 = vmatpush2.msra.mxu0 0.0
    %942 = vmatprep.subr.mxu0 0.0
    %943 = vmatpush2.msra.mxu0 0.0
    %944 = vmatprep.subr.mxu0 0.0
    %945 = vmatpush2.msra.mxu0 0.0
    %946 = vmatprep.subr.mxu0 0.0
    %947 = vmatpush2.msra.mxu0 0.0
    %948 = vmatprep.subr.mxu0 0.0
    %949 = vmatpush2.msra.mxu0 0.0
    %950 = vmatprep.subr.mxu0 0.0
    %951 = vmatpush2.msra.mxu0 0.0
    %952 = vmatprep.subr.mxu0 0.0
    %953 = vmatpush2.msra.mxu0 0.0
    %954 = vmatprep.mubr.f32.mxu0 0.0
    %955 = vmatmul.mubr.f32.gmra.mxu0 %v888
    %v956 = vpop.f32.mrf.mxu0
    %v957 = vadd.f32 %v884, %v956
    %v958 = vpop.f32.mrf.mxu0
    %959 = vdwg.mxu0
    %v960 = vld [vmem:[%s6] sm:$0x1]
    %v961 = vadd.f32 %v957, %v960
    %v962 = vsel %vm267, %v961, -inf
    %963 = vmax.xlane.f32.xlu0 %v962
    %v964 = vpop.xlane.xlu0 %963
    %v965 = vsub.f32 %v961, %v964
    %v966 = vmul.f32 %v965, 1.442695
    %v967 = vpow.pop %v966
    %v968 = vsel %vm267, %v967, 0.0
    %969 = vadd.xlane.f32.xlu0 %v968
    %v970 = vpop.xlane.xlu0 %969
    %v971 = vrcp.pop %v970
    %v972 = vmul.f32 %v967, %v971
    %v973 = vld [vmem:[#allocation4] sm:$0xff]
    %v974 = vld [vmem:[#allocation4 + $0x8] sm:$0x3]
    %v976 = vsel %vm281, %v972, 0
    %v979 = vsel %vm285, %v974, 0
    %981 = vmatprep.subr.mxu0 0.0
    %982 = vmatpush1.msra.mxu0 0.0
    %983 = vmatprep.subr.mxu0 0.0
    %984 = vmatpush1.msra.mxu0 0.0
    %985 = vmatprep.subr.mxu0 0.0
    %986 = vmatpush1.msra.mxu0 0.0
    %987 = vmatprep.subr.mxu0 0.0
    %988 = vmatpush1.msra.mxu0 0.0
    %989 = vmatprep.subr.mxu0 0.0
    %990 = vmatpush1.msra.mxu0 0.0
    %991 = vmatprep.subr.mxu0 0.0
    %992 = vmatpush1.msra.mxu0 0.0
    %993 = vmatprep.subr.mxu0 0.0
    %994 = vmatpush1.msra.mxu0 0.0
    %995 = vmatprep.subr.mxu0 0.0
    %996 = vmatpush1.msra.mxu0 0.0
    %997 = vmatprep.subr.mxu0 0.0
    %998 = vmatpush1.msra.mxu0 0.0
    %999 = vmatprep.subr.mxu0 0.0
    %1000 = vmatpush1.msra.mxu0 0.0
    %1001 = vmatprep.subr.mxu0 0.0
    %1002 = vmatpush1.msra.mxu0 0.0
    %1003 = vmatprep.subr.mxu0 0.0
    %1004 = vmatpush1.msra.mxu0 0.0
    %1005 = vmatprep.subr.mxu0 0.0
    %1006 = vmatpush1.msra.mxu0 0.0
    %1007 = vmatprep.subr.mxu0 0.0
    %1008 = vmatpush1.msra.mxu0 0.0
    %1009 = vmatprep.subr.mxu0 0.0
    %1010 = vmatpush1.msra.mxu0 %v979
    %1011 = vmatprep.subr.mxu0 0.0
    %1012 = vmatpush1.msra.mxu0 %v973
    %1013 = vmatprep.subr.mxu0 0.0
    %1014 = vmatpush2.msra.mxu0 0.0
    %1015 = vmatprep.subr.mxu0 0.0
    %1016 = vmatpush2.msra.mxu0 0.0
    %1017 = vmatprep.subr.mxu0 0.0
    %1018 = vmatpush2.msra.mxu0 0.0
    %1019 = vmatprep.subr.mxu0 0.0
    %1020 = vmatpush2.msra.mxu0 0.0
    %1021 = vmatprep.subr.mxu0 0.0
    %1022 = vmatpush2.msra.mxu0 0.0
    %1023 = vmatprep.subr.mxu0 0.0
    %1024 = vmatpush2.msra.mxu0 0.0
    %1025 = vmatprep.subr.mxu0 0.0
    %1026 = vmatpush2.msra.mxu0 0.0
    %1027 = vmatprep.subr.mxu0 0.0
    %1028 = vmatpush2.msra.mxu0 0.0
    %1029 = vmatprep.subr.mxu0 0.0
    %1030 = vmatpush2.msra.mxu0 0.0
    %1031 = vmatprep.subr.mxu0 0.0
    %1032 = vmatpush2.msra.mxu0 0.0
    %1033 = vmatprep.subr.mxu0 0.0
    %1034 = vmatpush2.msra.mxu0 0.0
    %1035 = vmatprep.subr.mxu0 0.0
    %1036 = vmatpush2.msra.mxu0 0.0
    %1037 = vmatprep.subr.mxu0 0.0
    %1038 = vmatpush2.msra.mxu0 0.0
    %1039 = vmatprep.subr.mxu0 0.0
    %1040 = vmatpush2.msra.mxu0 0.0
    %1041 = vmatprep.subr.mxu0 0.0
    %1042 = vmatpush2.msra.mxu0 0.0
    %1043 = vmatprep.subr.mxu0 0.0
    %1044 = vmatpush2.msra.mxu0 0.0
    %1045 = vmatprep.mubr.f32.mxu0 0.0
    %1046 = vmatmul.mubr.f32.gmra.mxu0 %v976
    %v1047 = vpop.f32.mrf.mxu0
    %v1048 = vadd.f32 0.0, %v1047
    %v1049 = vpop.f32.mrf.mxu0
    %1050 = vdwg.mxu0
    %v1051 = vld [vmem:[%s7] sm:$0xff]
    %v1052 = vld [vmem:[%s7 + $0x8] sm:$0xff]
    %v1053 = vld [vmem:[%s7 + $0x10] sm:$0xff]
    %v1054 = vld [vmem:[%s7 + $0x18] sm:$0xff]
    %v1055 = vld [vmem:[%s8] sm:$0xff]
    %v1056 = vld [vmem:[%s8 + $0x8] sm:$0xff]
    %v1057 = vld [vmem:[%s8 + $0x10] sm:$0xff]
    %v1058 = vld [vmem:[%s8 + $0x18] sm:$0xff]
    %v1060 = vsel %vm118, %v1048, 0
    %1062 = vmatprep.subr.mxu0 0.0
    %1063 = vmatpush1.msra.mxu0 0.0
    %1064 = vmatprep.subr.mxu0 0.0
    %1065 = vmatpush1.msra.mxu0 0.0
    %1066 = vmatprep.subr.mxu0 0.0
    %1067 = vmatpush1.msra.mxu0 0.0
    %1068 = vmatprep.subr.mxu0 0.0
    %1069 = vmatpush1.msra.mxu0 0.0
    %1070 = vmatprep.subr.mxu0 0.0
    %1071 = vmatpush1.msra.mxu0 0.0
    %1072 = vmatprep.subr.mxu0 0.0
    %1073 = vmatpush1.msra.mxu0 0.0
    %1074 = vmatprep.subr.mxu0 0.0
    %1075 = vmatpush1.msra.mxu0 0.0
    %1076 = vmatprep.subr.mxu0 0.0
    %1077 = vmatpush1.msra.mxu0 0.0
    %1078 = vmatprep.subr.mxu0 0.0
    %1079 = vmatpush1.msra.mxu0 0.0
    %1080 = vmatprep.subr.mxu0 0.0
    %1081 = vmatpush1.msra.mxu0 0.0
    %1082 = vmatprep.subr.mxu0 0.0
    %1083 = vmatpush1.msra.mxu0 0.0
    %1084 = vmatprep.subr.mxu0 0.0
    %1085 = vmatpush1.msra.mxu0 0.0
    %1086 = vmatprep.subr.mxu0 0.0
    %1087 = vmatpush1.msra.mxu0 %v1058
    %1088 = vmatprep.subr.mxu0 0.0
    %1089 = vmatpush1.msra.mxu0 %v1057
    %1090 = vmatprep.subr.mxu0 0.0
    %1091 = vmatpush1.msra.mxu0 %v1056
    %1092 = vmatprep.subr.mxu0 0.0
    %1093 = vmatpush1.msra.mxu0 %v1055
    %1094 = vmatprep.subr.mxu0 0.0
    %1095 = vmatpush2.msra.mxu0 0.0
    %1096 = vmatprep.subr.mxu0 0.0
    %1097 = vmatpush2.msra.mxu0 0.0
    %1098 = vmatprep.subr.mxu0 0.0
    %1099 = vmatpush2.msra.mxu0 0.0
    %1100 = vmatprep.subr.mxu0 0.0
    %1101 = vmatpush2.msra.mxu0 0.0
    %1102 = vmatprep.subr.mxu0 0.0
    %1103 = vmatpush2.msra.mxu0 0.0
    %1104 = vmatprep.subr.mxu0 0.0
    %1105 = vmatpush2.msra.mxu0 0.0
    %1106 = vmatprep.subr.mxu0 0.0
    %1107 = vmatpush2.msra.mxu0 0.0
    %1108 = vmatprep.subr.mxu0 0.0
    %1109 = vmatpush2.msra.mxu0 0.0
    %1110 = vmatprep.subr.mxu0 0.0
    %1111 = vmatpush2.msra.mxu0 0.0
    %1112 = vmatprep.subr.mxu0 0.0
    %1113 = vmatpush2.msra.mxu0 0.0
    %1114 = vmatprep.subr.mxu0 0.0
    %1115 = vmatpush2.msra.mxu0 0.0
    %1116 = vmatprep.subr.mxu0 0.0
    %1117 = vmatpush2.msra.mxu0 0.0
    %1118 = vmatprep.subr.mxu0 0.0
    %1119 = vmatpush2.msra.mxu0 0.0
    %1120 = vmatprep.subr.mxu0 0.0
    %1121 = vmatpush2.msra.mxu0 0.0
    %1122 = vmatprep.subr.mxu0 0.0
    %1123 = vmatpush2.msra.mxu0 0.0
    %1124 = vmatprep.subr.mxu0 0.0
    %1125 = vmatpush2.msra.mxu0 0.0
    %1126 = vmatprep.mubr.f32.mxu0 0.0
    %1127 = vmatmul.mubr.f32.gmra.mxu0 %v1060
    %v1128 = vpop.f32.mrf.mxu0
    %v1129 = vadd.f32 0.0, %v1128
    %v1130 = vpop.f32.mrf.mxu0
    %1131 = vdwg.mxu0
    %1132 = vmatprep.subr.mxu0 0.0
    %1133 = vmatpush1.msra.mxu0 0.0
    %1134 = vmatprep.subr.mxu0 0.0
    %1135 = vmatpush1.msra.mxu0 0.0
    %1136 = vmatprep.subr.mxu0 0.0
    %1137 = vmatpush1.msra.mxu0 0.0
    %1138 = vmatprep.subr.mxu0 0.0
    %1139 = vmatpush1.msra.mxu0 0.0
    %1140 = vmatprep.subr.mxu0 0.0
    %1141 = vmatpush1.msra.mxu0 0.0
    %1142 = vmatprep.subr.mxu0 0.0
    %1143 = vmatpush1.msra.mxu0 0.0
    %1144 = vmatprep.subr.mxu0 0.0
    %1145 = vmatpush1.msra.mxu0 0.0
    %1146 = vmatprep.subr.mxu0 0.0
    %1147 = vmatpush1.msra.mxu0 0.0
    %1148 = vmatprep.subr.mxu0 0.0
    %1149 = vmatpush1.msra.mxu0 0.0
    %1150 = vmatprep.subr.mxu0 0.0
    %1151 = vmatpush1.msra.mxu0 0.0
    %1152 = vmatprep.subr.mxu0 0.0
    %1153 = vmatpush1.msra.mxu0 0.0
    %1154 = vmatprep.subr.mxu0 0.0
    %1155 = vmatpush1.msra.mxu0 0.0
    %1156 = vmatprep.subr.mxu0 0.0
    %1157 = vmatpush1.msra.mxu0 %v1054
    %1158 = vmatprep.subr.mxu0 0.0
    %1159 = vmatpush1.msra.mxu0 %v1053
    %1160 = vmatprep.subr.mxu0 0.0
    %1161 = vmatpush1.msra.mxu0 %v1052
    %1162 = vmatprep.subr.mxu0 0.0
    %1163 = vmatpush1.msra.mxu0 %v1051
    %1164 = vmatprep.subr.mxu0 0.0
    %1165 = vmatpush2.msra.mxu0 0.0
    %1166 = vmatprep.subr.mxu0 0.0
    %1167 = vmatpush2.msra.mxu0 0.0
    %1168 = vmatprep.subr.mxu0 0.0
    %1169 = vmatpush2.msra.mxu0 0.0
    %1170 = vmatprep.subr.mxu0 0.0
    %1171 = vmatpush2.msra.mxu0 0.0
    %1172 = vmatprep.subr.mxu0 0.0
    %1173 = vmatpush2.msra.mxu0 0.0
    %1174 = vmatprep.subr.mxu0 0.0
    %1175 = vmatpush2.msra.mxu0 0.0
    %1176 = vmatprep.subr.mxu0 0.0
    %1177 = vmatpush2.msra.mxu0 0.0
    %1178 = vmatprep.subr.mxu0 0.0
    %1179 = vmatpush2.msra.mxu0 0.0
    %1180 = vmatprep.subr.mxu0 0.0
    %1181 = vmatpush2.msra.mxu0 0.0
    %1182 = vmatprep.subr.mxu0 0.0
    %1183 = vmatpush2.msra.mxu0 0.0
    %1184 = vmatprep.subr.mxu0 0.0
    %1185 = vmatpush2.msra.mxu0 0.0
    %1186 = vmatprep.subr.mxu0 0.0
    %1187 = vmatpush2.msra.mxu0 0.0
    %1188 = vmatprep.subr.mxu0 0.0
    %1189 = vmatpush2.msra.mxu0 0.0
    %1190 = vmatprep.subr.mxu0 0.0
    %1191 = vmatpush2.msra.mxu0 0.0
    %1192 = vmatprep.subr.mxu0 0.0
    %1193 = vmatpush2.msra.mxu0 0.0
    %1194 = vmatprep.subr.mxu0 0.0
    %1195 = vmatpush2.msra.mxu0 0.0
    %1196 = vmatprep.mubr.f32.mxu0 0.0
    %1197 = vmatmul.mubr.f32.gmra.mxu0 %v888
    %v1198 = vpop.f32.mrf.mxu0
    %v1199 = vadd.f32 %v1129, %v1198
    %v1200 = vpop.f32.mrf.mxu0
    %1201 = vdwg.mxu0
    %v1202 = vld [vmem:[#allocation6] sm:$0x1]
    %v1203 = vadd.f32 %v1199, %v1202
    %v1204 = vmax.f32 %v1203, 0.0
    %v1205 = vld [vmem:[%s10] sm:$0xff]
    %v1206 = vld [vmem:[%s10 + $0x8] sm:$0xff]
    %v1207 = vld [vmem:[%s10 + $0x10] sm:$0xff]
    %v1208 = vld [vmem:[%s10 + $0x18] sm:$0xff]
    %v1209 = vld [vmem:[#allocation8] sm:$0x1]
    %v1211 = vsel %vm118, %v1204, 0
    %1213 = vmatprep.subr.mxu0 0.0
    %1214 = vmatpush1.msra.mxu0 0.0
    %1215 = vmatprep.subr.mxu0 0.0
    %1216 = vmatpush1.msra.mxu0 0.0
    %1217 = vmatprep.subr.mxu0 0.0
    %1218 = vmatpush1.msra.mxu0 0.0
    %1219 = vmatprep.subr.mxu0 0.0
    %1220 = vmatpush1.msra.mxu0 0.0
    %1221 = vmatprep.subr.mxu0 0.0
    %1222 = vmatpush1.msra.mxu0 0.0
    %1223 = vmatprep.subr.mxu0 0.0
    %1224 = vmatpush1.msra.mxu0 0.0
    %1225 = vmatprep.subr.mxu0 0.0
    %1226 = vmatpush1.msra.mxu0 0.0
    %1227 = vmatprep.subr.mxu0 0.0
    %1228 = vmatpush1.msra.mxu0 0.0
    %1229 = vmatprep.subr.mxu0 0.0
    %1230 = vmatpush1.msra.mxu0 0.0
    %1231 = vmatprep.subr.mxu0 0.0
    %1232 = vmatpush1.msra.mxu0 0.0
    %1233 = vmatprep.subr.mxu0 0.0
    %1234 = vmatpush1.msra.mxu0 0.0
    %1235 = vmatprep.subr.mxu0 0.0
    %1236 = vmatpush1.msra.mxu0 0.0
    %1237 = vmatprep.subr.mxu0 0.0
    %1238 = vmatpush1.msra.mxu0 %v1208
    %1239 = vmatprep.subr.mxu0 0.0
    %1240 = vmatpush1.msra.mxu0 %v1207
    %1241 = vmatprep.subr.mxu0 0.0
    %1242 = vmatpush1.msra.mxu0 %v1206
    %1243 = vmatprep.subr.mxu0 0.0
    %1244 = vmatpush1.msra.mxu0 %v1205
    %1245 = vmatprep.subr.mxu0 0.0
    %1246 = vmatpush2.msra.mxu0 0.0
    %1247 = vmatprep.subr.mxu0 0.0
    %1248 = vmatpush2.msra.mxu0 0.0
    %1249 = vmatprep.subr.mxu0 0.0
    %1250 = vmatpush2.msra.mxu0 0.0
    %1251 = vmatprep.subr.mxu0 0.0
    %1252 = vmatpush2.msra.mxu0 0.0
    %1253 = vmatprep.subr.mxu0 0.0
    %1254 = vmatpush2.msra.mxu0 0.0
    %1255 = vmatprep.subr.mxu0 0.0
    %1256 = vmatpush2.msra.mxu0 0.0
    %1257 = vmatprep.subr.mxu0 0.0
    %1258 = vmatpush2.msra.mxu0 0.0
    %1259 = vmatprep.subr.mxu0 0.0
    %1260 = vmatpush2.msra.mxu0 0.0
    %1261 = vmatprep.subr.mxu0 0.0
    %1262 = vmatpush2.msra.mxu0 0.0
    %1263 = vmatprep.subr.mxu0 0.0
    %1264 = vmatpush2.msra.mxu0 0.0
    %1265 = vmatprep.subr.mxu0 0.0
    %1266 = vmatpush2.msra.mxu0 0.0
    %1267 = vmatprep.subr.mxu0 0.0
    %1268 = vmatpush2.msra.mxu0 0.0
    %1269 = vmatprep.subr.mxu0 0.0
    %1270 = vmatpush2.msra.mxu0 0.0
    %1271 = vmatprep.subr.mxu0 0.0
    %1272 = vmatpush2.msra.mxu0 0.0
    %1273 = vmatprep.subr.mxu0 0.0
    %1274 = vmatpush2.msra.mxu0 0.0
    %1275 = vmatprep.subr.mxu0 0.0
    %1276 = vmatpush2.msra.mxu0 0.0
    %1277 = vmatprep.mubr.f32.mxu0 0.0
    %1278 = vmatmul.mubr.f32.gmra.mxu0 %v1211
    %v1279 = vpop.f32.mrf.mxu0
    %v1280 = vadd.f32 %v1209, %v1279
    %v1281 = vpop.f32.mrf.mxu0
    %1282 = vdwg.mxu0
    %v1283 = vld [vmem:[%s11] sm:$0xff]
    %v1284 = vld [vmem:[%s11 + $0x8] sm:$0xff]
    %v1285 = vld [vmem:[%s11 + $0x10] sm:$0xff]
    %v1286 = vld [vmem:[%s11 + $0x18] sm:$0xff]
    %v1287 = vld [vmem:[#allocation9] sm:$0x1]
    %1288 = vmatprep.subr.mxu0 0.0
    %1289 = vmatpush1.msra.mxu0 0.0
    %1290 = vmatprep.subr.mxu0 0.0
    %1291 = vmatpush1.msra.mxu0 0.0
    %1292 = vmatprep.subr.mxu0 0.0
    %1293 = vmatpush1.msra.mxu0 0.0
    %1294 = vmatprep.subr.mxu0 0.0
    %1295 = vmatpush1.msra.mxu0 0.0
    %1296 = vmatprep.subr.mxu0 0.0
    %1297 = vmatpush1.msra.mxu0 0.0
    %1298 = vmatprep.subr.mxu0 0.0
    %1299 = vmatpush1.msra.mxu0 0.0
    %1300 = vmatprep.subr.mxu0 0.0
    %1301 = vmatpush1.msra.mxu0 0.0
    %1302 = vmatprep.subr.mxu0 0.0
    %1303 = vmatpush1.msra.mxu0 0.0
    %1304 = vmatprep.subr.mxu0 0.0
    %1305 = vmatpush1.msra.mxu0 0.0
    %1306 = vmatprep.subr.mxu0 0.0
    %1307 = vmatpush1.msra.mxu0 0.0
    %1308 = vmatprep.subr.mxu0 0.0
    %1309 = vmatpush1.msra.mxu0 0.0
    %1310 = vmatprep.subr.mxu0 0.0
    %1311 = vmatpush1.msra.mxu0 0.0
    %1312 = vmatprep.subr.mxu0 0.0
    %1313 = vmatpush1.msra.mxu0 %v1286
    %1314 = vmatprep.subr.mxu0 0.0
    %1315 = vmatpush1.msra.mxu0 %v1285
    %1316 = vmatprep.subr.mxu0 0.0
    %1317 = vmatpush1.msra.mxu0 %v1284
    %1318 = vmatprep.subr.mxu0 0.0
    %1319 = vmatpush1.msra.mxu0 %v1283
    %1320 = vmatprep.subr.mxu0 0.0
    %1321 = vmatpush2.msra.mxu0 0.0
    %1322 = vmatprep.subr.mxu0 0.0
    %1323 = vmatpush2.msra.mxu0 0.0
    %1324 = vmatprep.subr.mxu0 0.0
    %1325 = vmatpush2.msra.mxu0 0.0
    %1326 = vmatprep.subr.mxu0 0.0
    %1327 = vmatpush2.msra.mxu0 0.0
    %1328 = vmatprep.subr.mxu0 0.0
    %1329 = vmatpush2.msra.mxu0 0.0
    %1330 = vmatprep.subr.mxu0 0.0
    %1331 = vmatpush2.msra.mxu0 0.0
    %1332 = vmatprep.subr.mxu0 0.0
    %1333 = vmatpush2.msra.mxu0 0.0
    %1334 = vmatprep.subr.mxu0 0.0
    %1335 = vmatpush2.msra.mxu0 0.0
    %1336 = vmatprep.subr.mxu0 0.0
    %1337 = vmatpush2.msra.mxu0 0.0
    %1338 = vmatprep.subr.mxu0 0.0
    %1339 = vmatpush2.msra.mxu0 0.0
    %1340 = vmatprep.subr.mxu0 0.0
    %1341 = vmatpush2.msra.mxu0 0.0
    %1342 = vmatprep.subr.mxu0 0.0
    %1343 = vmatpush2.msra.mxu0 0.0
    %1344 = vmatprep.subr.mxu0 0.0
    %1345 = vmatpush2.msra.mxu0 0.0
    %1346 = vmatprep.subr.mxu0 0.0
    %1347 = vmatpush2.msra.mxu0 0.0
    %1348 = vmatprep.subr.mxu0 0.0
    %1349 = vmatpush2.msra.mxu0 0.0
    %1350 = vmatprep.subr.mxu0 0.0
    %1351 = vmatpush2.msra.mxu0 0.0
    %1352 = vmatprep.mubr.f32.mxu0 0.0
    %1353 = vmatmul.mubr.f32.gmra.mxu0 %v707
    %v1354 = vpop.f32.mrf.mxu0
    %v1355 = vadd.f32 %v1287, %v1354
    %v1356 = vpop.f32.mrf.mxu0
    %1357 = vdwg.mxu0
    %v1358 = vadd.f32 %v1280, %v1355
    %v1359 = vxor.u32 %v1358, 2147483648
    %v1360 = vmul.f32 %v1359, 1.442695
    %v1361 = vpow.pop %v1360
    %v1362 = vadd.f32 %v1361, 1.0
    %v1363 = vrcp.pop %v1362
    %v1364 = vmul.f32 1.0, %v1363
    %1366 = vrot.lane.b32.xlu0 %v1355, 64
    %v1367 = vpop.permute.xlu0 %1366
    %v1369 = vmul.f32 %v1364, %v1367
    %1371 = vrot.lane.b32.xlu0 %v1369, 64
    %v1372 = vpop.permute.xlu0 %1371
    %v1374 = vadd.f32 %v1280, %v1372
    %v1375 = vtanh.pop %v1374
    %v1376 = vsub.f32 1.0, %v1364
    %1378 = vrot.lane.b32.xlu0 %v1375, 96
    %v1379 = vpop.permute.xlu0 %1378
    %v1381 = vmul.f32 %v1376, %v1379
    %v1382 = vmul.f32 %v1364, %v698
    %v1383 = vadd.f32 %v1381, %v1382
    %v1384 = vld [vmem:[%s14] sm:$0xff]
    %v1385 = vld [vmem:[%s14 + $0x8] sm:$0xff]
    %v1386 = vld [vmem:[%s14 + $0x10] sm:$0xff]
    %v1387 = vld [vmem:[%s14 + $0x18] sm:$0xff]
    %v1388 = vld [vmem:[%s15] sm:$0x1]
    %1390 = vrot.lane.b32.xlu0 %v1383, 96
    %v1391 = vpop.permute.xlu0 %1390
    %v1392 = vsel %vm118, %v1391, 0
    %1394 = vmatprep.subr.mxu0 0.0
    %1395 = vmatpush1.msra.mxu0 0.0
    %1396 = vmatprep.subr.mxu0 0.0
    %1397 = vmatpush1.msra.mxu0 0.0
    %1398 = vmatprep.subr.mxu0 0.0
    %1399 = vmatpush1.msra.mxu0 0.0
    %1400 = vmatprep.subr.mxu0 0.0
    %1401 = vmatpush1.msra.mxu0 0.0
    %1402 = vmatprep.subr.mxu0 0.0
    %1403 = vmatpush1.msra.mxu0 0.0
    %1404 = vmatprep.subr.mxu0 0.0
    %1405 = vmatpush1.msra.mxu0 0.0
    %1406 = vmatprep.subr.mxu0 0.0
    %1407 = vmatpush1.msra.mxu0 0.0
    %1408 = vmatprep.subr.mxu0 0.0
    %1409 = vmatpush1.msra.mxu0 0.0
    %1410 = vmatprep.subr.mxu0 0.0
    %1411 = vmatpush1.msra.mxu0 0.0
    %1412 = vmatprep.subr.mxu0 0.0
    %1413 = vmatpush1.msra.mxu0 0.0
    %1414 = vmatprep.subr.mxu0 0.0
    %1415 = vmatpush1.msra.mxu0 0.0
    %1416 = vmatprep.subr.mxu0 0.0
    %1417 = vmatpush1.msra.mxu0 0.0
    %1418 = vmatprep.subr.mxu0 0.0
    %1419 = vmatpush1.msra.mxu0 %v1387
    %1420 = vmatprep.subr.mxu0 0.0
    %1421 = vmatpush1.msra.mxu0 %v1386
    %1422 = vmatprep.subr.mxu0 0.0
    %1423 = vmatpush1.msra.mxu0 %v1385
    %1424 = vmatprep.subr.mxu0 0.0
    %1425 = vmatpush1.msra.mxu0 %v1384
    %1426 = vmatprep.subr.mxu0 0.0
    %1427 = vmatpush2.msra.mxu0 0.0
    %1428 = vmatprep.subr.mxu0 0.0
    %1429 = vmatpush2.msra.mxu0 0.0
    %1430 = vmatprep.subr.mxu0 0.0
    %1431 = vmatpush2.msra.mxu0 0.0
    %1432 = vmatprep.subr.mxu0 0.0
    %1433 = vmatpush2.msra.mxu0 0.0
    %1434 = vmatprep.subr.mxu0 0.0
    %1435 = vmatpush2.msra.mxu0 0.0
    %1436 = vmatprep.subr.mxu0 0.0
    %1437 = vmatpush2.msra.mxu0 0.0
    %1438 = vmatprep.subr.mxu0 0.0
    %1439 = vmatpush2.msra.mxu0 0.0
    %1440 = vmatprep.subr.mxu0 0.0
    %1441 = vmatpush2.msra.mxu0 0.0
    %1442 = vmatprep.subr.mxu0 0.0
    %1443 = vmatpush2.msra.mxu0 0.0
    %1444 = vmatprep.subr.mxu0 0.0
    %1445 = vmatpush2.msra.mxu0 0.0
    %1446 = vmatprep.subr.mxu0 0.0
    %1447 = vmatpush2.msra.mxu0 0.0
    %1448 = vmatprep.subr.mxu0 0.0
    %1449 = vmatpush2.msra.mxu0 0.0
    %1450 = vmatprep.subr.mxu0 0.0
    %1451 = vmatpush2.msra.mxu0 0.0
    %1452 = vmatprep.subr.mxu0 0.0
    %1453 = vmatpush2.msra.mxu0 0.0
    %1454 = vmatprep.subr.mxu0 0.0
    %1455 = vmatpush2.msra.mxu0 0.0
    %1456 = vmatprep.subr.mxu0 0.0
    %1457 = vmatpush2.msra.mxu0 0.0
    %1458 = vmatprep.mubr.f32.mxu0 0.0
    %1459 = vmatmul.mubr.f32.gmra.mxu0 %v1392
    %v1460 = vpop.f32.mrf.mxu0
    %v1461 = vadd.f32 %v1388, %v1460
    %v1462 = vpop.f32.mrf.mxu0
    %1463 = vdwg.mxu0
    %v1464 = vsel %vm779, %v1461, -inf
    %1465 = vmax.xlane.f32.xlu0 %v1464
    %v1466 = vpop.xlane.xlu0 %1465
    %v1467 = vsub.f32 %v1461, %v1466
    %v1468 = vmul.f32 %v1467, 1.442695
    %v1469 = vpow.pop %v1468
    %v1470 = vsel %vm779, %v1469, 0.0
    %1471 = vadd.xlane.f32.xlu0 %v1470
    %v1472 = vpop.xlane.xlu0 %1471
    %v1473 = vlog2.pop %v1472
    %v1474 = vmul.f32 %v1473, 0.6931472
    %v1475 = vadd.f32 %v1474, %v1466
    %v1476 = vsub.f32 %v1461, %v1475
    %1477 = vrot.lane.b32.xlu0 %v1383, 16
    %v1478 = vpop.permute.xlu0 %1477
    %1480 = vrot.lane.b32.xlu0 %v972, 80
    %v1481 = vpop.permute.xlu0 %1480
    %v1483 = vsel %vm799, %v1476, %v1478
    %v1484 = vsel %vm801, %v1483, %v1481
    %v1485 = vsel %vm803, %v1484, 0.0
    %1486 = vst [vmem:[%s16 + $0x1] sm:$0x1] %v1485
    %s1487 = sld [smem:[#allocation3 + $0x2]]
    %s1488 = scalar_lea.vmem %s1, %s1487
    %v1489 = vld [vmem:[%s1488] sm:$0x1]
    %v1490 = vld [vmem:[%s4] sm:$0xff]
    %v1491 = vld [vmem:[%s4 + $0x8] sm:$0xff]
    %v1492 = vld [vmem:[%s4 + $0x10] sm:$0xff]
    %v1493 = vld [vmem:[%s4 + $0x18] sm:$0xff]
    %v1494 = vld [vmem:[%s5] sm:$0xff]
    %v1495 = vld [vmem:[%s5 + $0x8] sm:$0xff]
    %v1496 = vld [vmem:[%s5 + $0x10] sm:$0xff]
    %v1497 = vld [vmem:[%s5 + $0x18] sm:$0xff]
    %1498 = vmatprep.subr.mxu0 0.0
    %1499 = vmatpush1.msra.mxu0 0.0
    %1500 = vmatprep.subr.mxu0 0.0
    %1501 = vmatpush1.msra.mxu0 0.0
    %1502 = vmatprep.subr.mxu0 0.0
    %1503 = vmatpush1.msra.mxu0 0.0
    %1504 = vmatprep.subr.mxu0 0.0
    %1505 = vmatpush1.msra.mxu0 0.0
    %1506 = vmatprep.subr.mxu0 0.0
    %1507 = vmatpush1.msra.mxu0 0.0
    %1508 = vmatprep.subr.mxu0 0.0
    %1509 = vmatpush1.msra.mxu0 0.0
    %1510 = vmatprep.subr.mxu0 0.0
    %1511 = vmatpush1.msra.mxu0 0.0
    %1512 = vmatprep.subr.mxu0 0.0
    %1513 = vmatpush1.msra.mxu0 0.0
    %1514 = vmatprep.subr.mxu0 0.0
    %1515 = vmatpush1.msra.mxu0 0.0
    %1516 = vmatprep.subr.mxu0 0.0
    %1517 = vmatpush1.msra.mxu0 0.0
    %1518 = vmatprep.subr.mxu0 0.0
    %1519 = vmatpush1.msra.mxu0 0.0
    %1520 = vmatprep.subr.mxu0 0.0
    %1521 = vmatpush1.msra.mxu0 0.0
    %1522 = vmatprep.subr.mxu0 0.0
    %1523 = vmatpush1.msra.mxu0 %v1497
    %1524 = vmatprep.subr.mxu0 0.0
    %1525 = vmatpush1.msra.mxu0 %v1496
    %1526 = vmatprep.subr.mxu0 0.0
    %1527 = vmatpush1.msra.mxu0 %v1495
    %1528 = vmatprep.subr.mxu0 0.0
    %1529 = vmatpush1.msra.mxu0 %v1494
    %1530 = vmatprep.subr.mxu0 0.0
    %1531 = vmatpush2.msra.mxu0 0.0
    %1532 = vmatprep.subr.mxu0 0.0
    %1533 = vmatpush2.msra.mxu0 0.0
    %1534 = vmatprep.subr.mxu0 0.0
    %1535 = vmatpush2.msra.mxu0 0.0
    %1536 = vmatprep.subr.mxu0 0.0
    %1537 = vmatpush2.msra.mxu0 0.0
    %1538 = vmatprep.subr.mxu0 0.0
    %1539 = vmatpush2.msra.mxu0 0.0
    %1540 = vmatprep.subr.mxu0 0.0
    %1541 = vmatpush2.msra.mxu0 0.0
    %1542 = vmatprep.subr.mxu0 0.0
    %1543 = vmatpush2.msra.mxu0 0.0
    %1544 = vmatprep.subr.mxu0 0.0
    %1545 = vmatpush2.msra.mxu0 0.0
    %1546 = vmatprep.subr.mxu0 0.0
    %1547 = vmatpush2.msra.mxu0 0.0
    %1548 = vmatprep.subr.mxu0 0.0
    %1549 = vmatpush2.msra.mxu0 0.0
    %1550 = vmatprep.subr.mxu0 0.0
    %1551 = vmatpush2.msra.mxu0 0.0
    %1552 = vmatprep.subr.mxu0 0.0
    %1553 = vmatpush2.msra.mxu0 0.0
    %1554 = vmatprep.subr.mxu0 0.0
    %1555 = vmatpush2.msra.mxu0 0.0
    %1556 = vmatprep.subr.mxu0 0.0
    %1557 = vmatpush2.msra.mxu0 0.0
    %1558 = vmatprep.subr.mxu0 0.0
    %1559 = vmatpush2.msra.mxu0 0.0
    %1560 = vmatprep.subr.mxu0 0.0
    %1561 = vmatpush2.msra.mxu0 0.0
    %1562 = vmatprep.mubr.f32.mxu0 0.0
    %1563 = vmatmul.mubr.f32.gmra.mxu0 %v1392
    %v1564 = vpop.f32.mrf.mxu0
    %v1565 = vadd.f32 0.0, %v1564
    %v1566 = vpop.f32.mrf.mxu0
    %1567 = vdwg.mxu0
    %v1569 = vsel %vm118, %v1489, 0
    %1571 = vmatprep.subr.mxu0 0.0
    %1572 = vmatpush1.msra.mxu0 0.0
    %1573 = vmatprep.subr.mxu0 0.0
    %1574 = vmatpush1.msra.mxu0 0.0
    %1575 = vmatprep.subr.mxu0 0.0
    %1576 = vmatpush1.msra.mxu0 0.0
    %1577 = vmatprep.subr.mxu0 0.0
    %1578 = vmatpush1.msra.mxu0 0.0
    %1579 = vmatprep.subr.mxu0 0.0
    %1580 = vmatpush1.msra.mxu0 0.0
    %1581 = vmatprep.subr.mxu0 0.0
    %1582 = vmatpush1.msra.mxu0 0.0
    %1583 = vmatprep.subr.mxu0 0.0
    %1584 = vmatpush1.msra.mxu0 0.0
    %1585 = vmatprep.subr.mxu0 0.0
    %1586 = vmatpush1.msra.mxu0 0.0
    %1587 = vmatprep.subr.mxu0 0.0
    %1588 = vmatpush1.msra.mxu0 0.0
    %1589 = vmatprep.subr.mxu0 0.0
    %1590 = vmatpush1.msra.mxu0 0.0
    %1591 = vmatprep.subr.mxu0 0.0
    %1592 = vmatpush1.msra.mxu0 0.0
    %1593 = vmatprep.subr.mxu0 0.0
    %1594 = vmatpush1.msra.mxu0 0.0
    %1595 = vmatprep.subr.mxu0 0.0
    %1596 = vmatpush1.msra.mxu0 %v1493
    %1597 = vmatprep.subr.mxu0 0.0
    %1598 = vmatpush1.msra.mxu0 %v1492
    %1599 = vmatprep.subr.mxu0 0.0
    %1600 = vmatpush1.msra.mxu0 %v1491
    %1601 = vmatprep.subr.mxu0 0.0
    %1602 = vmatpush1.msra.mxu0 %v1490
    %1603 = vmatprep.subr.mxu0 0.0
    %1604 = vmatpush2.msra.mxu0 0.0
    %1605 = vmatprep.subr.mxu0 0.0
    %1606 = vmatpush2.msra.mxu0 0.0
    %1607 = vmatprep.subr.mxu0 0.0
    %1608 = vmatpush2.msra.mxu0 0.0
    %1609 = vmatprep.subr.mxu0 0.0
    %1610 = vmatpush2.msra.mxu0 0.0
    %1611 = vmatprep.subr.mxu0 0.0
    %1612 = vmatpush2.msra.mxu0 0.0
    %1613 = vmatprep.subr.mxu0 0.0
    %1614 = vmatpush2.msra.mxu0 0.0
    %1615 = vmatprep.subr.mxu0 0.0
    %1616 = vmatpush2.msra.mxu0 0.0
    %1617 = vmatprep.subr.mxu0 0.0
    %1618 = vmatpush2.msra.mxu0 0.0
    %1619 = vmatprep.subr.mxu0 0.0
    %1620 = vmatpush2.msra.mxu0 0.0
    %1621 = vmatprep.subr.mxu0 0.0
    %1622 = vmatpush2.msra.mxu0 0.0
    %1623 = vmatprep.subr.mxu0 0.0
    %1624 = vmatpush2.msra.mxu0 0.0
    %1625 = vmatprep.subr.mxu0 0.0
    %1626 = vmatpush2.msra.mxu0 0.0
    %1627 = vmatprep.subr.mxu0 0.0
    %1628 = vmatpush2.msra.mxu0 0.0
    %1629 = vmatprep.subr.mxu0 0.0
    %1630 = vmatpush2.msra.mxu0 0.0
    %1631 = vmatprep.subr.mxu0 0.0
    %1632 = vmatpush2.msra.mxu0 0.0
    %1633 = vmatprep.subr.mxu0 0.0
    %1634 = vmatpush2.msra.mxu0 0.0
    %1635 = vmatprep.mubr.f32.mxu0 0.0
    %1636 = vmatmul.mubr.f32.gmra.mxu0 %v1569
    %v1637 = vpop.f32.mrf.mxu0
    %v1638 = vadd.f32 %v1565, %v1637
    %v1639 = vpop.f32.mrf.mxu0
    %1640 = vdwg.mxu0
    %v1641 = vld [vmem:[%s6] sm:$0x1]
    %v1642 = vadd.f32 %v1638, %v1641
    %v1643 = vsel %vm267, %v1642, -inf
    %1644 = vmax.xlane.f32.xlu0 %v1643
    %v1645 = vpop.xlane.xlu0 %1644
    %v1646 = vsub.f32 %v1642, %v1645
    %v1647 = vmul.f32 %v1646, 1.442695
    %v1648 = vpow.pop %v1647
    %v1649 = vsel %vm267, %v1648, 0.0
    %1650 = vadd.xlane.f32.xlu0 %v1649
    %v1651 = vpop.xlane.xlu0 %1650
    %v1652 = vrcp.pop %v1651
    %v1653 = vmul.f32 %v1648, %v1652
    %v1654 = vld [vmem:[#allocation4] sm:$0xff]
    %v1655 = vld [vmem:[#allocation4 + $0x8] sm:$0x3]
    %v1657 = vsel %vm281, %v1653, 0
    %v1660 = vsel %vm285, %v1655, 0
    %1662 = vmatprep.subr.mxu0 0.0
    %1663 = vmatpush1.msra.mxu0 0.0
    %1664 = vmatprep.subr.mxu0 0.0
    %1665 = vmatpush1.msra.mxu0 0.0
    %1666 = vmatprep.subr.mxu0 0.0
    %1667 = vmatpush1.msra.mxu0 0.0
    %1668 = vmatprep.subr.mxu0 0.0
    %1669 = vmatpush1.msra.mxu0 0.0
    %1670 = vmatprep.subr.mxu0 0.0
    %1671 = vmatpush1.msra.mxu0 0.0
    %1672 = vmatprep.subr.mxu0 0.0
    %1673 = vmatpush1.msra.mxu0 0.0
    %1674 = vmatprep.subr.mxu0 0.0
    %1675 = vmatpush1.msra.mxu0 0.0
    %1676 = vmatprep.subr.mxu0 0.0
    %1677 = vmatpush1.msra.mxu0 0.0
    %1678 = vmatprep.subr.mxu0 0.0
    %1679 = vmatpush1.msra.mxu0 0.0
    %1680 = vmatprep.subr.mxu0 0.0
    %1681 = vmatpush1.msra.mxu0 0.0
    %1682 = vmatprep.subr.mxu0 0.0
    %1683 = vmatpush1.msra.mxu0 0.0
    %1684 = vmatprep.subr.mxu0 0.0
    %1685 = vmatpush1.msra.mxu0 0.0
    %1686 = vmatprep.subr.mxu0 0.0
    %1687 = vmatpush1.msra.mxu0 0.0
    %1688 = vmatprep.subr.mxu0 0.0
    %1689 = vmatpush1.msra.mxu0 0.0
    %1690 = vmatprep.subr.mxu0 0.0
    %1691 = vmatpush1.msra.mxu0 %v1660
    %1692 = vmatprep.subr.mxu0 0.0
    %1693 = vmatpush1.msra.mxu0 %v1654
    %1694 = vmatprep.subr.mxu0 0.0
    %1695 = vmatpush2.msra.mxu0 0.0
    %1696 = vmatprep.subr.mxu0 0.0
    %1697 = vmatpush2.msra.mxu0 0.0
    %1698 = vmatprep.subr.mxu0 0.0
    %1699 = vmatpush2.msra.mxu0 0.0
    %1700 = vmatprep.subr.mxu0 0.0
    %1701 = vmatpush2.msra.mxu0 0.0
    %1702 = vmatprep.subr.mxu0 0.0
    %1703 = vmatpush2.msra.mxu0 0.0
    %1704 = vmatprep.subr.mxu0 0.0
    %1705 = vmatpush2.msra.mxu0 0.0
    %1706 = vmatprep.subr.mxu0 0.0
    %1707 = vmatpush2.msra.mxu0 0.0
    %1708 = vmatprep.subr.mxu0 0.0
    %1709 = vmatpush2.msra.mxu0 0.0
    %1710 = vmatprep.subr.mxu0 0.0
    %1711 = vmatpush2.msra.mxu0 0.0
    %1712 = vmatprep.subr.mxu0 0.0
    %1713 = vmatpush2.msra.mxu0 0.0
    %1714 = vmatprep.subr.mxu0 0.0
    %1715 = vmatpush2.msra.mxu0 0.0
    %1716 = vmatprep.subr.mxu0 0.0
    %1717 = vmatpush2.msra.mxu0 0.0
    %1718 = vmatprep.subr.mxu0 0.0
    %1719 = vmatpush2.msra.mxu0 0.0
    %1720 = vmatprep.subr.mxu0 0.0
    %1721 = vmatpush2.msra.mxu0 0.0
    %1722 = vmatprep.subr.mxu0 0.0
    %1723 = vmatpush2.msra.mxu0 0.0
    %1724 = vmatprep.subr.mxu0 0.0
    %1725 = vmatpush2.msra.mxu0 0.0
    %1726 = vmatprep.mubr.f32.mxu0 0.0
    %1727 = vmatmul.mubr.f32.gmra.mxu0 %v1657
    %v1728 = vpop.f32.mrf.mxu0
    %v1729 = vadd.f32 0.0, %v1728
    %v1730 = vpop.f32.mrf.mxu0
    %1731 = vdwg.mxu0
    %v1732 = vld [vmem:[%s7] sm:$0xff]
    %v1733 = vld [vmem:[%s7 + $0x8] sm:$0xff]
    %v1734 = vld [vmem:[%s7 + $0x10] sm:$0xff]
    %v1735 = vld [vmem:[%s7 + $0x18] sm:$0xff]
    %v1736 = vld [vmem:[%s8] sm:$0xff]
    %v1737 = vld [vmem:[%s8 + $0x8] sm:$0xff]
    %v1738 = vld [vmem:[%s8 + $0x10] sm:$0xff]
    %v1739 = vld [vmem:[%s8 + $0x18] sm:$0xff]
    %v1741 = vsel %vm118, %v1729, 0
    %1743 = vmatprep.subr.mxu0 0.0
    %1744 = vmatpush1.msra.mxu0 0.0
    %1745 = vmatprep.subr.mxu0 0.0
    %1746 = vmatpush1.msra.mxu0 0.0
    %1747 = vmatprep.subr.mxu0 0.0
    %1748 = vmatpush1.msra.mxu0 0.0
    %1749 = vmatprep.subr.mxu0 0.0
    %1750 = vmatpush1.msra.mxu0 0.0
    %1751 = vmatprep.subr.mxu0 0.0
    %1752 = vmatpush1.msra.mxu0 0.0
    %1753 = vmatprep.subr.mxu0 0.0
    %1754 = vmatpush1.msra.mxu0 0.0
    %1755 = vmatprep.subr.mxu0 0.0
    %1756 = vmatpush1.msra.mxu0 0.0
    %1757 = vmatprep.subr.mxu0 0.0
    %1758 = vmatpush1.msra.mxu0 0.0
    %1759 = vmatprep.subr.mxu0 0.0
    %1760 = vmatpush1.msra.mxu0 0.0
    %1761 = vmatprep.subr.mxu0 0.0
    %1762 = vmatpush1.msra.mxu0 0.0
    %1763 = vmatprep.subr.mxu0 0.0
    %1764 = vmatpush1.msra.mxu0 0.0
    %1765 = vmatprep.subr.mxu0 0.0
    %1766 = vmatpush1.msra.mxu0 0.0
    %1767 = vmatprep.subr.mxu0 0.0
    %1768 = vmatpush1.msra.mxu0 %v1739
    %1769 = vmatprep.subr.mxu0 0.0
    %1770 = vmatpush1.msra.mxu0 %v1738
    %1771 = vmatprep.subr.mxu0 0.0
    %1772 = vmatpush1.msra.mxu0 %v1737
    %1773 = vmatprep.subr.mxu0 0.0
    %1774 = vmatpush1.msra.mxu0 %v1736
    %1775 = vmatprep.subr.mxu0 0.0
    %1776 = vmatpush2.msra.mxu0 0.0
    %1777 = vmatprep.subr.mxu0 0.0
    %1778 = vmatpush2.msra.mxu0 0.0
    %1779 = vmatprep.subr.mxu0 0.0
    %1780 = vmatpush2.msra.mxu0 0.0
    %1781 = vmatprep.subr.mxu0 0.0
    %1782 = vmatpush2.msra.mxu0 0.0
    %1783 = vmatprep.subr.mxu0 0.0
    %1784 = vmatpush2.msra.mxu0 0.0
    %1785 = vmatprep.subr.mxu0 0.0
    %1786 = vmatpush2.msra.mxu0 0.0
    %1787 = vmatprep.subr.mxu0 0.0
    %1788 = vmatpush2.msra.mxu0 0.0
    %1789 = vmatprep.subr.mxu0 0.0
    %1790 = vmatpush2.msra.mxu0 0.0
    %1791 = vmatprep.subr.mxu0 0.0
    %1792 = vmatpush2.msra.mxu0 0.0
    %1793 = vmatprep.subr.mxu0 0.0
    %1794 = vmatpush2.msra.mxu0 0.0
    %1795 = vmatprep.subr.mxu0 0.0
    %1796 = vmatpush2.msra.mxu0 0.0
    %1797 = vmatprep.subr.mxu0 0.0
    %1798 = vmatpush2.msra.mxu0 0.0
    %1799 = vmatprep.subr.mxu0 0.0
    %1800 = vmatpush2.msra.mxu0 0.0
    %1801 = vmatprep.subr.mxu0 0.0
    %1802 = vmatpush2.msra.mxu0 0.0
    %1803 = vmatprep.subr.mxu0 0.0
    %1804 = vmatpush2.msra.mxu0 0.0
    %1805 = vmatprep.subr.mxu0 0.0
    %1806 = vmatpush2.msra.mxu0 0.0
    %1807 = vmatprep.mubr.f32.mxu0 0.0
    %1808 = vmatmul.mubr.f32.gmra.mxu0 %v1741
    %v1809 = vpop.f32.mrf.mxu0
    %v1810 = vadd.f32 0.0, %v1809
    %v1811 = vpop.f32.mrf.mxu0
    %1812 = vdwg.mxu0
    %1813 = vmatprep.subr.mxu0 0.0
    %1814 = vmatpush1.msra.mxu0 0.0
    %1815 = vmatprep.subr.mxu0 0.0
    %1816 = vmatpush1.msra.mxu0 0.0
    %1817 = vmatprep.subr.mxu0 0.0
    %1818 = vmatpush1.msra.mxu0 0.0
    %1819 = vmatprep.subr.mxu0 0.0
    %1820 = vmatpush1.msra.mxu0 0.0
    %1821 = vmatprep.subr.mxu0 0.0
    %1822 = vmatpush1.msra.mxu0 0.0
    %1823 = vmatprep.subr.mxu0 0.0
    %1824 = vmatpush1.msra.mxu0 0.0
    %1825 = vmatprep.subr.mxu0 0.0
    %1826 = vmatpush1.msra.mxu0 0.0
    %1827 = vmatprep.subr.mxu0 0.0
    %1828 = vmatpush1.msra.mxu0 0.0
    %1829 = vmatprep.subr.mxu0 0.0
    %1830 = vmatpush1.msra.mxu0 0.0
    %1831 = vmatprep.subr.mxu0 0.0
    %1832 = vmatpush1.msra.mxu0 0.0
    %1833 = vmatprep.subr.mxu0 0.0
    %1834 = vmatpush1.msra.mxu0 0.0
    %1835 = vmatprep.subr.mxu0 0.0
    %1836 = vmatpush1.msra.mxu0 0.0
    %1837 = vmatprep.subr.mxu0 0.0
    %1838 = vmatpush1.msra.mxu0 %v1735
    %1839 = vmatprep.subr.mxu0 0.0
    %1840 = vmatpush1.msra.mxu0 %v1734
    %1841 = vmatprep.subr.mxu0 0.0
    %1842 = vmatpush1.msra.mxu0 %v1733
    %1843 = vmatprep.subr.mxu0 0.0
    %1844 = vmatpush1.msra.mxu0 %v1732
    %1845 = vmatprep.subr.mxu0 0.0
    %1846 = vmatpush2.msra.mxu0 0.0
    %1847 = vmatprep.subr.mxu0 0.0
    %1848 = vmatpush2.msra.mxu0 0.0
    %1849 = vmatprep.subr.mxu0 0.0
    %1850 = vmatpush2.msra.mxu0 0.0
    %1851 = vmatprep.subr.mxu0 0.0
    %1852 = vmatpush2.msra.mxu0 0.0
    %1853 = vmatprep.subr.mxu0 0.0
    %1854 = vmatpush2.msra.mxu0 0.0
    %1855 = vmatprep.subr.mxu0 0.0
    %1856 = vmatpush2.msra.mxu0 0.0
    %1857 = vmatprep.subr.mxu0 0.0
    %1858 = vmatpush2.msra.mxu0 0.0
    %1859 = vmatprep.subr.mxu0 0.0
    %1860 = vmatpush2.msra.mxu0 0.0
    %1861 = vmatprep.subr.mxu0 0.0
    %1862 = vmatpush2.msra.mxu0 0.0
    %1863 = vmatprep.subr.mxu0 0.0
    %1864 = vmatpush2.msra.mxu0 0.0
    %1865 = vmatprep.subr.mxu0 0.0
    %1866 = vmatpush2.msra.mxu0 0.0
    %1867 = vmatprep.subr.mxu0 0.0
    %1868 = vmatpush2.msra.mxu0 0.0
    %1869 = vmatprep.subr.mxu0 0.0
    %1870 = vmatpush2.msra.mxu0 0.0
    %1871 = vmatprep.subr.mxu0 0.0
    %1872 = vmatpush2.msra.mxu0 0.0
    %1873 = vmatprep.subr.mxu0 0.0
    %1874 = vmatpush2.msra.mxu0 0.0
    %1875 = vmatprep.subr.mxu0 0.0
    %1876 = vmatpush2.msra.mxu0 0.0
    %1877 = vmatprep.mubr.f32.mxu0 0.0
    %1878 = vmatmul.mubr.f32.gmra.mxu0 %v1569
    %v1879 = vpop.f32.mrf.mxu0
    %v1880 = vadd.f32 %v1810, %v1879
    %v1881 = vpop.f32.mrf.mxu0
    %1882 = vdwg.mxu0
    %v1883 = vld [vmem:[#allocation6] sm:$0x1]
    %v1884 = vadd.f32 %v1880, %v1883
    %v1885 = vmax.f32 %v1884, 0.0
    %v1886 = vld [vmem:[%s10] sm:$0xff]
    %v1887 = vld [vmem:[%s10 + $0x8] sm:$0xff]
    %v1888 = vld [vmem:[%s10 + $0x10] sm:$0xff]
    %v1889 = vld [vmem:[%s10 + $0x18] sm:$0xff]
    %v1890 = vld [vmem:[#allocation8] sm:$0x1]
    %v1892 = vsel %vm118, %v1885, 0
    %1894 = vmatprep.subr.mxu0 0.0
    %1895 = vmatpush1.msra.mxu0 0.0
    %1896 = vmatprep.subr.mxu0 0.0
    %1897 = vmatpush1.msra.mxu0 0.0
    %1898 = vmatprep.subr.mxu0 0.0
    %1899 = vmatpush1.msra.mxu0 0.0
    %1900 = vmatprep.subr.mxu0 0.0
    %1901 = vmatpush1.msra.mxu0 0.0
    %1902 = vmatprep.subr.mxu0 0.0
    %1903 = vmatpush1.msra.mxu0 0.0
    %1904 = vmatprep.subr.mxu0 0.0
    %1905 = vmatpush1.msra.mxu0 0.0
    %1906 = vmatprep.subr.mxu0 0.0
    %1907 = vmatpush1.msra.mxu0 0.0
    %1908 = vmatprep.subr.mxu0 0.0
    %1909 = vmatpush1.msra.mxu0 0.0
    %1910 = vmatprep.subr.mxu0 0.0
    %1911 = vmatpush1.msra.mxu0 0.0
    %1912 = vmatprep.subr.mxu0 0.0
    %1913 = vmatpush1.msra.mxu0 0.0
    %1914 = vmatprep.subr.mxu0 0.0
    %1915 = vmatpush1.msra.mxu0 0.0
    %1916 = vmatprep.subr.mxu0 0.0
    %1917 = vmatpush1.msra.mxu0 0.0
    %1918 = vmatprep.subr.mxu0 0.0
    %1919 = vmatpush1.msra.mxu0 %v1889
    %1920 = vmatprep.subr.mxu0 0.0
    %1921 = vmatpush1.msra.mxu0 %v1888
    %1922 = vmatprep.subr.mxu0 0.0
    %1923 = vmatpush1.msra.mxu0 %v1887
    %1924 = vmatprep.subr.mxu0 0.0
    %1925 = vmatpush1.msra.mxu0 %v1886
    %1926 = vmatprep.subr.mxu0 0.0
    %1927 = vmatpush2.msra.mxu0 0.0
    %1928 = vmatprep.subr.mxu0 0.0
    %1929 = vmatpush2.msra.mxu0 0.0
    %1930 = vmatprep.subr.mxu0 0.0
    %1931 = vmatpush2.msra.mxu0 0.0
    %1932 = vmatprep.subr.mxu0 0.0
    %1933 = vmatpush2.msra.mxu0 0.0
    %1934 = vmatprep.subr.mxu0 0.0
    %1935 = vmatpush2.msra.mxu0 0.0
    %1936 = vmatprep.subr.mxu0 0.0
    %1937 = vmatpush2.msra.mxu0 0.0
    %1938 = vmatprep.subr.mxu0 0.0
    %1939 = vmatpush2.msra.mxu0 0.0
    %1940 = vmatprep.subr.mxu0 0.0
    %1941 = vmatpush2.msra.mxu0 0.0
    %1942 = vmatprep.subr.mxu0 0.0
    %1943 = vmatpush2.msra.mxu0 0.0
    %1944 = vmatprep.subr.mxu0 0.0
    %1945 = vmatpush2.msra.mxu0 0.0
    %1946 = vmatprep.subr.mxu0 0.0
    %1947 = vmatpush2.msra.mxu0 0.0
    %1948 = vmatprep.subr.mxu0 0.0
    %1949 = vmatpush2.msra.mxu0 0.0
    %1950 = vmatprep.subr.mxu0 0.0
    %1951 = vmatpush2.msra.mxu0 0.0
    %1952 = vmatprep.subr.mxu0 0.0
    %1953 = vmatpush2.msra.mxu0 0.0
    %1954 = vmatprep.subr.mxu0 0.0
    %1955 = vmatpush2.msra.mxu0 0.0
    %1956 = vmatprep.subr.mxu0 0.0
    %1957 = vmatpush2.msra.mxu0 0.0
    %1958 = vmatprep.mubr.f32.mxu0 0.0
    %1959 = vmatmul.mubr.f32.gmra.mxu0 %v1892
    %v1960 = vpop.f32.mrf.mxu0
    %v1961 = vadd.f32 %v1890, %v1960
    %v1962 = vpop.f32.mrf.mxu0
    %1963 = vdwg.mxu0
    %v1964 = vld [vmem:[%s11] sm:$0xff]
    %v1965 = vld [vmem:[%s11 + $0x8] sm:$0xff]
    %v1966 = vld [vmem:[%s11 + $0x10] sm:$0xff]
    %v1967 = vld [vmem:[%s11 + $0x18] sm:$0xff]
    %v1968 = vld [vmem:[#allocation9] sm:$0x1]
    %1969 = vmatprep.subr.mxu0 0.0
    %1970 = vmatpush1.msra.mxu0 0.0
    %1971 = vmatprep.subr.mxu0 0.0
    %1972 = vmatpush1.msra.mxu0 0.0
    %1973 = vmatprep.subr.mxu0 0.0
    %1974 = vmatpush1.msra.mxu0 0.0
    %1975 = vmatprep.subr.mxu0 0.0
    %1976 = vmatpush1.msra.mxu0 0.0
    %1977 = vmatprep.subr.mxu0 0.0
    %1978 = vmatpush1.msra.mxu0 0.0
    %1979 = vmatprep.subr.mxu0 0.0
    %1980 = vmatpush1.msra.mxu0 0.0
    %1981 = vmatprep.subr.mxu0 0.0
    %1982 = vmatpush1.msra.mxu0 0.0
    %1983 = vmatprep.subr.mxu0 0.0
    %1984 = vmatpush1.msra.mxu0 0.0
    %1985 = vmatprep.subr.mxu0 0.0
    %1986 = vmatpush1.msra.mxu0 0.0
    %1987 = vmatprep.subr.mxu0 0.0
    %1988 = vmatpush1.msra.mxu0 0.0
    %1989 = vmatprep.subr.mxu0 0.0
    %1990 = vmatpush1.msra.mxu0 0.0
    %1991 = vmatprep.subr.mxu0 0.0
    %1992 = vmatpush1.msra.mxu0 0.0
    %1993 = vmatprep.subr.mxu0 0.0
    %1994 = vmatpush1.msra.mxu0 %v1967
    %1995 = vmatprep.subr.mxu0 0.0
    %1996 = vmatpush1.msra.mxu0 %v1966
    %1997 = vmatprep.subr.mxu0 0.0
    %1998 = vmatpush1.msra.mxu0 %v1965
    %1999 = vmatprep.subr.mxu0 0.0
    %2000 = vmatpush1.msra.mxu0 %v1964
    %2001 = vmatprep.subr.mxu0 0.0
    %2002 = vmatpush2.msra.mxu0 0.0
    %2003 = vmatprep.subr.mxu0 0.0
    %2004 = vmatpush2.msra.mxu0 0.0
    %2005 = vmatprep.subr.mxu0 0.0
    %2006 = vmatpush2.msra.mxu0 0.0
    %2007 = vmatprep.subr.mxu0 0.0
    %2008 = vmatpush2.msra.mxu0 0.0
    %2009 = vmatprep.subr.mxu0 0.0
    %2010 = vmatpush2.msra.mxu0 0.0
    %2011 = vmatprep.subr.mxu0 0.0
    %2012 = vmatpush2.msra.mxu0 0.0
    %2013 = vmatprep.subr.mxu0 0.0
    %2014 = vmatpush2.msra.mxu0 0.0
    %2015 = vmatprep.subr.mxu0 0.0
    %2016 = vmatpush2.msra.mxu0 0.0
    %2017 = vmatprep.subr.mxu0 0.0
    %2018 = vmatpush2.msra.mxu0 0.0
    %2019 = vmatprep.subr.mxu0 0.0
    %2020 = vmatpush2.msra.mxu0 0.0
    %2021 = vmatprep.subr.mxu0 0.0
    %2022 = vmatpush2.msra.mxu0 0.0
    %2023 = vmatprep.subr.mxu0 0.0
    %2024 = vmatpush2.msra.mxu0 0.0
    %2025 = vmatprep.subr.mxu0 0.0
    %2026 = vmatpush2.msra.mxu0 0.0
    %2027 = vmatprep.subr.mxu0 0.0
    %2028 = vmatpush2.msra.mxu0 0.0
    %2029 = vmatprep.subr.mxu0 0.0
    %2030 = vmatpush2.msra.mxu0 0.0
    %2031 = vmatprep.subr.mxu0 0.0
    %2032 = vmatpush2.msra.mxu0 0.0
    %2033 = vmatprep.mubr.f32.mxu0 0.0
    %2034 = vmatmul.mubr.f32.gmra.mxu0 %v1392
    %v2035 = vpop.f32.mrf.mxu0
    %v2036 = vadd.f32 %v1968, %v2035
    %v2037 = vpop.f32.mrf.mxu0
    %2038 = vdwg.mxu0
    %v2039 = vadd.f32 %v1961, %v2036
    %v2040 = vxor.u32 %v2039, 2147483648
    %v2041 = vmul.f32 %v2040, 1.442695
    %v2042 = vpow.pop %v2041
    %v2043 = vadd.f32 %v2042, 1.0
    %v2044 = vrcp.pop %v2043
    %v2045 = vmul.f32 1.0, %v2044
    %2047 = vrot.lane.b32.xlu0 %v2036, 64
    %v2048 = vpop.permute.xlu0 %2047
    %v2050 = vmul.f32 %v2045, %v2048
    %2052 = vrot.lane.b32.xlu0 %v2050, 64
    %v2053 = vpop.permute.xlu0 %2052
    %v2055 = vadd.f32 %v1961, %v2053
    %v2056 = vtanh.pop %v2055
    %v2057 = vsub.f32 1.0, %v2045
    %2059 = vrot.lane.b32.xlu0 %v2056, 96
    %v2060 = vpop.permute.xlu0 %2059
    %v2062 = vmul.f32 %v2057, %v2060
    %v2063 = vmul.f32 %v2045, %v1383
    %v2064 = vadd.f32 %v2062, %v2063
    %v2065 = vld [vmem:[%s14] sm:$0xff]
    %v2066 = vld [vmem:[%s14 + $0x8] sm:$0xff]
    %v2067 = vld [vmem:[%s14 + $0x10] sm:$0xff]
    %v2068 = vld [vmem:[%s14 + $0x18] sm:$0xff]
    %v2069 = vld [vmem:[%s15] sm:$0x1]
    %2071 = vrot.lane.b32.xlu0 %v2064, 96
    %v2072 = vpop.permute.xlu0 %2071
    %v2073 = vsel %vm118, %v2072, 0
    %2075 = vmatprep.subr.mxu0 0.0
    %2076 = vmatpush1.msra.mxu0 0.0
    %2077 = vmatprep.subr.mxu0 0.0
    %2078 = vmatpush1.msra.mxu0 0.0
    %2079 = vmatprep.subr.mxu0 0.0
    %2080 = vmatpush1.msra.mxu0 0.0
    %2081 = vmatprep.subr.mxu0 0.0
    %2082 = vmatpush1.msra.mxu0 0.0
    %2083 = vmatprep.subr.mxu0 0.0
    %2084 = vmatpush1.msra.mxu0 0.0
    %2085 = vmatprep.subr.mxu0 0.0
    %2086 = vmatpush1.msra.mxu0 0.0
    %2087 = vmatprep.subr.mxu0 0.0
    %2088 = vmatpush1.msra.mxu0 0.0
    %2089 = vmatprep.subr.mxu0 0.0
    %2090 = vmatpush1.msra.mxu0 0.0
    %2091 = vmatprep.subr.mxu0 0.0
    %2092 = vmatpush1.msra.mxu0 0.0
    %2093 = vmatprep.subr.mxu0 0.0
    %2094 = vmatpush1.msra.mxu0 0.0
    %2095 = vmatprep.subr.mxu0 0.0
    %2096 = vmatpush1.msra.mxu0 0.0
    %2097 = vmatprep.subr.mxu0 0.0
    %2098 = vmatpush1.msra.mxu0 0.0
    %2099 = vmatprep.subr.mxu0 0.0
    %2100 = vmatpush1.msra.mxu0 %v2068
    %2101 = vmatprep.subr.mxu0 0.0
    %2102 = vmatpush1.msra.mxu0 %v2067
    %2103 = vmatprep.subr.mxu0 0.0
    %2104 = vmatpush1.msra.mxu0 %v2066
    %2105 = vmatprep.subr.mxu0 0.0
    %2106 = vmatpush1.msra.mxu0 %v2065
    %2107 = vmatprep.subr.mxu0 0.0
    %2108 = vmatpush2.msra.mxu0 0.0
    %2109 = vmatprep.subr.mxu0 0.0
    %2110 = vmatpush2.msra.mxu0 0.0
    %2111 = vmatprep.subr.mxu0 0.0
    %2112 = vmatpush2.msra.mxu0 0.0
    %2113 = vmatprep.subr.mxu0 0.0
    %2114 = vmatpush2.msra.mxu0 0.0
    %2115 = vmatprep.subr.mxu0 0.0
    %2116 = vmatpush2.msra.mxu0 0.0
    %2117 = vmatprep.subr.mxu0 0.0
    %2118 = vmatpush2.msra.mxu0 0.0
    %2119 = vmatprep.subr.mxu0 0.0
    %2120 = vmatpush2.msra.mxu0 0.0
    %2121 = vmatprep.subr.mxu0 0.0
    %2122 = vmatpush2.msra.mxu0 0.0
    %2123 = vmatprep.subr.mxu0 0.0
    %2124 = vmatpush2.msra.mxu0 0.0
    %2125 = vmatprep.subr.mxu0 0.0
    %2126 = vmatpush2.msra.mxu0 0.0
    %2127 = vmatprep.subr.mxu0 0.0
    %2128 = vmatpush2.msra.mxu0 0.0
    %2129 = vmatprep.subr.mxu0 0.0
    %2130 = vmatpush2.msra.mxu0 0.0
    %2131 = vmatprep.subr.mxu0 0.0
    %2132 = vmatpush2.msra.mxu0 0.0
    %2133 = vmatprep.subr.mxu0 0.0
    %2134 = vmatpush2.msra.mxu0 0.0
    %2135 = vmatprep.subr.mxu0 0.0
    %2136 = vmatpush2.msra.mxu0 0.0
    %2137 = vmatprep.subr.mxu0 0.0
    %2138 = vmatpush2.msra.mxu0 0.0
    %2139 = vmatprep.mubr.f32.mxu0 0.0
    %2140 = vmatmul.mubr.f32.gmra.mxu0 %v2073
    %v2141 = vpop.f32.mrf.mxu0
    %v2142 = vadd.f32 %v2069, %v2141
    %v2143 = vpop.f32.mrf.mxu0
    %2144 = vdwg.mxu0
    %v2145 = vsel %vm779, %v2142, -inf
    %2146 = vmax.xlane.f32.xlu0 %v2145
    %v2147 = vpop.xlane.xlu0 %2146
    %v2148 = vsub.f32 %v2142, %v2147
    %v2149 = vmul.f32 %v2148, 1.442695
    %v2150 = vpow.pop %v2149
    %v2151 = vsel %vm779, %v2150, 0.0
    %2152 = vadd.xlane.f32.xlu0 %v2151
    %v2153 = vpop.xlane.xlu0 %2152
    %v2154 = vlog2.pop %v2153
    %v2155 = vmul.f32 %v2154, 0.6931472
    %v2156 = vadd.f32 %v2155, %v2147
    %v2157 = vsub.f32 %v2142, %v2156
    %2158 = vrot.lane.b32.xlu0 %v2064, 16
    %v2159 = vpop.permute.xlu0 %2158
    %2161 = vrot.lane.b32.xlu0 %v1653, 80
    %v2162 = vpop.permute.xlu0 %2161
    %v2164 = vsel %vm799, %v2157, %v2159
    %v2165 = vsel %vm801, %v2164, %v2162
    %v2166 = vsel %vm803, %v2165, 0.0
    %2167 = vst [vmem:[%s16 + $0x2] sm:$0x1] %v2166
    %s2168 = sld [smem:[#allocation3 + $0x3]]
    %s2169 = scalar_lea.vmem %s1, %s2168
    %v2170 = vld [vmem:[%s2169] sm:$0x1]
    %v2171 = vld [vmem:[%s4] sm:$0xff]
    %v2172 = vld [vmem:[%s4 + $0x8] sm:$0xff]
    %v2173 = vld [vmem:[%s4 + $0x10] sm:$0xff]
    %v2174 = vld [vmem:[%s4 + $0x18] sm:$0xff]
    %v2175 = vld [vmem:[%s5] sm:$0xff]
    %v2176 = vld [vmem:[%s5 + $0x8] sm:$0xff]
    %v2177 = vld [vmem:[%s5 + $0x10] sm:$0xff]
    %v2178 = vld [vmem:[%s5 + $0x18] sm:$0xff]
    %2179 = vmatprep.subr.mxu0 0.0
    %2180 = vmatpush1.msra.mxu0 0.0
    %2181 = vmatprep.subr.mxu0 0.0
    %2182 = vmatpush1.msra.mxu0 0.0
    %2183 = vmatprep.subr.mxu0 0.0
    %2184 = vmatpush1.msra.mxu0 0.0
    %2185 = vmatprep.subr.mxu0 0.0
    %2186 = vmatpush1.msra.mxu0 0.0
    %2187 = vmatprep.subr.mxu0 0.0
    %2188 = vmatpush1.msra.mxu0 0.0
    %2189 = vmatprep.subr.mxu0 0.0
    %2190 = vmatpush1.msra.mxu0 0.0
    %2191 = vmatprep.subr.mxu0 0.0
    %2192 = vmatpush1.msra.mxu0 0.0
    %2193 = vmatprep.subr.mxu0 0.0
    %2194 = vmatpush1.msra.mxu0 0.0
    %2195 = vmatprep.subr.mxu0 0.0
    %2196 = vmatpush1.msra.mxu0 0.0
    %2197 = vmatprep.subr.mxu0 0.0
    %2198 = vmatpush1.msra.mxu0 0.0
    %2199 = vmatprep.subr.mxu0 0.0
    %2200 = vmatpush1.msra.mxu0 0.0
    %2201 = vmatprep.subr.mxu0 0.0
    %2202 = vmatpush1.msra.mxu0 0.0
    %2203 = vmatprep.subr.mxu0 0.0
    %2204 = vmatpush1.msra.mxu0 %v2178
    %2205 = vmatprep.subr.mxu0 0.0
    %2206 = vmatpush1.msra.mxu0 %v2177
    %2207 = vmatprep.subr.mxu0 0.0
    %2208 = vmatpush1.msra.mxu0 %v2176
    %2209 = vmatprep.subr.mxu0 0.0
    %2210 = vmatpush1.msra.mxu0 %v2175
    %2211 = vmatprep.subr.mxu0 0.0
    %2212 = vmatpush2.msra.mxu0 0.0
    %2213 = vmatprep.subr.mxu0 0.0
    %2214 = vmatpush2.msra.mxu0 0.0
    %2215 = vmatprep.subr.mxu0 0.0
    %2216 = vmatpush2.msra.mxu0 0.0
    %2217 = vmatprep.subr.mxu0 0.0
    %2218 = vmatpush2.msra.mxu0 0.0
    %2219 = vmatprep.subr.mxu0 0.0
    %2220 = vmatpush2.msra.mxu0 0.0
    %2221 = vmatprep.subr.mxu0 0.0
    %2222 = vmatpush2.msra.mxu0 0.0
    %2223 = vmatprep.subr.mxu0 0.0
    %2224 = vmatpush2.msra.mxu0 0.0
    %2225 = vmatprep.subr.mxu0 0.0
    %2226 = vmatpush2.msra.mxu0 0.0
    %2227 = vmatprep.subr.mxu0 0.0
    %2228 = vmatpush2.msra.mxu0 0.0
    %2229 = vmatprep.subr.mxu0 0.0
    %2230 = vmatpush2.msra.mxu0 0.0
    %2231 = vmatprep.subr.mxu0 0.0
    %2232 = vmatpush2.msra.mxu0 0.0
    %2233 = vmatprep.subr.mxu0 0.0
    %2234 = vmatpush2.msra.mxu0 0.0
    %2235 = vmatprep.subr.mxu0 0.0
    %2236 = vmatpush2.msra.mxu0 0.0
    %2237 = vmatprep.subr.mxu0 0.0
    %2238 = vmatpush2.msra.mxu0 0.0
    %2239 = vmatprep.subr.mxu0 0.0
    %2240 = vmatpush2.msra.mxu0 0.0
    %2241 = vmatprep.subr.mxu0 0.0
    %2242 = vmatpush2.msra.mxu0 0.0
    %2243 = vmatprep.mubr.f32.mxu0 0.0
    %2244 = vmatmul.mubr.f32.gmra.mxu0 %v2073
    %v2245 = vpop.f32.mrf.mxu0
    %v2246 = vadd.f32 0.0, %v2245
    %v2247 = vpop.f32.mrf.mxu0
    %2248 = vdwg.mxu0
    %v2250 = vsel %vm118, %v2170, 0
    %2252 = vmatprep.subr.mxu0 0.0
    %2253 = vmatpush1.msra.mxu0 0.0
    %2254 = vmatprep.subr.mxu0 0.0
    %2255 = vmatpush1.msra.mxu0 0.0
    %2256 = vmatprep.subr.mxu0 0.0
    %2257 = vmatpush1.msra.mxu0 0.0
    %2258 = vmatprep.subr.mxu0 0.0
    %2259 = vmatpush1.msra.mxu0 0.0
    %2260 = vmatprep.subr.mxu0 0.0
    %2261 = vmatpush1.msra.mxu0 0.0
    %2262 = vmatprep.subr.mxu0 0.0
    %2263 = vmatpush1.msra.mxu0 0.0
    %2264 = vmatprep.subr.mxu0 0.0
    %2265 = vmatpush1.msra.mxu0 0.0
    %2266 = vmatprep.subr.mxu0 0.0
    %2267 = vmatpush1.msra.mxu0 0.0
    %2268 = vmatprep.subr.mxu0 0.0
    %2269 = vmatpush1.msra.mxu0 0.0
    %2270 = vmatprep.subr.mxu0 0.0
    %2271 = vmatpush1.msra.mxu0 0.0
    %2272 = vmatprep.subr.mxu0 0.0
    %2273 = vmatpush1.msra.mxu0 0.0
    %2274 = vmatprep.subr.mxu0 0.0
    %2275 = vmatpush1.msra.mxu0 0.0
    %2276 = vmatprep.subr.mxu0 0.0
    %2277 = vmatpush1.msra.mxu0 %v2174
    %2278 = vmatprep.subr.mxu0 0.0
    %2279 = vmatpush1.msra.mxu0 %v2173
    %2280 = vmatprep.subr.mxu0 0.0
    %2281 = vmatpush1.msra.mxu0 %v2172
    %2282 = vmatprep.subr.mxu0 0.0
    %2283 = vmatpush1.msra.mxu0 %v2171
    %2284 = vmatprep.subr.mxu0 0.0
    %2285 = vmatpush2.msra.mxu0 0.0
    %2286 = vmatprep.subr.mxu0 0.0
    %2287 = vmatpush2.msra.mxu0 0.0
    %2288 = vmatprep.subr.mxu0 0.0
    %2289 = vmatpush2.msra.mxu0 0.0
    %2290 = vmatprep.subr.mxu0 0.0
    %2291 = vmatpush2.msra.mxu0 0.0
    %2292 = vmatprep.subr.mxu0 0.0
    %2293 = vmatpush2.msra.mxu0 0.0
    %2294 = vmatprep.subr.mxu0 0.0
    %2295 = vmatpush2.msra.mxu0 0.0
    %2296 = vmatprep.subr.mxu0 0.0
    %2297 = vmatpush2.msra.mxu0 0.0
    %2298 = vmatprep.subr.mxu0 0.0
    %2299 = vmatpush2.msra.mxu0 0.0
    %2300 = vmatprep.subr.mxu0 0.0
    %2301 = vmatpush2.msra.mxu0 0.0
    %2302 = vmatprep.subr.mxu0 0.0
    %2303 = vmatpush2.msra.mxu0 0.0
    %2304 = vmatprep.subr.mxu0 0.0
    %2305 = vmatpush2.msra.mxu0 0.0
    %2306 = vmatprep.subr.mxu0 0.0
    %2307 = vmatpush2.msra.mxu0 0.0
    %2308 = vmatprep.subr.mxu0 0.0
    %2309 = vmatpush2.msra.mxu0 0.0
    %2310 = vmatprep.subr.mxu0 0.0
    %2311 = vmatpush2.msra.mxu0 0.0
    %2312 = vmatprep.subr.mxu0 0.0
    %2313 = vmatpush2.msra.mxu0 0.0
    %2314 = vmatprep.subr.mxu0 0.0
    %2315 = vmatpush2.msra.mxu0 0.0
    %2316 = vmatprep.mubr.f32.mxu0 0.0
    %2317 = vmatmul.mubr.f32.gmra.mxu0 %v2250
    %v2318 = vpop.f32.mrf.mxu0
    %v2319 = vadd.f32 %v2246, %v2318
    %v2320 = vpop.f32.mrf.mxu0
    %2321 = vdwg.mxu0
    %v2322 = vld [vmem:[%s6] sm:$0x1]
    %v2323 = vadd.f32 %v2319, %v2322
    %v2324 = vsel %vm267, %v2323, -inf
    %2325 = vmax.xlane.f32.xlu0 %v2324
    %v2326 = vpop.xlane.xlu0 %2325
    %v2327 = vsub.f32 %v2323, %v2326
    %v2328 = vmul.f32 %v2327, 1.442695
    %v2329 = vpow.pop %v2328
    %v2330 = vsel %vm267, %v2329, 0.0
    %2331 = vadd.xlane.f32.xlu0 %v2330
    %v2332 = vpop.xlane.xlu0 %2331
    %v2333 = vrcp.pop %v2332
    %v2334 = vmul.f32 %v2329, %v2333
    %v2335 = vld [vmem:[#allocation4] sm:$0xff]
    %v2336 = vld [vmem:[#allocation4 + $0x8] sm:$0x3]
    %v2338 = vsel %vm281, %v2334, 0
    %v2341 = vsel %vm285, %v2336, 0
    %2343 = vmatprep.subr.mxu0 0.0
    %2344 = vmatpush1.msra.mxu0 0.0
    %2345 = vmatprep.subr.mxu0 0.0
    %2346 = vmatpush1.msra.mxu0 0.0
    %2347 = vmatprep.subr.mxu0 0.0
    %2348 = vmatpush1.msra.mxu0 0.0
    %2349 = vmatprep.subr.mxu0 0.0
    %2350 = vmatpush1.msra.mxu0 0.0
    %2351 = vmatprep.subr.mxu0 0.0
    %2352 = vmatpush1.msra.mxu0 0.0
    %2353 = vmatprep.subr.mxu0 0.0
    %2354 = vmatpush1.msra.mxu0 0.0
    %2355 = vmatprep.subr.mxu0 0.0
    %2356 = vmatpush1.msra.mxu0 0.0
    %2357 = vmatprep.subr.mxu0 0.0
    %2358 = vmatpush1.msra.mxu0 0.0
    %2359 = vmatprep.subr.mxu0 0.0
    %2360 = vmatpush1.msra.mxu0 0.0
    %2361 = vmatprep.subr.mxu0 0.0
    %2362 = vmatpush1.msra.mxu0 0.0
    %2363 = vmatprep.subr.mxu0 0.0
    %2364 = vmatpush1.msra.mxu0 0.0
    %2365 = vmatprep.subr.mxu0 0.0
    %2366 = vmatpush1.msra.mxu0 0.0
    %2367 = vmatprep.subr.mxu0 0.0
    %2368 = vmatpush1.msra.mxu0 0.0
    %2369 = vmatprep.subr.mxu0 0.0
    %2370 = vmatpush1.msra.mxu0 0.0
    %2371 = vmatprep.subr.mxu0 0.0
    %2372 = vmatpush1.msra.mxu0 %v2341
    %2373 = vmatprep.subr.mxu0 0.0
    %2374 = vmatpush1.msra.mxu0 %v2335
    %2375 = vmatprep.subr.mxu0 0.0
    %2376 = vmatpush2.msra.mxu0 0.0
    %2377 = vmatprep.subr.mxu0 0.0
    %2378 = vmatpush2.msra.mxu0 0.0
    %2379 = vmatprep.subr.mxu0 0.0
    %2380 = vmatpush2.msra.mxu0 0.0
    %2381 = vmatprep.subr.mxu0 0.0
    %2382 = vmatpush2.msra.mxu0 0.0
    %2383 = vmatprep.subr.mxu0 0.0
    %2384 = vmatpush2.msra.mxu0 0.0
    %2385 = vmatprep.subr.mxu0 0.0
    %2386 = vmatpush2.msra.mxu0 0.0
    %2387 = vmatprep.subr.mxu0 0.0
    %2388 = vmatpush2.msra.mxu0 0.0
    %2389 = vmatprep.subr.mxu0 0.0
    %2390 = vmatpush2.msra.mxu0 0.0
    %2391 = vmatprep.subr.mxu0 0.0
    %2392 = vmatpush2.msra.mxu0 0.0
    %2393 = vmatprep.subr.mxu0 0.0
    %2394 = vmatpush2.msra.mxu0 0.0
    %2395 = vmatprep.subr.mxu0 0.0
    %2396 = vmatpush2.msra.mxu0 0.0
    %2397 = vmatprep.subr.mxu0 0.0
    %2398 = vmatpush2.msra.mxu0 0.0
    %2399 = vmatprep.subr.mxu0 0.0
    %2400 = vmatpush2.msra.mxu0 0.0
    %2401 = vmatprep.subr.mxu0 0.0
    %2402 = vmatpush2.msra.mxu0 0.0
    %2403 = vmatprep.subr.mxu0 0.0
    %2404 = vmatpush2.msra.mxu0 0.0
    %2405 = vmatprep.subr.mxu0 0.0
    %2406 = vmatpush2.msra.mxu0 0.0
    %2407 = vmatprep.mubr.f32.mxu0 0.0
    %2408 = vmatmul.mubr.f32.gmra.mxu0 %v2338
    %v2409 = vpop.f32.mrf.mxu0
    %v2410 = vadd.f32 0.0, %v2409
    %v2411 = vpop.f32.mrf.mxu0
    %2412 = vdwg.mxu0
    %v2413 = vld [vmem:[%s7] sm:$0xff]
    %v2414 = vld [vmem:[%s7 + $0x8] sm:$0xff]
    %v2415 = vld [vmem:[%s7 + $0x10] sm:$0xff]
    %v2416 = vld [vmem:[%s7 + $0x18] sm:$0xff]
    %v2417 = vld [vmem:[%s8] sm:$0xff]
    %v2418 = vld [vmem:[%s8 + $0x8] sm:$0xff]
    %v2419 = vld [vmem:[%s8 + $0x10] sm:$0xff]
    %v2420 = vld [vmem:[%s8 + $0x18] sm:$0xff]
    %v2422 = vsel %vm118, %v2410, 0
    %2424 = vmatprep.subr.mxu0 0.0
    %2425 = vmatpush1.msra.mxu0 0.0
    %2426 = vmatprep.subr.mxu0 0.0
    %2427 = vmatpush1.msra.mxu0 0.0
    %2428 = vmatprep.subr.mxu0 0.0
    %2429 = vmatpush1.msra.mxu0 0.0
    %2430 = vmatprep.subr.mxu0 0.0
    %2431 = vmatpush1.msra.mxu0 0.0
    %2432 = vmatprep.subr.mxu0 0.0
    %2433 = vmatpush1.msra.mxu0 0.0
    %2434 = vmatprep.subr.mxu0 0.0
    %2435 = vmatpush1.msra.mxu0 0.0
    %2436 = vmatprep.subr.mxu0 0.0
    %2437 = vmatpush1.msra.mxu0 0.0
    %2438 = vmatprep.subr.mxu0 0.0
    %2439 = vmatpush1.msra.mxu0 0.0
    %2440 = vmatprep.subr.mxu0 0.0
    %2441 = vmatpush1.msra.mxu0 0.0
    %2442 = vmatprep.subr.mxu0 0.0
    %2443 = vmatpush1.msra.mxu0 0.0
    %2444 = vmatprep.subr.mxu0 0.0
    %2445 = vmatpush1.msra.mxu0 0.0
    %2446 = vmatprep.subr.mxu0 0.0
    %2447 = vmatpush1.msra.mxu0 0.0
    %2448 = vmatprep.subr.mxu0 0.0
    %2449 = vmatpush1.msra.mxu0 %v2420
    %2450 = vmatprep.subr.mxu0 0.0
    %2451 = vmatpush1.msra.mxu0 %v2419
    %2452 = vmatprep.subr.mxu0 0.0
    %2453 = vmatpush1.msra.mxu0 %v2418
    %2454 = vmatprep.subr.mxu0 0.0
    %2455 = vmatpush1.msra.mxu0 %v2417
    %2456 = vmatprep.subr.mxu0 0.0
    %2457 = vmatpush2.msra.mxu0 0.0
    %2458 = vmatprep.subr.mxu0 0.0
    %2459 = vmatpush2.msra.mxu0 0.0
    %2460 = vmatprep.subr.mxu0 0.0
    %2461 = vmatpush2.msra.mxu0 0.0
    %2462 = vmatprep.subr.mxu0 0.0
    %2463 = vmatpush2.msra.mxu0 0.0
    %2464 = vmatprep.subr.mxu0 0.0
    %2465 = vmatpush2.msra.mxu0 0.0
    %2466 = vmatprep.subr.mxu0 0.0
    %2467 = vmatpush2.msra.mxu0 0.0
    %2468 = vmatprep.subr.mxu0 0.0
    %2469 = vmatpush2.msra.mxu0 0.0
    %2470 = vmatprep.subr.mxu0 0.0
    %2471 = vmatpush2.msra.mxu0 0.0
    %2472 = vmatprep.subr.mxu0 0.0
    %2473 = vmatpush2.msra.mxu0 0.0
    %2474 = vmatprep.subr.mxu0 0.0
    %2475 = vmatpush2.msra.mxu0 0.0
    %2476 = vmatprep.subr.mxu0 0.0
    %2477 = vmatpush2.msra.mxu0 0.0
    %2478 = vmatprep.subr.mxu0 0.0
    %2479 = vmatpush2.msra.mxu0 0.0
    %2480 = vmatprep.subr.mxu0 0.0
    %2481 = vmatpush2.msra.mxu0 0.0
    %2482 = vmatprep.subr.mxu0 0.0
    %2483 = vmatpush2.msra.mxu0 0.0
    %2484 = vmatprep.subr.mxu0 0.0
    %2485 = vmatpush2.msra.mxu0 0.0
    %2486 = vmatprep.subr.mxu0 0.0
    %2487 = vmatpush2.msra.mxu0 0.0
    %2488 = vmatprep.mubr.f32.mxu0 0.0
    %2489 = vmatmul.mubr.f32.gmra.mxu0 %v2422
    %v2490 = vpop.f32.mrf.mxu0
    %v2491 = vadd.f32 0.0, %v2490
    %v2492 = vpop.f32.mrf.mxu0
    %2493 = vdwg.mxu0
    %2494 = vmatprep.subr.mxu0 0.0
    %2495 = vmatpush1.msra.mxu0 0.0
    %2496 = vmatprep.subr.mxu0 0.0
    %2497 = vmatpush1.msra.mxu0 0.0
    %2498 = vmatprep.subr.mxu0 0.0
    %2499 = vmatpush1.msra.mxu0 0.0
    %2500 = vmatprep.subr.mxu0 0.0
    %2501 = vmatpush1.msra.mxu0 0.0
    %2502 = vmatprep.subr.mxu0 0.0
    %2503 = vmatpush1.msra.mxu0 0.0
    %2504 = vmatprep.subr.mxu0 0.0
    %2505 = vmatpush1.msra.mxu0 0.0
    %2506 = vmatprep.subr.mxu0 0.0
    %2507 = vmatpush1.msra.mxu0 0.0
    %2508 = vmatprep.subr.mxu0 0.0
    %2509 = vmatpush1.msra.mxu0 0.0
    %2510 = vmatprep.subr.mxu0 0.0
    %2511 = vmatpush1.msra.mxu0 0.0
    %2512 = vmatprep.subr.mxu0 0.0
    %2513 = vmatpush1.msra.mxu0 0.0
    %2514 = vmatprep.subr.mxu0 0.0
    %2515 = vmatpush1.msra.mxu0 0.0
    %2516 = vmatprep.subr.mxu0 0.0
    %2517 = vmatpush1.msra.mxu0 0.0
    %2518 = vmatprep.subr.mxu0 0.0
    %2519 = vmatpush1.msra.mxu0 %v2416
    %2520 = vmatprep.subr.mxu0 0.0
    %2521 = vmatpush1.msra.mxu0 %v2415
    %2522 = vmatprep.subr.mxu0 0.0
    %2523 = vmatpush1.msra.mxu0 %v2414
    %2524 = vmatprep.subr.mxu0 0.0
    %2525 = vmatpush1.msra.mxu0 %v2413
    %2526 = vmatprep.subr.mxu0 0.0
    %2527 = vmatpush2.msra.mxu0 0.0
    %2528 = vmatprep.subr.mxu0 0.0
    %2529 = vmatpush2.msra.mxu0 0.0
    %2530 = vmatprep.subr.mxu0 0.0
    %2531 = vmatpush2.msra.mxu0 0.0
    %2532 = vmatprep.subr.mxu0 0.0
    %2533 = vmatpush2.msra.mxu0 0.0
    %2534 = vmatprep.subr.mxu0 0.0
    %2535 = vmatpush2.msra.mxu0 0.0
    %2536 = vmatprep.subr.mxu0 0.0
    %2537 = vmatpush2.msra.mxu0 0.0
    %2538 = vmatprep.subr.mxu0 0.0
    %2539 = vmatpush2.msra.mxu0 0.0
    %2540 = vmatprep.subr.mxu0 0.0
    %2541 = vmatpush2.msra.mxu0 0.0
    %2542 = vmatprep.subr.mxu0 0.0
    %2543 = vmatpush2.msra.mxu0 0.0
    %2544 = vmatprep.subr.mxu0 0.0
    %2545 = vmatpush2.msra.mxu0 0.0
    %2546 = vmatprep.subr.mxu0 0.0
    %2547 = vmatpush2.msra.mxu0 0.0
    %2548 = vmatprep.subr.mxu0 0.0
    %2549 = vmatpush2.msra.mxu0 0.0
    %2550 = vmatprep.subr.mxu0 0.0
    %2551 = vmatpush2.msra.mxu0 0.0
    %2552 = vmatprep.subr.mxu0 0.0
    %2553 = vmatpush2.msra.mxu0 0.0
    %2554 = vmatprep.subr.mxu0 0.0
    %2555 = vmatpush2.msra.mxu0 0.0
    %2556 = vmatprep.subr.mxu0 0.0
    %2557 = vmatpush2.msra.mxu0 0.0
    %2558 = vmatprep.mubr.f32.mxu0 0.0
    %2559 = vmatmul.mubr.f32.gmra.mxu0 %v2250
    %v2560 = vpop.f32.mrf.mxu0
    %v2561 = vadd.f32 %v2491, %v2560
    %v2562 = vpop.f32.mrf.mxu0
    %2563 = vdwg.mxu0
    %v2564 = vld [vmem:[#allocation6] sm:$0x1]
    %v2565 = vadd.f32 %v2561, %v2564
    %v2566 = vmax.f32 %v2565, 0.0
    %v2567 = vld [vmem:[%s10] sm:$0xff]
    %v2568 = vld [vmem:[%s10 + $0x8] sm:$0xff]
    %v2569 = vld [vmem:[%s10 + $0x10] sm:$0xff]
    %v2570 = vld [vmem:[%s10 + $0x18] sm:$0xff]
    %v2571 = vld [vmem:[#allocation8] sm:$0x1]
    %v2573 = vsel %vm118, %v2566, 0
    %2575 = vmatprep.subr.mxu0 0.0
    %2576 = vmatpush1.msra.mxu0 0.0
    %2577 = vmatprep.subr.mxu0 0.0
    %2578 = vmatpush1.msra.mxu0 0.0
    %2579 = vmatprep.subr.mxu0 0.0
    %2580 = vmatpush1.msra.mxu0 0.0
    %2581 = vmatprep.subr.mxu0 0.0
    %2582 = vmatpush1.msra.mxu0 0.0
    %2583 = vmatprep.subr.mxu0 0.0
    %2584 = vmatpush1.msra.mxu0 0.0
    %2585 = vmatprep.subr.mxu0 0.0
    %2586 = vmatpush1.msra.mxu0 0.0
    %2587 = vmatprep.subr.mxu0 0.0
    %2588 = vmatpush1.msra.mxu0 0.0
    %2589 = vmatprep.subr.mxu0 0.0
    %2590 = vmatpush1.msra.mxu0 0.0
    %2591 = vmatprep.subr.mxu0 0.0
    %2592 = vmatpush1.msra.mxu0 0.0
    %2593 = vmatprep.subr.mxu0 0.0
    %2594 = vmatpush1.msra.mxu0 0.0
    %2595 = vmatprep.subr.mxu0 0.0
    %2596 = vmatpush1.msra.mxu0 0.0
    %2597 = vmatprep.subr.mxu0 0.0
    %2598 = vmatpush1.msra.mxu0 0.0
    %2599 = vmatprep.subr.mxu0 0.0
    %2600 = vmatpush1.msra.mxu0 %v2570
    %2601 = vmatprep.subr.mxu0 0.0
    %2602 = vmatpush1.msra.mxu0 %v2569
    %2603 = vmatprep.subr.mxu0 0.0
    %2604 = vmatpush1.msra.mxu0 %v2568
    %2605 = vmatprep.subr.mxu0 0.0
    %2606 = vmatpush1.msra.mxu0 %v2567
    %2607 = vmatprep.subr.mxu0 0.0
    %2608 = vmatpush2.msra.mxu0 0.0
    %2609 = vmatprep.subr.mxu0 0.0
    %2610 = vmatpush2.msra.mxu0 0.0
    %2611 = vmatprep.subr.mxu0 0.0
    %2612 = vmatpush2.msra.mxu0 0.0
    %2613 = vmatprep.subr.mxu0 0.0
    %2614 = vmatpush2.msra.mxu0 0.0
    %2615 = vmatprep.subr.mxu0 0.0
    %2616 = vmatpush2.msra.mxu0 0.0
    %2617 = vmatprep.subr.mxu0 0.0
    %2618 = vmatpush2.msra.mxu0 0.0
    %2619 = vmatprep.subr.mxu0 0.0
    %2620 = vmatpush2.msra.mxu0 0.0
    %2621 = vmatprep.subr.mxu0 0.0
    %2622 = vmatpush2.msra.mxu0 0.0
    %2623 = vmatprep.subr.mxu0 0.0
    %2624 = vmatpush2.msra.mxu0 0.0
    %2625 = vmatprep.subr.mxu0 0.0
    %2626 = vmatpush2.msra.mxu0 0.0
    %2627 = vmatprep.subr.mxu0 0.0
    %2628 = vmatpush2.msra.mxu0 0.0
    %2629 = vmatprep.subr.mxu0 0.0
    %2630 = vmatpush2.msra.mxu0 0.0
    %2631 = vmatprep.subr.mxu0 0.0
    %2632 = vmatpush2.msra.mxu0 0.0
    %2633 = vmatprep.subr.mxu0 0.0
    %2634 = vmatpush2.msra.mxu0 0.0
    %2635 = vmatprep.subr.mxu0 0.0
    %2636 = vmatpush2.msra.mxu0 0.0
    %2637 = vmatprep.subr.mxu0 0.0
    %2638 = vmatpush2.msra.mxu0 0.0
    %2639 = vmatprep.mubr.f32.mxu0 0.0
    %2640 = vmatmul.mubr.f32.gmra.mxu0 %v2573
    %v2641 = vpop.f32.mrf.mxu0
    %v2642 = vadd.f32 %v2571, %v2641
    %v2643 = vpop.f32.mrf.mxu0
    %2644 = vdwg.mxu0
    %v2645 = vld [vmem:[%s11] sm:$0xff]
    %v2646 = vld [vmem:[%s11 + $0x8] sm:$0xff]
    %v2647 = vld [vmem:[%s11 + $0x10] sm:$0xff]
    %v2648 = vld [vmem:[%s11 + $0x18] sm:$0xff]
    %v2649 = vld [vmem:[#allocation9] sm:$0x1]
    %2650 = vmatprep.subr.mxu0 0.0
    %2651 = vmatpush1.msra.mxu0 0.0
    %2652 = vmatprep.subr.mxu0 0.0
    %2653 = vmatpush1.msra.mxu0 0.0
    %2654 = vmatprep.subr.mxu0 0.0
    %2655 = vmatpush1.msra.mxu0 0.0
    %2656 = vmatprep.subr.mxu0 0.0
    %2657 = vmatpush1.msra.mxu0 0.0
    %2658 = vmatprep.subr.mxu0 0.0
    %2659 = vmatpush1.msra.mxu0 0.0
    %2660 = vmatprep.subr.mxu0 0.0
    %2661 = vmatpush1.msra.mxu0 0.0
    %2662 = vmatprep.subr.mxu0 0.0
    %2663 = vmatpush1.msra.mxu0 0.0
    %2664 = vmatprep.subr.mxu0 0.0
    %2665 = vmatpush1.msra.mxu0 0.0
    %2666 = vmatprep.subr.mxu0 0.0
    %2667 = vmatpush1.msra.mxu0 0.0
    %2668 = vmatprep.subr.mxu0 0.0
    %2669 = vmatpush1.msra.mxu0 0.0
    %2670 = vmatprep.subr.mxu0 0.0
    %2671 = vmatpush1.msra.mxu0 0.0
    %2672 = vmatprep.subr.mxu0 0.0
    %2673 = vmatpush1.msra.mxu0 0.0
    %2674 = vmatprep.subr.mxu0 0.0
    %2675 = vmatpush1.msra.mxu0 %v2648
    %2676 = vmatprep.subr.mxu0 0.0
    %2677 = vmatpush1.msra.mxu0 %v2647
    %2678 = vmatprep.subr.mxu0 0.0
    %2679 = vmatpush1.msra.mxu0 %v2646
    %2680 = vmatprep.subr.mxu0 0.0
    %2681 = vmatpush1.msra.mxu0 %v2645
    %2682 = vmatprep.subr.mxu0 0.0
    %2683 = vmatpush2.msra.mxu0 0.0
    %2684 = vmatprep.subr.mxu0 0.0
    %2685 = vmatpush2.msra.mxu0 0.0
    %2686 = vmatprep.subr.mxu0 0.0
    %2687 = vmatpush2.msra.mxu0 0.0
    %2688 = vmatprep.subr.mxu0 0.0
    %2689 = vmatpush2.msra.mxu0 0.0
    %2690 = vmatprep.subr.mxu0 0.0
    %2691 = vmatpush2.msra.mxu0 0.0
    %2692 = vmatprep.subr.mxu0 0.0
    %2693 = vmatpush2.msra.mxu0 0.0
    %2694 = vmatprep.subr.mxu0 0.0
    %2695 = vmatpush2.msra.mxu0 0.0
    %2696 = vmatprep.subr.mxu0 0.0
    %2697 = vmatpush2.msra.mxu0 0.0
    %2698 = vmatprep.subr.mxu0 0.0
    %2699 = vmatpush2.msra.mxu0 0.0
    %2700 = vmatprep.subr.mxu0 0.0
    %2701 = vmatpush2.msra.mxu0 0.0
    %2702 = vmatprep.subr.mxu0 0.0
    %2703 = vmatpush2.msra.mxu0 0.0
    %2704 = vmatprep.subr.mxu0 0.0
    %2705 = vmatpush2.msra.mxu0 0.0
    %2706 = vmatprep.subr.mxu0 0.0
    %2707 = vmatpush2.msra.mxu0 0.0
    %2708 = vmatprep.subr.mxu0 0.0
    %2709 = vmatpush2.msra.mxu0 0.0
    %2710 = vmatprep.subr.mxu0 0.0
    %2711 = vmatpush2.msra.mxu0 0.0
    %2712 = vmatprep.subr.mxu0 0.0
    %2713 = vmatpush2.msra.mxu0 0.0
    %2714 = vmatprep.mubr.f32.mxu0 0.0
    %2715 = vmatmul.mubr.f32.gmra.mxu0 %v2073
    %v2716 = vpop.f32.mrf.mxu0
    %v2717 = vadd.f32 %v2649, %v2716
    %v2718 = vpop.f32.mrf.mxu0
    %2719 = vdwg.mxu0
    %v2720 = vadd.f32 %v2642, %v2717
    %v2721 = vxor.u32 %v2720, 2147483648
    %v2722 = vmul.f32 %v2721, 1.442695
    %v2723 = vpow.pop %v2722
    %v2724 = vadd.f32 %v2723, 1.0
    %v2725 = vrcp.pop %v2724
    %v2726 = vmul.f32 1.0, %v2725
    %2728 = vrot.lane.b32.xlu0 %v2717, 64
    %v2729 = vpop.permute.xlu0 %2728
    %v2731 = vmul.f32 %v2726, %v2729
    %2733 = vrot.lane.b32.xlu0 %v2731, 64
    %v2734 = vpop.permute.xlu0 %2733
    %v2736 = vadd.f32 %v2642, %v2734
    %v2737 = vtanh.pop %v2736
    %v2738 = vsub.f32 1.0, %v2726
    %2740 = vrot.lane.b32.xlu0 %v2737, 96
    %v2741 = vpop.permute.xlu0 %2740
    %v2743 = vmul.f32 %v2738, %v2741
    %v2744 = vmul.f32 %v2726, %v2064
    %v2745 = vadd.f32 %v2743, %v2744
    %v2746 = vld [vmem:[%s14] sm:$0xff]
    %v2747 = vld [vmem:[%s14 + $0x8] sm:$0xff]
    %v2748 = vld [vmem:[%s14 + $0x10] sm:$0xff]
    %v2749 = vld [vmem:[%s14 + $0x18] sm:$0xff]
    %v2750 = vld [vmem:[%s15] sm:$0x1]
    %2752 = vrot.lane.b32.xlu0 %v2745, 96
    %v2753 = vpop.permute.xlu0 %2752
    %v2754 = vsel %vm118, %v2753, 0
    %2756 = vmatprep.subr.mxu0 0.0
    %2757 = vmatpush1.msra.mxu0 0.0
    %2758 = vmatprep.subr.mxu0 0.0
    %2759 = vmatpush1.msra.mxu0 0.0
    %2760 = vmatprep.subr.mxu0 0.0
    %2761 = vmatpush1.msra.mxu0 0.0
    %2762 = vmatprep.subr.mxu0 0.0
    %2763 = vmatpush1.msra.mxu0 0.0
    %2764 = vmatprep.subr.mxu0 0.0
    %2765 = vmatpush1.msra.mxu0 0.0
    %2766 = vmatprep.subr.mxu0 0.0
    %2767 = vmatpush1.msra.mxu0 0.0
    %2768 = vmatprep.subr.mxu0 0.0
    %2769 = vmatpush1.msra.mxu0 0.0
    %2770 = vmatprep.subr.mxu0 0.0
    %2771 = vmatpush1.msra.mxu0 0.0
    %2772 = vmatprep.subr.mxu0 0.0
    %2773 = vmatpush1.msra.mxu0 0.0
    %2774 = vmatprep.subr.mxu0 0.0
    %2775 = vmatpush1.msra.mxu0 0.0
    %2776 = vmatprep.subr.mxu0 0.0
    %2777 = vmatpush1.msra.mxu0 0.0
    %2778 = vmatprep.subr.mxu0 0.0
    %2779 = vmatpush1.msra.mxu0 0.0
    %2780 = vmatprep.subr.mxu0 0.0
    %2781 = vmatpush1.msra.mxu0 %v2749
    %2782 = vmatprep.subr.mxu0 0.0
    %2783 = vmatpush1.msra.mxu0 %v2748
    %2784 = vmatprep.subr.mxu0 0.0
    %2785 = vmatpush1.msra.mxu0 %v2747
    %2786 = vmatprep.subr.mxu0 0.0
    %2787 = vmatpush1.msra.mxu0 %v2746
    %2788 = vmatprep.subr.mxu0 0.0
    %2789 = vmatpush2.msra.mxu0 0.0
    %2790 = vmatprep.subr.mxu0 0.0
    %2791 = vmatpush2.msra.mxu0 0.0
    %2792 = vmatprep.subr.mxu0 0.0
    %2793 = vmatpush2.msra.mxu0 0.0
    %2794 = vmatprep.subr.mxu0 0.0
    %2795 = vmatpush2.msra.mxu0 0.0
    %2796 = vmatprep.subr.mxu0 0.0
    %2797 = vmatpush2.msra.mxu0 0.0
    %2798 = vmatprep.subr.mxu0 0.0
    %2799 = vmatpush2.msra.mxu0 0.0
    %2800 = vmatprep.subr.mxu0 0.0
    %2801 = vmatpush2.msra.mxu0 0.0
    %2802 = vmatprep.subr.mxu0 0.0
    %2803 = vmatpush2.msra.mxu0 0.0
    %2804 = vmatprep.subr.mxu0 0.0
    %2805 = vmatpush2.msra.mxu0 0.0
    %2806 = vmatprep.subr.mxu0 0.0
    %2807 = vmatpush2.msra.mxu0 0.0
    %2808 = vmatprep.subr.mxu0 0.0
    %2809 = vmatpush2.msra.mxu0 0.0
    %2810 = vmatprep.subr.mxu0 0.0
    %2811 = vmatpush2.msra.mxu0 0.0
    %2812 = vmatprep.subr.mxu0 0.0
    %2813 = vmatpush2.msra.mxu0 0.0
    %2814 = vmatprep.subr.mxu0 0.0
    %2815 = vmatpush2.msra.mxu0 0.0
    %2816 = vmatprep.subr.mxu0 0.0
    %2817 = vmatpush2.msra.mxu0 0.0
    %2818 = vmatprep.subr.mxu0 0.0
    %2819 = vmatpush2.msra.mxu0 0.0
    %2820 = vmatprep.mubr.f32.mxu0 0.0
    %2821 = vmatmul.mubr.f32.gmra.mxu0 %v2754
    %v2822 = vpop.f32.mrf.mxu0
    %v2823 = vadd.f32 %v2750, %v2822
    %v2824 = vpop.f32.mrf.mxu0
    %2825 = vdwg.mxu0
    %v2826 = vsel %vm779, %v2823, -inf
    %2827 = vmax.xlane.f32.xlu0 %v2826
    %v2828 = vpop.xlane.xlu0 %2827
    %v2829 = vsub.f32 %v2823, %v2828
    %v2830 = vmul.f32 %v2829, 1.442695
    %v2831 = vpow.pop %v2830
    %v2832 = vsel %vm779, %v2831, 0.0
    %2833 = vadd.xlane.f32.xlu0 %v2832
    %v2834 = vpop.xlane.xlu0 %2833
    %v2835 = vlog2.pop %v2834
    %v2836 = vmul.f32 %v2835, 0.6931472
    %v2837 = vadd.f32 %v2836, %v2828
    %v2838 = vsub.f32 %v2823, %v2837
    %2839 = vrot.lane.b32.xlu0 %v2745, 16
    %v2840 = vpop.permute.xlu0 %2839
    %2842 = vrot.lane.b32.xlu0 %v2334, 80
    %v2843 = vpop.permute.xlu0 %2842
    %v2845 = vsel %vm799, %v2838, %v2840
    %v2846 = vsel %vm801, %v2845, %v2843
    %v2847 = vsel %vm803, %v2846, 0.0
    %2848 = vst [vmem:[%s16 + $0x3] sm:$0x1] %v2847
    %s2849 = sld [smem:[#allocation3 + $0x4]]
    %s2850 = scalar_lea.vmem %s1, %s2849
    %v2851 = vld [vmem:[%s2850] sm:$0x1]
    %v2852 = vld [vmem:[%s4] sm:$0xff]
    %v2853 = vld [vmem:[%s4 + $0x8] sm:$0xff]
    %v2854 = vld [vmem:[%s4 + $0x10] sm:$0xff]
    %v2855 = vld [vmem:[%s4 + $0x18] sm:$0xff]
    %v2856 = vld [vmem:[%s5] sm:$0xff]
    %v2857 = vld [vmem:[%s5 + $0x8] sm:$0xff]
    %v2858 = vld [vmem:[%s5 + $0x10] sm:$0xff]
    %v2859 = vld [vmem:[%s5 + $0x18] sm:$0xff]
    %2860 = vmatprep.subr.mxu0 0.0
    %2861 = vmatpush1.msra.mxu0 0.0
    %2862 = vmatprep.subr.mxu0 0.0
    %2863 = vmatpush1.msra.mxu0 0.0
    %2864 = vmatprep.subr.mxu0 0.0
    %2865 = vmatpush1.msra.mxu0 0.0
    %2866 = vmatprep.subr.mxu0 0.0
    %2867 = vmatpush1.msra.mxu0 0.0
    %2868 = vmatprep.subr.mxu0 0.0
    %2869 = vmatpush1.msra.mxu0 0.0
    %2870 = vmatprep.subr.mxu0 0.0
    %2871 = vmatpush1.msra.mxu0 0.0
    %2872 = vmatprep.subr.mxu0 0.0
    %2873 = vmatpush1.msra.mxu0 0.0
    %2874 = vmatprep.subr.mxu0 0.0
    %2875 = vmatpush1.msra.mxu0 0.0
    %2876 = vmatprep.subr.mxu0 0.0
    %2877 = vmatpush1.msra.mxu0 0.0
    %2878 = vmatprep.subr.mxu0 0.0
    %2879 = vmatpush1.msra.mxu0 0.0
    %2880 = vmatprep.subr.mxu0 0.0
    %2881 = vmatpush1.msra.mxu0 0.0
    %2882 = vmatprep.subr.mxu0 0.0
    %2883 = vmatpush1.msra.mxu0 0.0
    %2884 = vmatprep.subr.mxu0 0.0
    %2885 = vmatpush1.msra.mxu0 %v2859
    %2886 = vmatprep.subr.mxu0 0.0
    %2887 = vmatpush1.msra.mxu0 %v2858
    %2888 = vmatprep.subr.mxu0 0.0
    %2889 = vmatpush1.msra.mxu0 %v2857
    %2890 = vmatprep.subr.mxu0 0.0
    %2891 = vmatpush1.msra.mxu0 %v2856
    %2892 = vmatprep.subr.mxu0 0.0
    %2893 = vmatpush2.msra.mxu0 0.0
    %2894 = vmatprep.subr.mxu0 0.0
    %2895 = vmatpush2.msra.mxu0 0.0
    %2896 = vmatprep.subr.mxu0 0.0
    %2897 = vmatpush2.msra.mxu0 0.0
    %2898 = vmatprep.subr.mxu0 0.0
    %2899 = vmatpush2.msra.mxu0 0.0
    %2900 = vmatprep.subr.mxu0 0.0
    %2901 = vmatpush2.msra.mxu0 0.0
    %2902 = vmatprep.subr.mxu0 0.0
    %2903 = vmatpush2.msra.mxu0 0.0
    %2904 = vmatprep.subr.mxu0 0.0
    %2905 = vmatpush2.msra.mxu0 0.0
    %2906 = vmatprep.subr.mxu0 0.0
    %2907 = vmatpush2.msra.mxu0 0.0
    %2908 = vmatprep.subr.mxu0 0.0
    %2909 = vmatpush2.msra.mxu0 0.0
    %2910 = vmatprep.subr.mxu0 0.0
    %2911 = vmatpush2.msra.mxu0 0.0
    %2912 = vmatprep.subr.mxu0 0.0
    %2913 = vmatpush2.msra.mxu0 0.0
    %2914 = vmatprep.subr.mxu0 0.0
    %2915 = vmatpush2.msra.mxu0 0.0
    %2916 = vmatprep.subr.mxu0 0.0
    %2917 = vmatpush2.msra.mxu0 0.0
    %2918 = vmatprep.subr.mxu0 0.0
    %2919 = vmatpush2.msra.mxu0 0.0
    %2920 = vmatprep.subr.mxu0 0.0
    %2921 = vmatpush2.msra.mxu0 0.0
    %2922 = vmatprep.subr.mxu0 0.0
    %2923 = vmatpush2.msra.mxu0 0.0
    %2924 = vmatprep.mubr.f32.mxu0 0.0
    %2925 = vmatmul.mubr.f32.gmra.mxu0 %v2754
    %v2926 = vpop.f32.mrf.mxu0
    %v2927 = vadd.f32 0.0, %v2926
    %v2928 = vpop.f32.mrf.mxu0
    %2929 = vdwg.mxu0
    %v2931 = vsel %vm118, %v2851, 0
    %2933 = vmatprep.subr.mxu0 0.0
    %2934 = vmatpush1.msra.mxu0 0.0
    %2935 = vmatprep.subr.mxu0 0.0
    %2936 = vmatpush1.msra.mxu0 0.0
    %2937 = vmatprep.subr.mxu0 0.0
    %2938 = vmatpush1.msra.mxu0 0.0
    %2939 = vmatprep.subr.mxu0 0.0
    %2940 = vmatpush1.msra.mxu0 0.0
    %2941 = vmatprep.subr.mxu0 0.0
    %2942 = vmatpush1.msra.mxu0 0.0
    %2943 = vmatprep.subr.mxu0 0.0
    %2944 = vmatpush1.msra.mxu0 0.0
    %2945 = vmatprep.subr.mxu0 0.0
    %2946 = vmatpush1.msra.mxu0 0.0
    %2947 = vmatprep.subr.mxu0 0.0
    %2948 = vmatpush1.msra.mxu0 0.0
    %2949 = vmatprep.subr.mxu0 0.0
    %2950 = vmatpush1.msra.mxu0 0.0
    %2951 = vmatprep.subr.mxu0 0.0
    %2952 = vmatpush1.msra.mxu0 0.0
    %2953 = vmatprep.subr.mxu0 0.0
    %2954 = vmatpush1.msra.mxu0 0.0
    %2955 = vmatprep.subr.mxu0 0.0
    %2956 = vmatpush1.msra.mxu0 0.0
    %2957 = vmatprep.subr.mxu0 0.0
    %2958 = vmatpush1.msra.mxu0 %v2855
    %2959 = vmatprep.subr.mxu0 0.0
    %2960 = vmatpush1.msra.mxu0 %v2854
    %2961 = vmatprep.subr.mxu0 0.0
    %2962 = vmatpush1.msra.mxu0 %v2853
    %2963 = vmatprep.subr.mxu0 0.0
    %2964 = vmatpush1.msra.mxu0 %v2852
    %2965 = vmatprep.subr.mxu0 0.0
    %2966 = vmatpush2.msra.mxu0 0.0
    %2967 = vmatprep.subr.mxu0 0.0
    %2968 = vmatpush2.msra.mxu0 0.0
    %2969 = vmatprep.subr.mxu0 0.0
    %2970 = vmatpush2.msra.mxu0 0.0
    %2971 = vmatprep.subr.mxu0 0.0
    %2972 = vmatpush2.msra.mxu0 0.0
    %2973 = vmatprep.subr.mxu0 0.0
    %2974 = vmatpush2.msra.mxu0 0.0
    %2975 = vmatprep.subr.mxu0 0.0
    %2976 = vmatpush2.msra.mxu0 0.0
    %2977 = vmatprep.subr.mxu0 0.0
    %2978 = vmatpush2.msra.mxu0 0.0
    %2979 = vmatprep.subr.mxu0 0.0
    %2980 = vmatpush2.msra.mxu0 0.0
    %2981 = vmatprep.subr.mxu0 0.0
    %2982 = vmatpush2.msra.mxu0 0.0
    %2983 = vmatprep.subr.mxu0 0.0
    %2984 = vmatpush2.msra.mxu0 0.0
    %2985 = vmatprep.subr.mxu0 0.0
    %2986 = vmatpush2.msra.mxu0 0.0
    %2987 = vmatprep.subr.mxu0 0.0
    %2988 = vmatpush2.msra.mxu0 0.0
    %2989 = vmatprep.subr.mxu0 0.0
    %2990 = vmatpush2.msra.mxu0 0.0
    %2991 = vmatprep.subr.mxu0 0.0
    %2992 = vmatpush2.msra.mxu0 0.0
    %2993 = vmatprep.subr.mxu0 0.0
    %2994 = vmatpush2.msra.mxu0 0.0
    %2995 = vmatprep.subr.mxu0 0.0
    %2996 = vmatpush2.msra.mxu0 0.0
    %2997 = vmatprep.mubr.f32.mxu0 0.0
    %2998 = vmatmul.mubr.f32.gmra.mxu0 %v2931
    %v2999 = vpop.f32.mrf.mxu0
    %v3000 = vadd.f32 %v2927, %v2999
    %v3001 = vpop.f32.mrf.mxu0
    %3002 = vdwg.mxu0
    %v3003 = vld [vmem:[%s6] sm:$0x1]
    %v3004 = vadd.f32 %v3000, %v3003
    %v3005 = vsel %vm267, %v3004, -inf
    %3006 = vmax.xlane.f32.xlu0 %v3005
    %v3007 = vpop.xlane.xlu0 %3006
    %v3008 = vsub.f32 %v3004, %v3007
    %v3009 = vmul.f32 %v3008, 1.442695
    %v3010 = vpow.pop %v3009
    %v3011 = vsel %vm267, %v3010, 0.0
    %3012 = vadd.xlane.f32.xlu0 %v3011
    %v3013 = vpop.xlane.xlu0 %3012
    %v3014 = vrcp.pop %v3013
    %v3015 = vmul.f32 %v3010, %v3014
    %v3016 = vld [vmem:[#allocation4] sm:$0xff]
    %v3017 = vld [vmem:[#allocation4 + $0x8] sm:$0x3]
    %v3019 = vsel %vm281, %v3015, 0
    %v3022 = vsel %vm285, %v3017, 0
    %3024 = vmatprep.subr.mxu0 0.0
    %3025 = vmatpush1.msra.mxu0 0.0
    %3026 = vmatprep.subr.mxu0 0.0
    %3027 = vmatpush1.msra.mxu0 0.0
    %3028 = vmatprep.subr.mxu0 0.0
    %3029 = vmatpush1.msra.mxu0 0.0
    %3030 = vmatprep.subr.mxu0 0.0
    %3031 = vmatpush1.msra.mxu0 0.0
    %3032 = vmatprep.subr.mxu0 0.0
    %3033 = vmatpush1.msra.mxu0 0.0
    %3034 = vmatprep.subr.mxu0 0.0
    %3035 = vmatpush1.msra.mxu0 0.0
    %3036 = vmatprep.subr.mxu0 0.0
    %3037 = vmatpush1.msra.mxu0 0.0
    %3038 = vmatprep.subr.mxu0 0.0
    %3039 = vmatpush1.msra.mxu0 0.0
    %3040 = vmatprep.subr.mxu0 0.0
    %3041 = vmatpush1.msra.mxu0 0.0
    %3042 = vmatprep.subr.mxu0 0.0
    %3043 = vmatpush1.msra.mxu0 0.0
    %3044 = vmatprep.subr.mxu0 0.0
    %3045 = vmatpush1.msra.mxu0 0.0
    %3046 = vmatprep.subr.mxu0 0.0
    %3047 = vmatpush1.msra.mxu0 0.0
    %3048 = vmatprep.subr.mxu0 0.0
    %3049 = vmatpush1.msra.mxu0 0.0
    %3050 = vmatprep.subr.mxu0 0.0
    %3051 = vmatpush1.msra.mxu0 0.0
    %3052 = vmatprep.subr.mxu0 0.0
    %3053 = vmatpush1.msra.mxu0 %v3022
    %3054 = vmatprep.subr.mxu0 0.0
    %3055 = vmatpush1.msra.mxu0 %v3016
    %3056 = vmatprep.subr.mxu0 0.0
    %3057 = vmatpush2.msra.mxu0 0.0
    %3058 = vmatprep.subr.mxu0 0.0
    %3059 = vmatpush2.msra.mxu0 0.0
    %3060 = vmatprep.subr.mxu0 0.0
    %3061 = vmatpush2.msra.mxu0 0.0
    %3062 = vmatprep.subr.mxu0 0.0
    %3063 = vmatpush2.msra.mxu0 0.0
    %3064 = vmatprep.subr.mxu0 0.0
    %3065 = vmatpush2.msra.mxu0 0.0
    %3066 = vmatprep.subr.mxu0 0.0
    %3067 = vmatpush2.msra.mxu0 0.0
    %3068 = vmatprep.subr.mxu0 0.0
    %3069 = vmatpush2.msra.mxu0 0.0
    %3070 = vmatprep.subr.mxu0 0.0
    %3071 = vmatpush2.msra.mxu0 0.0
    %3072 = vmatprep.subr.mxu0 0.0
    %3073 = vmatpush2.msra.mxu0 0.0
    %3074 = vmatprep.subr.mxu0 0.0
    %3075 = vmatpush2.msra.mxu0 0.0
    %3076 = vmatprep.subr.mxu0 0.0
    %3077 = vmatpush2.msra.mxu0 0.0
    %3078 = vmatprep.subr.mxu0 0.0
    %3079 = vmatpush2.msra.mxu0 0.0
    %3080 = vmatprep.subr.mxu0 0.0
    %3081 = vmatpush2.msra.mxu0 0.0
    %3082 = vmatprep.subr.mxu0 0.0
    %3083 = vmatpush2.msra.mxu0 0.0
    %3084 = vmatprep.subr.mxu0 0.0
    %3085 = vmatpush2.msra.mxu0 0.0
    %3086 = vmatprep.subr.mxu0 0.0
    %3087 = vmatpush2.msra.mxu0 0.0
    %3088 = vmatprep.mubr.f32.mxu0 0.0
    %3089 = vmatmul.mubr.f32.gmra.mxu0 %v3019
    %v3090 = vpop.f32.mrf.mxu0
    %v3091 = vadd.f32 0.0, %v3090
    %v3092 = vpop.f32.mrf.mxu0
    %3093 = vdwg.mxu0
    %v3094 = vld [vmem:[%s7] sm:$0xff]
    %v3095 = vld [vmem:[%s7 + $0x8] sm:$0xff]
    %v3096 = vld [vmem:[%s7 + $0x10] sm:$0xff]
    %v3097 = vld [vmem:[%s7 + $0x18] sm:$0xff]
    %v3098 = vld [vmem:[%s8] sm:$0xff]
    %v3099 = vld [vmem:[%s8 + $0x8] sm:$0xff]
    %v3100 = vld [vmem:[%s8 + $0x10] sm:$0xff]
    %v3101 = vld [vmem:[%s8 + $0x18] sm:$0xff]
    %v3103 = vsel %vm118, %v3091, 0
    %3105 = vmatprep.subr.mxu0 0.0
    %3106 = vmatpush1.msra.mxu0 0.0
    %3107 = vmatprep.subr.mxu0 0.0
    %3108 = vmatpush1.msra.mxu0 0.0
    %3109 = vmatprep.subr.mxu0 0.0
    %3110 = vmatpush1.msra.mxu0 0.0
    %3111 = vmatprep.subr.mxu0 0.0
    %3112 = vmatpush1.msra.mxu0 0.0
    %3113 = vmatprep.subr.mxu0 0.0
    %3114 = vmatpush1.msra.mxu0 0.0
    %3115 = vmatprep.subr.mxu0 0.0
    %3116 = vmatpush1.msra.mxu0 0.0
    %3117 = vmatprep.subr.mxu0 0.0
    %3118 = vmatpush1.msra.mxu0 0.0
    %3119 = vmatprep.subr.mxu0 0.0
    %3120 = vmatpush1.msra.mxu0 0.0
    %3121 = vmatprep.subr.mxu0 0.0
    %3122 = vmatpush1.msra.mxu0 0.0
    %3123 = vmatprep.subr.mxu0 0.0
    %3124 = vmatpush1.msra.mxu0 0.0
    %3125 = vmatprep.subr.mxu0 0.0
    %3126 = vmatpush1.msra.mxu0 0.0
    %3127 = vmatprep.subr.mxu0 0.0
    %3128 = vmatpush1.msra.mxu0 0.0
    %3129 = vmatprep.subr.mxu0 0.0
    %3130 = vmatpush1.msra.mxu0 %v3101
    %3131 = vmatprep.subr.mxu0 0.0
    %3132 = vmatpush1.msra.mxu0 %v3100
    %3133 = vmatprep.subr.mxu0 0.0
    %3134 = vmatpush1.msra.mxu0 %v3099
    %3135 = vmatprep.subr.mxu0 0.0
    %3136 = vmatpush1.msra.mxu0 %v3098
    %3137 = vmatprep.subr.mxu0 0.0
    %3138 = vmatpush2.msra.mxu0 0.0
    %3139 = vmatprep.subr.mxu0 0.0
    %3140 = vmatpush2.msra.mxu0 0.0
    %3141 = vmatprep.subr.mxu0 0.0
    %3142 = vmatpush2.msra.mxu0 0.0
    %3143 = vmatprep.subr.mxu0 0.0
    %3144 = vmatpush2.msra.mxu0 0.0
    %3145 = vmatprep.subr.mxu0 0.0
    %3146 = vmatpush2.msra.mxu0 0.0
    %3147 = vmatprep.subr.mxu0 0.0
    %3148 = vmatpush2.msra.mxu0 0.0
    %3149 = vmatprep.subr.mxu0 0.0
    %3150 = vmatpush2.msra.mxu0 0.0
    %3151 = vmatprep.subr.mxu0 0.0
    %3152 = vmatpush2.msra.mxu0 0.0
    %3153 = vmatprep.subr.mxu0 0.0
    %3154 = vmatpush2.msra.mxu0 0.0
    %3155 = vmatprep.subr.mxu0 0.0
    %3156 = vmatpush2.msra.mxu0 0.0
    %3157 = vmatprep.subr.mxu0 0.0
    %3158 = vmatpush2.msra.mxu0 0.0
    %3159 = vmatprep.subr.mxu0 0.0
    %3160 = vmatpush2.msra.mxu0 0.0
    %3161 = vmatprep.subr.mxu0 0.0
    %3162 = vmatpush2.msra.mxu0 0.0
    %3163 = vmatprep.subr.mxu0 0.0
    %3164 = vmatpush2.msra.mxu0 0.0
    %3165 = vmatprep.subr.mxu0 0.0
    %3166 = vmatpush2.msra.mxu0 0.0
    %3167 = vmatprep.subr.mxu0 0.0
    %3168 = vmatpush2.msra.mxu0 0.0
    %3169 = vmatprep.mubr.f32.mxu0 0.0
    %3170 = vmatmul.mubr.f32.gmra.mxu0 %v3103
    %v3171 = vpop.f32.mrf.mxu0
    %v3172 = vadd.f32 0.0, %v3171
    %v3173 = vpop.f32.mrf.mxu0
    %3174 = vdwg.mxu0
    %3175 = vmatprep.subr.mxu0 0.0
    %3176 = vmatpush1.msra.mxu0 0.0
    %3177 = vmatprep.subr.mxu0 0.0
    %3178 = vmatpush1.msra.mxu0 0.0
    %3179 = vmatprep.subr.mxu0 0.0
    %3180 = vmatpush1.msra.mxu0 0.0
    %3181 = vmatprep.subr.mxu0 0.0
    %3182 = vmatpush1.msra.mxu0 0.0
    %3183 = vmatprep.subr.mxu0 0.0
    %3184 = vmatpush1.msra.mxu0 0.0
    %3185 = vmatprep.subr.mxu0 0.0
    %3186 = vmatpush1.msra.mxu0 0.0
    %3187 = vmatprep.subr.mxu0 0.0
    %3188 = vmatpush1.msra.mxu0 0.0
    %3189 = vmatprep.subr.mxu0 0.0
    %3190 = vmatpush1.msra.mxu0 0.0
    %3191 = vmatprep.subr.mxu0 0.0
    %3192 = vmatpush1.msra.mxu0 0.0
    %3193 = vmatprep.subr.mxu0 0.0
    %3194 = vmatpush1.msra.mxu0 0.0
    %3195 = vmatprep.subr.mxu0 0.0
    %3196 = vmatpush1.msra.mxu0 0.0
    %3197 = vmatprep.subr.mxu0 0.0
    %3198 = vmatpush1.msra.mxu0 0.0
    %3199 = vmatprep.subr.mxu0 0.0
    %3200 = vmatpush1.msra.mxu0 %v3097
    %3201 = vmatprep.subr.mxu0 0.0
    %3202 = vmatpush1.msra.mxu0 %v3096
    %3203 = vmatprep.subr.mxu0 0.0
    %3204 = vmatpush1.msra.mxu0 %v3095
    %3205 = vmatprep.subr.mxu0 0.0
    %3206 = vmatpush1.msra.mxu0 %v3094
    %3207 = vmatprep.subr.mxu0 0.0
    %3208 = vmatpush2.msra.mxu0 0.0
    %3209 = vmatprep.subr.mxu0 0.0
    %3210 = vmatpush2.msra.mxu0 0.0
    %3211 = vmatprep.subr.mxu0 0.0
    %3212 = vmatpush2.msra.mxu0 0.0
    %3213 = vmatprep.subr.mxu0 0.0
    %3214 = vmatpush2.msra.mxu0 0.0
    %3215 = vmatprep.subr.mxu0 0.0
    %3216 = vmatpush2.msra.mxu0 0.0
    %3217 = vmatprep.subr.mxu0 0.0
    %3218 = vmatpush2.msra.mxu0 0.0
    %3219 = vmatprep.subr.mxu0 0.0
    %3220 = vmatpush2.msra.mxu0 0.0
    %3221 = vmatprep.subr.mxu0 0.0
    %3222 = vmatpush2.msra.mxu0 0.0
    %3223 = vmatprep.subr.mxu0 0.0
    %3224 = vmatpush2.msra.mxu0 0.0
    %3225 = vmatprep.subr.mxu0 0.0
    %3226 = vmatpush2.msra.mxu0 0.0
    %3227 = vmatprep.subr.mxu0 0.0
    %3228 = vmatpush2.msra.mxu0 0.0
    %3229 = vmatprep.subr.mxu0 0.0
    %3230 = vmatpush2.msra.mxu0 0.0
    %3231 = vmatprep.subr.mxu0 0.0
    %3232 = vmatpush2.msra.mxu0 0.0
    %3233 = vmatprep.subr.mxu0 0.0
    %3234 = vmatpush2.msra.mxu0 0.0
    %3235 = vmatprep.subr.mxu0 0.0
    %3236 = vmatpush2.msra.mxu0 0.0
    %3237 = vmatprep.subr.mxu0 0.0
    %3238 = vmatpush2.msra.mxu0 0.0
    %3239 = vmatprep.mubr.f32.mxu0 0.0
    %3240 = vmatmul.mubr.f32.gmra.mxu0 %v2931
    %v3241 = vpop.f32.mrf.mxu0
    %v3242 = vadd.f32 %v3172, %v3241
    %v3243 = vpop.f32.mrf.mxu0
    %3244 = vdwg.mxu0
    %v3245 = vld [vmem:[#allocation6] sm:$0x1]
    %v3246 = vadd.f32 %v3242, %v3245
    %v3247 = vmax.f32 %v3246, 0.0
    %v3248 = vld [vmem:[%s10] sm:$0xff]
    %v3249 = vld [vmem:[%s10 + $0x8] sm:$0xff]
    %v3250 = vld [vmem:[%s10 + $0x10] sm:$0xff]
    %v3251 = vld [vmem:[%s10 + $0x18] sm:$0xff]
    %v3252 = vld [vmem:[#allocation8] sm:$0x1]
    %v3254 = vsel %vm118, %v3247, 0
    %3256 = vmatprep.subr.mxu0 0.0
    %3257 = vmatpush1.msra.mxu0 0.0
    %3258 = vmatprep.subr.mxu0 0.0
    %3259 = vmatpush1.msra.mxu0 0.0
    %3260 = vmatprep.subr.mxu0 0.0
    %3261 = vmatpush1.msra.mxu0 0.0
    %3262 = vmatprep.subr.mxu0 0.0
    %3263 = vmatpush1.msra.mxu0 0.0
    %3264 = vmatprep.subr.mxu0 0.0
    %3265 = vmatpush1.msra.mxu0 0.0
    %3266 = vmatprep.subr.mxu0 0.0
    %3267 = vmatpush1.msra.mxu0 0.0
    %3268 = vmatprep.subr.mxu0 0.0
    %3269 = vmatpush1.msra.mxu0 0.0
    %3270 = vmatprep.subr.mxu0 0.0
    %3271 = vmatpush1.msra.mxu0 0.0
    %3272 = vmatprep.subr.mxu0 0.0
    %3273 = vmatpush1.msra.mxu0 0.0
    %3274 = vmatprep.subr.mxu0 0.0
    %3275 = vmatpush1.msra.mxu0 0.0
    %3276 = vmatprep.subr.mxu0 0.0
    %3277 = vmatpush1.msra.mxu0 0.0
    %3278 = vmatprep.subr.mxu0 0.0
    %3279 = vmatpush1.msra.mxu0 0.0
    %3280 = vmatprep.subr.mxu0 0.0
    %3281 = vmatpush1.msra.mxu0 %v3251
    %3282 = vmatprep.subr.mxu0 0.0
    %3283 = vmatpush1.msra.mxu0 %v3250
    %3284 = vmatprep.subr.mxu0 0.0
    %3285 = vmatpush1.msra.mxu0 %v3249
    %3286 = vmatprep.subr.mxu0 0.0
    %3287 = vmatpush1.msra.mxu0 %v3248
    %3288 = vmatprep.subr.mxu0 0.0
    %3289 = vmatpush2.msra.mxu0 0.0
    %3290 = vmatprep.subr.mxu0 0.0
    %3291 = vmatpush2.msra.mxu0 0.0
    %3292 = vmatprep.subr.mxu0 0.0
    %3293 = vmatpush2.msra.mxu0 0.0
    %3294 = vmatprep.subr.mxu0 0.0
    %3295 = vmatpush2.msra.mxu0 0.0
    %3296 = vmatprep.subr.mxu0 0.0
    %3297 = vmatpush2.msra.mxu0 0.0
    %3298 = vmatprep.subr.mxu0 0.0
    %3299 = vmatpush2.msra.mxu0 0.0
    %3300 = vmatprep.subr.mxu0 0.0
    %3301 = vmatpush2.msra.mxu0 0.0
    %3302 = vmatprep.subr.mxu0 0.0
    %3303 = vmatpush2.msra.mxu0 0.0
    %3304 = vmatprep.subr.mxu0 0.0
    %3305 = vmatpush2.msra.mxu0 0.0
    %3306 = vmatprep.subr.mxu0 0.0
    %3307 = vmatpush2.msra.mxu0 0.0
    %3308 = vmatprep.subr.mxu0 0.0
    %3309 = vmatpush2.msra.mxu0 0.0
    %3310 = vmatprep.subr.mxu0 0.0
    %3311 = vmatpush2.msra.mxu0 0.0
    %3312 = vmatprep.subr.mxu0 0.0
    %3313 = vmatpush2.msra.mxu0 0.0
    %3314 = vmatprep.subr.mxu0 0.0
    %3315 = vmatpush2.msra.mxu0 0.0
    %3316 = vmatprep.subr.mxu0 0.0
    %3317 = vmatpush2.msra.mxu0 0.0
    %3318 = vmatprep.subr.mxu0 0.0
    %3319 = vmatpush2.msra.mxu0 0.0
    %3320 = vmatprep.mubr.f32.mxu0 0.0
    %3321 = vmatmul.mubr.f32.gmra.mxu0 %v3254
    %v3322 = vpop.f32.mrf.mxu0
    %v3323 = vadd.f32 %v3252, %v3322
    %v3324 = vpop.f32.mrf.mxu0
    %3325 = vdwg.mxu0
    %v3326 = vld [vmem:[%s11] sm:$0xff]
    %v3327 = vld [vmem:[%s11 + $0x8] sm:$0xff]
    %v3328 = vld [vmem:[%s11 + $0x10] sm:$0xff]
    %v3329 = vld [vmem:[%s11 + $0x18] sm:$0xff]
    %v3330 = vld [vmem:[#allocation9] sm:$0x1]
    %3331 = vmatprep.subr.mxu0 0.0
    %3332 = vmatpush1.msra.mxu0 0.0
    %3333 = vmatprep.subr.mxu0 0.0
    %3334 = vmatpush1.msra.mxu0 0.0
    %3335 = vmatprep.subr.mxu0 0.0
    %3336 = vmatpush1.msra.mxu0 0.0
    %3337 = vmatprep.subr.mxu0 0.0
    %3338 = vmatpush1.msra.mxu0 0.0
    %3339 = vmatprep.subr.mxu0 0.0
    %3340 = vmatpush1.msra.mxu0 0.0
    %3341 = vmatprep.subr.mxu0 0.0
    %3342 = vmatpush1.msra.mxu0 0.0
    %3343 = vmatprep.subr.mxu0 0.0
    %3344 = vmatpush1.msra.mxu0 0.0
    %3345 = vmatprep.subr.mxu0 0.0
    %3346 = vmatpush1.msra.mxu0 0.0
    %3347 = vmatprep.subr.mxu0 0.0
    %3348 = vmatpush1.msra.mxu0 0.0
    %3349 = vmatprep.subr.mxu0 0.0
    %3350 = vmatpush1.msra.mxu0 0.0
    %3351 = vmatprep.subr.mxu0 0.0
    %3352 = vmatpush1.msra.mxu0 0.0
    %3353 = vmatprep.subr.mxu0 0.0
    %3354 = vmatpush1.msra.mxu0 0.0
    %3355 = vmatprep.subr.mxu0 0.0
    %3356 = vmatpush1.msra.mxu0 %v3329
    %3357 = vmatprep.subr.mxu0 0.0
    %3358 = vmatpush1.msra.mxu0 %v3328
    %3359 = vmatprep.subr.mxu0 0.0
    %3360 = vmatpush1.msra.mxu0 %v3327
    %3361 = vmatprep.subr.mxu0 0.0
    %3362 = vmatpush1.msra.mxu0 %v3326
    %3363 = vmatprep.subr.mxu0 0.0
    %3364 = vmatpush2.msra.mxu0 0.0
    %3365 = vmatprep.subr.mxu0 0.0
    %3366 = vmatpush2.msra.mxu0 0.0
    %3367 = vmatprep.subr.mxu0 0.0
    %3368 = vmatpush2.msra.mxu0 0.0
    %3369 = vmatprep.subr.mxu0 0.0
    %3370 = vmatpush2.msra.mxu0 0.0
    %3371 = vmatprep.subr.mxu0 0.0
    %3372 = vmatpush2.msra.mxu0 0.0
    %3373 = vmatprep.subr.mxu0 0.0
    %3374 = vmatpush2.msra.mxu0 0.0
    %3375 = vmatprep.subr.mxu0 0.0
    %3376 = vmatpush2.msra.mxu0 0.0
    %3377 = vmatprep.subr.mxu0 0.0
    %3378 = vmatpush2.msra.mxu0 0.0
    %3379 = vmatprep.subr.mxu0 0.0
    %3380 = vmatpush2.msra.mxu0 0.0
    %3381 = vmatprep.subr.mxu0 0.0
    %3382 = vmatpush2.msra.mxu0 0.0
    %3383 = vmatprep.subr.mxu0 0.0
    %3384 = vmatpush2.msra.mxu0 0.0
    %3385 = vmatprep.subr.mxu0 0.0
    %3386 = vmatpush2.msra.mxu0 0.0
    %3387 = vmatprep.subr.mxu0 0.0
    %3388 = vmatpush2.msra.mxu0 0.0
    %3389 = vmatprep.subr.mxu0 0.0
    %3390 = vmatpush2.msra.mxu0 0.0
    %3391 = vmatprep.subr.mxu0 0.0
    %3392 = vmatpush2.msra.mxu0 0.0
    %3393 = vmatprep.subr.mxu0 0.0
    %3394 = vmatpush2.msra.mxu0 0.0
    %3395 = vmatprep.mubr.f32.mxu0 0.0
    %3396 = vmatmul.mubr.f32.gmra.mxu0 %v2754
    %v3397 = vpop.f32.mrf.mxu0
    %v3398 = vadd.f32 %v3330, %v3397
    %v3399 = vpop.f32.mrf.mxu0
    %3400 = vdwg.mxu0
    %v3401 = vadd.f32 %v3323, %v3398
    %v3402 = vxor.u32 %v3401, 2147483648
    %v3403 = vmul.f32 %v3402, 1.442695
    %v3404 = vpow.pop %v3403
    %v3405 = vadd.f32 %v3404, 1.0
    %v3406 = vrcp.pop %v3405
    %v3407 = vmul.f32 1.0, %v3406
    %3409 = vrot.lane.b32.xlu0 %v3398, 64
    %v3410 = vpop.permute.xlu0 %3409
    %v3412 = vmul.f32 %v3407, %v3410
    %3414 = vrot.lane.b32.xlu0 %v3412, 64
    %v3415 = vpop.permute.xlu0 %3414
    %v3417 = vadd.f32 %v3323, %v3415
    %v3418 = vtanh.pop %v3417
    %v3419 = vsub.f32 1.0, %v3407
    %3421 = vrot.lane.b32.xlu0 %v3418, 96
    %v3422 = vpop.permute.xlu0 %3421
    %v3424 = vmul.f32 %v3419, %v3422
    %v3425 = vmul.f32 %v3407, %v2745
    %v3426 = vadd.f32 %v3424, %v3425
    %v3427 = vld [vmem:[%s14] sm:$0xff]
    %v3428 = vld [vmem:[%s14 + $0x8] sm:$0xff]
    %v3429 = vld [vmem:[%s14 + $0x10] sm:$0xff]
    %v3430 = vld [vmem:[%s14 + $0x18] sm:$0xff]
    %v3431 = vld [vmem:[%s15] sm:$0x1]
    %3433 = vrot.lane.b32.xlu0 %v3426, 96
    %v3434 = vpop.permute.xlu0 %3433
    %v3435 = vsel %vm118, %v3434, 0
    %3437 = vmatprep.subr.mxu0 0.0
    %3438 = vmatpush1.msra.mxu0 0.0
    %3439 = vmatprep.subr.mxu0 0.0
    %3440 = vmatpush1.msra.mxu0 0.0
    %3441 = vmatprep.subr.mxu0 0.0
    %3442 = vmatpush1.msra.mxu0 0.0
    %3443 = vmatprep.subr.mxu0 0.0
    %3444 = vmatpush1.msra.mxu0 0.0
    %3445 = vmatprep.subr.mxu0 0.0
    %3446 = vmatpush1.msra.mxu0 0.0
    %3447 = vmatprep.subr.mxu0 0.0
    %3448 = vmatpush1.msra.mxu0 0.0
    %3449 = vmatprep.subr.mxu0 0.0
    %3450 = vmatpush1.msra.mxu0 0.0
    %3451 = vmatprep.subr.mxu0 0.0
    %3452 = vmatpush1.msra.mxu0 0.0
    %3453 = vmatprep.subr.mxu0 0.0
    %3454 = vmatpush1.msra.mxu0 0.0
    %3455 = vmatprep.subr.mxu0 0.0
    %3456 = vmatpush1.msra.mxu0 0.0
    %3457 = vmatprep.subr.mxu0 0.0
    %3458 = vmatpush1.msra.mxu0 0.0
    %3459 = vmatprep.subr.mxu0 0.0
    %3460 = vmatpush1.msra.mxu0 0.0
    %3461 = vmatprep.subr.mxu0 0.0
    %3462 = vmatpush1.msra.mxu0 %v3430
    %3463 = vmatprep.subr.mxu0 0.0
    %3464 = vmatpush1.msra.mxu0 %v3429
    %3465 = vmatprep.subr.mxu0 0.0
    %3466 = vmatpush1.msra.mxu0 %v3428
    %3467 = vmatprep.subr.mxu0 0.0
    %3468 = vmatpush1.msra.mxu0 %v3427
    %3469 = vmatprep.subr.mxu0 0.0
    %3470 = vmatpush2.msra.mxu0 0.0
    %3471 = vmatprep.subr.mxu0 0.0
    %3472 = vmatpush2.msra.mxu0 0.0
    %3473 = vmatprep.subr.mxu0 0.0
    %3474 = vmatpush2.msra.mxu0 0.0
    %3475 = vmatprep.subr.mxu0 0.0
    %3476 = vmatpush2.msra.mxu0 0.0
    %3477 = vmatprep.subr.mxu0 0.0
    %3478 = vmatpush2.msra.mxu0 0.0
    %3479 = vmatprep.subr.mxu0 0.0
    %3480 = vmatpush2.msra.mxu0 0.0
    %3481 = vmatprep.subr.mxu0 0.0
    %3482 = vmatpush2.msra.mxu0 0.0
    %3483 = vmatprep.subr.mxu0 0.0
    %3484 = vmatpush2.msra.mxu0 0.0
    %3485 = vmatprep.subr.mxu0 0.0
    %3486 = vmatpush2.msra.mxu0 0.0
    %3487 = vmatprep.subr.mxu0 0.0
    %3488 = vmatpush2.msra.mxu0 0.0
    %3489 = vmatprep.subr.mxu0 0.0
    %3490 = vmatpush2.msra.mxu0 0.0
    %3491 = vmatprep.subr.mxu0 0.0
    %3492 = vmatpush2.msra.mxu0 0.0
    %3493 = vmatprep.subr.mxu0 0.0
    %3494 = vmatpush2.msra.mxu0 0.0
    %3495 = vmatprep.subr.mxu0 0.0
    %3496 = vmatpush2.msra.mxu0 0.0
    %3497 = vmatprep.subr.mxu0 0.0
    %3498 = vmatpush2.msra.mxu0 0.0
    %3499 = vmatprep.subr.mxu0 0.0
    %3500 = vmatpush2.msra.mxu0 0.0
    %3501 = vmatprep.mubr.f32.mxu0 0.0
    %3502 = vmatmul.mubr.f32.gmra.mxu0 %v3435
    %v3503 = vpop.f32.mrf.mxu0
    %v3504 = vadd.f32 %v3431, %v3503
    %v3505 = vpop.f32.mrf.mxu0
    %3506 = vdwg.mxu0
    %v3507 = vsel %vm779, %v3504, -inf
    %3508 = vmax.xlane.f32.xlu0 %v3507
    %v3509 = vpop.xlane.xlu0 %3508
    %v3510 = vsub.f32 %v3504, %v3509
    %v3511 = vmul.f32 %v3510, 1.442695
    %v3512 = vpow.pop %v3511
    %v3513 = vsel %vm779, %v3512, 0.0
    %3514 = vadd.xlane.f32.xlu0 %v3513
    %v3515 = vpop.xlane.xlu0 %3514
    %v3516 = vlog2.pop %v3515
    %v3517 = vmul.f32 %v3516, 0.6931472
    %v3518 = vadd.f32 %v3517, %v3509
    %v3519 = vsub.f32 %v3504, %v3518
    %3520 = vrot.lane.b32.xlu0 %v3426, 16
    %v3521 = vpop.permute.xlu0 %3520
    %3523 = vrot.lane.b32.xlu0 %v3015, 80
    %v3524 = vpop.permute.xlu0 %3523
    %v3526 = vsel %vm799, %v3519, %v3521
    %v3527 = vsel %vm801, %v3526, %v3524
    %v3528 = vsel %vm803, %v3527, 0.0
    %3529 = vst [vmem:[%s16 + $0x4] sm:$0x1] %v3528
    %s3530 = sld [smem:[#allocation3 + $0x5]]
    %s3531 = scalar_lea.vmem %s1, %s3530
    %v3532 = vld [vmem:[%s3531] sm:$0x1]
    %v3533 = vld [vmem:[%s4] sm:$0xff]
    %v3534 = vld [vmem:[%s4 + $0x8] sm:$0xff]
    %v3535 = vld [vmem:[%s4 + $0x10] sm:$0xff]
    %v3536 = vld [vmem:[%s4 + $0x18] sm:$0xff]
    %v3537 = vld [vmem:[%s5] sm:$0xff]
    %v3538 = vld [vmem:[%s5 + $0x8] sm:$0xff]
    %v3539 = vld [vmem:[%s5 + $0x10] sm:$0xff]
    %v3540 = vld [vmem:[%s5 + $0x18] sm:$0xff]
    %3541 = vmatprep.subr.mxu0 0.0
    %3542 = vmatpush1.msra.mxu0 0.0
    %3543 = vmatprep.subr.mxu0 0.0
    %3544 = vmatpush1.msra.mxu0 0.0
    %3545 = vmatprep.subr.mxu0 0.0
    %3546 = vmatpush1.msra.mxu0 0.0
    %3547 = vmatprep.subr.mxu0 0.0
    %3548 = vmatpush1.msra.mxu0 0.0
    %3549 = vmatprep.subr.mxu0 0.0
    %3550 = vmatpush1.msra.mxu0 0.0
    %3551 = vmatprep.subr.mxu0 0.0
    %3552 = vmatpush1.msra.mxu0 0.0
    %3553 = vmatprep.subr.mxu0 0.0
    %3554 = vmatpush1.msra.mxu0 0.0
    %3555 = vmatprep.subr.mxu0 0.0
    %3556 = vmatpush1.msra.mxu0 0.0
    %3557 = vmatprep.subr.mxu0 0.0
    %3558 = vmatpush1.msra.mxu0 0.0
    %3559 = vmatprep.subr.mxu0 0.0
    %3560 = vmatpush1.msra.mxu0 0.0
    %3561 = vmatprep.subr.mxu0 0.0
    %3562 = vmatpush1.msra.mxu0 0.0
    %3563 = vmatprep.subr.mxu0 0.0
    %3564 = vmatpush1.msra.mxu0 0.0
    %3565 = vmatprep.subr.mxu0 0.0
    %3566 = vmatpush1.msra.mxu0 %v3540
    %3567 = vmatprep.subr.mxu0 0.0
    %3568 = vmatpush1.msra.mxu0 %v3539
    %3569 = vmatprep.subr.mxu0 0.0
    %3570 = vmatpush1.msra.mxu0 %v3538
    %3571 = vmatprep.subr.mxu0 0.0
    %3572 = vmatpush1.msra.mxu0 %v3537
    %3573 = vmatprep.subr.mxu0 0.0
    %3574 = vmatpush2.msra.mxu0 0.0
    %3575 = vmatprep.subr.mxu0 0.0
    %3576 = vmatpush2.msra.mxu0 0.0
    %3577 = vmatprep.subr.mxu0 0.0
    %3578 = vmatpush2.msra.mxu0 0.0
    %3579 = vmatprep.subr.mxu0 0.0
    %3580 = vmatpush2.msra.mxu0 0.0
    %3581 = vmatprep.subr.mxu0 0.0
    %3582 = vmatpush2.msra.mxu0 0.0
    %3583 = vmatprep.subr.mxu0 0.0
    %3584 = vmatpush2.msra.mxu0 0.0
    %3585 = vmatprep.subr.mxu0 0.0
    %3586 = vmatpush2.msra.mxu0 0.0
    %3587 = vmatprep.subr.mxu0 0.0
    %3588 = vmatpush2.msra.mxu0 0.0
    %3589 = vmatprep.subr.mxu0 0.0
    %3590 = vmatpush2.msra.mxu0 0.0
    %3591 = vmatprep.subr.mxu0 0.0
    %3592 = vmatpush2.msra.mxu0 0.0
    %3593 = vmatprep.subr.mxu0 0.0
    %3594 = vmatpush2.msra.mxu0 0.0
    %3595 = vmatprep.subr.mxu0 0.0
    %3596 = vmatpush2.msra.mxu0 0.0
    %3597 = vmatprep.subr.mxu0 0.0
    %3598 = vmatpush2.msra.mxu0 0.0
    %3599 = vmatprep.subr.mxu0 0.0
    %3600 = vmatpush2.msra.mxu0 0.0
    %3601 = vmatprep.subr.mxu0 0.0
    %3602 = vmatpush2.msra.mxu0 0.0
    %3603 = vmatprep.subr.mxu0 0.0
    %3604 = vmatpush2.msra.mxu0 0.0
    %3605 = vmatprep.mubr.f32.mxu0 0.0
    %3606 = vmatmul.mubr.f32.gmra.mxu0 %v3435
    %v3607 = vpop.f32.mrf.mxu0
    %v3608 = vadd.f32 0.0, %v3607
    %v3609 = vpop.f32.mrf.mxu0
    %3610 = vdwg.mxu0
    %v3612 = vsel %vm118, %v3532, 0
    %3614 = vmatprep.subr.mxu0 0.0
    %3615 = vmatpush1.msra.mxu0 0.0
    %3616 = vmatprep.subr.mxu0 0.0
    %3617 = vmatpush1.msra.mxu0 0.0
    %3618 = vmatprep.subr.mxu0 0.0
    %3619 = vmatpush1.msra.mxu0 0.0
    %3620 = vmatprep.subr.mxu0 0.0
    %3621 = vmatpush1.msra.mxu0 0.0
    %3622 = vmatprep.subr.mxu0 0.0
    %3623 = vmatpush1.msra.mxu0 0.0
    %3624 = vmatprep.subr.mxu0 0.0
    %3625 = vmatpush1.msra.mxu0 0.0
    %3626 = vmatprep.subr.mxu0 0.0
    %3627 = vmatpush1.msra.mxu0 0.0
    %3628 = vmatprep.subr.mxu0 0.0
    %3629 = vmatpush1.msra.mxu0 0.0
    %3630 = vmatprep.subr.mxu0 0.0
    %3631 = vmatpush1.msra.mxu0 0.0
    %3632 = vmatprep.subr.mxu0 0.0
    %3633 = vmatpush1.msra.mxu0 0.0
    %3634 = vmatprep.subr.mxu0 0.0
    %3635 = vmatpush1.msra.mxu0 0.0
    %3636 = vmatprep.subr.mxu0 0.0
    %3637 = vmatpush1.msra.mxu0 0.0
    %3638 = vmatprep.subr.mxu0 0.0
    %3639 = vmatpush1.msra.mxu0 %v3536
    %3640 = vmatprep.subr.mxu0 0.0
    %3641 = vmatpush1.msra.mxu0 %v3535
    %3642 = vmatprep.subr.mxu0 0.0
    %3643 = vmatpush1.msra.mxu0 %v3534
    %3644 = vmatprep.subr.mxu0 0.0
    %3645 = vmatpush1.msra.mxu0 %v3533
    %3646 = vmatprep.subr.mxu0 0.0
    %3647 = vmatpush2.msra.mxu0 0.0
    %3648 = vmatprep.subr.mxu0 0.0
    %3649 = vmatpush2.msra.mxu0 0.0
    %3650 = vmatprep.subr.mxu0 0.0
    %3651 = vmatpush2.msra.mxu0 0.0
    %3652 = vmatprep.subr.mxu0 0.0
    %3653 = vmatpush2.msra.mxu0 0.0
    %3654 = vmatprep.subr.mxu0 0.0
    %3655 = vmatpush2.msra.mxu0 0.0
    %3656 = vmatprep.subr.mxu0 0.0
    %3657 = vmatpush2.msra.mxu0 0.0
    %3658 = vmatprep.subr.mxu0 0.0
    %3659 = vmatpush2.msra.mxu0 0.0
    %3660 = vmatprep.subr.mxu0 0.0
    %3661 = vmatpush2.msra.mxu0 0.0
    %3662 = vmatprep.subr.mxu0 0.0
    %3663 = vmatpush2.msra.mxu0 0.0
    %3664 = vmatprep.subr.mxu0 0.0
    %3665 = vmatpush2.msra.mxu0 0.0
    %3666 = vmatprep.subr.mxu0 0.0
    %3667 = vmatpush2.msra.mxu0 0.0
    %3668 = vmatprep.subr.mxu0 0.0
    %3669 = vmatpush2.msra.mxu0 0.0
    %3670 = vmatprep.subr.mxu0 0.0
    %3671 = vmatpush2.msra.mxu0 0.0
    %3672 = vmatprep.subr.mxu0 0.0
    %3673 = vmatpush2.msra.mxu0 0.0
    %3674 = vmatprep.subr.mxu0 0.0
    %3675 = vmatpush2.msra.mxu0 0.0
    %3676 = vmatprep.subr.mxu0 0.0
    %3677 = vmatpush2.msra.mxu0 0.0
    %3678 = vmatprep.mubr.f32.mxu0 0.0
    %3679 = vmatmul.mubr.f32.gmra.mxu0 %v3612
    %v3680 = vpop.f32.mrf.mxu0
    %v3681 = vadd.f32 %v3608, %v3680
    %v3682 = vpop.f32.mrf.mxu0
    %3683 = vdwg.mxu0
    %v3684 = vld [vmem:[%s6] sm:$0x1]
    %v3685 = vadd.f32 %v3681, %v3684
    %v3686 = vsel %vm267, %v3685, -inf
    %3687 = vmax.xlane.f32.xlu0 %v3686
    %v3688 = vpop.xlane.xlu0 %3687
    %v3689 = vsub.f32 %v3685, %v3688
    %v3690 = vmul.f32 %v3689, 1.442695
    %v3691 = vpow.pop %v3690
    %v3692 = vsel %vm267, %v3691, 0.0
    %3693 = vadd.xlane.f32.xlu0 %v3692
    %v3694 = vpop.xlane.xlu0 %3693
    %v3695 = vrcp.pop %v3694
    %v3696 = vmul.f32 %v3691, %v3695
    %v3697 = vld [vmem:[#allocation4] sm:$0xff]
    %v3698 = vld [vmem:[#allocation4 + $0x8] sm:$0x3]
    %v3700 = vsel %vm281, %v3696, 0
    %v3703 = vsel %vm285, %v3698, 0
    %3705 = vmatprep.subr.mxu0 0.0
    %3706 = vmatpush1.msra.mxu0 0.0
    %3707 = vmatprep.subr.mxu0 0.0
    %3708 = vmatpush1.msra.mxu0 0.0
    %3709 = vmatprep.subr.mxu0 0.0
    %3710 = vmatpush1.msra.mxu0 0.0
    %3711 = vmatprep.subr.mxu0 0.0
    %3712 = vmatpush1.msra.mxu0 0.0
    %3713 = vmatprep.subr.mxu0 0.0
    %3714 = vmatpush1.msra.mxu0 0.0
    %3715 = vmatprep.subr.mxu0 0.0
    %3716 = vmatpush1.msra.mxu0 0.0
    %3717 = vmatprep.subr.mxu0 0.0
    %3718 = vmatpush1.msra.mxu0 0.0
    %3719 = vmatprep.subr.mxu0 0.0
    %3720 = vmatpush1.msra.mxu0 0.0
    %3721 = vmatprep.subr.mxu0 0.0
    %3722 = vmatpush1.msra.mxu0 0.0
    %3723 = vmatprep.subr.mxu0 0.0
    %3724 = vmatpush1.msra.mxu0 0.0
    %3725 = vmatprep.subr.mxu0 0.0
    %3726 = vmatpush1.msra.mxu0 0.0
    %3727 = vmatprep.subr.mxu0 0.0
    %3728 = vmatpush1.msra.mxu0 0.0
    %3729 = vmatprep.subr.mxu0 0.0
    %3730 = vmatpush1.msra.mxu0 0.0
    %3731 = vmatprep.subr.mxu0 0.0
    %3732 = vmatpush1.msra.mxu0 0.0
    %3733 = vmatprep.subr.mxu0 0.0
    %3734 = vmatpush1.msra.mxu0 %v3703
    %3735 = vmatprep.subr.mxu0 0.0
    %3736 = vmatpush1.msra.mxu0 %v3697
    %3737 = vmatprep.subr.mxu0 0.0
    %3738 = vmatpush2.msra.mxu0 0.0
    %3739 = vmatprep.subr.mxu0 0.0
    %3740 = vmatpush2.msra.mxu0 0.0
    %3741 = vmatprep.subr.mxu0 0.0
    %3742 = vmatpush2.msra.mxu0 0.0
    %3743 = vmatprep.subr.mxu0 0.0
    %3744 = vmatpush2.msra.mxu0 0.0
    %3745 = vmatprep.subr.mxu0 0.0
    %3746 = vmatpush2.msra.mxu0 0.0
    %3747 = vmatprep.subr.mxu0 0.0
    %3748 = vmatpush2.msra.mxu0 0.0
    %3749 = vmatprep.subr.mxu0 0.0
    %3750 = vmatpush2.msra.mxu0 0.0
    %3751 = vmatprep.subr.mxu0 0.0
    %3752 = vmatpush2.msra.mxu0 0.0
    %3753 = vmatprep.subr.mxu0 0.0
    %3754 = vmatpush2.msra.mxu0 0.0
    %3755 = vmatprep.subr.mxu0 0.0
    %3756 = vmatpush2.msra.mxu0 0.0
    %3757 = vmatprep.subr.mxu0 0.0
    %3758 = vmatpush2.msra.mxu0 0.0
    %3759 = vmatprep.subr.mxu0 0.0
    %3760 = vmatpush2.msra.mxu0 0.0
    %3761 = vmatprep.subr.mxu0 0.0
    %3762 = vmatpush2.msra.mxu0 0.0
    %3763 = vmatprep.subr.mxu0 0.0
    %3764 = vmatpush2.msra.mxu0 0.0
    %3765 = vmatprep.subr.mxu0 0.0
    %3766 = vmatpush2.msra.mxu0 0.0
    %3767 = vmatprep.subr.mxu0 0.0
    %3768 = vmatpush2.msra.mxu0 0.0
    %3769 = vmatprep.mubr.f32.mxu0 0.0
    %3770 = vmatmul.mubr.f32.gmra.mxu0 %v3700
    %v3771 = vpop.f32.mrf.mxu0
    %v3772 = vadd.f32 0.0, %v3771
    %v3773 = vpop.f32.mrf.mxu0
    %3774 = vdwg.mxu0
    %v3775 = vld [vmem:[%s7] sm:$0xff]
    %v3776 = vld [vmem:[%s7 + $0x8] sm:$0xff]
    %v3777 = vld [vmem:[%s7 + $0x10] sm:$0xff]
    %v3778 = vld [vmem:[%s7 + $0x18] sm:$0xff]
    %v3779 = vld [vmem:[%s8] sm:$0xff]
    %v3780 = vld [vmem:[%s8 + $0x8] sm:$0xff]
    %v3781 = vld [vmem:[%s8 + $0x10] sm:$0xff]
    %v3782 = vld [vmem:[%s8 + $0x18] sm:$0xff]
    %v3784 = vsel %vm118, %v3772, 0
    %3786 = vmatprep.subr.mxu0 0.0
    %3787 = vmatpush1.msra.mxu0 0.0
    %3788 = vmatprep.subr.mxu0 0.0
    %3789 = vmatpush1.msra.mxu0 0.0
    %3790 = vmatprep.subr.mxu0 0.0
    %3791 = vmatpush1.msra.mxu0 0.0
    %3792 = vmatprep.subr.mxu0 0.0
    %3793 = vmatpush1.msra.mxu0 0.0
    %3794 = vmatprep.subr.mxu0 0.0
    %3795 = vmatpush1.msra.mxu0 0.0
    %3796 = vmatprep.subr.mxu0 0.0
    %3797 = vmatpush1.msra.mxu0 0.0
    %3798 = vmatprep.subr.mxu0 0.0
    %3799 = vmatpush1.msra.mxu0 0.0
    %3800 = vmatprep.subr.mxu0 0.0
    %3801 = vmatpush1.msra.mxu0 0.0
    %3802 = vmatprep.subr.mxu0 0.0
    %3803 = vmatpush1.msra.mxu0 0.0
    %3804 = vmatprep.subr.mxu0 0.0
    %3805 = vmatpush1.msra.mxu0 0.0
    %3806 = vmatprep.subr.mxu0 0.0
    %3807 = vmatpush1.msra.mxu0 0.0
    %3808 = vmatprep.subr.mxu0 0.0
    %3809 = vmatpush1.msra.mxu0 0.0
    %3810 = vmatprep.subr.mxu0 0.0
    %3811 = vmatpush1.msra.mxu0 %v3782
    %3812 = vmatprep.subr.mxu0 0.0
    %3813 = vmatpush1.msra.mxu0 %v3781
    %3814 = vmatprep.subr.mxu0 0.0
    %3815 = vmatpush1.msra.mxu0 %v3780
    %3816 = vmatprep.subr.mxu0 0.0
    %3817 = vmatpush1.msra.mxu0 %v3779
    %3818 = vmatprep.subr.mxu0 0.0
    %3819 = vmatpush2.msra.mxu0 0.0
    %3820 = vmatprep.subr.mxu0 0.0
    %3821 = vmatpush2.msra.mxu0 0.0
    %3822 = vmatprep.subr.mxu0 0.0
    %3823 = vmatpush2.msra.mxu0 0.0
    %3824 = vmatprep.subr.mxu0 0.0
    %3825 = vmatpush2.msra.mxu0 0.0
    %3826 = vmatprep.subr.mxu0 0.0
    %3827 = vmatpush2.msra.mxu0 0.0
    %3828 = vmatprep.subr.mxu0 0.0
    %3829 = vmatpush2.msra.mxu0 0.0
    %3830 = vmatprep.subr.mxu0 0.0
    %3831 = vmatpush2.msra.mxu0 0.0
    %3832 = vmatprep.subr.mxu0 0.0
    %3833 = vmatpush2.msra.mxu0 0.0
    %3834 = vmatprep.subr.mxu0 0.0
    %3835 = vmatpush2.msra.mxu0 0.0
    %3836 = vmatprep.subr.mxu0 0.0
    %3837 = vmatpush2.msra.mxu0 0.0
    %3838 = vmatprep.subr.mxu0 0.0
    %3839 = vmatpush2.msra.mxu0 0.0
    %3840 = vmatprep.subr.mxu0 0.0
    %3841 = vmatpush2.msra.mxu0 0.0
    %3842 = vmatprep.subr.mxu0 0.0
    %3843 = vmatpush2.msra.mxu0 0.0
    %3844 = vmatprep.subr.mxu0 0.0
    %3845 = vmatpush2.msra.mxu0 0.0
    %3846 = vmatprep.subr.mxu0 0.0
    %3847 = vmatpush2.msra.mxu0 0.0
    %3848 = vmatprep.subr.mxu0 0.0
    %3849 = vmatpush2.msra.mxu0 0.0
    %3850 = vmatprep.mubr.f32.mxu0 0.0
    %3851 = vmatmul.mubr.f32.gmra.mxu0 %v3784
    %v3852 = vpop.f32.mrf.mxu0
    %v3853 = vadd.f32 0.0, %v3852
    %v3854 = vpop.f32.mrf.mxu0
    %3855 = vdwg.mxu0
    %3856 = vmatprep.subr.mxu0 0.0
    %3857 = vmatpush1.msra.mxu0 0.0
    %3858 = vmatprep.subr.mxu0 0.0
    %3859 = vmatpush1.msra.mxu0 0.0
    %3860 = vmatprep.subr.mxu0 0.0
    %3861 = vmatpush1.msra.mxu0 0.0
    %3862 = vmatprep.subr.mxu0 0.0
    %3863 = vmatpush1.msra.mxu0 0.0
    %3864 = vmatprep.subr.mxu0 0.0
    %3865 = vmatpush1.msra.mxu0 0.0
    %3866 = vmatprep.subr.mxu0 0.0
    %3867 = vmatpush1.msra.mxu0 0.0
    %3868 = vmatprep.subr.mxu0 0.0
    %3869 = vmatpush1.msra.mxu0 0.0
    %3870 = vmatprep.subr.mxu0 0.0
    %3871 = vmatpush1.msra.mxu0 0.0
    %3872 = vmatprep.subr.mxu0 0.0
    %3873 = vmatpush1.msra.mxu0 0.0
    %3874 = vmatprep.subr.mxu0 0.0
    %3875 = vmatpush1.msra.mxu0 0.0
    %3876 = vmatprep.subr.mxu0 0.0
    %3877 = vmatpush1.msra.mxu0 0.0
    %3878 = vmatprep.subr.mxu0 0.0
    %3879 = vmatpush1.msra.mxu0 0.0
    %3880 = vmatprep.subr.mxu0 0.0
    %3881 = vmatpush1.msra.mxu0 %v3778
    %3882 = vmatprep.subr.mxu0 0.0
    %3883 = vmatpush1.msra.mxu0 %v3777
    %3884 = vmatprep.subr.mxu0 0.0
    %3885 = vmatpush1.msra.mxu0 %v3776
    %3886 = vmatprep.subr.mxu0 0.0
    %3887 = vmatpush1.msra.mxu0 %v3775
    %3888 = vmatprep.subr.mxu0 0.0
    %3889 = vmatpush2.msra.mxu0 0.0
    %3890 = vmatprep.subr.mxu0 0.0
    %3891 = vmatpush2.msra.mxu0 0.0
    %3892 = vmatprep.subr.mxu0 0.0
    %3893 = vmatpush2.msra.mxu0 0.0
    %3894 = vmatprep.subr.mxu0 0.0
    %3895 = vmatpush2.msra.mxu0 0.0
    %3896 = vmatprep.subr.mxu0 0.0
    %3897 = vmatpush2.msra.mxu0 0.0
    %3898 = vmatprep.subr.mxu0 0.0
    %3899 = vmatpush2.msra.mxu0 0.0
    %3900 = vmatprep.subr.mxu0 0.0
    %3901 = vmatpush2.msra.mxu0 0.0
    %3902 = vmatprep.subr.mxu0 0.0
    %3903 = vmatpush2.msra.mxu0 0.0
    %3904 = vmatprep.subr.mxu0 0.0
    %3905 = vmatpush2.msra.mxu0 0.0
    %3906 = vmatprep.subr.mxu0 0.0
    %3907 = vmatpush2.msra.mxu0 0.0
    %3908 = vmatprep.subr.mxu0 0.0
    %3909 = vmatpush2.msra.mxu0 0.0
    %3910 = vmatprep.subr.mxu0 0.0
    %3911 = vmatpush2.msra.mxu0 0.0
    %3912 = vmatprep.subr.mxu0 0.0
    %3913 = vmatpush2.msra.mxu0 0.0
    %3914 = vmatprep.subr.mxu0 0.0
    %3915 = vmatpush2.msra.mxu0 0.0
    %3916 = vmatprep.subr.mxu0 0.0
    %3917 = vmatpush2.msra.mxu0 0.0
    %3918 = vmatprep.subr.mxu0 0.0
    %3919 = vmatpush2.msra.mxu0 0.0
    %3920 = vmatprep.mubr.f32.mxu0 0.0
    %3921 = vmatmul.mubr.f32.gmra.mxu0 %v3612
    %v3922 = vpop.f32.mrf.mxu0
    %v3923 = vadd.f32 %v3853, %v3922
    %v3924 = vpop.f32.mrf.mxu0
    %3925 = vdwg.mxu0
    %v3926 = vld [vmem:[#allocation6] sm:$0x1]
    %v3927 = vadd.f32 %v3923, %v3926
    %v3928 = vmax.f32 %v3927, 0.0
    %v3929 = vld [vmem:[%s10] sm:$0xff]
    %v3930 = vld [vmem:[%s10 + $0x8] sm:$0xff]
    %v3931 = vld [vmem:[%s10 + $0x10] sm:$0xff]
    %v3932 = vld [vmem:[%s10 + $0x18] sm:$0xff]
    %v3933 = vld [vmem:[#allocation8] sm:$0x1]
    %v3935 = vsel %vm118, %v3928, 0
    %3937 = vmatprep.subr.mxu0 0.0
    %3938 = vmatpush1.msra.mxu0 0.0
    %3939 = vmatprep.subr.mxu0 0.0
    %3940 = vmatpush1.msra.mxu0 0.0
    %3941 = vmatprep.subr.mxu0 0.0
    %3942 = vmatpush1.msra.mxu0 0.0
    %3943 = vmatprep.subr.mxu0 0.0
    %3944 = vmatpush1.msra.mxu0 0.0
    %3945 = vmatprep.subr.mxu0 0.0
    %3946 = vmatpush1.msra.mxu0 0.0
    %3947 = vmatprep.subr.mxu0 0.0
    %3948 = vmatpush1.msra.mxu0 0.0
    %3949 = vmatprep.subr.mxu0 0.0
    %3950 = vmatpush1.msra.mxu0 0.0
    %3951 = vmatprep.subr.mxu0 0.0
    %3952 = vmatpush1.msra.mxu0 0.0
    %3953 = vmatprep.subr.mxu0 0.0
    %3954 = vmatpush1.msra.mxu0 0.0
    %3955 = vmatprep.subr.mxu0 0.0
    %3956 = vmatpush1.msra.mxu0 0.0
    %3957 = vmatprep.subr.mxu0 0.0
    %3958 = vmatpush1.msra.mxu0 0.0
    %3959 = vmatprep.subr.mxu0 0.0
    %3960 = vmatpush1.msra.mxu0 0.0
    %3961 = vmatprep.subr.mxu0 0.0
    %3962 = vmatpush1.msra.mxu0 %v3932
    %3963 = vmatprep.subr.mxu0 0.0
    %3964 = vmatpush1.msra.mxu0 %v3931
    %3965 = vmatprep.subr.mxu0 0.0
    %3966 = vmatpush1.msra.mxu0 %v3930
    %3967 = vmatprep.subr.mxu0 0.0
    %3968 = vmatpush1.msra.mxu0 %v3929
    %3969 = vmatprep.subr.mxu0 0.0
    %3970 = vmatpush2.msra.mxu0 0.0
    %3971 = vmatprep.subr.mxu0 0.0
    %3972 = vmatpush2.msra.mxu0 0.0
    %3973 = vmatprep.subr.mxu0 0.0
    %3974 = vmatpush2.msra.mxu0 0.0
    %3975 = vmatprep.subr.mxu0 0.0
    %3976 = vmatpush2.msra.mxu0 0.0
    %3977 = vmatprep.subr.mxu0 0.0
    %3978 = vmatpush2.msra.mxu0 0.0
    %3979 = vmatprep.subr.mxu0 0.0
    %3980 = vmatpush2.msra.mxu0 0.0
    %3981 = vmatprep.subr.mxu0 0.0
    %3982 = vmatpush2.msra.mxu0 0.0
    %3983 = vmatprep.subr.mxu0 0.0
    %3984 = vmatpush2.msra.mxu0 0.0
    %3985 = vmatprep.subr.mxu0 0.0
    %3986 = vmatpush2.msra.mxu0 0.0
    %3987 = vmatprep.subr.mxu0 0.0
    %3988 = vmatpush2.msra.mxu0 0.0
    %3989 = vmatprep.subr.mxu0 0.0
    %3990 = vmatpush2.msra.mxu0 0.0
    %3991 = vmatprep.subr.mxu0 0.0
    %3992 = vmatpush2.msra.mxu0 0.0
    %3993 = vmatprep.subr.mxu0 0.0
    %3994 = vmatpush2.msra.mxu0 0.0
    %3995 = vmatprep.subr.mxu0 0.0
    %3996 = vmatpush2.msra.mxu0 0.0
    %3997 = vmatprep.subr.mxu0 0.0
    %3998 = vmatpush2.msra.mxu0 0.0
    %3999 = vmatprep.subr.mxu0 0.0
    %4000 = vmatpush2.msra.mxu0 0.0
    %4001 = vmatprep.mubr.f32.mxu0 0.0
    %4002 = vmatmul.mubr.f32.gmra.mxu0 %v3935
    %v4003 = vpop.f32.mrf.mxu0
    %v4004 = vadd.f32 %v3933, %v4003
    %v4005 = vpop.f32.mrf.mxu0
    %4006 = vdwg.mxu0
    %v4007 = vld [vmem:[%s11] sm:$0xff]
    %v4008 = vld [vmem:[%s11 + $0x8] sm:$0xff]
    %v4009 = vld [vmem:[%s11 + $0x10] sm:$0xff]
    %v4010 = vld [vmem:[%s11 + $0x18] sm:$0xff]
    %v4011 = vld [vmem:[#allocation9] sm:$0x1]
    %4012 = vmatprep.subr.mxu0 0.0
    %4013 = vmatpush1.msra.mxu0 0.0
    %4014 = vmatprep.subr.mxu0 0.0
    %4015 = vmatpush1.msra.mxu0 0.0
    %4016 = vmatprep.subr.mxu0 0.0
    %4017 = vmatpush1.msra.mxu0 0.0
    %4018 = vmatprep.subr.mxu0 0.0
    %4019 = vmatpush1.msra.mxu0 0.0
    %4020 = vmatprep.subr.mxu0 0.0
    %4021 = vmatpush1.msra.mxu0 0.0
    %4022 = vmatprep.subr.mxu0 0.0
    %4023 = vmatpush1.msra.mxu0 0.0
    %4024 = vmatprep.subr.mxu0 0.0
    %4025 = vmatpush1.msra.mxu0 0.0
    %4026 = vmatprep.subr.mxu0 0.0
    %4027 = vmatpush1.msra.mxu0 0.0
    %4028 = vmatprep.subr.mxu0 0.0
    %4029 = vmatpush1.msra.mxu0 0.0
    %4030 = vmatprep.subr.mxu0 0.0
    %4031 = vmatpush1.msra.mxu0 0.0
    %4032 = vmatprep.subr.mxu0 0.0
    %4033 = vmatpush1.msra.mxu0 0.0
    %4034 = vmatprep.subr.mxu0 0.0
    %4035 = vmatpush1.msra.mxu0 0.0
    %4036 = vmatprep.subr.mxu0 0.0
    %4037 = vmatpush1.msra.mxu0 %v4010
    %4038 = vmatprep.subr.mxu0 0.0
    %4039 = vmatpush1.msra.mxu0 %v4009
    %4040 = vmatprep.subr.mxu0 0.0
    %4041 = vmatpush1.msra.mxu0 %v4008
    %4042 = vmatprep.subr.mxu0 0.0
    %4043 = vmatpush1.msra.mxu0 %v4007
    %4044 = vmatprep.subr.mxu0 0.0
    %4045 = vmatpush2.msra.mxu0 0.0
    %4046 = vmatprep.subr.mxu0 0.0
    %4047 = vmatpush2.msra.mxu0 0.0
    %4048 = vmatprep.subr.mxu0 0.0
    %4049 = vmatpush2.msra.mxu0 0.0
    %4050 = vmatprep.subr.mxu0 0.0
    %4051 = vmatpush2.msra.mxu0 0.0
    %4052 = vmatprep.subr.mxu0 0.0
    %4053 = vmatpush2.msra.mxu0 0.0
    %4054 = vmatprep.subr.mxu0 0.0
    %4055 = vmatpush2.msra.mxu0 0.0
    %4056 = vmatprep.subr.mxu0 0.0
    %4057 = vmatpush2.msra.mxu0 0.0
    %4058 = vmatprep.subr.mxu0 0.0
    %4059 = vmatpush2.msra.mxu0 0.0
    %4060 = vmatprep.subr.mxu0 0.0
    %4061 = vmatpush2.msra.mxu0 0.0
    %4062 = vmatprep.subr.mxu0 0.0
    %4063 = vmatpush2.msra.mxu0 0.0
    %4064 = vmatprep.subr.mxu0 0.0
    %4065 = vmatpush2.msra.mxu0 0.0
    %4066 = vmatprep.subr.mxu0 0.0
    %4067 = vmatpush2.msra.mxu0 0.0
    %4068 = vmatprep.subr.mxu0 0.0
    %4069 = vmatpush2.msra.mxu0 0.0
    %4070 = vmatprep.subr.mxu0 0.0
    %4071 = vmatpush2.msra.mxu0 0.0
    %4072 = vmatprep.subr.mxu0 0.0
    %4073 = vmatpush2.msra.mxu0 0.0
    %4074 = vmatprep.subr.mxu0 0.0
    %4075 = vmatpush2.msra.mxu0 0.0
    %4076 = vmatprep.mubr.f32.mxu0 0.0
    %4077 = vmatmul.mubr.f32.gmra.mxu0 %v3435
    %v4078 = vpop.f32.mrf.mxu0
    %v4079 = vadd.f32 %v4011, %v4078
    %v4080 = vpop.f32.mrf.mxu0
    %4081 = vdwg.mxu0
    %v4082 = vadd.f32 %v4004, %v4079
    %v4083 = vxor.u32 %v4082, 2147483648
    %v4084 = vmul.f32 %v4083, 1.442695
    %v4085 = vpow.pop %v4084
    %v4086 = vadd.f32 %v4085, 1.0
    %v4087 = vrcp.pop %v4086
    %v4088 = vmul.f32 1.0, %v4087
    %4090 = vrot.lane.b32.xlu0 %v4079, 64
    %v4091 = vpop.permute.xlu0 %4090
    %v4093 = vmul.f32 %v4088, %v4091
    %4095 = vrot.lane.b32.xlu0 %v4093, 64
    %v4096 = vpop.permute.xlu0 %4095
    %v4098 = vadd.f32 %v4004, %v4096
    %v4099 = vtanh.pop %v4098
    %v4100 = vsub.f32 1.0, %v4088
    %4102 = vrot.lane.b32.xlu0 %v4099, 96
    %v4103 = vpop.permute.xlu0 %4102
    %v4105 = vmul.f32 %v4100, %v4103
    %v4106 = vmul.f32 %v4088, %v3426
    %v4107 = vadd.f32 %v4105, %v4106
    %v4108 = vld [vmem:[%s14] sm:$0xff]
    %v4109 = vld [vmem:[%s14 + $0x8] sm:$0xff]
    %v4110 = vld [vmem:[%s14 + $0x10] sm:$0xff]
    %v4111 = vld [vmem:[%s14 + $0x18] sm:$0xff]
    %v4112 = vld [vmem:[%s15] sm:$0x1]
    %4114 = vrot.lane.b32.xlu0 %v4107, 96
    %v4115 = vpop.permute.xlu0 %4114
    %v4116 = vsel %vm118, %v4115, 0
    %4118 = vmatprep.subr.mxu0 0.0
    %4119 = vmatpush1.msra.mxu0 0.0
    %4120 = vmatprep.subr.mxu0 0.0
    %4121 = vmatpush1.msra.mxu0 0.0
    %4122 = vmatprep.subr.mxu0 0.0
    %4123 = vmatpush1.msra.mxu0 0.0
    %4124 = vmatprep.subr.mxu0 0.0
    %4125 = vmatpush1.msra.mxu0 0.0
    %4126 = vmatprep.subr.mxu0 0.0
    %4127 = vmatpush1.msra.mxu0 0.0
    %4128 = vmatprep.subr.mxu0 0.0
    %4129 = vmatpush1.msra.mxu0 0.0
    %4130 = vmatprep.subr.mxu0 0.0
    %4131 = vmatpush1.msra.mxu0 0.0
    %4132 = vmatprep.subr.mxu0 0.0
    %4133 = vmatpush1.msra.mxu0 0.0
    %4134 = vmatprep.subr.mxu0 0.0
    %4135 = vmatpush1.msra.mxu0 0.0
    %4136 = vmatprep.subr.mxu0 0.0
    %4137 = vmatpush1.msra.mxu0 0.0
    %4138 = vmatprep.subr.mxu0 0.0
    %4139 = vmatpush1.msra.mxu0 0.0
    %4140 = vmatprep.subr.mxu0 0.0
    %4141 = vmatpush1.msra.mxu0 0.0
    %4142 = vmatprep.subr.mxu0 0.0
    %4143 = vmatpush1.msra.mxu0 %v4111
    %4144 = vmatprep.subr.mxu0 0.0
    %4145 = vmatpush1.msra.mxu0 %v4110
    %4146 = vmatprep.subr.mxu0 0.0
    %4147 = vmatpush1.msra.mxu0 %v4109
    %4148 = vmatprep.subr.mxu0 0.0
    %4149 = vmatpush1.msra.mxu0 %v4108
    %4150 = vmatprep.subr.mxu0 0.0
    %4151 = vmatpush2.msra.mxu0 0.0
    %4152 = vmatprep.subr.mxu0 0.0
    %4153 = vmatpush2.msra.mxu0 0.0
    %4154 = vmatprep.subr.mxu0 0.0
    %4155 = vmatpush2.msra.mxu0 0.0
    %4156 = vmatprep.subr.mxu0 0.0
    %4157 = vmatpush2.msra.mxu0 0.0
    %4158 = vmatprep.subr.mxu0 0.0
    %4159 = vmatpush2.msra.mxu0 0.0
    %4160 = vmatprep.subr.mxu0 0.0
    %4161 = vmatpush2.msra.mxu0 0.0
    %4162 = vmatprep.subr.mxu0 0.0
    %4163 = vmatpush2.msra.mxu0 0.0
    %4164 = vmatprep.subr.mxu0 0.0
    %4165 = vmatpush2.msra.mxu0 0.0
    %4166 = vmatprep.subr.mxu0 0.0
    %4167 = vmatpush2.msra.mxu0 0.0
    %4168 = vmatprep.subr.mxu0 0.0
    %4169 = vmatpush2.msra.mxu0 0.0
    %4170 = vmatprep.subr.mxu0 0.0
    %4171 = vmatpush2.msra.mxu0 0.0
    %4172 = vmatprep.subr.mxu0 0.0
    %4173 = vmatpush2.msra.mxu0 0.0
    %4174 = vmatprep.subr.mxu0 0.0
    %4175 = vmatpush2.msra.mxu0 0.0
    %4176 = vmatprep.subr.mxu0 0.0
    %4177 = vmatpush2.msra.mxu0 0.0
    %4178 = vmatprep.subr.mxu0 0.0
    %4179 = vmatpush2.msra.mxu0 0.0
    %4180 = vmatprep.subr.mxu0 0.0
    %4181 = vmatpush2.msra.mxu0 0.0
    %4182 = vmatprep.mubr.f32.mxu0 0.0
    %4183 = vmatmul.mubr.f32.gmra.mxu0 %v4116
    %v4184 = vpop.f32.mrf.mxu0
    %v4185 = vadd.f32 %v4112, %v4184
    %v4186 = vpop.f32.mrf.mxu0
    %4187 = vdwg.mxu0
    %v4188 = vsel %vm779, %v4185, -inf
    %4189 = vmax.xlane.f32.xlu0 %v4188
    %v4190 = vpop.xlane.xlu0 %4189
    %v4191 = vsub.f32 %v4185, %v4190
    %v4192 = vmul.f32 %v4191, 1.442695
    %v4193 = vpow.pop %v4192
    %v4194 = vsel %vm779, %v4193, 0.0
    %4195 = vadd.xlane.f32.xlu0 %v4194
    %v4196 = vpop.xlane.xlu0 %4195
    %v4197 = vlog2.pop %v4196
    %v4198 = vmul.f32 %v4197, 0.6931472
    %v4199 = vadd.f32 %v4198, %v4190
    %v4200 = vsub.f32 %v4185, %v4199
    %4201 = vrot.lane.b32.xlu0 %v4107, 16
    %v4202 = vpop.permute.xlu0 %4201
    %4204 = vrot.lane.b32.xlu0 %v3696, 80
    %v4205 = vpop.permute.xlu0 %4204
    %v4207 = vsel %vm799, %v4200, %v4202
    %v4208 = vsel %vm801, %v4207, %v4205
    %v4209 = vsel %vm803, %v4208, 0.0
    %4210 = vst [vmem:[%s16 + $0x5] sm:$0x1] %v4209
    %s4211 = sld [smem:[#allocation3 + $0x6]]
    %s4212 = scalar_lea.vmem %s1, %s4211
    %v4213 = vld [vmem:[%s4212] sm:$0x1]
    %v4214 = vld [vmem:[%s4] sm:$0xff]
    %v4215 = vld [vmem:[%s4 + $0x8] sm:$0xff]
    %v4216 = vld [vmem:[%s4 + $0x10] sm:$0xff]
    %v4217 = vld [vmem:[%s4 + $0x18] sm:$0xff]
    %v4218 = vld [vmem:[%s5] sm:$0xff]
    %v4219 = vld [vmem:[%s5 + $0x8] sm:$0xff]
    %v4220 = vld [vmem:[%s5 + $0x10] sm:$0xff]
    %v4221 = vld [vmem:[%s5 + $0x18] sm:$0xff]
    %4222 = vmatprep.subr.mxu0 0.0
    %4223 = vmatpush1.msra.mxu0 0.0
    %4224 = vmatprep.subr.mxu0 0.0
    %4225 = vmatpush1.msra.mxu0 0.0
    %4226 = vmatprep.subr.mxu0 0.0
    %4227 = vmatpush1.msra.mxu0 0.0
    %4228 = vmatprep.subr.mxu0 0.0
    %4229 = vmatpush1.msra.mxu0 0.0
    %4230 = vmatprep.subr.mxu0 0.0
    %4231 = vmatpush1.msra.mxu0 0.0
    %4232 = vmatprep.subr.mxu0 0.0
    %4233 = vmatpush1.msra.mxu0 0.0
    %4234 = vmatprep.subr.mxu0 0.0
    %4235 = vmatpush1.msra.mxu0 0.0
    %4236 = vmatprep.subr.mxu0 0.0
    %4237 = vmatpush1.msra.mxu0 0.0
    %4238 = vmatprep.subr.mxu0 0.0
    %4239 = vmatpush1.msra.mxu0 0.0
    %4240 = vmatprep.subr.mxu0 0.0
    %4241 = vmatpush1.msra.mxu0 0.0
    %4242 = vmatprep.subr.mxu0 0.0
    %4243 = vmatpush1.msra.mxu0 0.0
    %4244 = vmatprep.subr.mxu0 0.0
    %4245 = vmatpush1.msra.mxu0 0.0
    %4246 = vmatprep.subr.mxu0 0.0
    %4247 = vmatpush1.msra.mxu0 %v4221
    %4248 = vmatprep.subr.mxu0 0.0
    %4249 = vmatpush1.msra.mxu0 %v4220
    %4250 = vmatprep.subr.mxu0 0.0
    %4251 = vmatpush1.msra.mxu0 %v4219
    %4252 = vmatprep.subr.mxu0 0.0
    %4253 = vmatpush1.msra.mxu0 %v4218
    %4254 = vmatprep.subr.mxu0 0.0
    %4255 = vmatpush2.msra.mxu0 0.0
    %4256 = vmatprep.subr.mxu0 0.0
    %4257 = vmatpush2.msra.mxu0 0.0
    %4258 = vmatprep.subr.mxu0 0.0
    %4259 = vmatpush2.msra.mxu0 0.0
    %4260 = vmatprep.subr.mxu0 0.0
    %4261 = vmatpush2.msra.mxu0 0.0
    %4262 = vmatprep.subr.mxu0 0.0
    %4263 = vmatpush2.msra.mxu0 0.0
    %4264 = vmatprep.subr.mxu0 0.0
    %4265 = vmatpush2.msra.mxu0 0.0
    %4266 = vmatprep.subr.mxu0 0.0
    %4267 = vmatpush2.msra.mxu0 0.0
    %4268 = vmatprep.subr.mxu0 0.0
    %4269 = vmatpush2.msra.mxu0 0.0
    %4270 = vmatprep.subr.mxu0 0.0
    %4271 = vmatpush2.msra.mxu0 0.0
    %4272 = vmatprep.subr.mxu0 0.0
    %4273 = vmatpush2.msra.mxu0 0.0
    %4274 = vmatprep.subr.mxu0 0.0
    %4275 = vmatpush2.msra.mxu0 0.0
    %4276 = vmatprep.subr.mxu0 0.0
    %4277 = vmatpush2.msra.mxu0 0.0
    %4278 = vmatprep.subr.mxu0 0.0
    %4279 = vmatpush2.msra.mxu0 0.0
    %4280 = vmatprep.subr.mxu0 0.0
    %4281 = vmatpush2.msra.mxu0 0.0
    %4282 = vmatprep.subr.mxu0 0.0
    %4283 = vmatpush2.msra.mxu0 0.0
    %4284 = vmatprep.subr.mxu0 0.0
    %4285 = vmatpush2.msra.mxu0 0.0
    %4286 = vmatprep.mubr.f32.mxu0 0.0
    %4287 = vmatmul.mubr.f32.gmra.mxu0 %v4116
    %v4288 = vpop.f32.mrf.mxu0
    %v4289 = vadd.f32 0.0, %v4288
    %v4290 = vpop.f32.mrf.mxu0
    %4291 = vdwg.mxu0
    %v4293 = vsel %vm118, %v4213, 0
    %4295 = vmatprep.subr.mxu0 0.0
    %4296 = vmatpush1.msra.mxu0 0.0
    %4297 = vmatprep.subr.mxu0 0.0
    %4298 = vmatpush1.msra.mxu0 0.0
    %4299 = vmatprep.subr.mxu0 0.0
    %4300 = vmatpush1.msra.mxu0 0.0
    %4301 = vmatprep.subr.mxu0 0.0
    %4302 = vmatpush1.msra.mxu0 0.0
    %4303 = vmatprep.subr.mxu0 0.0
    %4304 = vmatpush1.msra.mxu0 0.0
    %4305 = vmatprep.subr.mxu0 0.0
    %4306 = vmatpush1.msra.mxu0 0.0
    %4307 = vmatprep.subr.mxu0 0.0
    %4308 = vmatpush1.msra.mxu0 0.0
    %4309 = vmatprep.subr.mxu0 0.0
    %4310 = vmatpush1.msra.mxu0 0.0
    %4311 = vmatprep.subr.mxu0 0.0
    %4312 = vmatpush1.msra.mxu0 0.0
    %4313 = vmatprep.subr.mxu0 0.0
    %4314 = vmatpush1.msra.mxu0 0.0
    %4315 = vmatprep.subr.mxu0 0.0
    %4316 = vmatpush1.msra.mxu0 0.0
    %4317 = vmatprep.subr.mxu0 0.0
    %4318 = vmatpush1.msra.mxu0 0.0
    %4319 = vmatprep.subr.mxu0 0.0
    %4320 = vmatpush1.msra.mxu0 %v4217
    %4321 = vmatprep.subr.mxu0 0.0
    %4322 = vmatpush1.msra.mxu0 %v4216
    %4323 = vmatprep.subr.mxu0 0.0
    %4324 = vmatpush1.msra.mxu0 %v4215
    %4325 = vmatprep.subr.mxu0 0.0
    %4326 = vmatpush1.msra.mxu0 %v4214
    %4327 = vmatprep.subr.mxu0 0.0
    %4328 = vmatpush2.msra.mxu0 0.0
    %4329 = vmatprep.subr.mxu0 0.0
    %4330 = vmatpush2.msra.mxu0 0.0
    %4331 = vmatprep.subr.mxu0 0.0
    %4332 = vmatpush2.msra.mxu0 0.0
    %4333 = vmatprep.subr.mxu0 0.0
    %4334 = vmatpush2.msra.mxu0 0.0
    %4335 = vmatprep.subr.mxu0 0.0
    %4336 = vmatpush2.msra.mxu0 0.0
    %4337 = vmatprep.subr.mxu0 0.0
    %4338 = vmatpush2.msra.mxu0 0.0
    %4339 = vmatprep.subr.mxu0 0.0
    %4340 = vmatpush2.msra.mxu0 0.0
    %4341 = vmatprep.subr.mxu0 0.0
    %4342 = vmatpush2.msra.mxu0 0.0
    %4343 = vmatprep.subr.mxu0 0.0
    %4344 = vmatpush2.msra.mxu0 0.0
    %4345 = vmatprep.subr.mxu0 0.0
    %4346 = vmatpush2.msra.mxu0 0.0
    %4347 = vmatprep.subr.mxu0 0.0
    %4348 = vmatpush2.msra.mxu0 0.0
    %4349 = vmatprep.subr.mxu0 0.0
    %4350 = vmatpush2.msra.mxu0 0.0
    %4351 = vmatprep.subr.mxu0 0.0
    %4352 = vmatpush2.msra.mxu0 0.0
    %4353 = vmatprep.subr.mxu0 0.0
    %4354 = vmatpush2.msra.mxu0 0.0
    %4355 = vmatprep.subr.mxu0 0.0
    %4356 = vmatpush2.msra.mxu0 0.0
    %4357 = vmatprep.subr.mxu0 0.0
    %4358 = vmatpush2.msra.mxu0 0.0
    %4359 = vmatprep.mubr.f32.mxu0 0.0
    %4360 = vmatmul.mubr.f32.gmra.mxu0 %v4293
    %v4361 = vpop.f32.mrf.mxu0
    %v4362 = vadd.f32 %v4289, %v4361
    %v4363 = vpop.f32.mrf.mxu0
    %4364 = vdwg.mxu0
    %v4365 = vld [vmem:[%s6] sm:$0x1]
    %v4366 = vadd.f32 %v4362, %v4365
    %v4367 = vsel %vm267, %v4366, -inf
    %4368 = vmax.xlane.f32.xlu0 %v4367
    %v4369 = vpop.xlane.xlu0 %4368
    %v4370 = vsub.f32 %v4366, %v4369
    %v4371 = vmul.f32 %v4370, 1.442695
    %v4372 = vpow.pop %v4371
    %v4373 = vsel %vm267, %v4372, 0.0
    %4374 = vadd.xlane.f32.xlu0 %v4373
    %v4375 = vpop.xlane.xlu0 %4374
    %v4376 = vrcp.pop %v4375
    %v4377 = vmul.f32 %v4372, %v4376
    %v4378 = vld [vmem:[#allocation4] sm:$0xff]
    %v4379 = vld [vmem:[#allocation4 + $0x8] sm:$0x3]
    %v4381 = vsel %vm281, %v4377, 0
    %v4384 = vsel %vm285, %v4379, 0
    %4386 = vmatprep.subr.mxu0 0.0
    %4387 = vmatpush1.msra.mxu0 0.0
    %4388 = vmatprep.subr.mxu0 0.0
    %4389 = vmatpush1.msra.mxu0 0.0
    %4390 = vmatprep.subr.mxu0 0.0
    %4391 = vmatpush1.msra.mxu0 0.0
    %4392 = vmatprep.subr.mxu0 0.0
    %4393 = vmatpush1.msra.mxu0 0.0
    %4394 = vmatprep.subr.mxu0 0.0
    %4395 = vmatpush1.msra.mxu0 0.0
    %4396 = vmatprep.subr.mxu0 0.0
    %4397 = vmatpush1.msra.mxu0 0.0
    %4398 = vmatprep.subr.mxu0 0.0
    %4399 = vmatpush1.msra.mxu0 0.0
    %4400 = vmatprep.subr.mxu0 0.0
    %4401 = vmatpush1.msra.mxu0 0.0
    %4402 = vmatprep.subr.mxu0 0.0
    %4403 = vmatpush1.msra.mxu0 0.0
    %4404 = vmatprep.subr.mxu0 0.0
    %4405 = vmatpush1.msra.mxu0 0.0
    %4406 = vmatprep.subr.mxu0 0.0
    %4407 = vmatpush1.msra.mxu0 0.0
    %4408 = vmatprep.subr.mxu0 0.0
    %4409 = vmatpush1.msra.mxu0 0.0
    %4410 = vmatprep.subr.mxu0 0.0
    %4411 = vmatpush1.msra.mxu0 0.0
    %4412 = vmatprep.subr.mxu0 0.0
    %4413 = vmatpush1.msra.mxu0 0.0
    %4414 = vmatprep.subr.mxu0 0.0
    %4415 = vmatpush1.msra.mxu0 %v4384
    %4416 = vmatprep.subr.mxu0 0.0
    %4417 = vmatpush1.msra.mxu0 %v4378
    %4418 = vmatprep.subr.mxu0 0.0
    %4419 = vmatpush2.msra.mxu0 0.0
    %4420 = vmatprep.subr.mxu0 0.0
    %4421 = vmatpush2.msra.mxu0 0.0
    %4422 = vmatprep.subr.mxu0 0.0
    %4423 = vmatpush2.msra.mxu0 0.0
    %4424 = vmatprep.subr.mxu0 0.0
    %4425 = vmatpush2.msra.mxu0 0.0
    %4426 = vmatprep.subr.mxu0 0.0
    %4427 = vmatpush2.msra.mxu0 0.0
    %4428 = vmatprep.subr.mxu0 0.0
    %4429 = vmatpush2.msra.mxu0 0.0
    %4430 = vmatprep.subr.mxu0 0.0
    %4431 = vmatpush2.msra.mxu0 0.0
    %4432 = vmatprep.subr.mxu0 0.0
    %4433 = vmatpush2.msra.mxu0 0.0
    %4434 = vmatprep.subr.mxu0 0.0
    %4435 = vmatpush2.msra.mxu0 0.0
    %4436 = vmatprep.subr.mxu0 0.0
    %4437 = vmatpush2.msra.mxu0 0.0
    %4438 = vmatprep.subr.mxu0 0.0
    %4439 = vmatpush2.msra.mxu0 0.0
    %4440 = vmatprep.subr.mxu0 0.0
    %4441 = vmatpush2.msra.mxu0 0.0
    %4442 = vmatprep.subr.mxu0 0.0
    %4443 = vmatpush2.msra.mxu0 0.0
    %4444 = vmatprep.subr.mxu0 0.0
    %4445 = vmatpush2.msra.mxu0 0.0
    %4446 = vmatprep.subr.mxu0 0.0
    %4447 = vmatpush2.msra.mxu0 0.0
    %4448 = vmatprep.subr.mxu0 0.0
    %4449 = vmatpush2.msra.mxu0 0.0
    %4450 = vmatprep.mubr.f32.mxu0 0.0
    %4451 = vmatmul.mubr.f32.gmra.mxu0 %v4381
    %v4452 = vpop.f32.mrf.mxu0
    %v4453 = vadd.f32 0.0, %v4452
    %v4454 = vpop.f32.mrf.mxu0
    %4455 = vdwg.mxu0
    %v4456 = vld [vmem:[%s7] sm:$0xff]
    %v4457 = vld [vmem:[%s7 + $0x8] sm:$0xff]
    %v4458 = vld [vmem:[%s7 + $0x10] sm:$0xff]
    %v4459 = vld [vmem:[%s7 + $0x18] sm:$0xff]
    %v4460 = vld [vmem:[%s8] sm:$0xff]
    %v4461 = vld [vmem:[%s8 + $0x8] sm:$0xff]
    %v4462 = vld [vmem:[%s8 + $0x10] sm:$0xff]
    %v4463 = vld [vmem:[%s8 + $0x18] sm:$0xff]
    %v4465 = vsel %vm118, %v4453, 0
    %4467 = vmatprep.subr.mxu0 0.0
    %4468 = vmatpush1.msra.mxu0 0.0
    %4469 = vmatprep.subr.mxu0 0.0
    %4470 = vmatpush1.msra.mxu0 0.0
    %4471 = vmatprep.subr.mxu0 0.0
    %4472 = vmatpush1.msra.mxu0 0.0
    %4473 = vmatprep.subr.mxu0 0.0
    %4474 = vmatpush1.msra.mxu0 0.0
    %4475 = vmatprep.subr.mxu0 0.0
    %4476 = vmatpush1.msra.mxu0 0.0
    %4477 = vmatprep.subr.mxu0 0.0
    %4478 = vmatpush1.msra.mxu0 0.0
    %4479 = vmatprep.subr.mxu0 0.0
    %4480 = vmatpush1.msra.mxu0 0.0
    %4481 = vmatprep.subr.mxu0 0.0
    %4482 = vmatpush1.msra.mxu0 0.0
    %4483 = vmatprep.subr.mxu0 0.0
    %4484 = vmatpush1.msra.mxu0 0.0
    %4485 = vmatprep.subr.mxu0 0.0
    %4486 = vmatpush1.msra.mxu0 0.0
    %4487 = vmatprep.subr.mxu0 0.0
    %4488 = vmatpush1.msra.mxu0 0.0
    %4489 = vmatprep.subr.mxu0 0.0
    %4490 = vmatpush1.msra.mxu0 0.0
    %4491 = vmatprep.subr.mxu0 0.0
    %4492 = vmatpush1.msra.mxu0 %v4463
    %4493 = vmatprep.subr.mxu0 0.0
    %4494 = vmatpush1.msra.mxu0 %v4462
    %4495 = vmatprep.subr.mxu0 0.0
    %4496 = vmatpush1.msra.mxu0 %v4461
    %4497 = vmatprep.subr.mxu0 0.0
    %4498 = vmatpush1.msra.mxu0 %v4460
    %4499 = vmatprep.subr.mxu0 0.0
    %4500 = vmatpush2.msra.mxu0 0.0
    %4501 = vmatprep.subr.mxu0 0.0
    %4502 = vmatpush2.msra.mxu0 0.0
    %4503 = vmatprep.subr.mxu0 0.0
    %4504 = vmatpush2.msra.mxu0 0.0
    %4505 = vmatprep.subr.mxu0 0.0
    %4506 = vmatpush2.msra.mxu0 0.0
    %4507 = vmatprep.subr.mxu0 0.0
    %4508 = vmatpush2.msra.mxu0 0.0
    %4509 = vmatprep.subr.mxu0 0.0
    %4510 = vmatpush2.msra.mxu0 0.0
    %4511 = vmatprep.subr.mxu0 0.0
    %4512 = vmatpush2.msra.mxu0 0.0
    %4513 = vmatprep.subr.mxu0 0.0
    %4514 = vmatpush2.msra.mxu0 0.0
    %4515 = vmatprep.subr.mxu0 0.0
    %4516 = vmatpush2.msra.mxu0 0.0
    %4517 = vmatprep.subr.mxu0 0.0
    %4518 = vmatpush2.msra.mxu0 0.0
    %4519 = vmatprep.subr.mxu0 0.0
    %4520 = vmatpush2.msra.mxu0 0.0
    %4521 = vmatprep.subr.mxu0 0.0
    %4522 = vmatpush2.msra.mxu0 0.0
    %4523 = vmatprep.subr.mxu0 0.0
    %4524 = vmatpush2.msra.mxu0 0.0
    %4525 = vmatprep.subr.mxu0 0.0
    %4526 = vmatpush2.msra.mxu0 0.0
    %4527 = vmatprep.subr.mxu0 0.0
    %4528 = vmatpush2.msra.mxu0 0.0
    %4529 = vmatprep.subr.mxu0 0.0
    %4530 = vmatpush2.msra.mxu0 0.0
    %4531 = vmatprep.mubr.f32.mxu0 0.0
    %4532 = vmatmul.mubr.f32.gmra.mxu0 %v4465
    %v4533 = vpop.f32.mrf.mxu0
    %v4534 = vadd.f32 0.0, %v4533
    %v4535 = vpop.f32.mrf.mxu0
    %4536 = vdwg.mxu0
    %4537 = vmatprep.subr.mxu0 0.0
    %4538 = vmatpush1.msra.mxu0 0.0
    %4539 = vmatprep.subr.mxu0 0.0
    %4540 = vmatpush1.msra.mxu0 0.0
    %4541 = vmatprep.subr.mxu0 0.0
    %4542 = vmatpush1.msra.mxu0 0.0
    %4543 = vmatprep.subr.mxu0 0.0
    %4544 = vmatpush1.msra.mxu0 0.0
    %4545 = vmatprep.subr.mxu0 0.0
    %4546 = vmatpush1.msra.mxu0 0.0
    %4547 = vmatprep.subr.mxu0 0.0
    %4548 = vmatpush1.msra.mxu0 0.0
    %4549 = vmatprep.subr.mxu0 0.0
    %4550 = vmatpush1.msra.mxu0 0.0
    %4551 = vmatprep.subr.mxu0 0.0
    %4552 = vmatpush1.msra.mxu0 0.0
    %4553 = vmatprep.subr.mxu0 0.0
    %4554 = vmatpush1.msra.mxu0 0.0
    %4555 = vmatprep.subr.mxu0 0.0
    %4556 = vmatpush1.msra.mxu0 0.0
    %4557 = vmatprep.subr.mxu0 0.0
    %4558 = vmatpush1.msra.mxu0 0.0
    %4559 = vmatprep.subr.mxu0 0.0
    %4560 = vmatpush1.msra.mxu0 0.0
    %4561 = vmatprep.subr.mxu0 0.0
    %4562 = vmatpush1.msra.mxu0 %v4459
    %4563 = vmatprep.subr.mxu0 0.0
    %4564 = vmatpush1.msra.mxu0 %v4458
    %4565 = vmatprep.subr.mxu0 0.0
    %4566 = vmatpush1.msra.mxu0 %v4457
    %4567 = vmatprep.subr.mxu0 0.0
    %4568 = vmatpush1.msra.mxu0 %v4456
    %4569 = vmatprep.subr.mxu0 0.0
    %4570 = vmatpush2.msra.mxu0 0.0
    %4571 = vmatprep.subr.mxu0 0.0
    %4572 = vmatpush2.msra.mxu0 0.0
    %4573 = vmatprep.subr.mxu0 0.0
    %4574 = vmatpush2.msra.mxu0 0.0
    %4575 = vmatprep.subr.mxu0 0.0
    %4576 = vmatpush2.msra.mxu0 0.0
    %4577 = vmatprep.subr.mxu0 0.0
    %4578 = vmatpush2.msra.mxu0 0.0
    %4579 = vmatprep.subr.mxu0 0.0
    %4580 = vmatpush2.msra.mxu0 0.0
    %4581 = vmatprep.subr.mxu0 0.0
    %4582 = vmatpush2.msra.mxu0 0.0
    %4583 = vmatprep.subr.mxu0 0.0
    %4584 = vmatpush2.msra.mxu0 0.0
    %4585 = vmatprep.subr.mxu0 0.0
    %4586 = vmatpush2.msra.mxu0 0.0
    %4587 = vmatprep.subr.mxu0 0.0
    %4588 = vmatpush2.msra.mxu0 0.0
    %4589 = vmatprep.subr.mxu0 0.0
    %4590 = vmatpush2.msra.mxu0 0.0
    %4591 = vmatprep.subr.mxu0 0.0
    %4592 = vmatpush2.msra.mxu0 0.0
    %4593 = vmatprep.subr.mxu0 0.0
    %4594 = vmatpush2.msra.mxu0 0.0
    %4595 = vmatprep.subr.mxu0 0.0
    %4596 = vmatpush2.msra.mxu0 0.0
    %4597 = vmatprep.subr.mxu0 0.0
    %4598 = vmatpush2.msra.mxu0 0.0
    %4599 = vmatprep.subr.mxu0 0.0
    %4600 = vmatpush2.msra.mxu0 0.0
    %4601 = vmatprep.mubr.f32.mxu0 0.0
    %4602 = vmatmul.mubr.f32.gmra.mxu0 %v4293
    %v4603 = vpop.f32.mrf.mxu0
    %v4604 = vadd.f32 %v4534, %v4603
    %v4605 = vpop.f32.mrf.mxu0
    %4606 = vdwg.mxu0
    %v4607 = vld [vmem:[#allocation6] sm:$0x1]
    %v4608 = vadd.f32 %v4604, %v4607
    %v4609 = vmax.f32 %v4608, 0.0
    %v4610 = vld [vmem:[%s10] sm:$0xff]
    %v4611 = vld [vmem:[%s10 + $0x8] sm:$0xff]
    %v4612 = vld [vmem:[%s10 + $0x10] sm:$0xff]
    %v4613 = vld [vmem:[%s10 + $0x18] sm:$0xff]
    %v4614 = vld [vmem:[#allocation8] sm:$0x1]
    %v4616 = vsel %vm118, %v4609, 0
    %4618 = vmatprep.subr.mxu0 0.0
    %4619 = vmatpush1.msra.mxu0 0.0
    %4620 = vmatprep.subr.mxu0 0.0
    %4621 = vmatpush1.msra.mxu0 0.0
    %4622 = vmatprep.subr.mxu0 0.0
    %4623 = vmatpush1.msra.mxu0 0.0
    %4624 = vmatprep.subr.mxu0 0.0
    %4625 = vmatpush1.msra.mxu0 0.0
    %4626 = vmatprep.subr.mxu0 0.0
    %4627 = vmatpush1.msra.mxu0 0.0
    %4628 = vmatprep.subr.mxu0 0.0
    %4629 = vmatpush1.msra.mxu0 0.0
    %4630 = vmatprep.subr.mxu0 0.0
    %4631 = vmatpush1.msra.mxu0 0.0
    %4632 = vmatprep.subr.mxu0 0.0
    %4633 = vmatpush1.msra.mxu0 0.0
    %4634 = vmatprep.subr.mxu0 0.0
    %4635 = vmatpush1.msra.mxu0 0.0
    %4636 = vmatprep.subr.mxu0 0.0
    %4637 = vmatpush1.msra.mxu0 0.0
    %4638 = vmatprep.subr.mxu0 0.0
    %4639 = vmatpush1.msra.mxu0 0.0
    %4640 = vmatprep.subr.mxu0 0.0
    %4641 = vmatpush1.msra.mxu0 0.0
    %4642 = vmatprep.subr.mxu0 0.0
    %4643 = vmatpush1.msra.mxu0 %v4613
    %4644 = vmatprep.subr.mxu0 0.0
    %4645 = vmatpush1.msra.mxu0 %v4612
    %4646 = vmatprep.subr.mxu0 0.0
    %4647 = vmatpush1.msra.mxu0 %v4611
    %4648 = vmatprep.subr.mxu0 0.0
    %4649 = vmatpush1.msra.mxu0 %v4610
    %4650 = vmatprep.subr.mxu0 0.0
    %4651 = vmatpush2.msra.mxu0 0.0
    %4652 = vmatprep.subr.mxu0 0.0
    %4653 = vmatpush2.msra.mxu0 0.0
    %4654 = vmatprep.subr.mxu0 0.0
    %4655 = vmatpush2.msra.mxu0 0.0
    %4656 = vmatprep.subr.mxu0 0.0
    %4657 = vmatpush2.msra.mxu0 0.0
    %4658 = vmatprep.subr.mxu0 0.0
    %4659 = vmatpush2.msra.mxu0 0.0
    %4660 = vmatprep.subr.mxu0 0.0
    %4661 = vmatpush2.msra.mxu0 0.0
    %4662 = vmatprep.subr.mxu0 0.0
    %4663 = vmatpush2.msra.mxu0 0.0
    %4664 = vmatprep.subr.mxu0 0.0
    %4665 = vmatpush2.msra.mxu0 0.0
    %4666 = vmatprep.subr.mxu0 0.0
    %4667 = vmatpush2.msra.mxu0 0.0
    %4668 = vmatprep.subr.mxu0 0.0
    %4669 = vmatpush2.msra.mxu0 0.0
    %4670 = vmatprep.subr.mxu0 0.0
    %4671 = vmatpush2.msra.mxu0 0.0
    %4672 = vmatprep.subr.mxu0 0.0
    %4673 = vmatpush2.msra.mxu0 0.0
    %4674 = vmatprep.subr.mxu0 0.0
    %4675 = vmatpush2.msra.mxu0 0.0
    %4676 = vmatprep.subr.mxu0 0.0
    %4677 = vmatpush2.msra.mxu0 0.0
    %4678 = vmatprep.subr.mxu0 0.0
    %4679 = vmatpush2.msra.mxu0 0.0
    %4680 = vmatprep.subr.mxu0 0.0
    %4681 = vmatpush2.msra.mxu0 0.0
    %4682 = vmatprep.mubr.f32.mxu0 0.0
    %4683 = vmatmul.mubr.f32.gmra.mxu0 %v4616
    %v4684 = vpop.f32.mrf.mxu0
    %v4685 = vadd.f32 %v4614, %v4684
    %v4686 = vpop.f32.mrf.mxu0
    %4687 = vdwg.mxu0
    %v4688 = vld [vmem:[%s11] sm:$0xff]
    %v4689 = vld [vmem:[%s11 + $0x8] sm:$0xff]
    %v4690 = vld [vmem:[%s11 + $0x10] sm:$0xff]
    %v4691 = vld [vmem:[%s11 + $0x18] sm:$0xff]
    %v4692 = vld [vmem:[#allocation9] sm:$0x1]
    %4693 = vmatprep.subr.mxu0 0.0
    %4694 = vmatpush1.msra.mxu0 0.0
    %4695 = vmatprep.subr.mxu0 0.0
    %4696 = vmatpush1.msra.mxu0 0.0
    %4697 = vmatprep.subr.mxu0 0.0
    %4698 = vmatpush1.msra.mxu0 0.0
    %4699 = vmatprep.subr.mxu0 0.0
    %4700 = vmatpush1.msra.mxu0 0.0
    %4701 = vmatprep.subr.mxu0 0.0
    %4702 = vmatpush1.msra.mxu0 0.0
    %4703 = vmatprep.subr.mxu0 0.0
    %4704 = vmatpush1.msra.mxu0 0.0
    %4705 = vmatprep.subr.mxu0 0.0
    %4706 = vmatpush1.msra.mxu0 0.0
    %4707 = vmatprep.subr.mxu0 0.0
    %4708 = vmatpush1.msra.mxu0 0.0
    %4709 = vmatprep.subr.mxu0 0.0
    %4710 = vmatpush1.msra.mxu0 0.0
    %4711 = vmatprep.subr.mxu0 0.0
    %4712 = vmatpush1.msra.mxu0 0.0
    %4713 = vmatprep.subr.mxu0 0.0
    %4714 = vmatpush1.msra.mxu0 0.0
    %4715 = vmatprep.subr.mxu0 0.0
    %4716 = vmatpush1.msra.mxu0 0.0
    %4717 = vmatprep.subr.mxu0 0.0
    %4718 = vmatpush1.msra.mxu0 %v4691
    %4719 = vmatprep.subr.mxu0 0.0
    %4720 = vmatpush1.msra.mxu0 %v4690
    %4721 = vmatprep.subr.mxu0 0.0
    %4722 = vmatpush1.msra.mxu0 %v4689
    %4723 = vmatprep.subr.mxu0 0.0
    %4724 = vmatpush1.msra.mxu0 %v4688
    %4725 = vmatprep.subr.mxu0 0.0
    %4726 = vmatpush2.msra.mxu0 0.0
    %4727 = vmatprep.subr.mxu0 0.0
    %4728 = vmatpush2.msra.mxu0 0.0
    %4729 = vmatprep.subr.mxu0 0.0
    %4730 = vmatpush2.msra.mxu0 0.0
    %4731 = vmatprep.subr.mxu0 0.0
    %4732 = vmatpush2.msra.mxu0 0.0
    %4733 = vmatprep.subr.mxu0 0.0
    %4734 = vmatpush2.msra.mxu0 0.0
    %4735 = vmatprep.subr.mxu0 0.0
    %4736 = vmatpush2.msra.mxu0 0.0
    %4737 = vmatprep.subr.mxu0 0.0
    %4738 = vmatpush2.msra.mxu0 0.0
    %4739 = vmatprep.subr.mxu0 0.0
    %4740 = vmatpush2.msra.mxu0 0.0
    %4741 = vmatprep.subr.mxu0 0.0
    %4742 = vmatpush2.msra.mxu0 0.0
    %4743 = vmatprep.subr.mxu0 0.0
    %4744 = vmatpush2.msra.mxu0 0.0
    %4745 = vmatprep.subr.mxu0 0.0
    %4746 = vmatpush2.msra.mxu0 0.0
    %4747 = vmatprep.subr.mxu0 0.0
    %4748 = vmatpush2.msra.mxu0 0.0
    %4749 = vmatprep.subr.mxu0 0.0
    %4750 = vmatpush2.msra.mxu0 0.0
    %4751 = vmatprep.subr.mxu0 0.0
    %4752 = vmatpush2.msra.mxu0 0.0
    %4753 = vmatprep.subr.mxu0 0.0
    %4754 = vmatpush2.msra.mxu0 0.0
    %4755 = vmatprep.subr.mxu0 0.0
    %4756 = vmatpush2.msra.mxu0 0.0
    %4757 = vmatprep.mubr.f32.mxu0 0.0
    %4758 = vmatmul.mubr.f32.gmra.mxu0 %v4116
    %v4759 = vpop.f32.mrf.mxu0
    %v4760 = vadd.f32 %v4692, %v4759
    %v4761 = vpop.f32.mrf.mxu0
    %4762 = vdwg.mxu0
    %v4763 = vadd.f32 %v4685, %v4760
    %v4764 = vxor.u32 %v4763, 2147483648
    %v4765 = vmul.f32 %v4764, 1.442695
    %v4766 = vpow.pop %v4765
    %v4767 = vadd.f32 %v4766, 1.0
    %v4768 = vrcp.pop %v4767
    %v4769 = vmul.f32 1.0, %v4768
    %4771 = vrot.lane.b32.xlu0 %v4760, 64
    %v4772 = vpop.permute.xlu0 %4771
    %v4774 = vmul.f32 %v4769, %v4772
    %4776 = vrot.lane.b32.xlu0 %v4774, 64
    %v4777 = vpop.permute.xlu0 %4776
    %v4779 = vadd.f32 %v4685, %v4777
    %v4780 = vtanh.pop %v4779
    %v4781 = vsub.f32 1.0, %v4769
    %4783 = vrot.lane.b32.xlu0 %v4780, 96
    %v4784 = vpop.permute.xlu0 %4783
    %v4786 = vmul.f32 %v4781, %v4784
    %v4787 = vmul.f32 %v4769, %v4107
    %v4788 = vadd.f32 %v4786, %v4787
    %v4789 = vld [vmem:[%s14] sm:$0xff]
    %v4790 = vld [vmem:[%s14 + $0x8] sm:$0xff]
    %v4791 = vld [vmem:[%s14 + $0x10] sm:$0xff]
    %v4792 = vld [vmem:[%s14 + $0x18] sm:$0xff]
    %v4793 = vld [vmem:[%s15] sm:$0x1]
    %4795 = vrot.lane.b32.xlu0 %v4788, 96
    %v4796 = vpop.permute.xlu0 %4795
    %v4797 = vsel %vm118, %v4796, 0
    %4799 = vmatprep.subr.mxu0 0.0
    %4800 = vmatpush1.msra.mxu0 0.0
    %4801 = vmatprep.subr.mxu0 0.0
    %4802 = vmatpush1.msra.mxu0 0.0
    %4803 = vmatprep.subr.mxu0 0.0
    %4804 = vmatpush1.msra.mxu0 0.0
    %4805 = vmatprep.subr.mxu0 0.0
    %4806 = vmatpush1.msra.mxu0 0.0
    %4807 = vmatprep.subr.mxu0 0.0
    %4808 = vmatpush1.msra.mxu0 0.0
    %4809 = vmatprep.subr.mxu0 0.0
    %4810 = vmatpush1.msra.mxu0 0.0
    %4811 = vmatprep.subr.mxu0 0.0
    %4812 = vmatpush1.msra.mxu0 0.0
    %4813 = vmatprep.subr.mxu0 0.0
    %4814 = vmatpush1.msra.mxu0 0.0
    %4815 = vmatprep.subr.mxu0 0.0
    %4816 = vmatpush1.msra.mxu0 0.0
    %4817 = vmatprep.subr.mxu0 0.0
    %4818 = vmatpush1.msra.mxu0 0.0
    %4819 = vmatprep.subr.mxu0 0.0
    %4820 = vmatpush1.msra.mxu0 0.0
    %4821 = vmatprep.subr.mxu0 0.0
    %4822 = vmatpush1.msra.mxu0 0.0
    %4823 = vmatprep.subr.mxu0 0.0
    %4824 = vmatpush1.msra.mxu0 %v4792
    %4825 = vmatprep.subr.mxu0 0.0
    %4826 = vmatpush1.msra.mxu0 %v4791
    %4827 = vmatprep.subr.mxu0 0.0
    %4828 = vmatpush1.msra.mxu0 %v4790
    %4829 = vmatprep.subr.mxu0 0.0
    %4830 = vmatpush1.msra.mxu0 %v4789
    %4831 = vmatprep.subr.mxu0 0.0
    %4832 = vmatpush2.msra.mxu0 0.0
    %4833 = vmatprep.subr.mxu0 0.0
    %4834 = vmatpush2.msra.mxu0 0.0
    %4835 = vmatprep.subr.mxu0 0.0
    %4836 = vmatpush2.msra.mxu0 0.0
    %4837 = vmatprep.subr.mxu0 0.0
    %4838 = vmatpush2.msra.mxu0 0.0
    %4839 = vmatprep.subr.mxu0 0.0
    %4840 = vmatpush2.msra.mxu0 0.0
    %4841 = vmatprep.subr.mxu0 0.0
    %4842 = vmatpush2.msra.mxu0 0.0
    %4843 = vmatprep.subr.mxu0 0.0
    %4844 = vmatpush2.msra.mxu0 0.0
    %4845 = vmatprep.subr.mxu0 0.0
    %4846 = vmatpush2.msra.mxu0 0.0
    %4847 = vmatprep.subr.mxu0 0.0
    %4848 = vmatpush2.msra.mxu0 0.0
    %4849 = vmatprep.subr.mxu0 0.0
    %4850 = vmatpush2.msra.mxu0 0.0
    %4851 = vmatprep.subr.mxu0 0.0
    %4852 = vmatpush2.msra.mxu0 0.0
    %4853 = vmatprep.subr.mxu0 0.0
    %4854 = vmatpush2.msra.mxu0 0.0
    %4855 = vmatprep.subr.mxu0 0.0
    %4856 = vmatpush2.msra.mxu0 0.0
    %4857 = vmatprep.subr.mxu0 0.0
    %4858 = vmatpush2.msra.mxu0 0.0
    %4859 = vmatprep.subr.mxu0 0.0
    %4860 = vmatpush2.msra.mxu0 0.0
    %4861 = vmatprep.subr.mxu0 0.0
    %4862 = vmatpush2.msra.mxu0 0.0
    %4863 = vmatprep.mubr.f32.mxu0 0.0
    %4864 = vmatmul.mubr.f32.gmra.mxu0 %v4797
    %v4865 = vpop.f32.mrf.mxu0
    %v4866 = vadd.f32 %v4793, %v4865
    %v4867 = vpop.f32.mrf.mxu0
    %4868 = vdwg.mxu0
    %v4869 = vsel %vm779, %v4866, -inf
    %4870 = vmax.xlane.f32.xlu0 %v4869
    %v4871 = vpop.xlane.xlu0 %4870
    %v4872 = vsub.f32 %v4866, %v4871
    %v4873 = vmul.f32 %v4872, 1.442695
    %v4874 = vpow.pop %v4873
    %v4875 = vsel %vm779, %v4874, 0.0
    %4876 = vadd.xlane.f32.xlu0 %v4875
    %v4877 = vpop.xlane.xlu0 %4876
    %v4878 = vlog2.pop %v4877
    %v4879 = vmul.f32 %v4878, 0.6931472
    %v4880 = vadd.f32 %v4879, %v4871
    %v4881 = vsub.f32 %v4866, %v4880
    %4882 = vrot.lane.b32.xlu0 %v4788, 16
    %v4883 = vpop.permute.xlu0 %4882
    %4885 = vrot.lane.b32.xlu0 %v4377, 80
    %v4886 = vpop.permute.xlu0 %4885
    %v4888 = vsel %vm799, %v4881, %v4883
    %v4889 = vsel %vm801, %v4888, %v4886
    %v4890 = vsel %vm803, %v4889, 0.0
    %4891 = vst [vmem:[%s16 + $0x6] sm:$0x1] %v4890
    %s4892 = sld [smem:[#allocation3 + $0x7]]
    %s4893 = scalar_lea.vmem %s1, %s4892
    %v4894 = vld [vmem:[%s4893] sm:$0x1]
    %v4895 = vld [vmem:[%s4] sm:$0xff]
    %v4896 = vld [vmem:[%s4 + $0x8] sm:$0xff]
    %v4897 = vld [vmem:[%s4 + $0x10] sm:$0xff]
    %v4898 = vld [vmem:[%s4 + $0x18] sm:$0xff]
    %v4899 = vld [vmem:[%s5] sm:$0xff]
    %v4900 = vld [vmem:[%s5 + $0x8] sm:$0xff]
    %v4901 = vld [vmem:[%s5 + $0x10] sm:$0xff]
    %v4902 = vld [vmem:[%s5 + $0x18] sm:$0xff]
    %4903 = vmatprep.subr.mxu0 0.0
    %4904 = vmatpush1.msra.mxu0 0.0
    %4905 = vmatprep.subr.mxu0 0.0
    %4906 = vmatpush1.msra.mxu0 0.0
    %4907 = vmatprep.subr.mxu0 0.0
    %4908 = vmatpush1.msra.mxu0 0.0
    %4909 = vmatprep.subr.mxu0 0.0
    %4910 = vmatpush1.msra.mxu0 0.0
    %4911 = vmatprep.subr.mxu0 0.0
    %4912 = vmatpush1.msra.mxu0 0.0
    %4913 = vmatprep.subr.mxu0 0.0
    %4914 = vmatpush1.msra.mxu0 0.0
    %4915 = vmatprep.subr.mxu0 0.0
    %4916 = vmatpush1.msra.mxu0 0.0
    %4917 = vmatprep.subr.mxu0 0.0
    %4918 = vmatpush1.msra.mxu0 0.0
    %4919 = vmatprep.subr.mxu0 0.0
    %4920 = vmatpush1.msra.mxu0 0.0
    %4921 = vmatprep.subr.mxu0 0.0
    %4922 = vmatpush1.msra.mxu0 0.0
    %4923 = vmatprep.subr.mxu0 0.0
    %4924 = vmatpush1.msra.mxu0 0.0
    %4925 = vmatprep.subr.mxu0 0.0
    %4926 = vmatpush1.msra.mxu0 0.0
    %4927 = vmatprep.subr.mxu0 0.0
    %4928 = vmatpush1.msra.mxu0 %v4902
    %4929 = vmatprep.subr.mxu0 0.0
    %4930 = vmatpush1.msra.mxu0 %v4901
    %4931 = vmatprep.subr.mxu0 0.0
    %4932 = vmatpush1.msra.mxu0 %v4900
    %4933 = vmatprep.subr.mxu0 0.0
    %4934 = vmatpush1.msra.mxu0 %v4899
    %4935 = vmatprep.subr.mxu0 0.0
    %4936 = vmatpush2.msra.mxu0 0.0
    %4937 = vmatprep.subr.mxu0 0.0
    %4938 = vmatpush2.msra.mxu0 0.0
    %4939 = vmatprep.subr.mxu0 0.0
    %4940 = vmatpush2.msra.mxu0 0.0
    %4941 = vmatprep.subr.mxu0 0.0
    %4942 = vmatpush2.msra.mxu0 0.0
    %4943 = vmatprep.subr.mxu0 0.0
    %4944 = vmatpush2.msra.mxu0 0.0
    %4945 = vmatprep.subr.mxu0 0.0
    %4946 = vmatpush2.msra.mxu0 0.0
    %4947 = vmatprep.subr.mxu0 0.0
    %4948 = vmatpush2.msra.mxu0 0.0
    %4949 = vmatprep.subr.mxu0 0.0
    %4950 = vmatpush2.msra.mxu0 0.0
    %4951 = vmatprep.subr.mxu0 0.0
    %4952 = vmatpush2.msra.mxu0 0.0
    %4953 = vmatprep.subr.mxu0 0.0
    %4954 = vmatpush2.msra.mxu0 0.0
    %4955 = vmatprep.subr.mxu0 0.0
    %4956 = vmatpush2.msra.mxu0 0.0
    %4957 = vmatprep.subr.mxu0 0.0
    %4958 = vmatpush2.msra.mxu0 0.0
    %4959 = vmatprep.subr.mxu0 0.0
    %4960 = vmatpush2.msra.mxu0 0.0
    %4961 = vmatprep.subr.mxu0 0.0
    %4962 = vmatpush2.msra.mxu0 0.0
    %4963 = vmatprep.subr.mxu0 0.0
    %4964 = vmatpush2.msra.mxu0 0.0
    %4965 = vmatprep.subr.mxu0 0.0
    %4966 = vmatpush2.msra.mxu0 0.0
    %4967 = vmatprep.mubr.f32.mxu0 0.0
    %4968 = vmatmul.mubr.f32.gmra.mxu0 %v4797
    %v4969 = vpop.f32.mrf.mxu0
    %v4970 = vadd.f32 0.0, %v4969
    %v4971 = vpop.f32.mrf.mxu0
    %4972 = vdwg.mxu0
    %v4974 = vsel %vm118, %v4894, 0
    %4976 = vmatprep.subr.mxu0 0.0
    %4977 = vmatpush1.msra.mxu0 0.0
    %4978 = vmatprep.subr.mxu0 0.0
    %4979 = vmatpush1.msra.mxu0 0.0
    %4980 = vmatprep.subr.mxu0 0.0
    %4981 = vmatpush1.msra.mxu0 0.0
    %4982 = vmatprep.subr.mxu0 0.0
    %4983 = vmatpush1.msra.mxu0 0.0
    %4984 = vmatprep.subr.mxu0 0.0
    %4985 = vmatpush1.msra.mxu0 0.0
    %4986 = vmatprep.subr.mxu0 0.0
    %4987 = vmatpush1.msra.mxu0 0.0
    %4988 = vmatprep.subr.mxu0 0.0
    %4989 = vmatpush1.msra.mxu0 0.0
    %4990 = vmatprep.subr.mxu0 0.0
    %4991 = vmatpush1.msra.mxu0 0.0
    %4992 = vmatprep.subr.mxu0 0.0
    %4993 = vmatpush1.msra.mxu0 0.0
    %4994 = vmatprep.subr.mxu0 0.0
    %4995 = vmatpush1.msra.mxu0 0.0
    %4996 = vmatprep.subr.mxu0 0.0
    %4997 = vmatpush1.msra.mxu0 0.0
    %4998 = vmatprep.subr.mxu0 0.0
    %4999 = vmatpush1.msra.mxu0 0.0
    %5000 = vmatprep.subr.mxu0 0.0
    %5001 = vmatpush1.msra.mxu0 %v4898
    %5002 = vmatprep.subr.mxu0 0.0
    %5003 = vmatpush1.msra.mxu0 %v4897
    %5004 = vmatprep.subr.mxu0 0.0
    %5005 = vmatpush1.msra.mxu0 %v4896
    %5006 = vmatprep.subr.mxu0 0.0
    %5007 = vmatpush1.msra.mxu0 %v4895
    %5008 = vmatprep.subr.mxu0 0.0
    %5009 = vmatpush2.msra.mxu0 0.0
    %5010 = vmatprep.subr.mxu0 0.0
    %5011 = vmatpush2.msra.mxu0 0.0
    %5012 = vmatprep.subr.mxu0 0.0
    %5013 = vmatpush2.msra.mxu0 0.0
    %5014 = vmatprep.subr.mxu0 0.0
    %5015 = vmatpush2.msra.mxu0 0.0
    %5016 = vmatprep.subr.mxu0 0.0
    %5017 = vmatpush2.msra.mxu0 0.0
    %5018 = vmatprep.subr.mxu0 0.0
    %5019 = vmatpush2.msra.mxu0 0.0
    %5020 = vmatprep.subr.mxu0 0.0
    %5021 = vmatpush2.msra.mxu0 0.0
    %5022 = vmatprep.subr.mxu0 0.0
    %5023 = vmatpush2.msra.mxu0 0.0
    %5024 = vmatprep.subr.mxu0 0.0
    %5025 = vmatpush2.msra.mxu0 0.0
    %5026 = vmatprep.subr.mxu0 0.0
    %5027 = vmatpush2.msra.mxu0 0.0
    %5028 = vmatprep.subr.mxu0 0.0
    %5029 = vmatpush2.msra.mxu0 0.0
    %5030 = vmatprep.subr.mxu0 0.0
    %5031 = vmatpush2.msra.mxu0 0.0
    %5032 = vmatprep.subr.mxu0 0.0
    %5033 = vmatpush2.msra.mxu0 0.0
    %5034 = vmatprep.subr.mxu0 0.0
    %5035 = vmatpush2.msra.mxu0 0.0
    %5036 = vmatprep.subr.mxu0 0.0
    %5037 = vmatpush2.msra.mxu0 0.0
    %5038 = vmatprep.subr.mxu0 0.0
    %5039 = vmatpush2.msra.mxu0 0.0
    %5040 = vmatprep.mubr.f32.mxu0 0.0
    %5041 = vmatmul.mubr.f32.gmra.mxu0 %v4974
    %v5042 = vpop.f32.mrf.mxu0
    %v5043 = vadd.f32 %v4970, %v5042
    %v5044 = vpop.f32.mrf.mxu0
    %5045 = vdwg.mxu0
    %v5046 = vld [vmem:[%s6] sm:$0x1]
    %v5047 = vadd.f32 %v5043, %v5046
    %v5048 = vsel %vm267, %v5047, -inf
    %5049 = vmax.xlane.f32.xlu0 %v5048
    %v5050 = vpop.xlane.xlu0 %5049
    %v5051 = vsub.f32 %v5047, %v5050
    %v5052 = vmul.f32 %v5051, 1.442695
    %v5053 = vpow.pop %v5052
    %v5054 = vsel %vm267, %v5053, 0.0
    %5055 = vadd.xlane.f32.xlu0 %v5054
    %v5056 = vpop.xlane.xlu0 %5055
    %v5057 = vrcp.pop %v5056
    %v5058 = vmul.f32 %v5053, %v5057
    %v5059 = vld [vmem:[#allocation4] sm:$0xff]
    %v5060 = vld [vmem:[#allocation4 + $0x8] sm:$0x3]
    %v5062 = vsel %vm281, %v5058, 0
    %v5065 = vsel %vm285, %v5060, 0
    %5067 = vmatprep.subr.mxu0 0.0
    %5068 = vmatpush1.msra.mxu0 0.0
    %5069 = vmatprep.subr.mxu0 0.0
    %5070 = vmatpush1.msra.mxu0 0.0
    %5071 = vmatprep.subr.mxu0 0.0
    %5072 = vmatpush1.msra.mxu0 0.0
    %5073 = vmatprep.subr.mxu0 0.0
    %5074 = vmatpush1.msra.mxu0 0.0
    %5075 = vmatprep.subr.mxu0 0.0
    %5076 = vmatpush1.msra.mxu0 0.0
    %5077 = vmatprep.subr.mxu0 0.0
    %5078 = vmatpush1.msra.mxu0 0.0
    %5079 = vmatprep.subr.mxu0 0.0
    %5080 = vmatpush1.msra.mxu0 0.0
    %5081 = vmatprep.subr.mxu0 0.0
    %5082 = vmatpush1.msra.mxu0 0.0
    %5083 = vmatprep.subr.mxu0 0.0
    %5084 = vmatpush1.msra.mxu0 0.0
    %5085 = vmatprep.subr.mxu0 0.0
    %5086 = vmatpush1.msra.mxu0 0.0
    %5087 = vmatprep.subr.mxu0 0.0
    %5088 = vmatpush1.msra.mxu0 0.0
    %5089 = vmatprep.subr.mxu0 0.0
    %5090 = vmatpush1.msra.mxu0 0.0
    %5091 = vmatprep.subr.mxu0 0.0
    %5092 = vmatpush1.msra.mxu0 0.0
    %5093 = vmatprep.subr.mxu0 0.0
    %5094 = vmatpush1.msra.mxu0 0.0
    %5095 = vmatprep.subr.mxu0 0.0
    %5096 = vmatpush1.msra.mxu0 %v5065
    %5097 = vmatprep.subr.mxu0 0.0
    %5098 = vmatpush1.msra.mxu0 %v5059
    %5099 = vmatprep.subr.mxu0 0.0
    %5100 = vmatpush2.msra.mxu0 0.0
    %5101 = vmatprep.subr.mxu0 0.0
    %5102 = vmatpush2.msra.mxu0 0.0
    %5103 = vmatprep.subr.mxu0 0.0
    %5104 = vmatpush2.msra.mxu0 0.0
    %5105 = vmatprep.subr.mxu0 0.0
    %5106 = vmatpush2.msra.mxu0 0.0
    %5107 = vmatprep.subr.mxu0 0.0
    %5108 = vmatpush2.msra.mxu0 0.0
    %5109 = vmatprep.subr.mxu0 0.0
    %5110 = vmatpush2.msra.mxu0 0.0
    %5111 = vmatprep.subr.mxu0 0.0
    %5112 = vmatpush2.msra.mxu0 0.0
    %5113 = vmatprep.subr.mxu0 0.0
    %5114 = vmatpush2.msra.mxu0 0.0
    %5115 = vmatprep.subr.mxu0 0.0
    %5116 = vmatpush2.msra.mxu0 0.0
    %5117 = vmatprep.subr.mxu0 0.0
    %5118 = vmatpush2.msra.mxu0 0.0
    %5119 = vmatprep.subr.mxu0 0.0
    %5120 = vmatpush2.msra.mxu0 0.0
    %5121 = vmatprep.subr.mxu0 0.0
    %5122 = vmatpush2.msra.mxu0 0.0
    %5123 = vmatprep.subr.mxu0 0.0
    %5124 = vmatpush2.msra.mxu0 0.0
    %5125 = vmatprep.subr.mxu0 0.0
    %5126 = vmatpush2.msra.mxu0 0.0
    %5127 = vmatprep.subr.mxu0 0.0
    %5128 = vmatpush2.msra.mxu0 0.0
    %5129 = vmatprep.subr.mxu0 0.0
    %5130 = vmatpush2.msra.mxu0 0.0
    %5131 = vmatprep.mubr.f32.mxu0 0.0
    %5132 = vmatmul.mubr.f32.gmra.mxu0 %v5062
    %v5133 = vpop.f32.mrf.mxu0
    %v5134 = vadd.f32 0.0, %v5133
    %v5135 = vpop.f32.mrf.mxu0
    %5136 = vdwg.mxu0
    %v5137 = vld [vmem:[%s7] sm:$0xff]
    %v5138 = vld [vmem:[%s7 + $0x8] sm:$0xff]
    %v5139 = vld [vmem:[%s7 + $0x10] sm:$0xff]
    %v5140 = vld [vmem:[%s7 + $0x18] sm:$0xff]
    %v5141 = vld [vmem:[%s8] sm:$0xff]
    %v5142 = vld [vmem:[%s8 + $0x8] sm:$0xff]
    %v5143 = vld [vmem:[%s8 + $0x10] sm:$0xff]
    %v5144 = vld [vmem:[%s8 + $0x18] sm:$0xff]
    %v5146 = vsel %vm118, %v5134, 0
    %5148 = vmatprep.subr.mxu0 0.0
    %5149 = vmatpush1.msra.mxu0 0.0
    %5150 = vmatprep.subr.mxu0 0.0
    %5151 = vmatpush1.msra.mxu0 0.0
    %5152 = vmatprep.subr.mxu0 0.0
    %5153 = vmatpush1.msra.mxu0 0.0
    %5154 = vmatprep.subr.mxu0 0.0
    %5155 = vmatpush1.msra.mxu0 0.0
    %5156 = vmatprep.subr.mxu0 0.0
    %5157 = vmatpush1.msra.mxu0 0.0
    %5158 = vmatprep.subr.mxu0 0.0
    %5159 = vmatpush1.msra.mxu0 0.0
    %5160 = vmatprep.subr.mxu0 0.0
    %5161 = vmatpush1.msra.mxu0 0.0
    %5162 = vmatprep.subr.mxu0 0.0
    %5163 = vmatpush1.msra.mxu0 0.0
    %5164 = vmatprep.subr.mxu0 0.0
    %5165 = vmatpush1.msra.mxu0 0.0
    %5166 = vmatprep.subr.mxu0 0.0
    %5167 = vmatpush1.msra.mxu0 0.0
    %5168 = vmatprep.subr.mxu0 0.0
    %5169 = vmatpush1.msra.mxu0 0.0
    %5170 = vmatprep.subr.mxu0 0.0
    %5171 = vmatpush1.msra.mxu0 0.0
    %5172 = vmatprep.subr.mxu0 0.0
    %5173 = vmatpush1.msra.mxu0 %v5144
    %5174 = vmatprep.subr.mxu0 0.0
    %5175 = vmatpush1.msra.mxu0 %v5143
    %5176 = vmatprep.subr.mxu0 0.0
    %5177 = vmatpush1.msra.mxu0 %v5142
    %5178 = vmatprep.subr.mxu0 0.0
    %5179 = vmatpush1.msra.mxu0 %v5141
    %5180 = vmatprep.subr.mxu0 0.0
    %5181 = vmatpush2.msra.mxu0 0.0
    %5182 = vmatprep.subr.mxu0 0.0
    %5183 = vmatpush2.msra.mxu0 0.0
    %5184 = vmatprep.subr.mxu0 0.0
    %5185 = vmatpush2.msra.mxu0 0.0
    %5186 = vmatprep.subr.mxu0 0.0
    %5187 = vmatpush2.msra.mxu0 0.0
    %5188 = vmatprep.subr.mxu0 0.0
    %5189 = vmatpush2.msra.mxu0 0.0
    %5190 = vmatprep.subr.mxu0 0.0
    %5191 = vmatpush2.msra.mxu0 0.0
    %5192 = vmatprep.subr.mxu0 0.0
    %5193 = vmatpush2.msra.mxu0 0.0
    %5194 = vmatprep.subr.mxu0 0.0
    %5195 = vmatpush2.msra.mxu0 0.0
    %5196 = vmatprep.subr.mxu0 0.0
    %5197 = vmatpush2.msra.mxu0 0.0
    %5198 = vmatprep.subr.mxu0 0.0
    %5199 = vmatpush2.msra.mxu0 0.0
    %5200 = vmatprep.subr.mxu0 0.0
    %5201 = vmatpush2.msra.mxu0 0.0
    %5202 = vmatprep.subr.mxu0 0.0
    %5203 = vmatpush2.msra.mxu0 0.0
    %5204 = vmatprep.subr.mxu0 0.0
    %5205 = vmatpush2.msra.mxu0 0.0
    %5206 = vmatprep.subr.mxu0 0.0
    %5207 = vmatpush2.msra.mxu0 0.0
    %5208 = vmatprep.subr.mxu0 0.0
    %5209 = vmatpush2.msra.mxu0 0.0
    %5210 = vmatprep.subr.mxu0 0.0
    %5211 = vmatpush2.msra.mxu0 0.0
    %5212 = vmatprep.mubr.f32.mxu0 0.0
    %5213 = vmatmul.mubr.f32.gmra.mxu0 %v5146
    %v5214 = vpop.f32.mrf.mxu0
    %v5215 = vadd.f32 0.0, %v5214
    %v5216 = vpop.f32.mrf.mxu0
    %5217 = vdwg.mxu0
    %5218 = vmatprep.subr.mxu0 0.0
    %5219 = vmatpush1.msra.mxu0 0.0
    %5220 = vmatprep.subr.mxu0 0.0
    %5221 = vmatpush1.msra.mxu0 0.0
    %5222 = vmatprep.subr.mxu0 0.0
    %5223 = vmatpush1.msra.mxu0 0.0
    %5224 = vmatprep.subr.mxu0 0.0
    %5225 = vmatpush1.msra.mxu0 0.0
    %5226 = vmatprep.subr.mxu0 0.0
    %5227 = vmatpush1.msra.mxu0 0.0
    %5228 = vmatprep.subr.mxu0 0.0
    %5229 = vmatpush1.msra.mxu0 0.0
    %5230 = vmatprep.subr.mxu0 0.0
    %5231 = vmatpush1.msra.mxu0 0.0
    %5232 = vmatprep.subr.mxu0 0.0
    %5233 = vmatpush1.msra.mxu0 0.0
    %5234 = vmatprep.subr.mxu0 0.0
    %5235 = vmatpush1.msra.mxu0 0.0
    %5236 = vmatprep.subr.mxu0 0.0
    %5237 = vmatpush1.msra.mxu0 0.0
    %5238 = vmatprep.subr.mxu0 0.0
    %5239 = vmatpush1.msra.mxu0 0.0
    %5240 = vmatprep.subr.mxu0 0.0
    %5241 = vmatpush1.msra.mxu0 0.0
    %5242 = vmatprep.subr.mxu0 0.0
    %5243 = vmatpush1.msra.mxu0 %v5140
    %5244 = vmatprep.subr.mxu0 0.0
    %5245 = vmatpush1.msra.mxu0 %v5139
    %5246 = vmatprep.subr.mxu0 0.0
    %5247 = vmatpush1.msra.mxu0 %v5138
    %5248 = vmatprep.subr.mxu0 0.0
    %5249 = vmatpush1.msra.mxu0 %v5137
    %5250 = vmatprep.subr.mxu0 0.0
    %5251 = vmatpush2.msra.mxu0 0.0
    %5252 = vmatprep.subr.mxu0 0.0
    %5253 = vmatpush2.msra.mxu0 0.0
    %5254 = vmatprep.subr.mxu0 0.0
    %5255 = vmatpush2.msra.mxu0 0.0
    %5256 = vmatprep.subr.mxu0 0.0
    %5257 = vmatpush2.msra.mxu0 0.0
    %5258 = vmatprep.subr.mxu0 0.0
    %5259 = vmatpush2.msra.mxu0 0.0
    %5260 = vmatprep.subr.mxu0 0.0
    %5261 = vmatpush2.msra.mxu0 0.0
    %5262 = vmatprep.subr.mxu0 0.0
    %5263 = vmatpush2.msra.mxu0 0.0
    %5264 = vmatprep.subr.mxu0 0.0
    %5265 = vmatpush2.msra.mxu0 0.0
    %5266 = vmatprep.subr.mxu0 0.0
    %5267 = vmatpush2.msra.mxu0 0.0
    %5268 = vmatprep.subr.mxu0 0.0
    %5269 = vmatpush2.msra.mxu0 0.0
    %5270 = vmatprep.subr.mxu0 0.0
    %5271 = vmatpush2.msra.mxu0 0.0
    %5272 = vmatprep.subr.mxu0 0.0
    %5273 = vmatpush2.msra.mxu0 0.0
    %5274 = vmatprep.subr.mxu0 0.0
    %5275 = vmatpush2.msra.mxu0 0.0
    %5276 = vmatprep.subr.mxu0 0.0
    %5277 = vmatpush2.msra.mxu0 0.0
    %5278 = vmatprep.subr.mxu0 0.0
    %5279 = vmatpush2.msra.mxu0 0.0
    %5280 = vmatprep.subr.mxu0 0.0
    %5281 = vmatpush2.msra.mxu0 0.0
    %5282 = vmatprep.mubr.f32.mxu0 0.0
    %5283 = vmatmul.mubr.f32.gmra.mxu0 %v4974
    %v5284 = vpop.f32.mrf.mxu0
    %v5285 = vadd.f32 %v5215, %v5284
    %v5286 = vpop.f32.mrf.mxu0
    %5287 = vdwg.mxu0
    %v5288 = vld [vmem:[#allocation6] sm:$0x1]
    %v5289 = vadd.f32 %v5285, %v5288
    %v5290 = vmax.f32 %v5289, 0.0
    %v5291 = vld [vmem:[%s10] sm:$0xff]
    %v5292 = vld [vmem:[%s10 + $0x8] sm:$0xff]
    %v5293 = vld [vmem:[%s10 + $0x10] sm:$0xff]
    %v5294 = vld [vmem:[%s10 + $0x18] sm:$0xff]
    %v5295 = vld [vmem:[#allocation8] sm:$0x1]
    %v5297 = vsel %vm118, %v5290, 0
    %5299 = vmatprep.subr.mxu0 0.0
    %5300 = vmatpush1.msra.mxu0 0.0
    %5301 = vmatprep.subr.mxu0 0.0
    %5302 = vmatpush1.msra.mxu0 0.0
    %5303 = vmatprep.subr.mxu0 0.0
    %5304 = vmatpush1.msra.mxu0 0.0
    %5305 = vmatprep.subr.mxu0 0.0
    %5306 = vmatpush1.msra.mxu0 0.0
    %5307 = vmatprep.subr.mxu0 0.0
    %5308 = vmatpush1.msra.mxu0 0.0
    %5309 = vmatprep.subr.mxu0 0.0
    %5310 = vmatpush1.msra.mxu0 0.0
    %5311 = vmatprep.subr.mxu0 0.0
    %5312 = vmatpush1.msra.mxu0 0.0
    %5313 = vmatprep.subr.mxu0 0.0
    %5314 = vmatpush1.msra.mxu0 0.0
    %5315 = vmatprep.subr.mxu0 0.0
    %5316 = vmatpush1.msra.mxu0 0.0
    %5317 = vmatprep.subr.mxu0 0.0
    %5318 = vmatpush1.msra.mxu0 0.0
    %5319 = vmatprep.subr.mxu0 0.0
    %5320 = vmatpush1.msra.mxu0 0.0
    %5321 = vmatprep.subr.mxu0 0.0
    %5322 = vmatpush1.msra.mxu0 0.0
    %5323 = vmatprep.subr.mxu0 0.0
    %5324 = vmatpush1.msra.mxu0 %v5294
    %5325 = vmatprep.subr.mxu0 0.0
    %5326 = vmatpush1.msra.mxu0 %v5293
    %5327 = vmatprep.subr.mxu0 0.0
    %5328 = vmatpush1.msra.mxu0 %v5292
    %5329 = vmatprep.subr.mxu0 0.0
    %5330 = vmatpush1.msra.mxu0 %v5291
    %5331 = vmatprep.subr.mxu0 0.0
    %5332 = vmatpush2.msra.mxu0 0.0
    %5333 = vmatprep.subr.mxu0 0.0
    %5334 = vmatpush2.msra.mxu0 0.0
    %5335 = vmatprep.subr.mxu0 0.0
    %5336 = vmatpush2.msra.mxu0 0.0
    %5337 = vmatprep.subr.mxu0 0.0
    %5338 = vmatpush2.msra.mxu0 0.0
    %5339 = vmatprep.subr.mxu0 0.0
    %5340 = vmatpush2.msra.mxu0 0.0
    %5341 = vmatprep.subr.mxu0 0.0
    %5342 = vmatpush2.msra.mxu0 0.0
    %5343 = vmatprep.subr.mxu0 0.0
    %5344 = vmatpush2.msra.mxu0 0.0
    %5345 = vmatprep.subr.mxu0 0.0
    %5346 = vmatpush2.msra.mxu0 0.0
    %5347 = vmatprep.subr.mxu0 0.0
    %5348 = vmatpush2.msra.mxu0 0.0
    %5349 = vmatprep.subr.mxu0 0.0
    %5350 = vmatpush2.msra.mxu0 0.0
    %5351 = vmatprep.subr.mxu0 0.0
    %5352 = vmatpush2.msra.mxu0 0.0
    %5353 = vmatprep.subr.mxu0 0.0
    %5354 = vmatpush2.msra.mxu0 0.0
    %5355 = vmatprep.subr.mxu0 0.0
    %5356 = vmatpush2.msra.mxu0 0.0
    %5357 = vmatprep.subr.mxu0 0.0
    %5358 = vmatpush2.msra.mxu0 0.0
    %5359 = vmatprep.subr.mxu0 0.0
    %5360 = vmatpush2.msra.mxu0 0.0
    %5361 = vmatprep.subr.mxu0 0.0
    %5362 = vmatpush2.msra.mxu0 0.0
    %5363 = vmatprep.mubr.f32.mxu0 0.0
    %5364 = vmatmul.mubr.f32.gmra.mxu0 %v5297
    %v5365 = vpop.f32.mrf.mxu0
    %v5366 = vadd.f32 %v5295, %v5365
    %v5367 = vpop.f32.mrf.mxu0
    %5368 = vdwg.mxu0
    %v5369 = vld [vmem:[%s11] sm:$0xff]
    %v5370 = vld [vmem:[%s11 + $0x8] sm:$0xff]
    %v5371 = vld [vmem:[%s11 + $0x10] sm:$0xff]
    %v5372 = vld [vmem:[%s11 + $0x18] sm:$0xff]
    %v5373 = vld [vmem:[#allocation9] sm:$0x1]
    %5374 = vmatprep.subr.mxu0 0.0
    %5375 = vmatpush1.msra.mxu0 0.0
    %5376 = vmatprep.subr.mxu0 0.0
    %5377 = vmatpush1.msra.mxu0 0.0
    %5378 = vmatprep.subr.mxu0 0.0
    %5379 = vmatpush1.msra.mxu0 0.0
    %5380 = vmatprep.subr.mxu0 0.0
    %5381 = vmatpush1.msra.mxu0 0.0
    %5382 = vmatprep.subr.mxu0 0.0
    %5383 = vmatpush1.msra.mxu0 0.0
    %5384 = vmatprep.subr.mxu0 0.0
    %5385 = vmatpush1.msra.mxu0 0.0
    %5386 = vmatprep.subr.mxu0 0.0
    %5387 = vmatpush1.msra.mxu0 0.0
    %5388 = vmatprep.subr.mxu0 0.0
    %5389 = vmatpush1.msra.mxu0 0.0
    %5390 = vmatprep.subr.mxu0 0.0
    %5391 = vmatpush1.msra.mxu0 0.0
    %5392 = vmatprep.subr.mxu0 0.0
    %5393 = vmatpush1.msra.mxu0 0.0
    %5394 = vmatprep.subr.mxu0 0.0
    %5395 = vmatpush1.msra.mxu0 0.0
    %5396 = vmatprep.subr.mxu0 0.0
    %5397 = vmatpush1.msra.mxu0 0.0
    %5398 = vmatprep.subr.mxu0 0.0
    %5399 = vmatpush1.msra.mxu0 %v5372
    %5400 = vmatprep.subr.mxu0 0.0
    %5401 = vmatpush1.msra.mxu0 %v5371
    %5402 = vmatprep.subr.mxu0 0.0
    %5403 = vmatpush1.msra.mxu0 %v5370
    %5404 = vmatprep.subr.mxu0 0.0
    %5405 = vmatpush1.msra.mxu0 %v5369
    %5406 = vmatprep.subr.mxu0 0.0
    %5407 = vmatpush2.msra.mxu0 0.0
    %5408 = vmatprep.subr.mxu0 0.0
    %5409 = vmatpush2.msra.mxu0 0.0
    %5410 = vmatprep.subr.mxu0 0.0
    %5411 = vmatpush2.msra.mxu0 0.0
    %5412 = vmatprep.subr.mxu0 0.0
    %5413 = vmatpush2.msra.mxu0 0.0
    %5414 = vmatprep.subr.mxu0 0.0
    %5415 = vmatpush2.msra.mxu0 0.0
    %5416 = vmatprep.subr.mxu0 0.0
    %5417 = vmatpush2.msra.mxu0 0.0
    %5418 = vmatprep.subr.mxu0 0.0
    %5419 = vmatpush2.msra.mxu0 0.0
    %5420 = vmatprep.subr.mxu0 0.0
    %5421 = vmatpush2.msra.mxu0 0.0
    %5422 = vmatprep.subr.mxu0 0.0
    %5423 = vmatpush2.msra.mxu0 0.0
    %5424 = vmatprep.subr.mxu0 0.0
    %5425 = vmatpush2.msra.mxu0 0.0
    %5426 = vmatprep.subr.mxu0 0.0
    %5427 = vmatpush2.msra.mxu0 0.0
    %5428 = vmatprep.subr.mxu0 0.0
    %5429 = vmatpush2.msra.mxu0 0.0
    %5430 = vmatprep.subr.mxu0 0.0
    %5431 = vmatpush2.msra.mxu0 0.0
    %5432 = vmatprep.subr.mxu0 0.0
    %5433 = vmatpush2.msra.mxu0 0.0
    %5434 = vmatprep.subr.mxu0 0.0
    %5435 = vmatpush2.msra.mxu0 0.0
    %5436 = vmatprep.subr.mxu0 0.0
    %5437 = vmatpush2.msra.mxu0 0.0
    %5438 = vmatprep.mubr.f32.mxu0 0.0
    %5439 = vmatmul.mubr.f32.gmra.mxu0 %v4797
    %v5440 = vpop.f32.mrf.mxu0
    %v5441 = vadd.f32 %v5373, %v5440
    %v5442 = vpop.f32.mrf.mxu0
    %5443 = vdwg.mxu0
    %v5444 = vadd.f32 %v5366, %v5441
    %v5445 = vxor.u32 %v5444, 2147483648
    %v5446 = vmul.f32 %v5445, 1.442695
    %v5447 = vpow.pop %v5446
    %v5448 = vadd.f32 %v5447, 1.0
    %v5449 = vrcp.pop %v5448
    %v5450 = vmul.f32 1.0, %v5449
    %5452 = vrot.lane.b32.xlu0 %v5441, 64
    %v5453 = vpop.permute.xlu0 %5452
    %v5455 = vmul.f32 %v5450, %v5453
    %5457 = vrot.lane.b32.xlu0 %v5455, 64
    %v5458 = vpop.permute.xlu0 %5457
    %v5460 = vadd.f32 %v5366, %v5458
    %v5461 = vtanh.pop %v5460
    %v5462 = vsub.f32 1.0, %v5450
    %5464 = vrot.lane.b32.xlu0 %v5461, 96
    %v5465 = vpop.permute.xlu0 %5464
    %v5467 = vmul.f32 %v5462, %v5465
    %v5468 = vmul.f32 %v5450, %v4788
    %v5469 = vadd.f32 %v5467, %v5468
    %v5470 = vld [vmem:[%s14] sm:$0xff]
    %v5471 = vld [vmem:[%s14 + $0x8] sm:$0xff]
    %v5472 = vld [vmem:[%s14 + $0x10] sm:$0xff]
    %v5473 = vld [vmem:[%s14 + $0x18] sm:$0xff]
    %v5474 = vld [vmem:[%s15] sm:$0x1]
    %5476 = vrot.lane.b32.xlu0 %v5469, 96
    %v5477 = vpop.permute.xlu0 %5476
    %v5478 = vsel %vm118, %v5477, 0
    %5480 = vmatprep.subr.mxu0 0.0
    %5481 = vmatpush1.msra.mxu0 0.0
    %5482 = vmatprep.subr.mxu0 0.0
    %5483 = vmatpush1.msra.mxu0 0.0
    %5484 = vmatprep.subr.mxu0 0.0
    %5485 = vmatpush1.msra.mxu0 0.0
    %5486 = vmatprep.subr.mxu0 0.0
    %5487 = vmatpush1.msra.mxu0 0.0
    %5488 = vmatprep.subr.mxu0 0.0
    %5489 = vmatpush1.msra.mxu0 0.0
    %5490 = vmatprep.subr.mxu0 0.0
    %5491 = vmatpush1.msra.mxu0 0.0
    %5492 = vmatprep.subr.mxu0 0.0
    %5493 = vmatpush1.msra.mxu0 0.0
    %5494 = vmatprep.subr.mxu0 0.0
    %5495 = vmatpush1.msra.mxu0 0.0
    %5496 = vmatprep.subr.mxu0 0.0
    %5497 = vmatpush1.msra.mxu0 0.0
    %5498 = vmatprep.subr.mxu0 0.0
    %5499 = vmatpush1.msra.mxu0 0.0
    %5500 = vmatprep.subr.mxu0 0.0
    %5501 = vmatpush1.msra.mxu0 0.0
    %5502 = vmatprep.subr.mxu0 0.0
    %5503 = vmatpush1.msra.mxu0 0.0
    %5504 = vmatprep.subr.mxu0 0.0
    %5505 = vmatpush1.msra.mxu0 %v5473
    %5506 = vmatprep.subr.mxu0 0.0
    %5507 = vmatpush1.msra.mxu0 %v5472
    %5508 = vmatprep.subr.mxu0 0.0
    %5509 = vmatpush1.msra.mxu0 %v5471
    %5510 = vmatprep.subr.mxu0 0.0
    %5511 = vmatpush1.msra.mxu0 %v5470
    %5512 = vmatprep.subr.mxu0 0.0
    %5513 = vmatpush2.msra.mxu0 0.0
    %5514 = vmatprep.subr.mxu0 0.0
    %5515 = vmatpush2.msra.mxu0 0.0
    %5516 = vmatprep.subr.mxu0 0.0
    %5517 = vmatpush2.msra.mxu0 0.0
    %5518 = vmatprep.subr.mxu0 0.0
    %5519 = vmatpush2.msra.mxu0 0.0
    %5520 = vmatprep.subr.mxu0 0.0
    %5521 = vmatpush2.msra.mxu0 0.0
    %5522 = vmatprep.subr.mxu0 0.0
    %5523 = vmatpush2.msra.mxu0 0.0
    %5524 = vmatprep.subr.mxu0 0.0
    %5525 = vmatpush2.msra.mxu0 0.0
    %5526 = vmatprep.subr.mxu0 0.0
    %5527 = vmatpush2.msra.mxu0 0.0
    %5528 = vmatprep.subr.mxu0 0.0
    %5529 = vmatpush2.msra.mxu0 0.0
    %5530 = vmatprep.subr.mxu0 0.0
    %5531 = vmatpush2.msra.mxu0 0.0
    %5532 = vmatprep.subr.mxu0 0.0
    %5533 = vmatpush2.msra.mxu0 0.0
    %5534 = vmatprep.subr.mxu0 0.0
    %5535 = vmatpush2.msra.mxu0 0.0
    %5536 = vmatprep.subr.mxu0 0.0
    %5537 = vmatpush2.msra.mxu0 0.0
    %5538 = vmatprep.subr.mxu0 0.0
    %5539 = vmatpush2.msra.mxu0 0.0
    %5540 = vmatprep.subr.mxu0 0.0
    %5541 = vmatpush2.msra.mxu0 0.0
    %5542 = vmatprep.subr.mxu0 0.0
    %5543 = vmatpush2.msra.mxu0 0.0
    %5544 = vmatprep.mubr.f32.mxu0 0.0
    %5545 = vmatmul.mubr.f32.gmra.mxu0 %v5478
    %v5546 = vpop.f32.mrf.mxu0
    %v5547 = vadd.f32 %v5474, %v5546
    %v5548 = vpop.f32.mrf.mxu0
    %5549 = vdwg.mxu0
    %v5550 = vsel %vm779, %v5547, -inf
    %5551 = vmax.xlane.f32.xlu0 %v5550
    %v5552 = vpop.xlane.xlu0 %5551
    %v5553 = vsub.f32 %v5547, %v5552
    %v5554 = vmul.f32 %v5553, 1.442695
    %v5555 = vpow.pop %v5554
    %v5556 = vsel %vm779, %v5555, 0.0
    %5557 = vadd.xlane.f32.xlu0 %v5556
    %v5558 = vpop.xlane.xlu0 %5557
    %v5559 = vlog2.pop %v5558
    %v5560 = vmul.f32 %v5559, 0.6931472
    %v5561 = vadd.f32 %v5560, %v5552
    %v5562 = vsub.f32 %v5547, %v5561
    %5563 = vrot.lane.b32.xlu0 %v5469, 16
    %v5564 = vpop.permute.xlu0 %5563
    %5566 = vrot.lane.b32.xlu0 %v5058, 80
    %v5567 = vpop.permute.xlu0 %5566
    %v5569 = vsel %vm799, %v5562, %v5564
    %v5570 = vsel %vm801, %v5569, %v5567
    %v5571 = vsel %vm803, %v5570, 0.0
    %5572 = vst [vmem:[%s16 + $0x7] sm:$0x1] %v5571
    // Predicated region
    $region78: #{attn_decoder_decode.1} parent=1 // pred_check
      _
    $region79: #{attn_decoder_decode.1} parent=1 // pred_check_branch
      %5574 = sbr.rel (0) target = $region81
    $region80: #{attn_decoder_decode.1} parent=1 // pred_region
      _
    $region81: #{attn_decoder_decode.1} parent=1 // pred_fallthru
      _
    // Predicated region
    $region82: #{attn_decoder_decode.1} parent=1 // pred_check
      _
    $region83: #{attn_decoder_decode.1} parent=1 // pred_check_branch
      %5576 = sbr.rel (0) target = $region85
    $region84: #{attn_decoder_decode.1} parent=1 // pred_region
      _
    $region85: #{attn_decoder_decode.1} parent=1 // pred_fallthru
      _
    %5577 = vsyncpa [#allocation5], 1
    %5578 = vsyncpa [#allocation7], 1
    %5579 = vsyncpa [#allocation10], 1

</llo_original>
